<compile_context>
chip_gen: v7x
topology: tpu7x:2x2x1
jax: 0.10.0
libtpu: 0.0.40
codegen_flags: <defaults>
</compile_context>

<pallas_src>
import math
from functools import partial

import jax
import jax.numpy as jnp
from jax import lax
from jax.experimental import pallas as pl
from jax.experimental.pallas import tpu as pltpu


# ----------------------------- Pallas kernels ------------------------------

def _token_kernel(x_ref, g_ref, b_ref, skip_ref, xn_ref, *, eps):
    """Fused: pool_skip = max over H*W (lane-dense), x_norm = LayerNorm(norm1)."""
    x = x_ref[...].astype(jnp.float32)                       # (bm, HW, C)
    skip_ref[...] = jnp.max(x, axis=1).astype(skip_ref.dtype)   # (bm, C)
    mu = jnp.mean(x, axis=-1, keepdims=True)
    xc = x - mu
    var = jnp.mean(xc * xc, axis=-1, keepdims=True)
    y = xc * lax.rsqrt(var + eps)
    xn_ref[...] = (y * g_ref[...] + b_ref[...]).astype(xn_ref.dtype)


def _qkv_kernel(x_ref, w_ref, b_ref, o_ref):
    """One big matmul: (bm, H*W*C) @ (H*W*C, 3*base) + folded bias."""
    acc = jnp.dot(x_ref[...].astype(jnp.float32), w_ref[...].astype(jnp.float32),
                  preferred_element_type=jnp.float32)
    o_ref[...] = (acc + b_ref[...]).astype(o_ref.dtype)


def _heads_kernel(q_ref, k_ref, v_ref, rt_ref, skip_ref,
                  nqg_ref, nqb_ref, nkg_ref, nkb_ref, nvg_ref, nvb_ref,
                  pw_ref, pb_ref, n2g_ref, n2b_ref,
                  f1w_ref, f1b_ref, f2w_ref, f2b_ref,
                  png_ref, pnb_ref,
                  xout_ref, attn_ref, *, scale, eps):
    """Per-head LNs + attention (all heads batched) + proj + skip + MLP + proj_norm."""
    def ln(z, g, b):
        mu = jnp.mean(z, axis=-1, keepdims=True)
        zc = z - mu
        var = jnp.mean(zc * zc, axis=-1, keepdims=True)
        return zc * lax.rsqrt(var + eps) * g + b

    q = ln(q_ref[...].astype(jnp.float32), nqg_ref[...], nqb_ref[...])   # (NH, T, d)
    k = ln(k_ref[...].astype(jnp.float32), nkg_ref[...], nkb_ref[...])
    v = ln(v_ref[...].astype(jnp.float32), nvg_ref[...], nvb_ref[...])
    rt = rt_ref[...].astype(jnp.float32)                                 # (T, T, d)
    NH, T, d = q.shape

    # attention for all heads of this batch item in a single grid step
    s = jnp.einsum('nqd,nkd->nqk', q * scale, k,
                   preferred_element_type=jnp.float32)                   # (NH, T, T)
    # temporal relative position: rel[n, i, j] = <q[n, i], Rt[i, j]>
    rel = jnp.sum(q[:, :, None, :] * rt[None, :, :, :], axis=-1)         # (NH, T, T)
    logits = s + rel
    m = jnp.max(logits, axis=-1, keepdims=True)
    p = jnp.exp(logits - m)
    attn = p * pl.reciprocal(jnp.sum(p, axis=-1, keepdims=True), approx=True)
    attn_ref[...] = attn.astype(attn_ref.dtype)
    xo = jnp.einsum('nqk,nkd->nqd', attn, v,
                    preferred_element_type=jnp.float32) + q              # (NH, T, d)

    # output projection: 'b n t c -> b t (n c)' folded into head-sliced matmuls,
    # accumulated directly with bias + pool-skip (no materialized rearrange).
    pw = pw_ref[...].astype(jnp.float32)                                 # (base, base)
    x1 = pb_ref[...].astype(jnp.float32) + skip_ref[...].astype(jnp.float32)  # (T, base)
    for n in range(NH):
        x1 = x1 + jnp.dot(xo[n], pw[n * d:(n + 1) * d, :],
                          preferred_element_type=jnp.float32)

    # MLP block (norm2 -> fc1 + exact GELU -> fc2) + residual, then proj_norm
    h = ln(x1, n2g_ref[...], n2b_ref[...])
    h = jnp.dot(h, f1w_ref[...].astype(jnp.float32),
                preferred_element_type=jnp.float32) + f1b_ref[...]
    h = 0.5 * h * (1.0 + lax.erf(h * (1.0 / math.sqrt(2.0))))
    h = jnp.dot(h, f2w_ref[...].astype(jnp.float32),
                preferred_element_type=jnp.float32) + f2b_ref[...]
    x2 = ln(h + x1, png_ref[...], pnb_ref[...])
    xout_ref[...] = x2.astype(xout_ref.dtype)


# ----------------------------- kernel wrappers ------------------------------

def _row_block(m, cap):
    """Largest divisor of m that is <= cap (m itself when it already fits)."""
    if m <= cap:
        return m
    best = 1
    for cand in range(1, cap + 1):
        if m % cand == 0:
            best = cand
    return best


def pallas_token(x3, gamma, beta, eps):
    """x3: (B*T, H*W, C) -> (pool_skip (B*T, C), x_norm (B*T, H*W, C))."""
    BT, HW, C = x3.shape
    bm = _row_block(BT, 512)
    kern = partial(_token_kernel, eps=eps)
    return pl.pallas_call(
        kern,
        out_shape=(jax.ShapeDtypeStruct((BT, C), x3.dtype),
                   jax.ShapeDtypeStruct((BT, HW, C), x3.dtype)),
        grid=(BT // bm,),
        in_specs=[pl.BlockSpec((bm, HW, C), lambda i: (i, 0, 0)),
                  pl.BlockSpec((1, 1, C), lambda i: (0, 0, 0)),
                  pl.BlockSpec((1, 1, C), lambda i: (0, 0, 0))],
        out_specs=(pl.BlockSpec((bm, C), lambda i: (i, 0)),
                   pl.BlockSpec((bm, HW, C), lambda i: (i, 0, 0))),
        compiler_params=pltpu.CompilerParams(dimension_semantics=("parallel",)),
    )(x3, gamma.reshape(1, 1, C), beta.reshape(1, 1, C))


def pallas_qkv(xn_flat, w_eff, b_eff):
    """(B*T, H*W*C) @ (H*W*C, 3*base) + bias -> (B*T, 3*base)."""
    M, K = xn_flat.shape
    N = w_eff.shape[1]
    bm = _row_block(M, 512)
    return pl.pallas_call(
        _qkv_kernel,
        out_shape=jax.ShapeDtypeStruct((M, N), xn_flat.dtype),
        grid=(M // bm,),
        in_specs=[pl.BlockSpec((bm, K), lambda i: (i, 0)),
                  pl.BlockSpec((K, N), lambda i: (0, 0)),
                  pl.BlockSpec((1, N), lambda i: (0, 0))],
        out_specs=pl.BlockSpec((bm, N), lambda i: (i, 0)),
        compiler_params=pltpu.CompilerParams(dimension_semantics=("parallel",)),
    )(xn_flat, w_eff, b_eff.reshape(1, N))


def pallas_heads(q, k, v, rt, skip, params, *, num_heads, scale, eps):
    """q/k/v: (B*NH, T, d); rt: (T, T, d); skip: (B*T, base).
    Returns x_rows (B*T, base) and attn (B*NH, T, T) (f32)."""
    BN, T, d = q.shape
    B = BN // num_heads
    base = num_heads * d
    hidden = params["fc1_w"].shape[1]
    BT = B * T
    kern = partial(_heads_kernel, scale=scale, eps=eps)

    vec = lambda a: a.reshape(1, -1)

    def const_spec(shape):
        if len(shape) == 2:
            return pl.BlockSpec(shape, lambda i: (0, 0))
        return pl.BlockSpec(shape, lambda i: (0, 0, 0))

    hd_spec = pl.BlockSpec((num_heads, T, d), lambda i: (i, 0, 0))
    row_spec = pl.BlockSpec((T, base), lambda i: (i, 0))

    return pl.pallas_call(
        kern,
        out_shape=(jax.ShapeDtypeStruct((BT, base), q.dtype),
                   jax.ShapeDtypeStruct((BN, T, T), jnp.float32)),
        grid=(B,),
        in_specs=[hd_spec, hd_spec, hd_spec,
                  const_spec((T, T, d)),
                  row_spec,
                  const_spec((1, d)), const_spec((1, d)),
                  const_spec((1, d)), const_spec((1, d)),
                  const_spec((1, d)), const_spec((1, d)),
                  const_spec((base, base)), const_spec((1, base)),
                  const_spec((1, base)), const_spec((1, base)),
                  const_spec((base, hidden)), const_spec((1, hidden)),
                  const_spec((hidden, base)), const_spec((1, base)),
                  const_spec((1, base)), const_spec((1, base))],
        out_specs=(row_spec,
                   pl.BlockSpec((num_heads, T, T), lambda i: (i, 0, 0))),
        compiler_params=pltpu.CompilerParams(dimension_semantics=("parallel",)),
    )(q, k, v, rt, skip,
      vec(params["normq_g"]), vec(params["normq_b"]),
      vec(params["normk_g"]), vec(params["normk_b"]),
      vec(params["normv_g"]), vec(params["normv_b"]),
      params["proj_w"], vec(params["proj_b"]),
      vec(params["norm2_g"]), vec(params["norm2_b"]),
      params["fc1_w"], vec(params["fc1_b"]),
      params["fc2_w"], vec(params["fc2_b"]),
      vec(params["proj_norm_g"]), vec(params["proj_norm_b"]))


# ------------------------------ JAX glue -----------------------------------

def interpolate_rel_pos(rel_pos, d):
    """F.interpolate(..., size=d, mode='linear', align_corners=False) on axis 0."""
    ori_d = rel_pos.shape[0]
    if ori_d == d:
        return rel_pos
    scale = ori_d / d
    i = jnp.arange(d, dtype=jnp.float32)
    src = jnp.maximum(scale * (i + 0.5) - 0.5, 0.0)
    i0 = jnp.minimum(jnp.floor(src).astype(jnp.int32), ori_d - 1)
    off = jnp.where(i0 < ori_d - 1, 1, 0)
    w1 = (src - i0.astype(jnp.float32))[:, None]
    return (1.0 - w1) * rel_pos[i0] + w1 * rel_pos[i0 + off]


def _fold_qkv_pool(params, C, num_heads, d, H, W):
    """Fold the qkv Linear and the 1x7x7 Conv3d's (no bias) into one matmul.

    Returns W_eff (H*W*C, 3*num_heads*d) and b_eff (3*num_heads*d,) so that
    x_norm_flat @ W_eff + b_eff directly yields the pooled q|k|v per (b, t),
    columns ordered (part, head, channel) with channel fastest.
    """
    HW = H * W
    w3 = params["qkv_w"].reshape(C, 3, num_heads, d)
    b3 = params["qkv_b"].reshape(3, num_heads, d)
    ws, bs = [], []
    for part, key in enumerate(("pool_q_w", "pool_k_w", "pool_v_w")):
        cw = params[key][:, :, 0]                             # (d_out, d_in, H, W)
        cw = cw.transpose(2, 3, 1, 0).reshape(HW, d, d)       # (p, d_in, d_out)
        wp = jnp.einsum("cni,pio->pcno", w3[:, part], cw)     # (p, C, n, d_out)
        ws.append(wp.reshape(HW * C, num_heads * d))
        bs.append(jnp.einsum("ni,io->no", b3[part], cw.sum(axis=0)).reshape(-1))
    return jnp.concatenate(ws, axis=1), jnp.concatenate(bs)


def adaptive_pooler_forward(x, params, *, num_heads, eps=1e-6):
    B, C, T, H, W = x.shape
    base_dim = params["qkv_w"].shape[1] // 3
    head_dim = base_dim // num_heads
    scale = head_dim ** (-0.5)
    HW = H * W
    BT = B * T

    # b c t h w -> (b t) (h w) c    (pure layout glue)
    x3 = x.transpose(0, 2, 3, 4, 1).reshape(BT, HW, C)

    # kernel 1: norm1 LayerNorm + MaxPool3d((1,7,7)) skip (lane-dense output)
    pool_skip, x_norm = pallas_token(x3, params["norm1_g"], params["norm1_b"], eps)

    # kernel 2: qkv Linear + pool Conv3d folded into one K = H*W*C matmul
    w_eff, b_eff = _fold_qkv_pool(params, C, num_heads, head_dim, H, W)
    qkvp = pallas_qkv(x_norm.reshape(BT, HW * C), w_eff, b_eff)   # (BT, 3*base)

    # (b t) (qkv n c) -> qkv (b n) t c    (tiny layout glue)
    qkvp = qkvp.reshape(B, T, 3, num_heads, head_dim)
    qkvp = qkvp.transpose(2, 0, 3, 1, 4).reshape(3, B * num_heads, T, head_dim)
    q, k, v = qkvp[0], qkvp[1], qkvp[2]

    # TODO(synk): temporal rel-pos linear interpolation + (T,T) table gather stays
    # in XLA glue (data-dependent gather, a few KB; not worth a Pallas kernel).
    rel_pos = interpolate_rel_pos(params["rel_pos_t"], 2 * T - 1)
    dist = jnp.arange(T)[:, None] - jnp.arange(T)[None, :] + (T - 1)
    rt = rel_pos[dist]                                            # (T, T, head_dim)

    skip = pool_skip                                              # (BT, C)
    if "pool_proj_w" in params:   # only when input_dim != base_dim (not this test)
        skip = skip @ params["pool_proj_w"] + params["pool_proj_b"]

    # kernel 3: per-head LN + attention + proj + skip + MLP + proj_norm
    x_rows, attn = pallas_heads(q, k, v, rt, skip, params,
                                num_heads=num_heads, scale=scale, eps=eps)
    attn = attn.reshape(B, num_heads, T, T)
    x_out = x_rows.reshape(B, T, base_dim).transpose(0, 2, 1)     # (B, base, T)
    return x_out, attn


# ------------------------- pure-JAX reference ------------------------------

def reference_forward(x, params, *, num_heads, eps=1e-6):
    B, C, T, H, W = x.shape
    base_dim = params["qkv_w"].shape[1] // 3
    head_dim = base_dim // num_heads
    scale = head_dim ** (-0.5)

    def ln(z, g, b):
        mu = jnp.mean(z, axis=-1, keepdims=True)
        var = jnp.mean((z - mu) ** 2, axis=-1, keepdims=True)
        return (z - mu) / jnp.sqrt(var + eps) * g + b

    pool_skip = jnp.max(x, axis=(3, 4)).transpose(0, 2, 1)         # (B,T,C)
    xt = x.transpose(0, 2, 3, 4, 1)
    xn = ln(xt, params["norm1_g"], params["norm1_b"])
    qkv = xn @ params["qkv_w"] + params["qkv_b"]
    qkv = qkv.reshape(B, T, H, W, 3, num_heads, head_dim)
    qkv = qkv.transpose(4, 0, 5, 6, 1, 2, 3)                       # (3,B,n,c,T,H,W)

    def conv(z, w):
        return jnp.einsum("bncthw,ochw->bnto", z, w[:, :, 0])

    q = ln(conv(qkv[0], params["pool_q_w"]), params["normq_g"], params["normq_b"])
    k = ln(conv(qkv[1], params["pool_k_w"]), params["normk_g"], params["normk_b"])
    v = ln(conv(qkv[2], params["pool_v_w"]), params["normv_g"], params["normv_b"])
    attn = jnp.einsum("bnic,bnjc->bnij", q * scale, k)
    rel_pos = interpolate_rel_pos(params["rel_pos_t"], 2 * T - 1)
    dist = jnp.arange(T)[:, None] - jnp.arange(T)[None, :] + (T - 1)
    rel = jnp.einsum("bnic,ijc->bnij", q, rel_pos[dist])
    attn = jax.nn.softmax(attn + rel, axis=-1)
    xo = jnp.einsum("bnij,bnjc->bnic", attn, v) + q
    xo = xo.transpose(0, 2, 1, 3).reshape(B, T, base_dim)
    xo = xo @ params["proj_w"] + params["proj_b"]
    skip = pool_skip
    if "pool_proj_w" in params:
        skip = skip @ params["pool_proj_w"] + params["pool_proj_b"]
    x1 = xo + skip
    h = ln(x1, params["norm2_g"], params["norm2_b"])
    h = h @ params["fc1_w"] + params["fc1_b"]
    h = 0.5 * h * (1.0 + lax.erf(h / math.sqrt(2.0)))
    h = h @ params["fc2_w"] + params["fc2_b"]
    x2 = ln(h + x1, params["proj_norm_g"], params["proj_norm_b"])
    return x2.transpose(0, 2, 1), attn


# --------------------------------- main -------------------------------------

if __name__ == "__main__":
    B, T, H, W = 2, 8, 7, 7
    input_dim = 32          # == base_dim -> pool_proj is Identity (as in module)
    base_dim = 32
    num_heads = 4
    head_dim = base_dim // num_heads
    mlp_hidden = int(base_dim * 4.0)

    key = jax.random.PRNGKey(0)
    ks = jax.random.split(key, 12)
    x = jax.random.normal(ks[0], (B, input_dim, T, H, W), jnp.float32)

    def tn(k, shape, std=0.02):
        return std * jax.random.normal(k, shape, jnp.float32)

    params = {
        "norm1_g": jnp.ones((input_dim,), jnp.float32),
        "norm1_b": jnp.zeros((input_dim,), jnp.float32),
        "qkv_w": tn(ks[1], (input_dim, 3 * base_dim)),
        "qkv_b": jnp.zeros((3 * base_dim,), jnp.float32),
        "normq_g": jnp.ones((head_dim,), jnp.float32),
        "normq_b": jnp.zeros((head_dim,), jnp.float32),
        "normk_g": jnp.ones((head_dim,), jnp.float32),
        "normk_b": jnp.zeros((head_dim,), jnp.float32),
        "normv_g": jnp.ones((head_dim,), jnp.float32),
        "normv_b": jnp.zeros((head_dim,), jnp.float32),
        "pool_q_w": tn(ks[2], (head_dim, head_dim, 1, 7, 7), 0.05),
        "pool_k_w": tn(ks[3], (head_dim, head_dim, 1, 7, 7), 0.05),
        "pool_v_w": tn(ks[4], (head_dim, head_dim, 1, 7, 7), 0.05),
        # module inits rel_pos_t to zeros; use small random values so the
        # relative-position path is actually exercised (deterministic).
        "rel_pos_t": tn(ks[5], (2 * 64 - 1, head_dim)),
        "proj_w": tn(ks[6], (base_dim, base_dim)),
        "proj_b": jnp.zeros((base_dim,), jnp.float32),
        "norm2_g": jnp.ones((base_dim,), jnp.float32),
        "norm2_b": jnp.zeros((base_dim,), jnp.float32),
        "fc1_w": tn(ks[7], (base_dim, mlp_hidden)),
        "fc1_b": jnp.zeros((mlp_hidden,), jnp.float32),
        "fc2_w": tn(ks[8], (mlp_hidden, base_dim)),
        "fc2_b": jnp.zeros((base_dim,), jnp.float32),
        "proj_norm_g": jnp.ones((base_dim,), jnp.float32),
        "proj_norm_b": jnp.zeros((base_dim,), jnp.float32),
    }

    fwd = jax.jit(partial(adaptive_pooler_forward, num_heads=num_heads))
    out_x, attn = fwd(x, params)
    jax.block_until_ready((out_x, attn))

    ref_x, ref_attn = reference_forward(x, params, num_heads=num_heads)
    assert out_x.shape == (B, base_dim, T)
    assert attn.shape == (B, num_heads, T, T)
    assert bool(jnp.all(jnp.isfinite(out_x))) and bool(jnp.all(jnp.isfinite(attn)))
    # tolerance covers the EUP approximate reciprocal used for the softmax denom
    assert jnp.allclose(out_x, ref_x, atol=5e-3, rtol=5e-3)
    assert jnp.allclose(attn, ref_attn, atol=5e-3, rtol=5e-3)
    print("KERNEL_OK")
</pallas_src>

<mosaic_0001>
module attributes {stable_mosaic.version = 11 : i64} {
  func.func @_token_kernel(%arg0: i32, %arg1: memref<16x49x32xf32, #tpu.memory_space<vmem>>, %arg2: memref<1x1x32xf32, #tpu.memory_space<vmem>>, %arg3: memref<1x1x32xf32, #tpu.memory_space<vmem>>, %arg4: memref<16x32xf32, #tpu.memory_space<vmem>>, %arg5: memref<16x49x32xf32, #tpu.memory_space<vmem>>) attributes {dimension_semantics = [#tpu.dimension_semantics<parallel>], iteration_bounds = array<i64: 1>, scalar_prefetch = 0 : i64, scratch_operands = 0 : i64, tpu.core_type = #tpu.core_type<tc>, window_params = [{transform_indices = @transform_0, window_bounds = array<i64: 16, 49, 32>}, {pipeline_mode = #tpu.pipeline_mode<synchronous>, transform_indices = @transform_1, window_bounds = array<i64: 1, 1, 32>}, {pipeline_mode = #tpu.pipeline_mode<synchronous>, transform_indices = @transform_2, window_bounds = array<i64: 1, 1, 32>}, {transform_indices = @transform_3, window_bounds = array<i64: 16, 32>}, {transform_indices = @transform_4, window_bounds = array<i64: 16, 49, 32>}]} {
    %c0 = arith.constant 0 : index
    %c0_0 = arith.constant 0 : index
    %c0_1 = arith.constant 0 : index
    %0 = vector.load %arg1[%c0, %c0_0, %c0_1] : memref<16x49x32xf32, #tpu.memory_space<vmem>>, vector<16x49x32xf32>
    %cst = arith.constant dense<0xFF800000> : vector<16x32xf32>
    %1 = vector.multi_reduction <maximumf>, %0, %cst [1] : vector<16x49x32xf32> to vector<16x32xf32>
    %c0_2 = arith.constant 0 : index
    %c0_3 = arith.constant 0 : index
    %2 = vector.load %arg4[%c0_2, %c0_3] : memref<16x32xf32, #tpu.memory_space<vmem>>, vector<16x32xf32>
    tpu.vector_store %arg4[%c0_2, %c0_3], %1 {strides = array<i32>} : memref<16x32xf32, #tpu.memory_space<vmem>>, vector<16x32xf32>,
    %cst_4 = arith.constant dense<0.000000e+00> : vector<16x49xf32>
    %3 = vector.multi_reduction <add>, %0, %cst_4 [2] : vector<16x49x32xf32> to vector<16x49xf32>
    %4 = vector.shape_cast %3 : vector<16x49xf32> to vector<16x49x1xf32>
    %cst_5 = arith.constant 3.200000e+01 : f32
    %5 = vector.broadcast %cst_5 : f32 to vector<16x49x1xf32>
    %6 = arith.divf %4, %5 : vector<16x49x1xf32>
    %7 = vector.broadcast %6 : vector<16x49x1xf32> to vector<16x49x32xf32>
    %8 = arith.subf %0, %7 : vector<16x49x32xf32>
    %9 = arith.mulf %8, %8 : vector<16x49x32xf32>
    %cst_6 = arith.constant dense<0.000000e+00> : vector<16x49xf32>
    %10 = vector.multi_reduction <add>, %9, %cst_6 [2] : vector<16x49x32xf32> to vector<16x49xf32>
    %11 = vector.shape_cast %10 : vector<16x49xf32> to vector<16x49x1xf32>
    %cst_7 = arith.constant 3.200000e+01 : f32
    %12 = vector.broadcast %cst_7 : f32 to vector<16x49x1xf32>
    %13 = arith.divf %11, %12 : vector<16x49x1xf32>
    %cst_8 = arith.constant 9.99999997E-7 : f32
    %14 = vector.broadcast %cst_8 : f32 to vector<16x49x1xf32>
    %15 = arith.addf %13, %14 : vector<16x49x1xf32>
    %16 = math.rsqrt %15 : vector<16x49x1xf32>
    %17 = vector.broadcast %16 : vector<16x49x1xf32> to vector<16x49x32xf32>
    %18 = arith.mulf %8, %17 : vector<16x49x32xf32>
    %c0_9 = arith.constant 0 : index
    %c0_10 = arith.constant 0 : index
    %c0_11 = arith.constant 0 : index
    %19 = vector.load %arg2[%c0_9, %c0_10, %c0_11] : memref<1x1x32xf32, #tpu.memory_space<vmem>>, vector<1x1x32xf32>
    %20 = vector.broadcast %19 : vector<1x1x32xf32> to vector<16x49x32xf32>
    %21 = arith.mulf %18, %20 : vector<16x49x32xf32>
    %c0_12 = arith.constant 0 : index
    %c0_13 = arith.constant 0 : index
    %c0_14 = arith.constant 0 : index
    %22 = vector.load %arg3[%c0_12, %c0_13, %c0_14] : memref<1x1x32xf32, #tpu.memory_space<vmem>>, vector<1x1x32xf32>
    %23 = vector.broadcast %22 : vector<1x1x32xf32> to vector<16x49x32xf32>
    %24 = arith.addf %21, %23 : vector<16x49x32xf32>
    %c0_15 = arith.constant 0 : index
    %c0_16 = arith.constant 0 : index
    %c0_17 = arith.constant 0 : index
    %25 = vector.load %arg5[%c0_15, %c0_16, %c0_17] : memref<16x49x32xf32, #tpu.memory_space<vmem>>, vector<16x49x32xf32>
    tpu.vector_store %arg5[%c0_15, %c0_16, %c0_17], %24 {strides = array<i32>} : memref<16x49x32xf32, #tpu.memory_space<vmem>>, vector<16x49x32xf32>,
    return
  }
  func.func @transform_0(%arg0: i32) -> (i32, i32, i32) {
    %c0_i32 = arith.constant 0 : i32
    %c0_i32_0 = arith.constant 0 : i32
    %c0_i32_1 = arith.constant 0 : i32
    return %arg0, %c0_i32, %c0_i32_0 : i32, i32, i32
  }
  func.func @transform_1(%arg0: i32) -> (i32, i32, i32) {
    %c0_i32 = arith.constant 0 : i32
    %c0_i32_0 = arith.constant 0 : i32
    %c0_i32_1 = arith.constant 0 : i32
    %c0_i32_2 = arith.constant 0 : i32
    return %c0_i32, %c0_i32_0, %c0_i32_1 : i32, i32, i32
  }
  func.func @transform_2(%arg0: i32) -> (i32, i32, i32) {
    %c0_i32 = arith.constant 0 : i32
    %c0_i32_0 = arith.constant 0 : i32
    %c0_i32_1 = arith.constant 0 : i32
    %c0_i32_2 = arith.constant 0 : i32
    return %c0_i32, %c0_i32_0, %c0_i32_1 : i32, i32, i32
  }
  func.func @transform_3(%arg0: i32) -> (i32, i32) {
    %c0_i32 = arith.constant 0 : i32
    %c0_i32_0 = arith.constant 0 : i32
    return %arg0, %c0_i32 : i32, i32
  }
  func.func @transform_4(%arg0: i32) -> (i32, i32, i32) {
    %c0_i32 = arith.constant 0 : i32
    %c0_i32_0 = arith.constant 0 : i32
    %c0_i32_1 = arith.constant 0 : i32
    return %arg0, %c0_i32, %c0_i32_0 : i32, i32, i32
  }
}

module attributes {stable_mosaic.version = 11 : i64} {
  func.func @_qkv_kernel(%arg0: i32, %arg1: memref<16x1568xf32, #tpu.memory_space<vmem>>, %arg2: memref<1568x96xf32, #tpu.memory_space<vmem>>, %arg3: memref<1x96xf32, #tpu.memory_space<vmem>>, %arg4: memref<16x96xf32, #tpu.memory_space<vmem>>) attributes {dimension_semantics = [#tpu.dimension_semantics<parallel>], iteration_bounds = array<i64: 1>, scalar_prefetch = 0 : i64, scratch_operands = 0 : i64, tpu.core_type = #tpu.core_type<tc>, window_params = [{transform_indices = @transform_0, window_bounds = array<i64: 16, 1568>}, {pipeline_mode = #tpu.pipeline_mode<synchronous>, transform_indices = @transform_1, window_bounds = array<i64: 1568, 96>}, {pipeline_mode = #tpu.pipeline_mode<synchronous>, transform_indices = @transform_2, window_bounds = array<i64: 1, 96>}, {transform_indices = @transform_3, window_bounds = array<i64: 16, 96>}]} {
    %c0 = arith.constant 0 : index
    %c0_0 = arith.constant 0 : index
    %0 = vector.load %arg1[%c0, %c0_0] : memref<16x1568xf32, #tpu.memory_space<vmem>>, vector<16x1568xf32>
    %c0_1 = arith.constant 0 : index
    %c0_2 = arith.constant 0 : index
    %1 = vector.load %arg2[%c0_1, %c0_2] : memref<1568x96xf32, #tpu.memory_space<vmem>>, vector<1568x96xf32>
    %cst = arith.constant dense<0.000000e+00> : vector<16x96xf32>
    %2 = tpu.matmul %0, %1, %cst {dimension_numbers = #tpu.dot_dimension_numbers<[1], [0], [0], [1], [0, 0, 1, 1], [], []>} : vector<16x1568xf32>, vector<1568x96xf32>, vector<16x96xf32> -> vector<16x96xf32>
    %c0_3 = arith.constant 0 : index
    %c0_4 = arith.constant 0 : index
    %3 = vector.load %arg3[%c0_3, %c0_4] : memref<1x96xf32, #tpu.memory_space<vmem>>, vector<1x96xf32>
    %4 = vector.broadcast %3 : vector<1x96xf32> to vector<16x96xf32>
    %5 = arith.addf %2, %4 : vector<16x96xf32>
    %c0_5 = arith.constant 0 : index
    %c0_6 = arith.constant 0 : index
    %6 = vector.load %arg4[%c0_5, %c0_6] : memref<16x96xf32, #tpu.memory_space<vmem>>, vector<16x96xf32>
    tpu.vector_store %arg4[%c0_5, %c0_6], %5 {strides = array<i32>} : memref<16x96xf32, #tpu.memory_space<vmem>>, vector<16x96xf32>,
    return
  }
  func.func @transform_0(%arg0: i32) -> (i32, i32) {
    %c0_i32 = arith.constant 0 : i32
    %c0_i32_0 = arith.constant 0 : i32
    return %arg0, %c0_i32 : i32, i32
  }
  func.func @transform_1(%arg0: i32) -> (i32, i32) {
    %c0_i32 = arith.constant 0 : i32
    %c0_i32_0 = arith.constant 0 : i32
    %c0_i32_1 = arith.constant 0 : i32
    return %c0_i32, %c0_i32_0 : i32, i32
  }
  func.func @transform_2(%arg0: i32) -> (i32, i32) {
    %c0_i32 = arith.constant 0 : i32
    %c0_i32_0 = arith.constant 0 : i32
    %c0_i32_1 = arith.constant 0 : i32
    return %c0_i32, %c0_i32_0 : i32, i32
  }
  func.func @transform_3(%arg0: i32) -> (i32, i32) {
    %c0_i32 = arith.constant 0 : i32
    %c0_i32_0 = arith.constant 0 : i32
    return %arg0, %c0_i32 : i32, i32
  }
}

module attributes {stable_mosaic.version = 11 : i64} {
  func.func @_heads_kernel(%arg0: i32, %arg1: memref<4x8x8xf32, #tpu.memory_space<vmem>>, %arg2: memref<4x8x8xf32, #tpu.memory_space<vmem>>, %arg3: memref<4x8x8xf32, #tpu.memory_space<vmem>>, %arg4: memref<8x8x8xf32, #tpu.memory_space<vmem>>, %arg5: memref<8x32xf32, #tpu.memory_space<vmem>>, %arg6: memref<1x8xf32, #tpu.memory_space<vmem>>, %arg7: memref<1x8xf32, #tpu.memory_space<vmem>>, %arg8: memref<1x8xf32, #tpu.memory_space<vmem>>, %arg9: memref<1x8xf32, #tpu.memory_space<vmem>>, %arg10: memref<1x8xf32, #tpu.memory_space<vmem>>, %arg11: memref<1x8xf32, #tpu.memory_space<vmem>>, %arg12: memref<32x32xf32, #tpu.memory_space<vmem>>, %arg13: memref<1x32xf32, #tpu.memory_space<vmem>>, %arg14: memref<1x32xf32, #tpu.memory_space<vmem>>, %arg15: memref<1x32xf32, #tpu.memory_space<vmem>>, %arg16: memref<32x128xf32, #tpu.memory_space<vmem>>, %arg17: memref<1x128xf32, #tpu.memory_space<vmem>>, %arg18: memref<128x32xf32, #tpu.memory_space<vmem>>, %arg19: memref<1x32xf32, #tpu.memory_space<vmem>>, %arg20: memref<1x32xf32, #tpu.memory_space<vmem>>, %arg21: memref<1x32xf32, #tpu.memory_space<vmem>>, %arg22: memref<8x32xf32, #tpu.memory_space<vmem>>, %arg23: memref<4x8x8xf32, #tpu.memory_space<vmem>>) attributes {dimension_semantics = [#tpu.dimension_semantics<parallel>], iteration_bounds = array<i64: 2>, scalar_prefetch = 0 : i64, scratch_operands = 0 : i64, tpu.core_type = #tpu.core_type<tc>, window_params = [{transform_indices = @transform_0, window_bounds = array<i64: 4, 8, 8>}, {transform_indices = @transform_1, window_bounds = array<i64: 4, 8, 8>}, {transform_indices = @transform_2, window_bounds = array<i64: 4, 8, 8>}, {pipeline_mode = #tpu.pipeline_mode<synchronous>, transform_indices = @transform_3, window_bounds = array<i64: 8, 8, 8>}, {transform_indices = @transform_4, window_bounds = array<i64: 8, 32>}, {pipeline_mode = #tpu.pipeline_mode<synchronous>, transform_indices = @transform_5, window_bounds = array<i64: 1, 8>}, {pipeline_mode = #tpu.pipeline_mode<synchronous>, transform_indices = @transform_6, window_bounds = array<i64: 1, 8>}, {pipeline_mode = #tpu.pipeline_mode<synchronous>, transform_indices = @transform_7, window_bounds = array<i64: 1, 8>}, {pipeline_mode = #tpu.pipeline_mode<synchronous>, transform_indices = @transform_8, window_bounds = array<i64: 1, 8>}, {pipeline_mode = #tpu.pipeline_mode<synchronous>, transform_indices = @transform_9, window_bounds = array<i64: 1, 8>}, {pipeline_mode = #tpu.pipeline_mode<synchronous>, transform_indices = @transform_10, window_bounds = array<i64: 1, 8>}, {pipeline_mode = #tpu.pipeline_mode<synchronous>, transform_indices = @transform_11, window_bounds = array<i64: 32, 32>}, {pipeline_mode = #tpu.pipeline_mode<synchronous>, transform_indices = @transform_12, window_bounds = array<i64: 1, 32>}, {pipeline_mode = #tpu.pipeline_mode<synchronous>, transform_indices = @transform_13, window_bounds = array<i64: 1, 32>}, {pipeline_mode = #tpu.pipeline_mode<synchronous>, transform_indices = @transform_14, window_bounds = array<i64: 1, 32>}, {pipeline_mode = #tpu.pipeline_mode<synchronous>, transform_indices = @transform_15, window_bounds = array<i64: 32, 128>}, {pipeline_mode = #tpu.pipeline_mode<synchronous>, transform_indices = @transform_16, window_bounds = array<i64: 1, 128>}, {pipeline_mode = #tpu.pipeline_mode<synchronous>, transform_indices = @transform_17, window_bounds = array<i64: 128, 32>}, {pipeline_mode = #tpu.pipeline_mode<synchronous>, transform_indices = @transform_18, window_bounds = array<i64: 1, 32>}, {pipeline_mode = #tpu.pipeline_mode<synchronous>, transform_indices = @transform_19, window_bounds = array<i64: 1, 32>}, {pipeline_mode = #tpu.pipeline_mode<synchronous>, transform_indices = @transform_20, window_bounds = array<i64: 1, 32>}, {transform_indices = @transform_21, window_bounds = array<i64: 8, 32>}, {transform_indices = @transform_22, window_bounds = array<i64: 4, 8, 8>}]} {
    %c0 = arith.constant 0 : index
    %c0_0 = arith.constant 0 : index
    %c0_1 = arith.constant 0 : index
    %0 = vector.load %arg1[%c0, %c0_0, %c0_1] : memref<4x8x8xf32, #tpu.memory_space<vmem>>, vector<4x8x8xf32>
    %c0_2 = arith.constant 0 : index
    %c0_3 = arith.constant 0 : index
    %1 = vector.load %arg6[%c0_2, %c0_3] : memref<1x8xf32, #tpu.memory_space<vmem>>, vector<1x8xf32>
    %c0_4 = arith.constant 0 : index
    %c0_5 = arith.constant 0 : index
    %2 = vector.load %arg7[%c0_4, %c0_5] : memref<1x8xf32, #tpu.memory_space<vmem>>, vector<1x8xf32>
    %cst = arith.constant dense<0.000000e+00> : vector<4x8xf32>
    %3 = vector.multi_reduction <add>, %0, %cst [2] : vector<4x8x8xf32> to vector<4x8xf32>
    %4 = vector.shape_cast %3 : vector<4x8xf32> to vector<4x8x1xf32>
    %cst_6 = arith.constant 8.000000e+00 : f32
    %5 = vector.broadcast %cst_6 : f32 to vector<4x8x1xf32>
    %6 = arith.divf %4, %5 : vector<4x8x1xf32>
    %7 = vector.broadcast %6 : vector<4x8x1xf32> to vector<4x8x8xf32>
    %8 = arith.subf %0, %7 : vector<4x8x8xf32>
    %9 = arith.mulf %8, %8 : vector<4x8x8xf32>
    %cst_7 = arith.constant dense<0.000000e+00> : vector<4x8xf32>
    %10 = vector.multi_reduction <add>, %9, %cst_7 [2] : vector<4x8x8xf32> to vector<4x8xf32>
    %11 = vector.shape_cast %10 : vector<4x8xf32> to vector<4x8x1xf32>
    %cst_8 = arith.constant 8.000000e+00 : f32
    %12 = vector.broadcast %cst_8 : f32 to vector<4x8x1xf32>
    %13 = arith.divf %11, %12 : vector<4x8x1xf32>
    %cst_9 = arith.constant 9.99999997E-7 : f32
    %14 = vector.broadcast %cst_9 : f32 to vector<4x8x1xf32>
    %15 = arith.addf %13, %14 : vector<4x8x1xf32>
    %16 = math.rsqrt %15 : vector<4x8x1xf32>
    %17 = vector.broadcast %16 : vector<4x8x1xf32> to vector<4x8x8xf32>
    %18 = arith.mulf %8, %17 : vector<4x8x8xf32>
    %19 = vector.shape_cast %1 : vector<1x8xf32> to vector<1x1x8xf32>
    %20 = vector.broadcast %19 : vector<1x1x8xf32> to vector<4x8x8xf32>
    %21 = arith.mulf %18, %20 : vector<4x8x8xf32>
    %22 = vector.shape_cast %2 : vector<1x8xf32> to vector<1x1x8xf32>
    %23 = vector.broadcast %22 : vector<1x1x8xf32> to vector<4x8x8xf32>
    %24 = arith.addf %21, %23 : vector<4x8x8xf32>
    %c0_10 = arith.constant 0 : index
    %c0_11 = arith.constant 0 : index
    %c0_12 = arith.constant 0 : index
    %25 = vector.load %arg2[%c0_10, %c0_11, %c0_12] : memref<4x8x8xf32, #tpu.memory_space<vmem>>, vector<4x8x8xf32>
    %c0_13 = arith.constant 0 : index
    %c0_14 = arith.constant 0 : index
    %26 = vector.load %arg8[%c0_13, %c0_14] : memref<1x8xf32, #tpu.memory_space<vmem>>, vector<1x8xf32>
    %c0_15 = arith.constant 0 : index
    %c0_16 = arith.constant 0 : index
    %27 = vector.load %arg9[%c0_15, %c0_16] : memref<1x8xf32, #tpu.memory_space<vmem>>, vector<1x8xf32>
    %cst_17 = arith.constant dense<0.000000e+00> : vector<4x8xf32>
    %28 = vector.multi_reduction <add>, %25, %cst_17 [2] : vector<4x8x8xf32> to vector<4x8xf32>
    %29 = vector.shape_cast %28 : vector<4x8xf32> to vector<4x8x1xf32>
    %cst_18 = arith.constant 8.000000e+00 : f32
    %30 = vector.broadcast %cst_18 : f32 to vector<4x8x1xf32>
    %31 = arith.divf %29, %30 : vector<4x8x1xf32>
    %32 = vector.broadcast %31 : vector<4x8x1xf32> to vector<4x8x8xf32>
    %33 = arith.subf %25, %32 : vector<4x8x8xf32>
    %34 = arith.mulf %33, %33 : vector<4x8x8xf32>
    %cst_19 = arith.constant dense<0.000000e+00> : vector<4x8xf32>
    %35 = vector.multi_reduction <add>, %34, %cst_19 [2] : vector<4x8x8xf32> to vector<4x8xf32>
    %36 = vector.shape_cast %35 : vector<4x8xf32> to vector<4x8x1xf32>
    %cst_20 = arith.constant 8.000000e+00 : f32
    %37 = vector.broadcast %cst_20 : f32 to vector<4x8x1xf32>
    %38 = arith.divf %36, %37 : vector<4x8x1xf32>
    %cst_21 = arith.constant 9.99999997E-7 : f32
    %39 = vector.broadcast %cst_21 : f32 to vector<4x8x1xf32>
    %40 = arith.addf %38, %39 : vector<4x8x1xf32>
    %41 = math.rsqrt %40 : vector<4x8x1xf32>
    %42 = vector.broadcast %41 : vector<4x8x1xf32> to vector<4x8x8xf32>
    %43 = arith.mulf %33, %42 : vector<4x8x8xf32>
    %44 = vector.shape_cast %26 : vector<1x8xf32> to vector<1x1x8xf32>
    %45 = vector.broadcast %44 : vector<1x1x8xf32> to vector<4x8x8xf32>
    %46 = arith.mulf %43, %45 : vector<4x8x8xf32>
    %47 = vector.shape_cast %27 : vector<1x8xf32> to vector<1x1x8xf32>
    %48 = vector.broadcast %47 : vector<1x1x8xf32> to vector<4x8x8xf32>
    %49 = arith.addf %46, %48 : vector<4x8x8xf32>
    %c0_22 = arith.constant 0 : index
    %c0_23 = arith.constant 0 : index
    %c0_24 = arith.constant 0 : index
    %50 = vector.load %arg3[%c0_22, %c0_23, %c0_24] : memref<4x8x8xf32, #tpu.memory_space<vmem>>, vector<4x8x8xf32>
    %c0_25 = arith.constant 0 : index
    %c0_26 = arith.constant 0 : index
    %51 = vector.load %arg10[%c0_25, %c0_26] : memref<1x8xf32, #tpu.memory_space<vmem>>, vector<1x8xf32>
    %c0_27 = arith.constant 0 : index
    %c0_28 = arith.constant 0 : index
    %52 = vector.load %arg11[%c0_27, %c0_28] : memref<1x8xf32, #tpu.memory_space<vmem>>, vector<1x8xf32>
    %cst_29 = arith.constant dense<0.000000e+00> : vector<4x8xf32>
    %53 = vector.multi_reduction <add>, %50, %cst_29 [2] : vector<4x8x8xf32> to vector<4x8xf32>
    %54 = vector.shape_cast %53 : vector<4x8xf32> to vector<4x8x1xf32>
    %cst_30 = arith.constant 8.000000e+00 : f32
    %55 = vector.broadcast %cst_30 : f32 to vector<4x8x1xf32>
    %56 = arith.divf %54, %55 : vector<4x8x1xf32>
    %57 = vector.broadcast %56 : vector<4x8x1xf32> to vector<4x8x8xf32>
    %58 = arith.subf %50, %57 : vector<4x8x8xf32>
    %59 = arith.mulf %58, %58 : vector<4x8x8xf32>
    %cst_31 = arith.constant dense<0.000000e+00> : vector<4x8xf32>
    %60 = vector.multi_reduction <add>, %59, %cst_31 [2] : vector<4x8x8xf32> to vector<4x8xf32>
    %61 = vector.shape_cast %60 : vector<4x8xf32> to vector<4x8x1xf32>
    %cst_32 = arith.constant 8.000000e+00 : f32
    %62 = vector.broadcast %cst_32 : f32 to vector<4x8x1xf32>
    %63 = arith.divf %61, %62 : vector<4x8x1xf32>
    %cst_33 = arith.constant 9.99999997E-7 : f32
    %64 = vector.broadcast %cst_33 : f32 to vector<4x8x1xf32>
    %65 = arith.addf %63, %64 : vector<4x8x1xf32>
    %66 = math.rsqrt %65 : vector<4x8x1xf32>
    %67 = vector.broadcast %66 : vector<4x8x1xf32> to vector<4x8x8xf32>
    %68 = arith.mulf %58, %67 : vector<4x8x8xf32>
    %69 = vector.shape_cast %51 : vector<1x8xf32> to vector<1x1x8xf32>
    %70 = vector.broadcast %69 : vector<1x1x8xf32> to vector<4x8x8xf32>
    %71 = arith.mulf %68, %70 : vector<4x8x8xf32>
    %72 = vector.shape_cast %52 : vector<1x8xf32> to vector<1x1x8xf32>
    %73 = vector.broadcast %72 : vector<1x1x8xf32> to vector<4x8x8xf32>
    %74 = arith.addf %71, %73 : vector<4x8x8xf32>
    %c0_34 = arith.constant 0 : index
    %c0_35 = arith.constant 0 : index
    %c0_36 = arith.constant 0 : index
    %75 = vector.load %arg4[%c0_34, %c0_35, %c0_36] : memref<8x8x8xf32, #tpu.memory_space<vmem>>, vector<8x8x8xf32>
    %cst_37 = arith.constant 0.353553385 : f32
    %76 = vector.broadcast %cst_37 : f32 to vector<4x8x8xf32>
    %77 = arith.mulf %24, %76 : vector<4x8x8xf32>
    "tpu.trace_start"() <{level = 10 : i32, message = "nqd,nkd->nqk"}> : () -> ()
    %cst_38 = arith.constant dense<0.000000e+00> : vector<4x8x8xf32>
    %78 = tpu.matmul %77, %49, %cst_38 {dimension_numbers = #tpu.dot_dimension_numbers<[2], [2], [1], [1], [0, 0, 0, 1, 1, 1], [0], [0]>} : vector<4x8x8xf32>, vector<4x8x8xf32>, vector<4x8x8xf32> -> vector<4x8x8xf32>
    "tpu.trace_stop"() : () -> ()
    %79 = vector.shape_cast %24 : vector<4x8x8xf32> to vector<4x8x1x8xf32>
    %80 = vector.shape_cast %75 : vector<8x8x8xf32> to vector<1x8x8x8xf32>
    %81 = vector.broadcast %79 : vector<4x8x1x8xf32> to vector<4x8x8x8xf32>
    %82 = vector.broadcast %80 : vector<1x8x8x8xf32> to vector<4x8x8x8xf32>
    %83 = arith.mulf %81, %82 : vector<4x8x8x8xf32>
    %cst_39 = arith.constant dense<0.000000e+00> : vector<4x8x8xf32>
    %84 = vector.multi_reduction <add>, %83, %cst_39 [3] : vector<4x8x8x8xf32> to vector<4x8x8xf32>
    %85 = arith.addf %78, %84 : vector<4x8x8xf32>
    %cst_40 = arith.constant dense<0xFF800000> : vector<4x8xf32>
    %86 = vector.multi_reduction <maximumf>, %85, %cst_40 [2] : vector<4x8x8xf32> to vector<4x8xf32>
    %87 = vector.shape_cast %86 : vector<4x8xf32> to vector<4x8x1xf32>
    %88 = vector.broadcast %87 : vector<4x8x1xf32> to vector<4x8x8xf32>
    %89 = arith.subf %85, %88 : vector<4x8x8xf32>
    %90 = math.exp %89 : vector<4x8x8xf32>
    %cst_41 = arith.constant dense<0.000000e+00> : vector<4x8xf32>
    %91 = vector.multi_reduction <add>, %90, %cst_41 [2] : vector<4x8x8xf32> to vector<4x8xf32>
    %92 = vector.shape_cast %91 : vector<4x8xf32> to vector<4x8x1xf32>
    %93 = tpu.reciprocal %92 {approx = true} : vector<4x8x1xf32> -> vector<4x8x1xf32>
    %94 = vector.broadcast %93 : vector<4x8x1xf32> to vector<4x8x8xf32>
    %95 = arith.mulf %90, %94 : vector<4x8x8xf32>
    %c0_42 = arith.constant 0 : index
    %c0_43 = arith.constant 0 : index
    %c0_44 = arith.constant 0 : index
    %96 = vector.load %arg23[%c0_42, %c0_43, %c0_44] : memref<4x8x8xf32, #tpu.memory_space<vmem>>, vector<4x8x8xf32>
    tpu.vector_store %arg23[%c0_42, %c0_43, %c0_44], %95 {strides = array<i32>} : memref<4x8x8xf32, #tpu.memory_space<vmem>>, vector<4x8x8xf32>,
    "tpu.trace_start"() <{level = 10 : i32, message = "nqk,nkd->nqd"}> : () -> ()
    %cst_45 = arith.constant dense<0.000000e+00> : vector<4x8x8xf32>
    %97 = tpu.matmul %95, %74, %cst_45 {dimension_numbers = #tpu.dot_dimension_numbers<[2], [1], [1], [2], [0, 0, 0, 1, 1, 2], [0], [0]>} : vector<4x8x8xf32>, vector<4x8x8xf32>, vector<4x8x8xf32> -> vector<4x8x8xf32>
    "tpu.trace_stop"() : () -> ()
    %98 = arith.addf %97, %24 : vector<4x8x8xf32>
    %c0_46 = arith.constant 0 : index
    %c0_47 = arith.constant 0 : index
    %99 = vector.load %arg12[%c0_46, %c0_47] : memref<32x32xf32, #tpu.memory_space<vmem>>, vector<32x32xf32>
    %c0_48 = arith.constant 0 : index
    %c0_49 = arith.constant 0 : index
    %100 = vector.load %arg13[%c0_48, %c0_49] : memref<1x32xf32, #tpu.memory_space<vmem>>, vector<1x32xf32>
    %c0_50 = arith.constant 0 : index
    %c0_51 = arith.constant 0 : index
    %101 = vector.load %arg5[%c0_50, %c0_51] : memref<8x32xf32, #tpu.memory_space<vmem>>, vector<8x32xf32>
    %102 = vector.broadcast %100 : vector<1x32xf32> to vector<8x32xf32>
    %103 = arith.addf %102, %101 : vector<8x32xf32>
    %104 = vector.extract_strided_slice %98 {offsets = [0, 0, 0], sizes = [1, 8, 8], strides = [1, 1, 1]} : vector<4x8x8xf32> to vector<1x8x8xf32>
    %105 = vector.shape_cast %104 : vector<1x8x8xf32> to vector<8x8xf32>
    %106 = vector.extract_strided_slice %99 {offsets = [0, 0], sizes = [8, 32], strides = [1, 1]} : vector<32x32xf32> to vector<8x32xf32>
    %cst_52 = arith.constant dense<0.000000e+00> : vector<8x32xf32>
    %107 = tpu.matmul %105, %106, %cst_52 {dimension_numbers = #tpu.dot_dimension_numbers<[1], [0], [0], [1], [0, 0, 1, 1], [], []>} : vector<8x8xf32>, vector<8x32xf32>, vector<8x32xf32> -> vector<8x32xf32>
    %108 = arith.addf %103, %107 : vector<8x32xf32>
    %109 = vector.extract_strided_slice %98 {offsets = [1, 0, 0], sizes = [1, 8, 8], strides = [1, 1, 1]} : vector<4x8x8xf32> to vector<1x8x8xf32>
    %110 = vector.shape_cast %109 : vector<1x8x8xf32> to vector<8x8xf32>
    %111 = vector.extract_strided_slice %99 {offsets = [8, 0], sizes = [8, 32], strides = [1, 1]} : vector<32x32xf32> to vector<8x32xf32>
    %cst_53 = arith.constant dense<0.000000e+00> : vector<8x32xf32>
    %112 = tpu.matmul %110, %111, %cst_53 {dimension_numbers = #tpu.dot_dimension_numbers<[1], [0], [0], [1], [0, 0, 1, 1], [], []>} : vector<8x8xf32>, vector<8x32xf32>, vector<8x32xf32> -> vector<8x32xf32>
    %113 = arith.addf %108, %112 : vector<8x32xf32>
    %114 = vector.extract_strided_slice %98 {offsets = [2, 0, 0], sizes = [1, 8, 8], strides = [1, 1, 1]} : vector<4x8x8xf32> to vector<1x8x8xf32>
    %115 = vector.shape_cast %114 : vector<1x8x8xf32> to vector<8x8xf32>
    %116 = vector.extract_strided_slice %99 {offsets = [16, 0], sizes = [8, 32], strides = [1, 1]} : vector<32x32xf32> to vector<8x32xf32>
    %cst_54 = arith.constant dense<0.000000e+00> : vector<8x32xf32>
    %117 = tpu.matmul %115, %116, %cst_54 {dimension_numbers = #tpu.dot_dimension_numbers<[1], [0], [0], [1], [0, 0, 1, 1], [], []>} : vector<8x8xf32>, vector<8x32xf32>, vector<8x32xf32> -> vector<8x32xf32>
    %118 = arith.addf %113, %117 : vector<8x32xf32>
    %119 = vector.extract_strided_slice %98 {offsets = [3, 0, 0], sizes = [1, 8, 8], strides = [1, 1, 1]} : vector<4x8x8xf32> to vector<1x8x8xf32>
    %120 = vector.shape_cast %119 : vector<1x8x8xf32> to vector<8x8xf32>
    %121 = vector.extract_strided_slice %99 {offsets = [24, 0], sizes = [8, 32], strides = [1, 1]} : vector<32x32xf32> to vector<8x32xf32>
    %cst_55 = arith.constant dense<0.000000e+00> : vector<8x32xf32>
    %122 = tpu.matmul %120, %121, %cst_55 {dimension_numbers = #tpu.dot_dimension_numbers<[1], [0], [0], [1], [0, 0, 1, 1], [], []>} : vector<8x8xf32>, vector<8x32xf32>, vector<8x32xf32> -> vector<8x32xf32>
    %123 = arith.addf %118, %122 : vector<8x32xf32>
    %c0_56 = arith.constant 0 : index
    %c0_57 = arith.constant 0 : index
    %124 = vector.load %arg14[%c0_56, %c0_57] : memref<1x32xf32, #tpu.memory_space<vmem>>, vector<1x32xf32>
    %c0_58 = arith.constant 0 : index
    %c0_59 = arith.constant 0 : index
    %125 = vector.load %arg15[%c0_58, %c0_59] : memref<1x32xf32, #tpu.memory_space<vmem>>, vector<1x32xf32>
    %cst_60 = arith.constant dense<0.000000e+00> : vector<8xf32>
    %126 = vector.multi_reduction <add>, %123, %cst_60 [1] : vector<8x32xf32> to vector<8xf32>
    %127 = vector.shape_cast %126 : vector<8xf32> to vector<8x1xf32>
    %cst_61 = arith.constant 3.200000e+01 : f32
    %128 = vector.broadcast %cst_61 : f32 to vector<8x1xf32>
    %129 = arith.divf %127, %128 : vector<8x1xf32>
    %130 = vector.broadcast %129 : vector<8x1xf32> to vector<8x32xf32>
    %131 = arith.subf %123, %130 : vector<8x32xf32>
    %132 = arith.mulf %131, %131 : vector<8x32xf32>
    %cst_62 = arith.constant dense<0.000000e+00> : vector<8xf32>
    %133 = vector.multi_reduction <add>, %132, %cst_62 [1] : vector<8x32xf32> to vector<8xf32>
    %134 = vector.shape_cast %133 : vector<8xf32> to vector<8x1xf32>
    %cst_63 = arith.constant 3.200000e+01 : f32
    %135 = vector.broadcast %cst_63 : f32 to vector<8x1xf32>
    %136 = arith.divf %134, %135 : vector<8x1xf32>
    %cst_64 = arith.constant 9.99999997E-7 : f32
    %137 = vector.broadcast %cst_64 : f32 to vector<8x1xf32>
    %138 = arith.addf %136, %137 : vector<8x1xf32>
    %139 = math.rsqrt %138 : vector<8x1xf32>
    %140 = vector.broadcast %139 : vector<8x1xf32> to vector<8x32xf32>
    %141 = arith.mulf %131, %140 : vector<8x32xf32>
    %142 = vector.broadcast %124 : vector<1x32xf32> to vector<8x32xf32>
    %143 = arith.mulf %141, %142 : vector<8x32xf32>
    %144 = vector.broadcast %125 : vector<1x32xf32> to vector<8x32xf32>
    %145 = arith.addf %143, %144 : vector<8x32xf32>
    %c0_65 = arith.constant 0 : index
    %c0_66 = arith.constant 0 : index
    %146 = vector.load %arg16[%c0_65, %c0_66] : memref<32x128xf32, #tpu.memory_space<vmem>>, vector<32x128xf32>
    %cst_67 = arith.constant dense<0.000000e+00> : vector<8x128xf32>
    %147 = tpu.matmul %145, %146, %cst_67 {dimension_numbers = #tpu.dot_dimension_numbers<[1], [0], [0], [1], [0, 0, 1, 1], [], []>} : vector<8x32xf32>, vector<32x128xf32>, vector<8x128xf32> -> vector<8x128xf32>
    %c0_68 = arith.constant 0 : index
    %c0_69 = arith.constant 0 : index
    %148 = vector.load %arg17[%c0_68, %c0_69] : memref<1x128xf32, #tpu.memory_space<vmem>>, vector<1x128xf32>
    %149 = vector.broadcast %148 : vector<1x128xf32> to vector<8x128xf32>
    %150 = arith.addf %147, %149 : vector<8x128xf32>
    %cst_70 = arith.constant 5.000000e-01 : f32
    %151 = vector.broadcast %cst_70 : f32 to vector<8x128xf32>
    %152 = arith.mulf %151, %150 : vector<8x128xf32>
    %cst_71 = arith.constant 0.707106769 : f32
    %153 = vector.broadcast %cst_71 : f32 to vector<8x128xf32>
    %154 = arith.mulf %150, %153 : vector<8x128xf32>
    %155 = math.erf %154 : vector<8x128xf32>
    %cst_72 = arith.constant 1.000000e+00 : f32
    %156 = vector.broadcast %cst_72 : f32 to vector<8x128xf32>
    %157 = arith.addf %156, %155 : vector<8x128xf32>
    %158 = arith.mulf %152, %157 : vector<8x128xf32>
    %c0_73 = arith.constant 0 : index
    %c0_74 = arith.constant 0 : index
    %159 = vector.load %arg18[%c0_73, %c0_74] : memref<128x32xf32, #tpu.memory_space<vmem>>, vector<128x32xf32>
    %cst_75 = arith.constant dense<0.000000e+00> : vector<8x32xf32>
    %160 = tpu.matmul %158, %159, %cst_75 {dimension_numbers = #tpu.dot_dimension_numbers<[1], [0], [0], [1], [0, 0, 1, 1], [], []>} : vector<8x128xf32>, vector<128x32xf32>, vector<8x32xf32> -> vector<8x32xf32>
    %c0_76 = arith.constant 0 : index
    %c0_77 = arith.constant 0 : index
    %161 = vector.load %arg19[%c0_76, %c0_77] : memref<1x32xf32, #tpu.memory_space<vmem>>, vector<1x32xf32>
    %162 = vector.broadcast %161 : vector<1x32xf32> to vector<8x32xf32>
    %163 = arith.addf %160, %162 : vector<8x32xf32>
    %164 = arith.addf %163, %123 : vector<8x32xf32>
    %c0_78 = arith.constant 0 : index
    %c0_79 = arith.constant 0 : index
    %165 = vector.load %arg20[%c0_78, %c0_79] : memref<1x32xf32, #tpu.memory_space<vmem>>, vector<1x32xf32>
    %c0_80 = arith.constant 0 : index
    %c0_81 = arith.constant 0 : index
    %166 = vector.load %arg21[%c0_80, %c0_81] : memref<1x32xf32, #tpu.memory_space<vmem>>, vector<1x32xf32>
    %cst_82 = arith.constant dense<0.000000e+00> : vector<8xf32>
    %167 = vector.multi_reduction <add>, %164, %cst_82 [1] : vector<8x32xf32> to vector<8xf32>
    %168 = vector.shape_cast %167 : vector<8xf32> to vector<8x1xf32>
    %cst_83 = arith.constant 3.200000e+01 : f32
    %169 = vector.broadcast %cst_83 : f32 to vector<8x1xf32>
    %170 = arith.divf %168, %169 : vector<8x1xf32>
    %171 = vector.broadcast %170 : vector<8x1xf32> to vector<8x32xf32>
    %172 = arith.subf %164, %171 : vector<8x32xf32>
    %173 = arith.mulf %172, %172 : vector<8x32xf32>
    %cst_84 = arith.constant dense<0.000000e+00> : vector<8xf32>
    %174 = vector.multi_reduction <add>, %173, %cst_84 [1] : vector<8x32xf32> to vector<8xf32>
    %175 = vector.shape_cast %174 : vector<8xf32> to vector<8x1xf32>
    %cst_85 = arith.constant 3.200000e+01 : f32
    %176 = vector.broadcast %cst_85 : f32 to vector<8x1xf32>
    %177 = arith.divf %175, %176 : vector<8x1xf32>
    %cst_86 = arith.constant 9.99999997E-7 : f32
    %178 = vector.broadcast %cst_86 : f32 to vector<8x1xf32>
    %179 = arith.addf %177, %178 : vector<8x1xf32>
    %180 = math.rsqrt %179 : vector<8x1xf32>
    %181 = vector.broadcast %180 : vector<8x1xf32> to vector<8x32xf32>
    %182 = arith.mulf %172, %181 : vector<8x32xf32>
    %183 = vector.broadcast %165 : vector<1x32xf32> to vector<8x32xf32>
    %184 = arith.mulf %182, %183 : vector<8x32xf32>
    %185 = vector.broadcast %166 : vector<1x32xf32> to vector<8x32xf32>
    %186 = arith.addf %184, %185 : vector<8x32xf32>
    %c0_87 = arith.constant 0 : index
    %c0_88 = arith.constant 0 : index
    %187 = vector.load %arg22[%c0_87, %c0_88] : memref<8x32xf32, #tpu.memory_space<vmem>>, vector<8x32xf32>
    tpu.vector_store %arg22[%c0_87, %c0_88], %186 {strides = array<i32>} : memref<8x32xf32, #tpu.memory_space<vmem>>, vector<8x32xf32>,
    return
  }
  func.func @transform_0(%arg0: i32) -> (i32, i32, i32) {
    %c0_i32 = arith.constant 0 : i32
    %c0_i32_0 = arith.constant 0 : i32
    %c0_i32_1 = arith.constant 0 : i32
    return %arg0, %c0_i32, %c0_i32_0 : i32, i32, i32
  }
  func.func @transform_1(%arg0: i32) -> (i32, i32, i32) {
    %c0_i32 = arith.constant 0 : i32
    %c0_i32_0 = arith.constant 0 : i32
    %c0_i32_1 = arith.constant 0 : i32
    return %arg0, %c0_i32, %c0_i32_0 : i32, i32, i32
  }
  func.func @transform_2(%arg0: i32) -> (i32, i32, i32) {
    %c0_i32 = arith.constant 0 : i32
    %c0_i32_0 = arith.constant 0 : i32
    %c0_i32_1 = arith.constant 0 : i32
    return %arg0, %c0_i32, %c0_i32_0 : i32, i32, i32
  }
  func.func @transform_3(%arg0: i32) -> (i32, i32, i32) {
    %c0_i32 = arith.constant 0 : i32
    %c0_i32_0 = arith.constant 0 : i32
    %c0_i32_1 = arith.constant 0 : i32
    %c0_i32_2 = arith.constant 0 : i32
    return %c0_i32, %c0_i32_0, %c0_i32_1 : i32, i32, i32
  }
  func.func @transform_4(%arg0: i32) -> (i32, i32) {
    %c0_i32 = arith.constant 0 : i32
    %c0_i32_0 = arith.constant 0 : i32
    return %arg0, %c0_i32 : i32, i32
  }
  func.func @transform_5(%arg0: i32) -> (i32, i32) {
    %c0_i32 = arith.constant 0 : i32
    %c0_i32_0 = arith.constant 0 : i32
    %c0_i32_1 = arith.constant 0 : i32
    return %c0_i32, %c0_i32_0 : i32, i32
  }
  func.func @transform_6(%arg0: i32) -> (i32, i32) {
    %c0_i32 = arith.constant 0 : i32
    %c0_i32_0 = arith.constant 0 : i32
    %c0_i32_1 = arith.constant 0 : i32
    return %c0_i32, %c0_i32_0 : i32, i32
  }
  func.func @transform_7(%arg0: i32) -> (i32, i32) {
    %c0_i32 = arith.constant 0 : i32
    %c0_i32_0 = arith.constant 0 : i32
    %c0_i32_1 = arith.constant 0 : i32
    return %c0_i32, %c0_i32_0 : i32, i32
  }
  func.func @transform_8(%arg0: i32) -> (i32, i32) {
    %c0_i32 = arith.constant 0 : i32
    %c0_i32_0 = arith.constant 0 : i32
    %c0_i32_1 = arith.constant 0 : i32
    return %c0_i32, %c0_i32_0 : i32, i32
  }
  func.func @transform_9(%arg0: i32) -> (i32, i32) {
    %c0_i32 = arith.constant 0 : i32
    %c0_i32_0 = arith.constant 0 : i32
    %c0_i32_1 = arith.constant 0 : i32
    return %c0_i32, %c0_i32_0 : i32, i32
  }
  func.func @transform_10(%arg0: i32) -> (i32, i32) {
    %c0_i32 = arith.constant 0 : i32
    %c0_i32_0 = arith.constant 0 : i32
    %c0_i32_1 = arith.constant 0 : i32
    return %c0_i32, %c0_i32_0 : i32, i32
  }
  func.func @transform_11(%arg0: i32) -> (i32, i32) {
    %c0_i32 = arith.constant 0 : i32
    %c0_i32_0 = arith.constant 0 : i32
    %c0_i32_1 = arith.constant 0 : i32
    return %c0_i32, %c0_i32_0 : i32, i32
  }
  func.func @transform_12(%arg0: i32) -> (i32, i32) {
    %c0_i32 = arith.constant 0 : i32
    %c0_i32_0 = arith.constant 0 : i32
    %c0_i32_1 = arith.constant 0 : i32
    return %c0_i32, %c0_i32_0 : i32, i32
  }
  func.func @transform_13(%arg0: i32) -> (i32, i32) {
    %c0_i32 = arith.constant 0 : i32
    %c0_i32_0 = arith.constant 0 : i32
    %c0_i32_1 = arith.constant 0 : i32
    return %c0_i32, %c0_i32_0 : i32, i32
  }
  func.func @transform_14(%arg0: i32) -> (i32, i32) {
    %c0_i32 = arith.constant 0 : i32
    %c0_i32_0 = arith.constant 0 : i32
    %c0_i32_1 = arith.constant 0 : i32
    return %c0_i32, %c0_i32_0 : i32, i32
  }
  func.func @transform_15(%arg0: i32) -> (i32, i32) {
    %c0_i32 = arith.constant 0 : i32
    %c0_i32_0 = arith.constant 0 : i32
    %c0_i32_1 = arith.constant 0 : i32
    return %c0_i32, %c0_i32_0 : i32, i32
  }
  func.func @transform_16(%arg0: i32) -> (i32, i32) {
    %c0_i32 = arith.constant 0 : i32
    %c0_i32_0 = arith.constant 0 : i32
    %c0_i32_1 = arith.constant 0 : i32
    return %c0_i32, %c0_i32_0 : i32, i32
  }
  func.func @transform_17(%arg0: i32) -> (i32, i32) {
    %c0_i32 = arith.constant 0 : i32
    %c0_i32_0 = arith.constant 0 : i32
    %c0_i32_1 = arith.constant 0 : i32
    return %c0_i32, %c0_i32_0 : i32, i32
  }
  func.func @transform_18(%arg0: i32) -> (i32, i32) {
    %c0_i32 = arith.constant 0 : i32
    %c0_i32_0 = arith.constant 0 : i32
    %c0_i32_1 = arith.constant 0 : i32
    return %c0_i32, %c0_i32_0 : i32, i32
  }
  func.func @transform_19(%arg0: i32) -> (i32, i32) {
    %c0_i32 = arith.constant 0 : i32
    %c0_i32_0 = arith.constant 0 : i32
    %c0_i32_1 = arith.constant 0 : i32
    return %c0_i32, %c0_i32_0 : i32, i32
  }
  func.func @transform_20(%arg0: i32) -> (i32, i32) {
    %c0_i32 = arith.constant 0 : i32
    %c0_i32_0 = arith.constant 0 : i32
    %c0_i32_1 = arith.constant 0 : i32
    return %c0_i32, %c0_i32_0 : i32, i32
  }
  func.func @transform_21(%arg0: i32) -> (i32, i32) {
    %c0_i32 = arith.constant 0 : i32
    %c0_i32_0 = arith.constant 0 : i32
    return %arg0, %c0_i32 : i32, i32
  }
  func.func @transform_22(%arg0: i32) -> (i32, i32, i32) {
    %c0_i32 = arith.constant 0 : i32
    %c0_i32_0 = arith.constant 0 : i32
    %c0_i32_1 = arith.constant 0 : i32
    return %arg0, %c0_i32, %c0_i32_0 : i32, i32, i32
  }
}

</mosaic_0001>

<llo_original>
// kernel: adaptive_pooler_forward.4
$region0: #{adaptive_pooler_forward.4}
  #allocation0 [shape = 'u32[]', space=smem, size = 0x4, offset = 0x4, fixed_abs, tag = 'smem constant byte address 0x4 - core index']
  #allocation1 [shape = 'u32[144,128]{1,0:T(1,128)}', space=vmem, size = 0x12000, scoped, tag = 'internal scratch']
  %s0 = inlined_call_operand.vmem [shape: f32[16,1568], index: 0, kind: input, shape index: {}]
  %s1 = inlined_call_operand.vmem [shape: f32[1568,96], index: 1, kind: input, shape index: {}]
  %s2 = inlined_call_operand.vmem [shape: f32[1,96], index: 2, kind: input, shape index: {}]
  %s3 = inlined_call_operand.vmem [shape: f32[16,96], index: 3, kind: output, shape index: {}]
  %s4 = sld [smem:[#allocation0]]
  $region22: #{adaptive_pooler_forward.4} parent=0
    _
  %s6 = ssub.s32 1, %s4
  %s7 = scalar_select 0, %s6, %s4
  // Predicated region
  $region2: #{adaptive_pooler_forward.4} parent=0 // pred_check
    _
  $region3: #{adaptive_pooler_forward.4} parent=0 // pred_check_branch
    %9 = sbr.rel (0) target = $region5
  $region4: #{adaptive_pooler_forward.4} parent=0 // pred_region
    _
  $region5: #{adaptive_pooler_forward.4} parent=0 // pred_fallthru
    _
  // Predicated region
  $region6: #{adaptive_pooler_forward.4} parent=0 // pred_check
    _
  $region7: #{adaptive_pooler_forward.4} parent=0 // pred_check_branch
    %11 = sbr.rel (0) target = $region9
  $region8: #{adaptive_pooler_forward.4} parent=0 // pred_region
    _
  $region9: #{adaptive_pooler_forward.4} parent=0 // pred_fallthru
    _
  // Predicated region
  $region10: #{adaptive_pooler_forward.4} parent=0 // pred_check
    _
  $region11: #{adaptive_pooler_forward.4} parent=0 // pred_check_branch
    %13 = sbr.rel (0) target = $region13
  $region12: #{adaptive_pooler_forward.4} parent=0 // pred_region
    _
  $region13: #{adaptive_pooler_forward.4} parent=0 // pred_fallthru
    _
  %v14 = vld [vmem:[%s0] sm:$0xff]
  %v15 = vld [vmem:[%s0 + $0x8] sm:$0xff]
  %v16 = vld [vmem:[%s0 + $0x10] sm:$0xff]
  %v17 = vld [vmem:[%s0 + $0x18] sm:$0xff]
  %v18 = vld [vmem:[%s0 + $0x20] sm:$0xff]
  %v19 = vld [vmem:[%s0 + $0x28] sm:$0xff]
  %v20 = vld [vmem:[%s0 + $0x30] sm:$0xff]
  %v21 = vld [vmem:[%s0 + $0x38] sm:$0xff]
  %v22 = vld [vmem:[%s0 + $0x40] sm:$0xff]
  %v23 = vld [vmem:[%s0 + $0x48] sm:$0xff]
  %v24 = vld [vmem:[%s0 + $0x50] sm:$0xff]
  %v25 = vld [vmem:[%s0 + $0x58] sm:$0xff]
  %v26 = vld [vmem:[%s0 + $0x60] sm:$0xff]
  %v27 = vld [vmem:[%s0 + $0x68] sm:$0xff]
  %v28 = vld [vmem:[%s0 + $0x70] sm:$0xff]
  %v29 = vld [vmem:[%s0 + $0x78] sm:$0xff]
  %v30 = vld [vmem:[%s0 + $0x80] sm:$0xff]
  %v31 = vld [vmem:[%s0 + $0x88] sm:$0xff]
  %v32 = vld [vmem:[%s0 + $0x90] sm:$0xff]
  %v33 = vld [vmem:[%s0 + $0x98] sm:$0xff]
  %v34 = vld [vmem:[%s0 + $0xa0] sm:$0xff]
  %v35 = vld [vmem:[%s0 + $0xa8] sm:$0xff]
  %v36 = vld [vmem:[%s0 + $0xb0] sm:$0xff]
  %v37 = vld [vmem:[%s0 + $0xb8] sm:$0xff]
  %v38 = vld [vmem:[%s0 + $0xc0] sm:$0xff]
  %v39 = vld [vmem:[%s0 + $0xc8] sm:$0xff]
  %v40 = vld [vmem:[%s1] sm:$0xff]
  %v41 = vld [vmem:[%s1 + $0x8] sm:$0xff]
  %v42 = vld [vmem:[%s1 + $0x10] sm:$0xff]
  %v43 = vld [vmem:[%s1 + $0x18] sm:$0xff]
  %v44 = vld [vmem:[%s1 + $0x20] sm:$0xff]
  %v45 = vld [vmem:[%s1 + $0x28] sm:$0xff]
  %v46 = vld [vmem:[%s1 + $0x30] sm:$0xff]
  %v47 = vld [vmem:[%s1 + $0x38] sm:$0xff]
  %v48 = vld [vmem:[%s1 + $0x40] sm:$0xff]
  %v49 = vld [vmem:[%s1 + $0x48] sm:$0xff]
  %v50 = vld [vmem:[%s1 + $0x50] sm:$0xff]
  %v51 = vld [vmem:[%s1 + $0x58] sm:$0xff]
  %v52 = vld [vmem:[%s1 + $0x60] sm:$0xff]
  %v53 = vld [vmem:[%s1 + $0x68] sm:$0xff]
  %v54 = vld [vmem:[%s1 + $0x70] sm:$0xff]
  %v55 = vld [vmem:[%s1 + $0x78] sm:$0xff]
  %v56 = vld [vmem:[%s1 + $0x80] sm:$0xff]
  %v57 = vld [vmem:[%s1 + $0x88] sm:$0xff]
  %v58 = vld [vmem:[%s1 + $0x90] sm:$0xff]
  %v59 = vld [vmem:[%s1 + $0x98] sm:$0xff]
  %v60 = vld [vmem:[%s1 + $0xa0] sm:$0xff]
  %v61 = vld [vmem:[%s1 + $0xa8] sm:$0xff]
  %v62 = vld [vmem:[%s1 + $0xb0] sm:$0xff]
  %v63 = vld [vmem:[%s1 + $0xb8] sm:$0xff]
  %v64 = vld [vmem:[%s1 + $0xc0] sm:$0xff]
  %v65 = vld [vmem:[%s1 + $0xc8] sm:$0xff]
  %v66 = vld [vmem:[%s1 + $0xd0] sm:$0xff]
  %v67 = vld [vmem:[%s1 + $0xd8] sm:$0xff]
  %v68 = vld [vmem:[%s1 + $0xe0] sm:$0xff]
  %v69 = vld [vmem:[%s1 + $0xe8] sm:$0xff]
  %v70 = vld [vmem:[%s1 + $0xf0] sm:$0xff]
  %v71 = vld [vmem:[%s1 + $0xf8] sm:$0xff]
  %v72 = vld [vmem:[%s1 + $0x100] sm:$0xff]
  %v73 = vld [vmem:[%s1 + $0x108] sm:$0xff]
  %v74 = vld [vmem:[%s1 + $0x110] sm:$0xff]
  %v75 = vld [vmem:[%s1 + $0x118] sm:$0xff]
  %v76 = vld [vmem:[%s1 + $0x120] sm:$0xff]
  %v77 = vld [vmem:[%s1 + $0x128] sm:$0xff]
  %v78 = vld [vmem:[%s1 + $0x130] sm:$0xff]
  %v79 = vld [vmem:[%s1 + $0x138] sm:$0xff]
  %v80 = vld [vmem:[%s1 + $0x140] sm:$0xff]
  %v81 = vld [vmem:[%s1 + $0x148] sm:$0xff]
  %v82 = vld [vmem:[%s1 + $0x150] sm:$0xff]
  %v83 = vld [vmem:[%s1 + $0x158] sm:$0xff]
  %v84 = vld [vmem:[%s1 + $0x160] sm:$0xff]
  %v85 = vld [vmem:[%s1 + $0x168] sm:$0xff]
  %v86 = vld [vmem:[%s1 + $0x170] sm:$0xff]
  %v87 = vld [vmem:[%s1 + $0x178] sm:$0xff]
  %v88 = vld [vmem:[%s1 + $0x180] sm:$0xff]
  %v89 = vld [vmem:[%s1 + $0x188] sm:$0xff]
  %v90 = vld [vmem:[%s1 + $0x190] sm:$0xff]
  %v91 = vld [vmem:[%s1 + $0x198] sm:$0xff]
  %v92 = vld [vmem:[%s1 + $0x1a0] sm:$0xff]
  %v93 = vld [vmem:[%s1 + $0x1a8] sm:$0xff]
  %v94 = vld [vmem:[%s1 + $0x1b0] sm:$0xff]
  %v95 = vld [vmem:[%s1 + $0x1b8] sm:$0xff]
  %v96 = vld [vmem:[%s1 + $0x1c0] sm:$0xff]
  %v97 = vld [vmem:[%s1 + $0x1c8] sm:$0xff]
  %v98 = vld [vmem:[%s1 + $0x1d0] sm:$0xff]
  %v99 = vld [vmem:[%s1 + $0x1d8] sm:$0xff]
  %v100 = vld [vmem:[%s1 + $0x1e0] sm:$0xff]
  %v101 = vld [vmem:[%s1 + $0x1e8] sm:$0xff]
  %v102 = vld [vmem:[%s1 + $0x1f0] sm:$0xff]
  %v103 = vld [vmem:[%s1 + $0x1f8] sm:$0xff]
  %v104 = vld [vmem:[%s1 + $0x200] sm:$0xff]
  %v105 = vld [vmem:[%s1 + $0x208] sm:$0xff]
  %v106 = vld [vmem:[%s1 + $0x210] sm:$0xff]
  %v107 = vld [vmem:[%s1 + $0x218] sm:$0xff]
  %v108 = vld [vmem:[%s1 + $0x220] sm:$0xff]
  %v109 = vld [vmem:[%s1 + $0x228] sm:$0xff]
  %v110 = vld [vmem:[%s1 + $0x230] sm:$0xff]
  %v111 = vld [vmem:[%s1 + $0x238] sm:$0xff]
  %v112 = vld [vmem:[%s1 + $0x240] sm:$0xff]
  %v113 = vld [vmem:[%s1 + $0x248] sm:$0xff]
  %v114 = vld [vmem:[%s1 + $0x250] sm:$0xff]
  %v115 = vld [vmem:[%s1 + $0x258] sm:$0xff]
  %v116 = vld [vmem:[%s1 + $0x260] sm:$0xff]
  %v117 = vld [vmem:[%s1 + $0x268] sm:$0xff]
  %v118 = vld [vmem:[%s1 + $0x270] sm:$0xff]
  %v119 = vld [vmem:[%s1 + $0x278] sm:$0xff]
  %v120 = vld [vmem:[%s1 + $0x280] sm:$0xff]
  %v121 = vld [vmem:[%s1 + $0x288] sm:$0xff]
  %v122 = vld [vmem:[%s1 + $0x290] sm:$0xff]
  %v123 = vld [vmem:[%s1 + $0x298] sm:$0xff]
  %v124 = vld [vmem:[%s1 + $0x2a0] sm:$0xff]
  %v125 = vld [vmem:[%s1 + $0x2a8] sm:$0xff]
  %v126 = vld [vmem:[%s1 + $0x2b0] sm:$0xff]
  %v127 = vld [vmem:[%s1 + $0x2b8] sm:$0xff]
  %v128 = vld [vmem:[%s1 + $0x2c0] sm:$0xff]
  %v129 = vld [vmem:[%s1 + $0x2c8] sm:$0xff]
  %v130 = vld [vmem:[%s1 + $0x2d0] sm:$0xff]
  %v131 = vld [vmem:[%s1 + $0x2d8] sm:$0xff]
  %v132 = vld [vmem:[%s1 + $0x2e0] sm:$0xff]
  %v133 = vld [vmem:[%s1 + $0x2e8] sm:$0xff]
  %v134 = vld [vmem:[%s1 + $0x2f0] sm:$0xff]
  %v135 = vld [vmem:[%s1 + $0x2f8] sm:$0xff]
  %v136 = vld [vmem:[%s1 + $0x300] sm:$0xff]
  %v137 = vld [vmem:[%s1 + $0x308] sm:$0xff]
  %v138 = vld [vmem:[%s1 + $0x310] sm:$0xff]
  %v139 = vld [vmem:[%s1 + $0x318] sm:$0xff]
  %v140 = vld [vmem:[%s1 + $0x320] sm:$0xff]
  %v141 = vld [vmem:[%s1 + $0x328] sm:$0xff]
  %v142 = vld [vmem:[%s1 + $0x330] sm:$0xff]
  %v143 = vld [vmem:[%s1 + $0x338] sm:$0xff]
  %v144 = vld [vmem:[%s1 + $0x340] sm:$0xff]
  %v145 = vld [vmem:[%s1 + $0x348] sm:$0xff]
  %v146 = vld [vmem:[%s1 + $0x350] sm:$0xff]
  %v147 = vld [vmem:[%s1 + $0x358] sm:$0xff]
  %v148 = vld [vmem:[%s1 + $0x360] sm:$0xff]
  %v149 = vld [vmem:[%s1 + $0x368] sm:$0xff]
  %v150 = vld [vmem:[%s1 + $0x370] sm:$0xff]
  %v151 = vld [vmem:[%s1 + $0x378] sm:$0xff]
  %v152 = vld [vmem:[%s1 + $0x380] sm:$0xff]
  %v153 = vld [vmem:[%s1 + $0x388] sm:$0xff]
  %v154 = vld [vmem:[%s1 + $0x390] sm:$0xff]
  %v155 = vld [vmem:[%s1 + $0x398] sm:$0xff]
  %v156 = vld [vmem:[%s1 + $0x3a0] sm:$0xff]
  %v157 = vld [vmem:[%s1 + $0x3a8] sm:$0xff]
  %v158 = vld [vmem:[%s1 + $0x3b0] sm:$0xff]
  %v159 = vld [vmem:[%s1 + $0x3b8] sm:$0xff]
  %v160 = vld [vmem:[%s1 + $0x3c0] sm:$0xff]
  %v161 = vld [vmem:[%s1 + $0x3c8] sm:$0xff]
  %v162 = vld [vmem:[%s1 + $0x3d0] sm:$0xff]
  %v163 = vld [vmem:[%s1 + $0x3d8] sm:$0xff]
  %v164 = vld [vmem:[%s1 + $0x3e0] sm:$0xff]
  %v165 = vld [vmem:[%s1 + $0x3e8] sm:$0xff]
  %v166 = vld [vmem:[%s1 + $0x3f0] sm:$0xff]
  %v167 = vld [vmem:[%s1 + $0x3f8] sm:$0xff]
  %v168 = vld [vmem:[%s1 + $0x400] sm:$0xff]
  %v169 = vld [vmem:[%s1 + $0x408] sm:$0xff]
  %v170 = vld [vmem:[%s1 + $0x410] sm:$0xff]
  %v171 = vld [vmem:[%s1 + $0x418] sm:$0xff]
  %v172 = vld [vmem:[%s1 + $0x420] sm:$0xff]
  %v173 = vld [vmem:[%s1 + $0x428] sm:$0xff]
  %v174 = vld [vmem:[%s1 + $0x430] sm:$0xff]
  %v175 = vld [vmem:[%s1 + $0x438] sm:$0xff]
  %v176 = vld [vmem:[%s1 + $0x440] sm:$0xff]
  %v177 = vld [vmem:[%s1 + $0x448] sm:$0xff]
  %v178 = vld [vmem:[%s1 + $0x450] sm:$0xff]
  %v179 = vld [vmem:[%s1 + $0x458] sm:$0xff]
  %v180 = vld [vmem:[%s1 + $0x460] sm:$0xff]
  %v181 = vld [vmem:[%s1 + $0x468] sm:$0xff]
  %v182 = vld [vmem:[%s1 + $0x470] sm:$0xff]
  %v183 = vld [vmem:[%s1 + $0x478] sm:$0xff]
  %v184 = vld [vmem:[%s1 + $0x480] sm:$0xff]
  %v185 = vld [vmem:[%s1 + $0x488] sm:$0xff]
  %v186 = vld [vmem:[%s1 + $0x490] sm:$0xff]
  %v187 = vld [vmem:[%s1 + $0x498] sm:$0xff]
  %v188 = vld [vmem:[%s1 + $0x4a0] sm:$0xff]
  %v189 = vld [vmem:[%s1 + $0x4a8] sm:$0xff]
  %v190 = vld [vmem:[%s1 + $0x4b0] sm:$0xff]
  %v191 = vld [vmem:[%s1 + $0x4b8] sm:$0xff]
  %v192 = vld [vmem:[%s1 + $0x4c0] sm:$0xff]
  %v193 = vld [vmem:[%s1 + $0x4c8] sm:$0xff]
  %v194 = vld [vmem:[%s1 + $0x4d0] sm:$0xff]
  %v195 = vld [vmem:[%s1 + $0x4d8] sm:$0xff]
  %v196 = vld [vmem:[%s1 + $0x4e0] sm:$0xff]
  %v197 = vld [vmem:[%s1 + $0x4e8] sm:$0xff]
  %v198 = vld [vmem:[%s1 + $0x4f0] sm:$0xff]
  %v199 = vld [vmem:[%s1 + $0x4f8] sm:$0xff]
  %v200 = vld [vmem:[%s1 + $0x500] sm:$0xff]
  %v201 = vld [vmem:[%s1 + $0x508] sm:$0xff]
  %v202 = vld [vmem:[%s1 + $0x510] sm:$0xff]
  %v203 = vld [vmem:[%s1 + $0x518] sm:$0xff]
  %v204 = vld [vmem:[%s1 + $0x520] sm:$0xff]
  %v205 = vld [vmem:[%s1 + $0x528] sm:$0xff]
  %v206 = vld [vmem:[%s1 + $0x530] sm:$0xff]
  %v207 = vld [vmem:[%s1 + $0x538] sm:$0xff]
  %v208 = vld [vmem:[%s1 + $0x540] sm:$0xff]
  %v209 = vld [vmem:[%s1 + $0x548] sm:$0xff]
  %v210 = vld [vmem:[%s1 + $0x550] sm:$0xff]
  %v211 = vld [vmem:[%s1 + $0x558] sm:$0xff]
  %v212 = vld [vmem:[%s1 + $0x560] sm:$0xff]
  %v213 = vld [vmem:[%s1 + $0x568] sm:$0xff]
  %v214 = vld [vmem:[%s1 + $0x570] sm:$0xff]
  %v215 = vld [vmem:[%s1 + $0x578] sm:$0xff]
  %v216 = vld [vmem:[%s1 + $0x580] sm:$0xff]
  %v217 = vld [vmem:[%s1 + $0x588] sm:$0xff]
  %v218 = vld [vmem:[%s1 + $0x590] sm:$0xff]
  %v219 = vld [vmem:[%s1 + $0x598] sm:$0xff]
  %v220 = vld [vmem:[%s1 + $0x5a0] sm:$0xff]
  %v221 = vld [vmem:[%s1 + $0x5a8] sm:$0xff]
  %v222 = vld [vmem:[%s1 + $0x5b0] sm:$0xff]
  %v223 = vld [vmem:[%s1 + $0x5b8] sm:$0xff]
  %v224 = vld [vmem:[%s1 + $0x5c0] sm:$0xff]
  %v225 = vld [vmem:[%s1 + $0x5c8] sm:$0xff]
  %v226 = vld [vmem:[%s1 + $0x5d0] sm:$0xff]
  %v227 = vld [vmem:[%s1 + $0x5d8] sm:$0xff]
  %v228 = vld [vmem:[%s1 + $0x5e0] sm:$0xff]
  %v229 = vld [vmem:[%s1 + $0x5e8] sm:$0xff]
  %v230 = vld [vmem:[%s1 + $0x5f0] sm:$0xff]
  %v231 = vld [vmem:[%s1 + $0x5f8] sm:$0xff]
  %v232 = vld [vmem:[%s1 + $0x600] sm:$0xff]
  %v233 = vld [vmem:[%s1 + $0x608] sm:$0xff]
  %v234 = vld [vmem:[%s1 + $0x610] sm:$0xff]
  %v235 = vld [vmem:[%s1 + $0x618] sm:$0xff]
  %v236 = vld [vmem:[%s2] sm:$0x1]
  %v238 = vlaneseq
  %v239 = vshrl.u32 %v238, 7
  %v240 = vsub.s32 0, %v239
  %v241 = vrot.slane %v236, %v240
  %vm243 = vcmask 261120
  %v245 = vsel %vm243, %v26, 0
  %v248 = vsel %vm243, %v39, 0
  %250 = vmatprep.subr.mxu0 0.0
  %251 = vmatpush1.msra.mxu0 %v40
  %252 = vmatprep.subr.mxu0 0.0
  %253 = vmatpush1.msra.mxu0 %v41
  %254 = vmatprep.subr.mxu0 0.0
  %255 = vmatpush1.msra.mxu0 %v42
  %256 = vmatprep.subr.mxu0 0.0
  %257 = vmatpush1.msra.mxu0 %v43
  %258 = vmatprep.subr.mxu0 0.0
  %259 = vmatpush1.msra.mxu0 %v44
  %260 = vmatprep.subr.mxu0 0.0
  %261 = vmatpush1.msra.mxu0 %v45
  %262 = vmatprep.subr.mxu0 0.0
  %263 = vmatpush1.msra.mxu0 %v46
  %264 = vmatprep.subr.mxu0 0.0
  %265 = vmatpush1.msra.mxu0 %v47
  %266 = vmatprep.subr.mxu0 0.0
  %267 = vmatpush1.msra.mxu0 %v48
  %268 = vmatprep.subr.mxu0 0.0
  %269 = vmatpush1.msra.mxu0 %v49
  %270 = vmatprep.subr.mxu0 0.0
  %271 = vmatpush1.msra.mxu0 %v50
  %272 = vmatprep.subr.mxu0 0.0
  %273 = vmatpush1.msra.mxu0 %v51
  %274 = vmatprep.subr.mxu0 0.0
  %275 = vmatpush1.msra.mxu0 %v52
  %276 = vmatprep.subr.mxu0 0.0
  %277 = vmatpush1.msra.mxu0 %v53
  %278 = vmatprep.subr.mxu0 0.0
  %279 = vmatpush1.msra.mxu0 %v54
  %280 = vmatprep.subr.mxu0 0.0
  %281 = vmatpush1.msra.mxu0 %v55
  %282 = vmatprep.subr.mxu0 0.0
  %283 = vmatpush1.msra.mxu0 %v56
  %284 = vmatprep.subr.mxu0 0.0
  %285 = vmatpush1.msra.mxu0 %v57
  %286 = vmatprep.subr.mxu0 0.0
  %287 = vmatpush1.msra.mxu0 %v58
  %288 = vmatprep.subr.mxu0 0.0
  %289 = vmatpush1.msra.mxu0 %v59
  %290 = vmatprep.subr.mxu0 0.0
  %291 = vmatpush1.msra.mxu0 %v60
  %292 = vmatprep.subr.mxu0 0.0
  %293 = vmatpush1.msra.mxu0 %v61
  %294 = vmatprep.subr.mxu0 0.0
  %295 = vmatpush1.msra.mxu0 %v62
  %296 = vmatprep.subr.mxu0 0.0
  %297 = vmatpush1.msra.mxu0 %v63
  %298 = vmatprep.subr.mxu0 0.0
  %299 = vmatpush1.msra.mxu0 %v64
  %300 = vmatprep.subr.mxu0 0.0
  %301 = vmatpush1.msra.mxu0 %v65
  %302 = vmatprep.subr.mxu0 0.0
  %303 = vmatpush1.msra.mxu0 %v66
  %304 = vmatprep.subr.mxu0 0.0
  %305 = vmatpush1.msra.mxu0 %v67
  %306 = vmatprep.subr.mxu0 0.0
  %307 = vmatpush1.msra.mxu0 %v68
  %308 = vmatprep.subr.mxu0 0.0
  %309 = vmatpush1.msra.mxu0 %v69
  %310 = vmatprep.subr.mxu0 0.0
  %311 = vmatpush1.msra.mxu0 %v70
  %312 = vmatprep.subr.mxu0 0.0
  %313 = vmatpush1.msra.mxu0 %v71
  %314 = vmatprep.mubr.f32.mxu0 %v15
  %315 = vmatmul.mubr.f32.gmra.mrb[0].mxu0 %v14
  %v316 = vpop.f32.mrb[0].mxu0
  %v317 = vadd.f32 %v241, %v316
  %v318 = vpop.f32.mrb[0].mxu0
  %319 = vmatprep.mubr.f32.mxu0 %v28
  %320 = vmatmul.mubr.f32.gmra.mrb[0].mxu0 %v27
  %v321 = vpop.f32.mrb[0].mxu0
  %v322 = vadd.f32 %v241, %v321
  %v323 = vpop.f32.mrb[0].mxu0
  %324 = vdwg.mxu0
  %325 = vmatprep.subr.mxu0 0.0
  %326 = vmatpush1.msra.mxu0 %v72
  %327 = vmatprep.subr.mxu0 0.0
  %328 = vmatpush1.msra.mxu0 %v73
  %329 = vmatprep.subr.mxu0 0.0
  %330 = vmatpush1.msra.mxu0 %v74
  %331 = vmatprep.subr.mxu0 0.0
  %332 = vmatpush1.msra.mxu0 %v75
  %333 = vmatprep.subr.mxu0 0.0
  %334 = vmatpush1.msra.mxu0 %v76
  %335 = vmatprep.subr.mxu0 0.0
  %336 = vmatpush1.msra.mxu0 %v77
  %337 = vmatprep.subr.mxu0 0.0
  %338 = vmatpush1.msra.mxu0 %v78
  %339 = vmatprep.subr.mxu0 0.0
  %340 = vmatpush1.msra.mxu0 %v79
  %341 = vmatprep.subr.mxu0 0.0
  %342 = vmatpush1.msra.mxu0 %v80
  %343 = vmatprep.subr.mxu0 0.0
  %344 = vmatpush1.msra.mxu0 %v81
  %345 = vmatprep.subr.mxu0 0.0
  %346 = vmatpush1.msra.mxu0 %v82
  %347 = vmatprep.subr.mxu0 0.0
  %348 = vmatpush1.msra.mxu0 %v83
  %349 = vmatprep.subr.mxu0 0.0
  %350 = vmatpush1.msra.mxu0 %v84
  %351 = vmatprep.subr.mxu0 0.0
  %352 = vmatpush1.msra.mxu0 %v85
  %353 = vmatprep.subr.mxu0 0.0
  %354 = vmatpush1.msra.mxu0 %v86
  %355 = vmatprep.subr.mxu0 0.0
  %356 = vmatpush1.msra.mxu0 %v87
  %357 = vmatprep.subr.mxu0 0.0
  %358 = vmatpush1.msra.mxu0 %v88
  %359 = vmatprep.subr.mxu0 0.0
  %360 = vmatpush1.msra.mxu0 %v89
  %361 = vmatprep.subr.mxu0 0.0
  %362 = vmatpush1.msra.mxu0 %v90
  %363 = vmatprep.subr.mxu0 0.0
  %364 = vmatpush1.msra.mxu0 %v91
  %365 = vmatprep.subr.mxu0 0.0
  %366 = vmatpush1.msra.mxu0 %v92
  %367 = vmatprep.subr.mxu0 0.0
  %368 = vmatpush1.msra.mxu0 %v93
  %369 = vmatprep.subr.mxu0 0.0
  %370 = vmatpush1.msra.mxu0 %v94
  %371 = vmatprep.subr.mxu0 0.0
  %372 = vmatpush1.msra.mxu0 %v95
  %373 = vmatprep.subr.mxu0 0.0
  %374 = vmatpush1.msra.mxu0 %v96
  %375 = vmatprep.subr.mxu0 0.0
  %376 = vmatpush1.msra.mxu0 %v97
  %377 = vmatprep.subr.mxu0 0.0
  %378 = vmatpush1.msra.mxu0 %v98
  %379 = vmatprep.subr.mxu0 0.0
  %380 = vmatpush1.msra.mxu0 %v99
  %381 = vmatprep.subr.mxu0 0.0
  %382 = vmatpush1.msra.mxu0 %v100
  %383 = vmatprep.subr.mxu0 0.0
  %384 = vmatpush1.msra.mxu0 %v101
  %385 = vmatprep.subr.mxu0 0.0
  %386 = vmatpush1.msra.mxu0 %v102
  %387 = vmatprep.subr.mxu0 0.0
  %388 = vmatpush1.msra.mxu0 %v103
  %389 = vmatprep.mubr.f32.mxu0 %v17
  %390 = vmatmul.mubr.f32.gmra.mrb[0].mxu0 %v16
  %v391 = vpop.f32.mrb[0].mxu0
  %v392 = vadd.f32 %v317, %v391
  %v393 = vpop.f32.mrb[0].mxu0
  %394 = vmatprep.mubr.f32.mxu0 %v30
  %395 = vmatmul.mubr.f32.gmra.mrb[0].mxu0 %v29
  %v396 = vpop.f32.mrb[0].mxu0
  %v397 = vadd.f32 %v322, %v396
  %v398 = vpop.f32.mrb[0].mxu0
  %399 = vdwg.mxu0
  %400 = vmatprep.subr.mxu0 0.0
  %401 = vmatpush1.msra.mxu0 %v104
  %402 = vmatprep.subr.mxu0 0.0
  %403 = vmatpush1.msra.mxu0 %v105
  %404 = vmatprep.subr.mxu0 0.0
  %405 = vmatpush1.msra.mxu0 %v106
  %406 = vmatprep.subr.mxu0 0.0
  %407 = vmatpush1.msra.mxu0 %v107
  %408 = vmatprep.subr.mxu0 0.0
  %409 = vmatpush1.msra.mxu0 %v108
  %410 = vmatprep.subr.mxu0 0.0
  %411 = vmatpush1.msra.mxu0 %v109
  %412 = vmatprep.subr.mxu0 0.0
  %413 = vmatpush1.msra.mxu0 %v110
  %414 = vmatprep.subr.mxu0 0.0
  %415 = vmatpush1.msra.mxu0 %v111
  %416 = vmatprep.subr.mxu0 0.0
  %417 = vmatpush1.msra.mxu0 %v112
  %418 = vmatprep.subr.mxu0 0.0
  %419 = vmatpush1.msra.mxu0 %v113
  %420 = vmatprep.subr.mxu0 0.0
  %421 = vmatpush1.msra.mxu0 %v114
  %422 = vmatprep.subr.mxu0 0.0
  %423 = vmatpush1.msra.mxu0 %v115
  %424 = vmatprep.subr.mxu0 0.0
  %425 = vmatpush1.msra.mxu0 %v116
  %426 = vmatprep.subr.mxu0 0.0
  %427 = vmatpush1.msra.mxu0 %v117
  %428 = vmatprep.subr.mxu0 0.0
  %429 = vmatpush1.msra.mxu0 %v118
  %430 = vmatprep.subr.mxu0 0.0
  %431 = vmatpush1.msra.mxu0 %v119
  %432 = vmatprep.subr.mxu0 0.0
  %433 = vmatpush1.msra.mxu0 %v120
  %434 = vmatprep.subr.mxu0 0.0
  %435 = vmatpush1.msra.mxu0 %v121
  %436 = vmatprep.subr.mxu0 0.0
  %437 = vmatpush1.msra.mxu0 %v122
  %438 = vmatprep.subr.mxu0 0.0
  %439 = vmatpush1.msra.mxu0 %v123
  %440 = vmatprep.subr.mxu0 0.0
  %441 = vmatpush1.msra.mxu0 %v124
  %442 = vmatprep.subr.mxu0 0.0
  %443 = vmatpush1.msra.mxu0 %v125
  %444 = vmatprep.subr.mxu0 0.0
  %445 = vmatpush1.msra.mxu0 %v126
  %446 = vmatprep.subr.mxu0 0.0
  %447 = vmatpush1.msra.mxu0 %v127
  %448 = vmatprep.subr.mxu0 0.0
  %449 = vmatpush1.msra.mxu0 %v128
  %450 = vmatprep.subr.mxu0 0.0
  %451 = vmatpush1.msra.mxu0 %v129
  %452 = vmatprep.subr.mxu0 0.0
  %453 = vmatpush1.msra.mxu0 %v130
  %454 = vmatprep.subr.mxu0 0.0
  %455 = vmatpush1.msra.mxu0 %v131
  %456 = vmatprep.subr.mxu0 0.0
  %457 = vmatpush1.msra.mxu0 %v132
  %458 = vmatprep.subr.mxu0 0.0
  %459 = vmatpush1.msra.mxu0 %v133
  %460 = vmatprep.subr.mxu0 0.0
  %461 = vmatpush1.msra.mxu0 %v134
  %462 = vmatprep.subr.mxu0 0.0
  %463 = vmatpush1.msra.mxu0 %v135
  %464 = vmatprep.mubr.f32.mxu0 %v19
  %465 = vmatmul.mubr.f32.gmra.mrb[0].mxu0 %v18
  %v466 = vpop.f32.mrb[0].mxu0
  %v467 = vadd.f32 %v392, %v466
  %v468 = vpop.f32.mrb[0].mxu0
  %469 = vmatprep.mubr.f32.mxu0 %v32
  %470 = vmatmul.mubr.f32.gmra.mrb[0].mxu0 %v31
  %v471 = vpop.f32.mrb[0].mxu0
  %v472 = vadd.f32 %v397, %v471
  %v473 = vpop.f32.mrb[0].mxu0
  %474 = vdwg.mxu0
  %475 = vmatprep.subr.mxu0 0.0
  %476 = vmatpush1.msra.mxu0 %v136
  %477 = vmatprep.subr.mxu0 0.0
  %478 = vmatpush1.msra.mxu0 %v137
  %479 = vmatprep.subr.mxu0 0.0
  %480 = vmatpush1.msra.mxu0 %v138
  %481 = vmatprep.subr.mxu0 0.0
  %482 = vmatpush1.msra.mxu0 %v139
  %483 = vmatprep.subr.mxu0 0.0
  %484 = vmatpush1.msra.mxu0 %v140
  %485 = vmatprep.subr.mxu0 0.0
  %486 = vmatpush1.msra.mxu0 %v141
  %487 = vmatprep.subr.mxu0 0.0
  %488 = vmatpush1.msra.mxu0 %v142
  %489 = vmatprep.subr.mxu0 0.0
  %490 = vmatpush1.msra.mxu0 %v143
  %491 = vmatprep.subr.mxu0 0.0
  %492 = vmatpush1.msra.mxu0 %v144
  %493 = vmatprep.subr.mxu0 0.0
  %494 = vmatpush1.msra.mxu0 %v145
  %495 = vmatprep.subr.mxu0 0.0
  %496 = vmatpush1.msra.mxu0 %v146
  %497 = vmatprep.subr.mxu0 0.0
  %498 = vmatpush1.msra.mxu0 %v147
  %499 = vmatprep.subr.mxu0 0.0
  %500 = vmatpush1.msra.mxu0 %v148
  %501 = vmatprep.subr.mxu0 0.0
  %502 = vmatpush1.msra.mxu0 %v149
  %503 = vmatprep.subr.mxu0 0.0
  %504 = vmatpush1.msra.mxu0 %v150
  %505 = vmatprep.subr.mxu0 0.0
  %506 = vmatpush1.msra.mxu0 %v151
  %507 = vmatprep.subr.mxu0 0.0
  %508 = vmatpush1.msra.mxu0 %v152
  %509 = vmatprep.subr.mxu0 0.0
  %510 = vmatpush1.msra.mxu0 %v153
  %511 = vmatprep.subr.mxu0 0.0
  %512 = vmatpush1.msra.mxu0 %v154
  %513 = vmatprep.subr.mxu0 0.0
  %514 = vmatpush1.msra.mxu0 %v155
  %515 = vmatprep.subr.mxu0 0.0
  %516 = vmatpush1.msra.mxu0 %v156
  %517 = vmatprep.subr.mxu0 0.0
  %518 = vmatpush1.msra.mxu0 %v157
  %519 = vmatprep.subr.mxu0 0.0
  %520 = vmatpush1.msra.mxu0 %v158
  %521 = vmatprep.subr.mxu0 0.0
  %522 = vmatpush1.msra.mxu0 %v159
  %523 = vmatprep.subr.mxu0 0.0
  %524 = vmatpush1.msra.mxu0 %v160
  %525 = vmatprep.subr.mxu0 0.0
  %526 = vmatpush1.msra.mxu0 %v161
  %527 = vmatprep.subr.mxu0 0.0
  %528 = vmatpush1.msra.mxu0 %v162
  %529 = vmatprep.subr.mxu0 0.0
  %530 = vmatpush1.msra.mxu0 %v163
  %531 = vmatprep.subr.mxu0 0.0
  %532 = vmatpush1.msra.mxu0 %v164
  %533 = vmatprep.subr.mxu0 0.0
  %534 = vmatpush1.msra.mxu0 %v165
  %535 = vmatprep.subr.mxu0 0.0
  %536 = vmatpush1.msra.mxu0 %v166
  %537 = vmatprep.subr.mxu0 0.0
  %538 = vmatpush1.msra.mxu0 %v167
  %539 = vmatprep.mubr.f32.mxu0 %v21
  %540 = vmatmul.mubr.f32.gmra.mrb[0].mxu0 %v20
  %v541 = vpop.f32.mrb[0].mxu0
  %v542 = vadd.f32 %v467, %v541
  %v543 = vpop.f32.mrb[0].mxu0
  %544 = vmatprep.mubr.f32.mxu0 %v34
  %545 = vmatmul.mubr.f32.gmra.mrb[0].mxu0 %v33
  %v546 = vpop.f32.mrb[0].mxu0
  %v547 = vadd.f32 %v472, %v546
  %v548 = vpop.f32.mrb[0].mxu0
  %549 = vdwg.mxu0
  %550 = vmatprep.subr.mxu0 0.0
  %551 = vmatpush1.msra.mxu0 %v168
  %552 = vmatprep.subr.mxu0 0.0
  %553 = vmatpush1.msra.mxu0 %v169
  %554 = vmatprep.subr.mxu0 0.0
  %555 = vmatpush1.msra.mxu0 %v170
  %556 = vmatprep.subr.mxu0 0.0
  %557 = vmatpush1.msra.mxu0 %v171
  %558 = vmatprep.subr.mxu0 0.0
  %559 = vmatpush1.msra.mxu0 %v172
  %560 = vmatprep.subr.mxu0 0.0
  %561 = vmatpush1.msra.mxu0 %v173
  %562 = vmatprep.subr.mxu0 0.0
  %563 = vmatpush1.msra.mxu0 %v174
  %564 = vmatprep.subr.mxu0 0.0
  %565 = vmatpush1.msra.mxu0 %v175
  %566 = vmatprep.subr.mxu0 0.0
  %567 = vmatpush1.msra.mxu0 %v176
  %568 = vmatprep.subr.mxu0 0.0
  %569 = vmatpush1.msra.mxu0 %v177
  %570 = vmatprep.subr.mxu0 0.0
  %571 = vmatpush1.msra.mxu0 %v178
  %572 = vmatprep.subr.mxu0 0.0
  %573 = vmatpush1.msra.mxu0 %v179
  %574 = vmatprep.subr.mxu0 0.0
  %575 = vmatpush1.msra.mxu0 %v180
  %576 = vmatprep.subr.mxu0 0.0
  %577 = vmatpush1.msra.mxu0 %v181
  %578 = vmatprep.subr.mxu0 0.0
  %579 = vmatpush1.msra.mxu0 %v182
  %580 = vmatprep.subr.mxu0 0.0
  %581 = vmatpush1.msra.mxu0 %v183
  %582 = vmatprep.subr.mxu0 0.0
  %583 = vmatpush1.msra.mxu0 %v184
  %584 = vmatprep.subr.mxu0 0.0
  %585 = vmatpush1.msra.mxu0 %v185
  %586 = vmatprep.subr.mxu0 0.0
  %587 = vmatpush1.msra.mxu0 %v186
  %588 = vmatprep.subr.mxu0 0.0
  %589 = vmatpush1.msra.mxu0 %v187
  %590 = vmatprep.subr.mxu0 0.0
  %591 = vmatpush1.msra.mxu0 %v188
  %592 = vmatprep.subr.mxu0 0.0
  %593 = vmatpush1.msra.mxu0 %v189
  %594 = vmatprep.subr.mxu0 0.0
  %595 = vmatpush1.msra.mxu0 %v190
  %596 = vmatprep.subr.mxu0 0.0
  %597 = vmatpush1.msra.mxu0 %v191
  %598 = vmatprep.subr.mxu0 0.0
  %599 = vmatpush1.msra.mxu0 %v192
  %600 = vmatprep.subr.mxu0 0.0
  %601 = vmatpush1.msra.mxu0 %v193
  %602 = vmatprep.subr.mxu0 0.0
  %603 = vmatpush1.msra.mxu0 %v194
  %604 = vmatprep.subr.mxu0 0.0
  %605 = vmatpush1.msra.mxu0 %v195
  %606 = vmatprep.subr.mxu0 0.0
  %607 = vmatpush1.msra.mxu0 %v196
  %608 = vmatprep.subr.mxu0 0.0
  %609 = vmatpush1.msra.mxu0 %v197
  %610 = vmatprep.subr.mxu0 0.0
  %611 = vmatpush1.msra.mxu0 %v198
  %612 = vmatprep.subr.mxu0 0.0
  %613 = vmatpush1.msra.mxu0 %v199
  %614 = vmatprep.mubr.f32.mxu0 %v23
  %615 = vmatmul.mubr.f32.gmra.mrb[0].mxu0 %v22
  %v616 = vpop.f32.mrb[0].mxu0
  %v617 = vadd.f32 %v542, %v616
  %v618 = vpop.f32.mrb[0].mxu0
  %619 = vmatprep.mubr.f32.mxu0 %v36
  %620 = vmatmul.mubr.f32.gmra.mrb[0].mxu0 %v35
  %v621 = vpop.f32.mrb[0].mxu0
  %v622 = vadd.f32 %v547, %v621
  %v623 = vpop.f32.mrb[0].mxu0
  %624 = vdwg.mxu0
  %625 = vmatprep.subr.mxu0 0.0
  %626 = vmatpush1.msra.mxu0 %v200
  %627 = vmatprep.subr.mxu0 0.0
  %628 = vmatpush1.msra.mxu0 %v201
  %629 = vmatprep.subr.mxu0 0.0
  %630 = vmatpush1.msra.mxu0 %v202
  %631 = vmatprep.subr.mxu0 0.0
  %632 = vmatpush1.msra.mxu0 %v203
  %633 = vmatprep.subr.mxu0 0.0
  %634 = vmatpush1.msra.mxu0 %v204
  %635 = vmatprep.subr.mxu0 0.0
  %636 = vmatpush1.msra.mxu0 %v205
  %637 = vmatprep.subr.mxu0 0.0
  %638 = vmatpush1.msra.mxu0 %v206
  %639 = vmatprep.subr.mxu0 0.0
  %640 = vmatpush1.msra.mxu0 %v207
  %641 = vmatprep.subr.mxu0 0.0
  %642 = vmatpush1.msra.mxu0 %v208
  %643 = vmatprep.subr.mxu0 0.0
  %644 = vmatpush1.msra.mxu0 %v209
  %645 = vmatprep.subr.mxu0 0.0
  %646 = vmatpush1.msra.mxu0 %v210
  %647 = vmatprep.subr.mxu0 0.0
  %648 = vmatpush1.msra.mxu0 %v211
  %649 = vmatprep.subr.mxu0 0.0
  %650 = vmatpush1.msra.mxu0 %v212
  %651 = vmatprep.subr.mxu0 0.0
  %652 = vmatpush1.msra.mxu0 %v213
  %653 = vmatprep.subr.mxu0 0.0
  %654 = vmatpush1.msra.mxu0 %v214
  %655 = vmatprep.subr.mxu0 0.0
  %656 = vmatpush1.msra.mxu0 %v215
  %657 = vmatprep.subr.mxu0 0.0
  %658 = vmatpush1.msra.mxu0 %v216
  %659 = vmatprep.subr.mxu0 0.0
  %660 = vmatpush1.msra.mxu0 %v217
  %661 = vmatprep.subr.mxu0 0.0
  %662 = vmatpush1.msra.mxu0 %v218
  %663 = vmatprep.subr.mxu0 0.0
  %664 = vmatpush1.msra.mxu0 %v219
  %665 = vmatprep.subr.mxu0 0.0
  %666 = vmatpush1.msra.mxu0 %v220
  %667 = vmatprep.subr.mxu0 0.0
  %668 = vmatpush1.msra.mxu0 %v221
  %669 = vmatprep.subr.mxu0 0.0
  %670 = vmatpush1.msra.mxu0 %v222
  %671 = vmatprep.subr.mxu0 0.0
  %672 = vmatpush1.msra.mxu0 %v223
  %673 = vmatprep.subr.mxu0 0.0
  %674 = vmatpush1.msra.mxu0 %v224
  %675 = vmatprep.subr.mxu0 0.0
  %676 = vmatpush1.msra.mxu0 %v225
  %677 = vmatprep.subr.mxu0 0.0
  %678 = vmatpush1.msra.mxu0 %v226
  %679 = vmatprep.subr.mxu0 0.0
  %680 = vmatpush1.msra.mxu0 %v227
  %681 = vmatprep.subr.mxu0 0.0
  %682 = vmatpush1.msra.mxu0 %v228
  %683 = vmatprep.subr.mxu0 0.0
  %684 = vmatpush1.msra.mxu0 %v229
  %685 = vmatprep.subr.mxu0 0.0
  %686 = vmatpush1.msra.mxu0 %v230
  %687 = vmatprep.subr.mxu0 0.0
  %688 = vmatpush1.msra.mxu0 %v231
  %689 = vmatprep.mubr.f32.mxu0 %v25
  %690 = vmatmul.mubr.f32.gmra.mrb[0].mxu0 %v24
  %v691 = vpop.f32.mrb[0].mxu0
  %v692 = vadd.f32 %v617, %v691
  %v693 = vpop.f32.mrb[0].mxu0
  %694 = vmatprep.mubr.f32.mxu0 %v38
  %695 = vmatmul.mubr.f32.gmra.mrb[0].mxu0 %v37
  %v696 = vpop.f32.mrb[0].mxu0
  %v697 = vadd.f32 %v622, %v696
  %v698 = vpop.f32.mrb[0].mxu0
  %699 = vdwg.mxu0
  %700 = vmatprep.subr.mxu0 0.0
  %701 = vmatpush1.msra.mxu0 %v232
  %702 = vmatprep.subr.mxu0 0.0
  %703 = vmatpush1.msra.mxu0 %v233
  %704 = vmatprep.subr.mxu0 0.0
  %705 = vmatpush1.msra.mxu0 %v234
  %706 = vmatprep.subr.mxu0 0.0
  %707 = vmatpush1.msra.mxu0 %v235
  %708 = vmatprep.subr.mxu0 0.0
  %709 = vmatpush1.msra.mxu0 0.0
  %710 = vmatprep.subr.mxu0 0.0
  %711 = vmatpush1.msra.mxu0 0.0
  %712 = vmatprep.subr.mxu0 0.0
  %713 = vmatpush1.msra.mxu0 0.0
  %714 = vmatprep.subr.mxu0 0.0
  %715 = vmatpush1.msra.mxu0 0.0
  %716 = vmatprep.subr.mxu0 0.0
  %717 = vmatpush1.msra.mxu0 0.0
  %718 = vmatprep.subr.mxu0 0.0
  %719 = vmatpush1.msra.mxu0 0.0
  %720 = vmatprep.subr.mxu0 0.0
  %721 = vmatpush1.msra.mxu0 0.0
  %722 = vmatprep.subr.mxu0 0.0
  %723 = vmatpush1.msra.mxu0 0.0
  %724 = vmatprep.subr.mxu0 0.0
  %725 = vmatpush1.msra.mxu0 0.0
  %726 = vmatprep.subr.mxu0 0.0
  %727 = vmatpush1.msra.mxu0 0.0
  %728 = vmatprep.subr.mxu0 0.0
  %729 = vmatpush1.msra.mxu0 0.0
  %730 = vmatprep.subr.mxu0 0.0
  %731 = vmatpush1.msra.mxu0 0.0
  %732 = vmatprep.subr.mxu0 0.0
  %733 = vmatpush1.msra.mxu0 0.0
  %734 = vmatprep.subr.mxu0 0.0
  %735 = vmatpush1.msra.mxu0 0.0
  %736 = vmatprep.subr.mxu0 0.0
  %737 = vmatpush1.msra.mxu0 0.0
  %738 = vmatprep.subr.mxu0 0.0
  %739 = vmatpush1.msra.mxu0 0.0
  %740 = vmatprep.subr.mxu0 0.0
  %741 = vmatpush1.msra.mxu0 0.0
  %742 = vmatprep.subr.mxu0 0.0
  %743 = vmatpush1.msra.mxu0 0.0
  %744 = vmatprep.subr.mxu0 0.0
  %745 = vmatpush1.msra.mxu0 0.0
  %746 = vmatprep.subr.mxu0 0.0
  %747 = vmatpush1.msra.mxu0 0.0
  %748 = vmatprep.subr.mxu0 0.0
  %749 = vmatpush1.msra.mxu0 0.0
  %750 = vmatprep.subr.mxu0 0.0
  %751 = vmatpush1.msra.mxu0 0.0
  %752 = vmatprep.subr.mxu0 0.0
  %753 = vmatpush1.msra.mxu0 0.0
  %754 = vmatprep.subr.mxu0 0.0
  %755 = vmatpush1.msra.mxu0 0.0
  %756 = vmatprep.subr.mxu0 0.0
  %757 = vmatpush1.msra.mxu0 0.0
  %758 = vmatprep.subr.mxu0 0.0
  %759 = vmatpush1.msra.mxu0 0.0
  %760 = vmatprep.subr.mxu0 0.0
  %761 = vmatpush1.msra.mxu0 0.0
  %762 = vmatprep.subr.mxu0 0.0
  %763 = vmatpush1.msra.mxu0 0.0
  %764 = vmatprep.mubr.f32.mxu0 0.0
  %765 = vmatmul.mubr.f32.gmra.mrb[0].mxu0 %v245
  %v766 = vpop.f32.mrb[0].mxu0
  %v767 = vadd.f32 %v692, %v766
  %v768 = vpop.f32.mrb[0].mxu0
  %769 = vmatprep.mubr.f32.mxu0 0.0
  %770 = vmatmul.mubr.f32.gmra.mrb[0].mxu0 %v248
  %v771 = vpop.f32.mrb[0].mxu0
  %v772 = vadd.f32 %v697, %v771
  %v773 = vpop.f32.mrb[0].mxu0
  %774 = vdwg.mxu0
  %vm775 = vcmask 785408
  %776 = vst.msk [vmem:[%s3] sm:$0xff] %vm775, %v767
  %777 = vst.msk [vmem:[%s3 + $0x8] sm:$0xff] %vm775, %v772
  // Predicated region
  $region14: #{adaptive_pooler_forward.4} parent=0 // pred_check
    _
  $region15: #{adaptive_pooler_forward.4} parent=0 // pred_check_branch
    %779 = sbr.rel (0) target = $region17
  $region16: #{adaptive_pooler_forward.4} parent=0 // pred_region
    _
  $region17: #{adaptive_pooler_forward.4} parent=0 // pred_fallthru
    _
  // Predicated region
  $region18: #{adaptive_pooler_forward.4} parent=0 // pred_check
    _
  $region19: #{adaptive_pooler_forward.4} parent=0 // pred_check_branch
    %781 = sbr.rel (0) target = $region21
  $region20: #{adaptive_pooler_forward.4} parent=0 // pred_region
    _
  $region21: #{adaptive_pooler_forward.4} parent=0 // pred_fallthru
    _

// kernel: adaptive_pooler_forward.3
$region0: #{adaptive_pooler_forward.3}
  #allocation0 [shape = 'u32[]', space=smem, size = 0x4, offset = 0x4, fixed_abs, tag = 'smem constant byte address 0x4 - core index']
  #allocation1 [shape = 'u32[144,128]{1,0:T(1,128)}', space=vmem, size = 0x12000, scoped, tag = 'internal scratch']
  %s0 = inlined_call_operand.vmem [shape: f32[16,49,32], index: 0, kind: input, shape index: {}]
  %s1 = inlined_call_operand.vmem [shape: f32[1,1,32], index: 1, kind: input, shape index: {}]
  %s2 = inlined_call_operand.vmem [shape: f32[1,1,32], index: 2, kind: input, shape index: {}]
  %s3 = inlined_call_operand.vmem [shape: f32[16,32], index: 3, kind: output, shape index: {0}]
  %s4 = inlined_call_operand.vmem [shape: f32[16,49,32], index: 4, kind: output, shape index: {1}]
  %5 = xla_tuple %s3, %s4
  %s6 = sld [smem:[#allocation0]]
  $region30: #{adaptive_pooler_forward.3} parent=0
    _
  %s8 = ssub.s32 1, %s6
  %s9 = scalar_select 0, %s8, %s6
  // Predicated region
  $region2: #{adaptive_pooler_forward.3} parent=0 // pred_check
    _
  $region3: #{adaptive_pooler_forward.3} parent=0 // pred_check_branch
    %11 = sbr.rel (0) target = $region5
  $region4: #{adaptive_pooler_forward.3} parent=0 // pred_region
    _
  $region5: #{adaptive_pooler_forward.3} parent=0 // pred_fallthru
    _
  // Predicated region
  $region6: #{adaptive_pooler_forward.3} parent=0 // pred_check
    _
  $region7: #{adaptive_pooler_forward.3} parent=0 // pred_check_branch
    %13 = sbr.rel (0) target = $region9
  $region8: #{adaptive_pooler_forward.3} parent=0 // pred_region
    _
  $region9: #{adaptive_pooler_forward.3} parent=0 // pred_fallthru
    _
  // Predicated region
  $region10: #{adaptive_pooler_forward.3} parent=0 // pred_check
    _
  $region11: #{adaptive_pooler_forward.3} parent=0 // pred_check_branch
    %15 = sbr.rel (0) target = $region13
  $region12: #{adaptive_pooler_forward.3} parent=0 // pred_region
    _
  $region13: #{adaptive_pooler_forward.3} parent=0 // pred_fallthru
    _
  %v16 = vld [vmem:[%s0] sm:$0xff]
  %v17 = vld [vmem:[%s0 + $0x8] sm:$0xff]
  %v18 = vld [vmem:[%s0 + $0x10] sm:$0xff]
  %v19 = vld [vmem:[%s0 + $0x18] sm:$0xff]
  %v20 = vld [vmem:[%s0 + $0x20] sm:$0xff]
  %v21 = vld [vmem:[%s0 + $0x28] sm:$0xff]
  %v22 = vld [vmem:[%s0 + $0x30] sm:$0x1]
  %v23 = vld [vmem:[%s0 + $0x38] sm:$0xff]
  %v24 = vld [vmem:[%s0 + $0x40] sm:$0xff]
  %v25 = vld [vmem:[%s0 + $0x48] sm:$0xff]
  %v26 = vld [vmem:[%s0 + $0x50] sm:$0xff]
  %v27 = vld [vmem:[%s0 + $0x58] sm:$0xff]
  %v28 = vld [vmem:[%s0 + $0x60] sm:$0xff]
  %v29 = vld [vmem:[%s0 + $0x68] sm:$0x1]
  %v30 = vld [vmem:[%s0 + $0x70] sm:$0xff]
  %v31 = vld [vmem:[%s0 + $0x78] sm:$0xff]
  %v32 = vld [vmem:[%s0 + $0x80] sm:$0xff]
  %v33 = vld [vmem:[%s0 + $0x88] sm:$0xff]
  %v34 = vld [vmem:[%s0 + $0x90] sm:$0xff]
  %v35 = vld [vmem:[%s0 + $0x98] sm:$0xff]
  %v36 = vld [vmem:[%s0 + $0xa0] sm:$0x1]
  %v37 = vld [vmem:[%s0 + $0xa8] sm:$0xff]
  %v38 = vld [vmem:[%s0 + $0xb0] sm:$0xff]
  %v39 = vld [vmem:[%s0 + $0xb8] sm:$0xff]
  %v40 = vld [vmem:[%s0 + $0xc0] sm:$0xff]
  %v41 = vld [vmem:[%s0 + $0xc8] sm:$0xff]
  %v42 = vld [vmem:[%s0 + $0xd0] sm:$0xff]
  %v43 = vld [vmem:[%s0 + $0xd8] sm:$0x1]
  %v44 = vld [vmem:[%s0 + $0xe0] sm:$0xff]
  %v45 = vld [vmem:[%s0 + $0xe8] sm:$0xff]
  %v46 = vld [vmem:[%s0 + $0xf0] sm:$0xff]
  %v47 = vld [vmem:[%s0 + $0xf8] sm:$0xff]
  %v48 = vld [vmem:[%s0 + $0x100] sm:$0xff]
  %v49 = vld [vmem:[%s0 + $0x108] sm:$0xff]
  %v50 = vld [vmem:[%s0 + $0x110] sm:$0x1]
  %v51 = vld [vmem:[%s0 + $0x118] sm:$0xff]
  %v52 = vld [vmem:[%s0 + $0x120] sm:$0xff]
  %v53 = vld [vmem:[%s0 + $0x128] sm:$0xff]
  %v54 = vld [vmem:[%s0 + $0x130] sm:$0xff]
  %v55 = vld [vmem:[%s0 + $0x138] sm:$0xff]
  %v56 = vld [vmem:[%s0 + $0x140] sm:$0xff]
  %v57 = vld [vmem:[%s0 + $0x148] sm:$0x1]
  %v58 = vld [vmem:[%s0 + $0x150] sm:$0xff]
  %v59 = vld [vmem:[%s0 + $0x158] sm:$0xff]
  %v60 = vld [vmem:[%s0 + $0x160] sm:$0xff]
  %v61 = vld [vmem:[%s0 + $0x168] sm:$0xff]
  %v62 = vld [vmem:[%s0 + $0x170] sm:$0xff]
  %v63 = vld [vmem:[%s0 + $0x178] sm:$0xff]
  %v64 = vld [vmem:[%s0 + $0x180] sm:$0x1]
  %v65 = vld [vmem:[%s0 + $0x188] sm:$0xff]
  %v66 = vld [vmem:[%s0 + $0x190] sm:$0xff]
  %v67 = vld [vmem:[%s0 + $0x198] sm:$0xff]
  %v68 = vld [vmem:[%s0 + $0x1a0] sm:$0xff]
  %v69 = vld [vmem:[%s0 + $0x1a8] sm:$0xff]
  %v70 = vld [vmem:[%s0 + $0x1b0] sm:$0xff]
  %v71 = vld [vmem:[%s0 + $0x1b8] sm:$0x1]
  %v72 = vld [vmem:[%s0 + $0x1c0] sm:$0xff]
  %v73 = vld [vmem:[%s0 + $0x1c8] sm:$0xff]
  %v74 = vld [vmem:[%s0 + $0x1d0] sm:$0xff]
  %v75 = vld [vmem:[%s0 + $0x1d8] sm:$0xff]
  %v76 = vld [vmem:[%s0 + $0x1e0] sm:$0xff]
  %v77 = vld [vmem:[%s0 + $0x1e8] sm:$0xff]
  %v78 = vld [vmem:[%s0 + $0x1f0] sm:$0x1]
  %v79 = vld [vmem:[%s0 + $0x1f8] sm:$0xff]
  %v80 = vld [vmem:[%s0 + $0x200] sm:$0xff]
  %v81 = vld [vmem:[%s0 + $0x208] sm:$0xff]
  %v82 = vld [vmem:[%s0 + $0x210] sm:$0xff]
  %v83 = vld [vmem:[%s0 + $0x218] sm:$0xff]
  %v84 = vld [vmem:[%s0 + $0x220] sm:$0xff]
  %v85 = vld [vmem:[%s0 + $0x228] sm:$0x1]
  %v86 = vld [vmem:[%s0 + $0x230] sm:$0xff]
  %v87 = vld [vmem:[%s0 + $0x238] sm:$0xff]
  %v88 = vld [vmem:[%s0 + $0x240] sm:$0xff]
  %v89 = vld [vmem:[%s0 + $0x248] sm:$0xff]
  %v90 = vld [vmem:[%s0 + $0x250] sm:$0xff]
  %v91 = vld [vmem:[%s0 + $0x258] sm:$0xff]
  %v92 = vld [vmem:[%s0 + $0x260] sm:$0x1]
  %v93 = vld [vmem:[%s0 + $0x268] sm:$0xff]
  %v94 = vld [vmem:[%s0 + $0x270] sm:$0xff]
  %v95 = vld [vmem:[%s0 + $0x278] sm:$0xff]
  %v96 = vld [vmem:[%s0 + $0x280] sm:$0xff]
  %v97 = vld [vmem:[%s0 + $0x288] sm:$0xff]
  %v98 = vld [vmem:[%s0 + $0x290] sm:$0xff]
  %v99 = vld [vmem:[%s0 + $0x298] sm:$0x1]
  %v100 = vld [vmem:[%s0 + $0x2a0] sm:$0xff]
  %v101 = vld [vmem:[%s0 + $0x2a8] sm:$0xff]
  %v102 = vld [vmem:[%s0 + $0x2b0] sm:$0xff]
  %v103 = vld [vmem:[%s0 + $0x2b8] sm:$0xff]
  %v104 = vld [vmem:[%s0 + $0x2c0] sm:$0xff]
  %v105 = vld [vmem:[%s0 + $0x2c8] sm:$0xff]
  %v106 = vld [vmem:[%s0 + $0x2d0] sm:$0x1]
  %v107 = vld [vmem:[%s0 + $0x2d8] sm:$0xff]
  %v108 = vld [vmem:[%s0 + $0x2e0] sm:$0xff]
  %v109 = vld [vmem:[%s0 + $0x2e8] sm:$0xff]
  %v110 = vld [vmem:[%s0 + $0x2f0] sm:$0xff]
  %v111 = vld [vmem:[%s0 + $0x2f8] sm:$0xff]
  %v112 = vld [vmem:[%s0 + $0x300] sm:$0xff]
  %v113 = vld [vmem:[%s0 + $0x308] sm:$0x1]
  %v114 = vld [vmem:[%s0 + $0x310] sm:$0xff]
  %v115 = vld [vmem:[%s0 + $0x318] sm:$0xff]
  %v116 = vld [vmem:[%s0 + $0x320] sm:$0xff]
  %v117 = vld [vmem:[%s0 + $0x328] sm:$0xff]
  %v118 = vld [vmem:[%s0 + $0x330] sm:$0xff]
  %v119 = vld [vmem:[%s0 + $0x338] sm:$0xff]
  %v120 = vld [vmem:[%s0 + $0x340] sm:$0x1]
  %v121 = vld [vmem:[%s0 + $0x348] sm:$0xff]
  %v122 = vld [vmem:[%s0 + $0x350] sm:$0xff]
  %v123 = vld [vmem:[%s0 + $0x358] sm:$0xff]
  %v124 = vld [vmem:[%s0 + $0x360] sm:$0xff]
  %v125 = vld [vmem:[%s0 + $0x368] sm:$0xff]
  %v126 = vld [vmem:[%s0 + $0x370] sm:$0xff]
  %v127 = vld [vmem:[%s0 + $0x378] sm:$0x1]
  %vm128 = vcmask 261120
  %v129 = vsel %vm128, %v16, -inf
  %v130 = vsel %vm128, %v17, -inf
  %v131 = vmax.f32 %v129, %v130
  %v132 = vsel %vm128, %v18, -inf
  %v133 = vmax.f32 %v131, %v132
  %v134 = vsel %vm128, %v19, -inf
  %v135 = vmax.f32 %v133, %v134
  %v136 = vsel %vm128, %v20, -inf
  %v137 = vmax.f32 %v135, %v136
  %v138 = vsel %vm128, %v21, -inf
  %v139 = vmax.f32 %v137, %v138
  %vm140 = vcmask 253952
  %v141 = vsel %vm140, %v22, -inf
  %v142 = vmax.f32 %v139, %v141
  %v143 = vrot.slane %v142, 4
  %v144 = vmax.f32 %v142, %v143
  %v145 = vrot.slane %v144, 2
  %v146 = vmax.f32 %v144, %v145
  %v147 = vrot.slane %v146, 1
  %v148 = vmax.f32 %v146, %v147
  %v149 = vsel %vm128, %v23, -inf
  %v150 = vsel %vm128, %v24, -inf
  %v151 = vmax.f32 %v149, %v150
  %v152 = vsel %vm128, %v25, -inf
  %v153 = vmax.f32 %v151, %v152
  %v154 = vsel %vm128, %v26, -inf
  %v155 = vmax.f32 %v153, %v154
  %v156 = vsel %vm128, %v27, -inf
  %v157 = vmax.f32 %v155, %v156
  %v158 = vsel %vm128, %v28, -inf
  %v159 = vmax.f32 %v157, %v158
  %v160 = vsel %vm140, %v29, -inf
  %v161 = vmax.f32 %v159, %v160
  %v162 = vrot.slane %v161, 4
  %v163 = vmax.f32 %v161, %v162
  %v164 = vrot.slane %v163, 2
  %v165 = vmax.f32 %v163, %v164
  %v166 = vrot.slane %v165, 1
  %v167 = vmax.f32 %v165, %v166
  %v168 = vsel %vm128, %v30, -inf
  %v169 = vsel %vm128, %v31, -inf
  %v170 = vmax.f32 %v168, %v169
  %v171 = vsel %vm128, %v32, -inf
  %v172 = vmax.f32 %v170, %v171
  %v173 = vsel %vm128, %v33, -inf
  %v174 = vmax.f32 %v172, %v173
  %v175 = vsel %vm128, %v34, -inf
  %v176 = vmax.f32 %v174, %v175
  %v177 = vsel %vm128, %v35, -inf
  %v178 = vmax.f32 %v176, %v177
  %v179 = vsel %vm140, %v36, -inf
  %v180 = vmax.f32 %v178, %v179
  %v181 = vrot.slane %v180, 4
  %v182 = vmax.f32 %v180, %v181
  %v183 = vrot.slane %v182, 2
  %v184 = vmax.f32 %v182, %v183
  %v185 = vrot.slane %v184, 1
  %v186 = vmax.f32 %v184, %v185
  %v187 = vsel %vm128, %v37, -inf
  %v188 = vsel %vm128, %v38, -inf
  %v189 = vmax.f32 %v187, %v188
  %v190 = vsel %vm128, %v39, -inf
  %v191 = vmax.f32 %v189, %v190
  %v192 = vsel %vm128, %v40, -inf
  %v193 = vmax.f32 %v191, %v192
  %v194 = vsel %vm128, %v41, -inf
  %v195 = vmax.f32 %v193, %v194
  %v196 = vsel %vm128, %v42, -inf
  %v197 = vmax.f32 %v195, %v196
  %v198 = vsel %vm140, %v43, -inf
  %v199 = vmax.f32 %v197, %v198
  %v200 = vrot.slane %v199, 4
  %v201 = vmax.f32 %v199, %v200
  %v202 = vrot.slane %v201, 2
  %v203 = vmax.f32 %v201, %v202
  %v204 = vrot.slane %v203, 1
  %v205 = vmax.f32 %v203, %v204
  %v206 = vsel %vm128, %v44, -inf
  %v207 = vsel %vm128, %v45, -inf
  %v208 = vmax.f32 %v206, %v207
  %v209 = vsel %vm128, %v46, -inf
  %v210 = vmax.f32 %v208, %v209
  %v211 = vsel %vm128, %v47, -inf
  %v212 = vmax.f32 %v210, %v211
  %v213 = vsel %vm128, %v48, -inf
  %v214 = vmax.f32 %v212, %v213
  %v215 = vsel %vm128, %v49, -inf
  %v216 = vmax.f32 %v214, %v215
  %v217 = vsel %vm140, %v50, -inf
  %v218 = vmax.f32 %v216, %v217
  %v219 = vrot.slane %v218, 4
  %v220 = vmax.f32 %v218, %v219
  %v221 = vrot.slane %v220, 2
  %v222 = vmax.f32 %v220, %v221
  %v223 = vrot.slane %v222, 1
  %v224 = vmax.f32 %v222, %v223
  %v225 = vsel %vm128, %v51, -inf
  %v226 = vsel %vm128, %v52, -inf
  %v227 = vmax.f32 %v225, %v226
  %v228 = vsel %vm128, %v53, -inf
  %v229 = vmax.f32 %v227, %v228
  %v230 = vsel %vm128, %v54, -inf
  %v231 = vmax.f32 %v229, %v230
  %v232 = vsel %vm128, %v55, -inf
  %v233 = vmax.f32 %v231, %v232
  %v234 = vsel %vm128, %v56, -inf
  %v235 = vmax.f32 %v233, %v234
  %v236 = vsel %vm140, %v57, -inf
  %v237 = vmax.f32 %v235, %v236
  %v238 = vrot.slane %v237, 4
  %v239 = vmax.f32 %v237, %v238
  %v240 = vrot.slane %v239, 2
  %v241 = vmax.f32 %v239, %v240
  %v242 = vrot.slane %v241, 1
  %v243 = vmax.f32 %v241, %v242
  %v244 = vsel %vm128, %v58, -inf
  %v245 = vsel %vm128, %v59, -inf
  %v246 = vmax.f32 %v244, %v245
  %v247 = vsel %vm128, %v60, -inf
  %v248 = vmax.f32 %v246, %v247
  %v249 = vsel %vm128, %v61, -inf
  %v250 = vmax.f32 %v248, %v249
  %v251 = vsel %vm128, %v62, -inf
  %v252 = vmax.f32 %v250, %v251
  %v253 = vsel %vm128, %v63, -inf
  %v254 = vmax.f32 %v252, %v253
  %v255 = vsel %vm140, %v64, -inf
  %v256 = vmax.f32 %v254, %v255
  %v257 = vrot.slane %v256, 4
  %v258 = vmax.f32 %v256, %v257
  %v259 = vrot.slane %v258, 2
  %v260 = vmax.f32 %v258, %v259
  %v261 = vrot.slane %v260, 1
  %v262 = vmax.f32 %v260, %v261
  %v263 = vsel %vm128, %v65, -inf
  %v264 = vsel %vm128, %v66, -inf
  %v265 = vmax.f32 %v263, %v264
  %v266 = vsel %vm128, %v67, -inf
  %v267 = vmax.f32 %v265, %v266
  %v268 = vsel %vm128, %v68, -inf
  %v269 = vmax.f32 %v267, %v268
  %v270 = vsel %vm128, %v69, -inf
  %v271 = vmax.f32 %v269, %v270
  %v272 = vsel %vm128, %v70, -inf
  %v273 = vmax.f32 %v271, %v272
  %v274 = vsel %vm140, %v71, -inf
  %v275 = vmax.f32 %v273, %v274
  %v276 = vrot.slane %v275, 4
  %v277 = vmax.f32 %v275, %v276
  %v278 = vrot.slane %v277, 2
  %v279 = vmax.f32 %v277, %v278
  %v280 = vrot.slane %v279, 1
  %v281 = vmax.f32 %v279, %v280
  %v282 = vsel %vm128, %v72, -inf
  %v283 = vsel %vm128, %v73, -inf
  %v284 = vmax.f32 %v282, %v283
  %v285 = vsel %vm128, %v74, -inf
  %v286 = vmax.f32 %v284, %v285
  %v287 = vsel %vm128, %v75, -inf
  %v288 = vmax.f32 %v286, %v287
  %v289 = vsel %vm128, %v76, -inf
  %v290 = vmax.f32 %v288, %v289
  %v291 = vsel %vm128, %v77, -inf
  %v292 = vmax.f32 %v290, %v291
  %v293 = vsel %vm140, %v78, -inf
  %v294 = vmax.f32 %v292, %v293
  %v295 = vrot.slane %v294, 4
  %v296 = vmax.f32 %v294, %v295
  %v297 = vrot.slane %v296, 2
  %v298 = vmax.f32 %v296, %v297
  %v299 = vrot.slane %v298, 1
  %v300 = vmax.f32 %v298, %v299
  %v301 = vsel %vm128, %v79, -inf
  %v302 = vsel %vm128, %v80, -inf
  %v303 = vmax.f32 %v301, %v302
  %v304 = vsel %vm128, %v81, -inf
  %v305 = vmax.f32 %v303, %v304
  %v306 = vsel %vm128, %v82, -inf
  %v307 = vmax.f32 %v305, %v306
  %v308 = vsel %vm128, %v83, -inf
  %v309 = vmax.f32 %v307, %v308
  %v310 = vsel %vm128, %v84, -inf
  %v311 = vmax.f32 %v309, %v310
  %v312 = vsel %vm140, %v85, -inf
  %v313 = vmax.f32 %v311, %v312
  %v314 = vrot.slane %v313, 4
  %v315 = vmax.f32 %v313, %v314
  %v316 = vrot.slane %v315, 2
  %v317 = vmax.f32 %v315, %v316
  %v318 = vrot.slane %v317, 1
  %v319 = vmax.f32 %v317, %v318
  %v320 = vsel %vm128, %v86, -inf
  %v321 = vsel %vm128, %v87, -inf
  %v322 = vmax.f32 %v320, %v321
  %v323 = vsel %vm128, %v88, -inf
  %v324 = vmax.f32 %v322, %v323
  %v325 = vsel %vm128, %v89, -inf
  %v326 = vmax.f32 %v324, %v325
  %v327 = vsel %vm128, %v90, -inf
  %v328 = vmax.f32 %v326, %v327
  %v329 = vsel %vm128, %v91, -inf
  %v330 = vmax.f32 %v328, %v329
  %v331 = vsel %vm140, %v92, -inf
  %v332 = vmax.f32 %v330, %v331
  %v333 = vrot.slane %v332, 4
  %v334 = vmax.f32 %v332, %v333
  %v335 = vrot.slane %v334, 2
  %v336 = vmax.f32 %v334, %v335
  %v337 = vrot.slane %v336, 1
  %v338 = vmax.f32 %v336, %v337
  %v339 = vsel %vm128, %v93, -inf
  %v340 = vsel %vm128, %v94, -inf
  %v341 = vmax.f32 %v339, %v340
  %v342 = vsel %vm128, %v95, -inf
  %v343 = vmax.f32 %v341, %v342
  %v344 = vsel %vm128, %v96, -inf
  %v345 = vmax.f32 %v343, %v344
  %v346 = vsel %vm128, %v97, -inf
  %v347 = vmax.f32 %v345, %v346
  %v348 = vsel %vm128, %v98, -inf
  %v349 = vmax.f32 %v347, %v348
  %v350 = vsel %vm140, %v99, -inf
  %v351 = vmax.f32 %v349, %v350
  %v352 = vrot.slane %v351, 4
  %v353 = vmax.f32 %v351, %v352
  %v354 = vrot.slane %v353, 2
  %v355 = vmax.f32 %v353, %v354
  %v356 = vrot.slane %v355, 1
  %v357 = vmax.f32 %v355, %v356
  %v358 = vsel %vm128, %v100, -inf
  %v359 = vsel %vm128, %v101, -inf
  %v360 = vmax.f32 %v358, %v359
  %v361 = vsel %vm128, %v102, -inf
  %v362 = vmax.f32 %v360, %v361
  %v363 = vsel %vm128, %v103, -inf
  %v364 = vmax.f32 %v362, %v363
  %v365 = vsel %vm128, %v104, -inf
  %v366 = vmax.f32 %v364, %v365
  %v367 = vsel %vm128, %v105, -inf
  %v368 = vmax.f32 %v366, %v367
  %v369 = vsel %vm140, %v106, -inf
  %v370 = vmax.f32 %v368, %v369
  %v371 = vrot.slane %v370, 4
  %v372 = vmax.f32 %v370, %v371
  %v373 = vrot.slane %v372, 2
  %v374 = vmax.f32 %v372, %v373
  %v375 = vrot.slane %v374, 1
  %v376 = vmax.f32 %v374, %v375
  %v377 = vsel %vm128, %v107, -inf
  %v378 = vsel %vm128, %v108, -inf
  %v379 = vmax.f32 %v377, %v378
  %v380 = vsel %vm128, %v109, -inf
  %v381 = vmax.f32 %v379, %v380
  %v382 = vsel %vm128, %v110, -inf
  %v383 = vmax.f32 %v381, %v382
  %v384 = vsel %vm128, %v111, -inf
  %v385 = vmax.f32 %v383, %v384
  %v386 = vsel %vm128, %v112, -inf
  %v387 = vmax.f32 %v385, %v386
  %v388 = vsel %vm140, %v113, -inf
  %v389 = vmax.f32 %v387, %v388
  %v390 = vrot.slane %v389, 4
  %v391 = vmax.f32 %v389, %v390
  %v392 = vrot.slane %v391, 2
  %v393 = vmax.f32 %v391, %v392
  %v394 = vrot.slane %v393, 1
  %v395 = vmax.f32 %v393, %v394
  %v396 = vsel %vm128, %v114, -inf
  %v397 = vsel %vm128, %v115, -inf
  %v398 = vmax.f32 %v396, %v397
  %v399 = vsel %vm128, %v116, -inf
  %v400 = vmax.f32 %v398, %v399
  %v401 = vsel %vm128, %v117, -inf
  %v402 = vmax.f32 %v400, %v401
  %v403 = vsel %vm128, %v118, -inf
  %v404 = vmax.f32 %v402, %v403
  %v405 = vsel %vm128, %v119, -inf
  %v406 = vmax.f32 %v404, %v405
  %v407 = vsel %vm140, %v120, -inf
  %v408 = vmax.f32 %v406, %v407
  %v409 = vrot.slane %v408, 4
  %v410 = vmax.f32 %v408, %v409
  %v411 = vrot.slane %v410, 2
  %v412 = vmax.f32 %v410, %v411
  %v413 = vrot.slane %v412, 1
  %v414 = vmax.f32 %v412, %v413
  %v415 = vsel %vm128, %v121, -inf
  %v416 = vsel %vm128, %v122, -inf
  %v417 = vmax.f32 %v415, %v416
  %v418 = vsel %vm128, %v123, -inf
  %v419 = vmax.f32 %v417, %v418
  %v420 = vsel %vm128, %v124, -inf
  %v421 = vmax.f32 %v419, %v420
  %v422 = vsel %vm128, %v125, -inf
  %v423 = vmax.f32 %v421, %v422
  %v424 = vsel %vm128, %v126, -inf
  %v425 = vmax.f32 %v423, %v424
  %v426 = vsel %vm140, %v127, -inf
  %v427 = vmax.f32 %v425, %v426
  %v428 = vrot.slane %v427, 4
  %v429 = vmax.f32 %v427, %v428
  %v430 = vrot.slane %v429, 2
  %v431 = vmax.f32 %v429, %v430
  %v432 = vrot.slane %v431, 1
  %v433 = vmax.f32 %v431, %v432
  %vm450 = vcmask 1041409
  %v451 = vsel %vm450, %v167, %v148
  %vm452 = vcmask 1042434
  %v453 = vsel %vm452, %v186, %v451
  %vm454 = vcmask 1043459
  %v455 = vsel %vm454, %v205, %v453
  %vm456 = vcmask 1044484
  %v457 = vsel %vm456, %v224, %v455
  %vm458 = vcmask 1045509
  %v459 = vsel %vm458, %v243, %v457
  %vm460 = vcmask 1046534
  %v461 = vsel %vm460, %v262, %v459
  %vm462 = vcmask 1047559
  %v463 = vsel %vm462, %v281, %v461
  %v464 = vsel %vm450, %v319, %v300
  %v465 = vsel %vm452, %v338, %v464
  %v466 = vsel %vm454, %v357, %v465
  %v467 = vsel %vm456, %v376, %v466
  %v468 = vsel %vm458, %v395, %v467
  %v469 = vsel %vm460, %v414, %v468
  %v470 = vsel %vm462, %v433, %v469
  %473 = vst.msk [vmem:[%s3] sm:$0xff] %vm128, %v463
  %474 = vst.msk [vmem:[%s3 + $0x8] sm:$0xff] %vm128, %v470
  %v475 = vsel %vm128, %v16, 0.0
  %476 = vadd.xlane.f32.xlu0 %v475
  %v477 = vpop.xlane.xlu0 %476
  %v478 = vsel %vm128, %v17, 0.0
  %479 = vadd.xlane.f32.xlu0 %v478
  %v480 = vpop.xlane.xlu0 %479
  %v481 = vsel %vm128, %v18, 0.0
  %482 = vadd.xlane.f32.xlu0 %v481
  %v483 = vpop.xlane.xlu0 %482
  %v484 = vsel %vm128, %v19, 0.0
  %485 = vadd.xlane.f32.xlu0 %v484
  %v486 = vpop.xlane.xlu0 %485
  %v487 = vsel %vm128, %v20, 0.0
  %488 = vadd.xlane.f32.xlu0 %v487
  %v489 = vpop.xlane.xlu0 %488
  %v490 = vsel %vm128, %v21, 0.0
  %491 = vadd.xlane.f32.xlu0 %v490
  %v492 = vpop.xlane.xlu0 %491
  %v493 = vsel %vm140, %v22, 0.0
  %494 = vadd.xlane.f32.xlu0 %v493
  %v495 = vpop.xlane.xlu0 %494
  %v496 = vsel %vm128, %v23, 0.0
  %497 = vadd.xlane.f32.xlu0 %v496
  %v498 = vpop.xlane.xlu0 %497
  %v499 = vsel %vm128, %v24, 0.0
  %500 = vadd.xlane.f32.xlu0 %v499
  %v501 = vpop.xlane.xlu0 %500
  %v502 = vsel %vm128, %v25, 0.0
  %503 = vadd.xlane.f32.xlu0 %v502
  %v504 = vpop.xlane.xlu0 %503
  %v505 = vsel %vm128, %v26, 0.0
  %506 = vadd.xlane.f32.xlu0 %v505
  %v507 = vpop.xlane.xlu0 %506
  %v508 = vsel %vm128, %v27, 0.0
  %509 = vadd.xlane.f32.xlu0 %v508
  %v510 = vpop.xlane.xlu0 %509
  %v511 = vsel %vm128, %v28, 0.0
  %512 = vadd.xlane.f32.xlu0 %v511
  %v513 = vpop.xlane.xlu0 %512
  %v514 = vsel %vm140, %v29, 0.0
  %515 = vadd.xlane.f32.xlu0 %v514
  %v516 = vpop.xlane.xlu0 %515
  %v517 = vsel %vm128, %v30, 0.0
  %518 = vadd.xlane.f32.xlu0 %v517
  %v519 = vpop.xlane.xlu0 %518
  %v520 = vsel %vm128, %v31, 0.0
  %521 = vadd.xlane.f32.xlu0 %v520
  %v522 = vpop.xlane.xlu0 %521
  %v523 = vsel %vm128, %v32, 0.0
  %524 = vadd.xlane.f32.xlu0 %v523
  %v525 = vpop.xlane.xlu0 %524
  %v526 = vsel %vm128, %v33, 0.0
  %527 = vadd.xlane.f32.xlu0 %v526
  %v528 = vpop.xlane.xlu0 %527
  %v529 = vsel %vm128, %v34, 0.0
  %530 = vadd.xlane.f32.xlu0 %v529
  %v531 = vpop.xlane.xlu0 %530
  %v532 = vsel %vm128, %v35, 0.0
  %533 = vadd.xlane.f32.xlu0 %v532
  %v534 = vpop.xlane.xlu0 %533
  %v535 = vsel %vm140, %v36, 0.0
  %536 = vadd.xlane.f32.xlu0 %v535
  %v537 = vpop.xlane.xlu0 %536
  %v538 = vsel %vm128, %v37, 0.0
  %539 = vadd.xlane.f32.xlu0 %v538
  %v540 = vpop.xlane.xlu0 %539
  %v541 = vsel %vm128, %v38, 0.0
  %542 = vadd.xlane.f32.xlu0 %v541
  %v543 = vpop.xlane.xlu0 %542
  %v544 = vsel %vm128, %v39, 0.0
  %545 = vadd.xlane.f32.xlu0 %v544
  %v546 = vpop.xlane.xlu0 %545
  %v547 = vsel %vm128, %v40, 0.0
  %548 = vadd.xlane.f32.xlu0 %v547
  %v549 = vpop.xlane.xlu0 %548
  %v550 = vsel %vm128, %v41, 0.0
  %551 = vadd.xlane.f32.xlu0 %v550
  %v552 = vpop.xlane.xlu0 %551
  %v553 = vsel %vm128, %v42, 0.0
  %554 = vadd.xlane.f32.xlu0 %v553
  %v555 = vpop.xlane.xlu0 %554
  %v556 = vsel %vm140, %v43, 0.0
  %557 = vadd.xlane.f32.xlu0 %v556
  %v558 = vpop.xlane.xlu0 %557
  %v559 = vsel %vm128, %v44, 0.0
  %560 = vadd.xlane.f32.xlu0 %v559
  %v561 = vpop.xlane.xlu0 %560
  %v562 = vsel %vm128, %v45, 0.0
  %563 = vadd.xlane.f32.xlu0 %v562
  %v564 = vpop.xlane.xlu0 %563
  %v565 = vsel %vm128, %v46, 0.0
  %566 = vadd.xlane.f32.xlu0 %v565
  %v567 = vpop.xlane.xlu0 %566
  %v568 = vsel %vm128, %v47, 0.0
  %569 = vadd.xlane.f32.xlu0 %v568
  %v570 = vpop.xlane.xlu0 %569
  %v571 = vsel %vm128, %v48, 0.0
  %572 = vadd.xlane.f32.xlu0 %v571
  %v573 = vpop.xlane.xlu0 %572
  %v574 = vsel %vm128, %v49, 0.0
  %575 = vadd.xlane.f32.xlu0 %v574
  %v576 = vpop.xlane.xlu0 %575
  %v577 = vsel %vm140, %v50, 0.0
  %578 = vadd.xlane.f32.xlu0 %v577
  %v579 = vpop.xlane.xlu0 %578
  %v580 = vsel %vm128, %v51, 0.0
  %581 = vadd.xlane.f32.xlu0 %v580
  %v582 = vpop.xlane.xlu0 %581
  %v583 = vsel %vm128, %v52, 0.0
  %584 = vadd.xlane.f32.xlu0 %v583
  %v585 = vpop.xlane.xlu0 %584
  %v586 = vsel %vm128, %v53, 0.0
  %587 = vadd.xlane.f32.xlu0 %v586
  %v588 = vpop.xlane.xlu0 %587
  %v589 = vsel %vm128, %v54, 0.0
  %590 = vadd.xlane.f32.xlu0 %v589
  %v591 = vpop.xlane.xlu0 %590
  %v592 = vsel %vm128, %v55, 0.0
  %593 = vadd.xlane.f32.xlu0 %v592
  %v594 = vpop.xlane.xlu0 %593
  %v595 = vsel %vm128, %v56, 0.0
  %596 = vadd.xlane.f32.xlu0 %v595
  %v597 = vpop.xlane.xlu0 %596
  %v598 = vsel %vm140, %v57, 0.0
  %599 = vadd.xlane.f32.xlu0 %v598
  %v600 = vpop.xlane.xlu0 %599
  %v601 = vsel %vm128, %v58, 0.0
  %602 = vadd.xlane.f32.xlu0 %v601
  %v603 = vpop.xlane.xlu0 %602
  %v604 = vsel %vm128, %v59, 0.0
  %605 = vadd.xlane.f32.xlu0 %v604
  %v606 = vpop.xlane.xlu0 %605
  %v607 = vsel %vm128, %v60, 0.0
  %608 = vadd.xlane.f32.xlu0 %v607
  %v609 = vpop.xlane.xlu0 %608
  %v610 = vsel %vm128, %v61, 0.0
  %611 = vadd.xlane.f32.xlu0 %v610
  %v612 = vpop.xlane.xlu0 %611
  %v613 = vsel %vm128, %v62, 0.0
  %614 = vadd.xlane.f32.xlu0 %v613
  %v615 = vpop.xlane.xlu0 %614
  %v616 = vsel %vm128, %v63, 0.0
  %617 = vadd.xlane.f32.xlu0 %v616
  %v618 = vpop.xlane.xlu0 %617
  %v619 = vsel %vm140, %v64, 0.0
  %620 = vadd.xlane.f32.xlu0 %v619
  %v621 = vpop.xlane.xlu0 %620
  %v622 = vsel %vm128, %v65, 0.0
  %623 = vadd.xlane.f32.xlu0 %v622
  %v624 = vpop.xlane.xlu0 %623
  %v625 = vsel %vm128, %v66, 0.0
  %626 = vadd.xlane.f32.xlu0 %v625
  %v627 = vpop.xlane.xlu0 %626
  %v628 = vsel %vm128, %v67, 0.0
  %629 = vadd.xlane.f32.xlu0 %v628
  %v630 = vpop.xlane.xlu0 %629
  %v631 = vsel %vm128, %v68, 0.0
  %632 = vadd.xlane.f32.xlu0 %v631
  %v633 = vpop.xlane.xlu0 %632
  %v634 = vsel %vm128, %v69, 0.0
  %635 = vadd.xlane.f32.xlu0 %v634
  %v636 = vpop.xlane.xlu0 %635
  %v637 = vsel %vm128, %v70, 0.0
  %638 = vadd.xlane.f32.xlu0 %v637
  %v639 = vpop.xlane.xlu0 %638
  %v640 = vsel %vm140, %v71, 0.0
  %641 = vadd.xlane.f32.xlu0 %v640
  %v642 = vpop.xlane.xlu0 %641
  %v643 = vsel %vm128, %v72, 0.0
  %644 = vadd.xlane.f32.xlu0 %v643
  %v645 = vpop.xlane.xlu0 %644
  %v646 = vsel %vm128, %v73, 0.0
  %647 = vadd.xlane.f32.xlu0 %v646
  %v648 = vpop.xlane.xlu0 %647
  %v649 = vsel %vm128, %v74, 0.0
  %650 = vadd.xlane.f32.xlu0 %v649
  %v651 = vpop.xlane.xlu0 %650
  %v652 = vsel %vm128, %v75, 0.0
  %653 = vadd.xlane.f32.xlu0 %v652
  %v654 = vpop.xlane.xlu0 %653
  %v655 = vsel %vm128, %v76, 0.0
  %656 = vadd.xlane.f32.xlu0 %v655
  %v657 = vpop.xlane.xlu0 %656
  %v658 = vsel %vm128, %v77, 0.0
  %659 = vadd.xlane.f32.xlu0 %v658
  %v660 = vpop.xlane.xlu0 %659
  %v661 = vsel %vm140, %v78, 0.0
  %662 = vadd.xlane.f32.xlu0 %v661
  %v663 = vpop.xlane.xlu0 %662
  %v664 = vsel %vm128, %v79, 0.0
  %665 = vadd.xlane.f32.xlu0 %v664
  %v666 = vpop.xlane.xlu0 %665
  %v667 = vsel %vm128, %v80, 0.0
  %668 = vadd.xlane.f32.xlu0 %v667
  %v669 = vpop.xlane.xlu0 %668
  %v670 = vsel %vm128, %v81, 0.0
  %671 = vadd.xlane.f32.xlu0 %v670
  %v672 = vpop.xlane.xlu0 %671
  %v673 = vsel %vm128, %v82, 0.0
  %674 = vadd.xlane.f32.xlu0 %v673
  %v675 = vpop.xlane.xlu0 %674
  %v676 = vsel %vm128, %v83, 0.0
  %677 = vadd.xlane.f32.xlu0 %v676
  %v678 = vpop.xlane.xlu0 %677
  %v679 = vsel %vm128, %v84, 0.0
  %680 = vadd.xlane.f32.xlu0 %v679
  %v681 = vpop.xlane.xlu0 %680
  %v682 = vsel %vm140, %v85, 0.0
  %683 = vadd.xlane.f32.xlu0 %v682
  %v684 = vpop.xlane.xlu0 %683
  %v685 = vsel %vm128, %v86, 0.0
  %686 = vadd.xlane.f32.xlu0 %v685
  %v687 = vpop.xlane.xlu0 %686
  %v688 = vsel %vm128, %v87, 0.0
  %689 = vadd.xlane.f32.xlu0 %v688
  %v690 = vpop.xlane.xlu0 %689
  %v691 = vsel %vm128, %v88, 0.0
  %692 = vadd.xlane.f32.xlu0 %v691
  %v693 = vpop.xlane.xlu0 %692
  %v694 = vsel %vm128, %v89, 0.0
  %695 = vadd.xlane.f32.xlu0 %v694
  %v696 = vpop.xlane.xlu0 %695
  %v697 = vsel %vm128, %v90, 0.0
  %698 = vadd.xlane.f32.xlu0 %v697
  %v699 = vpop.xlane.xlu0 %698
  %v700 = vsel %vm128, %v91, 0.0
  %701 = vadd.xlane.f32.xlu0 %v700
  %v702 = vpop.xlane.xlu0 %701
  %v703 = vsel %vm140, %v92, 0.0
  %704 = vadd.xlane.f32.xlu0 %v703
  %v705 = vpop.xlane.xlu0 %704
  %v706 = vsel %vm128, %v93, 0.0
  %707 = vadd.xlane.f32.xlu0 %v706
  %v708 = vpop.xlane.xlu0 %707
  %v709 = vsel %vm128, %v94, 0.0
  %710 = vadd.xlane.f32.xlu0 %v709
  %v711 = vpop.xlane.xlu0 %710
  %v712 = vsel %vm128, %v95, 0.0
  %713 = vadd.xlane.f32.xlu0 %v712
  %v714 = vpop.xlane.xlu0 %713
  %v715 = vsel %vm128, %v96, 0.0
  %716 = vadd.xlane.f32.xlu0 %v715
  %v717 = vpop.xlane.xlu0 %716
  %v718 = vsel %vm128, %v97, 0.0
  %719 = vadd.xlane.f32.xlu0 %v718
  %v720 = vpop.xlane.xlu0 %719
  %v721 = vsel %vm128, %v98, 0.0
  %722 = vadd.xlane.f32.xlu0 %v721
  %v723 = vpop.xlane.xlu0 %722
  %v724 = vsel %vm140, %v99, 0.0
  %725 = vadd.xlane.f32.xlu0 %v724
  %v726 = vpop.xlane.xlu0 %725
  %v727 = vsel %vm128, %v100, 0.0
  %728 = vadd.xlane.f32.xlu0 %v727
  %v729 = vpop.xlane.xlu0 %728
  %v730 = vsel %vm128, %v101, 0.0
  %731 = vadd.xlane.f32.xlu0 %v730
  %v732 = vpop.xlane.xlu0 %731
  %v733 = vsel %vm128, %v102, 0.0
  %734 = vadd.xlane.f32.xlu0 %v733
  %v735 = vpop.xlane.xlu0 %734
  %v736 = vsel %vm128, %v103, 0.0
  %737 = vadd.xlane.f32.xlu0 %v736
  %v738 = vpop.xlane.xlu0 %737
  %v739 = vsel %vm128, %v104, 0.0
  %740 = vadd.xlane.f32.xlu0 %v739
  %v741 = vpop.xlane.xlu0 %740
  %v742 = vsel %vm128, %v105, 0.0
  %743 = vadd.xlane.f32.xlu0 %v742
  %v744 = vpop.xlane.xlu0 %743
  %v745 = vsel %vm140, %v106, 0.0
  %746 = vadd.xlane.f32.xlu0 %v745
  %v747 = vpop.xlane.xlu0 %746
  %v748 = vsel %vm128, %v107, 0.0
  %749 = vadd.xlane.f32.xlu0 %v748
  %v750 = vpop.xlane.xlu0 %749
  %v751 = vsel %vm128, %v108, 0.0
  %752 = vadd.xlane.f32.xlu0 %v751
  %v753 = vpop.xlane.xlu0 %752
  %v754 = vsel %vm128, %v109, 0.0
  %755 = vadd.xlane.f32.xlu0 %v754
  %v756 = vpop.xlane.xlu0 %755
  %v757 = vsel %vm128, %v110, 0.0
  %758 = vadd.xlane.f32.xlu0 %v757
  %v759 = vpop.xlane.xlu0 %758
  %v760 = vsel %vm128, %v111, 0.0
  %761 = vadd.xlane.f32.xlu0 %v760
  %v762 = vpop.xlane.xlu0 %761
  %v763 = vsel %vm128, %v112, 0.0
  %764 = vadd.xlane.f32.xlu0 %v763
  %v765 = vpop.xlane.xlu0 %764
  %v766 = vsel %vm140, %v113, 0.0
  %767 = vadd.xlane.f32.xlu0 %v766
  %v768 = vpop.xlane.xlu0 %767
  %v769 = vsel %vm128, %v114, 0.0
  %770 = vadd.xlane.f32.xlu0 %v769
  %v771 = vpop.xlane.xlu0 %770
  %v772 = vsel %vm128, %v115, 0.0
  %773 = vadd.xlane.f32.xlu0 %v772
  %v774 = vpop.xlane.xlu0 %773
  %v775 = vsel %vm128, %v116, 0.0
  %776 = vadd.xlane.f32.xlu0 %v775
  %v777 = vpop.xlane.xlu0 %776
  %v778 = vsel %vm128, %v117, 0.0
  %779 = vadd.xlane.f32.xlu0 %v778
  %v780 = vpop.xlane.xlu0 %779
  %v781 = vsel %vm128, %v118, 0.0
  %782 = vadd.xlane.f32.xlu0 %v781
  %v783 = vpop.xlane.xlu0 %782
  %v784 = vsel %vm128, %v119, 0.0
  %785 = vadd.xlane.f32.xlu0 %v784
  %v786 = vpop.xlane.xlu0 %785
  %v787 = vsel %vm140, %v120, 0.0
  %788 = vadd.xlane.f32.xlu0 %v787
  %v789 = vpop.xlane.xlu0 %788
  %v790 = vsel %vm128, %v121, 0.0
  %791 = vadd.xlane.f32.xlu0 %v790
  %v792 = vpop.xlane.xlu0 %791
  %v793 = vsel %vm128, %v122, 0.0
  %794 = vadd.xlane.f32.xlu0 %v793
  %v795 = vpop.xlane.xlu0 %794
  %v796 = vsel %vm128, %v123, 0.0
  %797 = vadd.xlane.f32.xlu0 %v796
  %v798 = vpop.xlane.xlu0 %797
  %v799 = vsel %vm128, %v124, 0.0
  %800 = vadd.xlane.f32.xlu0 %v799
  %v801 = vpop.xlane.xlu0 %800
  %v802 = vsel %vm128, %v125, 0.0
  %803 = vadd.xlane.f32.xlu0 %v802
  %v804 = vpop.xlane.xlu0 %803
  %v805 = vsel %vm128, %v126, 0.0
  %806 = vadd.xlane.f32.xlu0 %v805
  %v807 = vpop.xlane.xlu0 %806
  %v808 = vsel %vm140, %v127, 0.0
  %809 = vadd.xlane.f32.xlu0 %v808
  %v810 = vpop.xlane.xlu0 %809
  %v811 = vrcp.pop 32.0
  %v812 = vmul.f32 %v477, %v811
  %v813 = vmul.f32 %v480, %v811
  %v814 = vmul.f32 %v483, %v811
  %v815 = vmul.f32 %v486, %v811
  %v816 = vmul.f32 %v489, %v811
  %v817 = vmul.f32 %v492, %v811
  %v818 = vmul.f32 %v495, %v811
  %v819 = vmul.f32 %v498, %v811
  %v820 = vmul.f32 %v501, %v811
  %v821 = vmul.f32 %v504, %v811
  %v822 = vmul.f32 %v507, %v811
  %v823 = vmul.f32 %v510, %v811
  %v824 = vmul.f32 %v513, %v811
  %v825 = vmul.f32 %v516, %v811
  %v826 = vmul.f32 %v519, %v811
  %v827 = vmul.f32 %v522, %v811
  %v828 = vmul.f32 %v525, %v811
  %v829 = vmul.f32 %v528, %v811
  %v830 = vmul.f32 %v531, %v811
  %v831 = vmul.f32 %v534, %v811
  %v832 = vmul.f32 %v537, %v811
  %v833 = vmul.f32 %v540, %v811
  %v834 = vmul.f32 %v543, %v811
  %v835 = vmul.f32 %v546, %v811
  %v836 = vmul.f32 %v549, %v811
  %v837 = vmul.f32 %v552, %v811
  %v838 = vmul.f32 %v555, %v811
  %v839 = vmul.f32 %v558, %v811
  %v840 = vmul.f32 %v561, %v811
  %v841 = vmul.f32 %v564, %v811
  %v842 = vmul.f32 %v567, %v811
  %v843 = vmul.f32 %v570, %v811
  %v844 = vmul.f32 %v573, %v811
  %v845 = vmul.f32 %v576, %v811
  %v846 = vmul.f32 %v579, %v811
  %v847 = vmul.f32 %v582, %v811
  %v848 = vmul.f32 %v585, %v811
  %v849 = vmul.f32 %v588, %v811
  %v850 = vmul.f32 %v591, %v811
  %v851 = vmul.f32 %v594, %v811
  %v852 = vmul.f32 %v597, %v811
  %v853 = vmul.f32 %v600, %v811
  %v854 = vmul.f32 %v603, %v811
  %v855 = vmul.f32 %v606, %v811
  %v856 = vmul.f32 %v609, %v811
  %v857 = vmul.f32 %v612, %v811
  %v858 = vmul.f32 %v615, %v811
  %v859 = vmul.f32 %v618, %v811
  %v860 = vmul.f32 %v621, %v811
  %v861 = vmul.f32 %v624, %v811
  %v862 = vmul.f32 %v627, %v811
  %v863 = vmul.f32 %v630, %v811
  %v864 = vmul.f32 %v633, %v811
  %v865 = vmul.f32 %v636, %v811
  %v866 = vmul.f32 %v639, %v811
  %v867 = vmul.f32 %v642, %v811
  %v868 = vmul.f32 %v645, %v811
  %v869 = vmul.f32 %v648, %v811
  %v870 = vmul.f32 %v651, %v811
  %v871 = vmul.f32 %v654, %v811
  %v872 = vmul.f32 %v657, %v811
  %v873 = vmul.f32 %v660, %v811
  %v874 = vmul.f32 %v663, %v811
  %v875 = vmul.f32 %v666, %v811
  %v876 = vmul.f32 %v669, %v811
  %v877 = vmul.f32 %v672, %v811
  %v878 = vmul.f32 %v675, %v811
  %v879 = vmul.f32 %v678, %v811
  %v880 = vmul.f32 %v681, %v811
  %v881 = vmul.f32 %v684, %v811
  %v882 = vmul.f32 %v687, %v811
  %v883 = vmul.f32 %v690, %v811
  %v884 = vmul.f32 %v693, %v811
  %v885 = vmul.f32 %v696, %v811
  %v886 = vmul.f32 %v699, %v811
  %v887 = vmul.f32 %v702, %v811
  %v888 = vmul.f32 %v705, %v811
  %v889 = vmul.f32 %v708, %v811
  %v890 = vmul.f32 %v711, %v811
  %v891 = vmul.f32 %v714, %v811
  %v892 = vmul.f32 %v717, %v811
  %v893 = vmul.f32 %v720, %v811
  %v894 = vmul.f32 %v723, %v811
  %v895 = vmul.f32 %v726, %v811
  %v896 = vmul.f32 %v729, %v811
  %v897 = vmul.f32 %v732, %v811
  %v898 = vmul.f32 %v735, %v811
  %v899 = vmul.f32 %v738, %v811
  %v900 = vmul.f32 %v741, %v811
  %v901 = vmul.f32 %v744, %v811
  %v902 = vmul.f32 %v747, %v811
  %v903 = vmul.f32 %v750, %v811
  %v904 = vmul.f32 %v753, %v811
  %v905 = vmul.f32 %v756, %v811
  %v906 = vmul.f32 %v759, %v811
  %v907 = vmul.f32 %v762, %v811
  %v908 = vmul.f32 %v765, %v811
  %v909 = vmul.f32 %v768, %v811
  %v910 = vmul.f32 %v771, %v811
  %v911 = vmul.f32 %v774, %v811
  %v912 = vmul.f32 %v777, %v811
  %v913 = vmul.f32 %v780, %v811
  %v914 = vmul.f32 %v783, %v811
  %v915 = vmul.f32 %v786, %v811
  %v916 = vmul.f32 %v789, %v811
  %v917 = vmul.f32 %v792, %v811
  %v918 = vmul.f32 %v795, %v811
  %v919 = vmul.f32 %v798, %v811
  %v920 = vmul.f32 %v801, %v811
  %v921 = vmul.f32 %v804, %v811
  %v922 = vmul.f32 %v807, %v811
  %v923 = vmul.f32 %v810, %v811
  %v924 = vsub.f32 %v16, %v812
  %v925 = vsub.f32 %v17, %v813
  %v926 = vsub.f32 %v18, %v814
  %v927 = vsub.f32 %v19, %v815
  %v928 = vsub.f32 %v20, %v816
  %v929 = vsub.f32 %v21, %v817
  %v930 = vsub.f32 %v22, %v818
  %v931 = vsub.f32 %v23, %v819
  %v932 = vsub.f32 %v24, %v820
  %v933 = vsub.f32 %v25, %v821
  %v934 = vsub.f32 %v26, %v822
  %v935 = vsub.f32 %v27, %v823
  %v936 = vsub.f32 %v28, %v824
  %v937 = vsub.f32 %v29, %v825
  %v938 = vsub.f32 %v30, %v826
  %v939 = vsub.f32 %v31, %v827
  %v940 = vsub.f32 %v32, %v828
  %v941 = vsub.f32 %v33, %v829
  %v942 = vsub.f32 %v34, %v830
  %v943 = vsub.f32 %v35, %v831
  %v944 = vsub.f32 %v36, %v832
  %v945 = vsub.f32 %v37, %v833
  %v946 = vsub.f32 %v38, %v834
  %v947 = vsub.f32 %v39, %v835
  %v948 = vsub.f32 %v40, %v836
  %v949 = vsub.f32 %v41, %v837
  %v950 = vsub.f32 %v42, %v838
  %v951 = vsub.f32 %v43, %v839
  %v952 = vsub.f32 %v44, %v840
  %v953 = vsub.f32 %v45, %v841
  %v954 = vsub.f32 %v46, %v842
  %v955 = vsub.f32 %v47, %v843
  %v956 = vsub.f32 %v48, %v844
  %v957 = vsub.f32 %v49, %v845
  %v958 = vsub.f32 %v50, %v846
  %v959 = vsub.f32 %v51, %v847
  %v960 = vsub.f32 %v52, %v848
  %v961 = vsub.f32 %v53, %v849
  %v962 = vsub.f32 %v54, %v850
  %v963 = vsub.f32 %v55, %v851
  %v964 = vsub.f32 %v56, %v852
  %v965 = vsub.f32 %v57, %v853
  %v966 = vsub.f32 %v58, %v854
  %v967 = vsub.f32 %v59, %v855
  %v968 = vsub.f32 %v60, %v856
  %v969 = vsub.f32 %v61, %v857
  %v970 = vsub.f32 %v62, %v858
  %v971 = vsub.f32 %v63, %v859
  %v972 = vsub.f32 %v64, %v860
  %v973 = vsub.f32 %v65, %v861
  %v974 = vsub.f32 %v66, %v862
  %v975 = vsub.f32 %v67, %v863
  %v976 = vsub.f32 %v68, %v864
  %v977 = vsub.f32 %v69, %v865
  %v978 = vsub.f32 %v70, %v866
  %v979 = vsub.f32 %v71, %v867
  %v980 = vsub.f32 %v72, %v868
  %v981 = vsub.f32 %v73, %v869
  %v982 = vsub.f32 %v74, %v870
  %v983 = vsub.f32 %v75, %v871
  %v984 = vsub.f32 %v76, %v872
  %v985 = vsub.f32 %v77, %v873
  %v986 = vsub.f32 %v78, %v874
  %v987 = vsub.f32 %v79, %v875
  %v988 = vsub.f32 %v80, %v876
  %v989 = vsub.f32 %v81, %v877
  %v990 = vsub.f32 %v82, %v878
  %v991 = vsub.f32 %v83, %v879
  %v992 = vsub.f32 %v84, %v880
  %v993 = vsub.f32 %v85, %v881
  %v994 = vsub.f32 %v86, %v882
  %v995 = vsub.f32 %v87, %v883
  %v996 = vsub.f32 %v88, %v884
  %v997 = vsub.f32 %v89, %v885
  %v998 = vsub.f32 %v90, %v886
  %v999 = vsub.f32 %v91, %v887
  %v1000 = vsub.f32 %v92, %v888
  %v1001 = vsub.f32 %v93, %v889
  %v1002 = vsub.f32 %v94, %v890
  %v1003 = vsub.f32 %v95, %v891
  %v1004 = vsub.f32 %v96, %v892
  %v1005 = vsub.f32 %v97, %v893
  %v1006 = vsub.f32 %v98, %v894
  %v1007 = vsub.f32 %v99, %v895
  %v1008 = vsub.f32 %v100, %v896
  %v1009 = vsub.f32 %v101, %v897
  %v1010 = vsub.f32 %v102, %v898
  %v1011 = vsub.f32 %v103, %v899
  %v1012 = vsub.f32 %v104, %v900
  %v1013 = vsub.f32 %v105, %v901
  %v1014 = vsub.f32 %v106, %v902
  %v1015 = vsub.f32 %v107, %v903
  %v1016 = vsub.f32 %v108, %v904
  %v1017 = vsub.f32 %v109, %v905
  %v1018 = vsub.f32 %v110, %v906
  %v1019 = vsub.f32 %v111, %v907
  %v1020 = vsub.f32 %v112, %v908
  %v1021 = vsub.f32 %v113, %v909
  %v1022 = vsub.f32 %v114, %v910
  %v1023 = vsub.f32 %v115, %v911
  %v1024 = vsub.f32 %v116, %v912
  %v1025 = vsub.f32 %v117, %v913
  %v1026 = vsub.f32 %v118, %v914
  %v1027 = vsub.f32 %v119, %v915
  %v1028 = vsub.f32 %v120, %v916
  %v1029 = vsub.f32 %v121, %v917
  %v1030 = vsub.f32 %v122, %v918
  %v1031 = vsub.f32 %v123, %v919
  %v1032 = vsub.f32 %v124, %v920
  %v1033 = vsub.f32 %v125, %v921
  %v1034 = vsub.f32 %v126, %v922
  %v1035 = vsub.f32 %v127, %v923
  %v1036 = vmul.f32 %v924, %v924
  %v1037 = vmul.f32 %v925, %v925
  %v1038 = vmul.f32 %v926, %v926
  %v1039 = vmul.f32 %v927, %v927
  %v1040 = vmul.f32 %v928, %v928
  %v1041 = vmul.f32 %v929, %v929
  %v1042 = vmul.f32 %v930, %v930
  %v1043 = vmul.f32 %v931, %v931
  %v1044 = vmul.f32 %v932, %v932
  %v1045 = vmul.f32 %v933, %v933
  %v1046 = vmul.f32 %v934, %v934
  %v1047 = vmul.f32 %v935, %v935
  %v1048 = vmul.f32 %v936, %v936
  %v1049 = vmul.f32 %v937, %v937
  %v1050 = vmul.f32 %v938, %v938
  %v1051 = vmul.f32 %v939, %v939
  %v1052 = vmul.f32 %v940, %v940
  %v1053 = vmul.f32 %v941, %v941
  %v1054 = vmul.f32 %v942, %v942
  %v1055 = vmul.f32 %v943, %v943
  %v1056 = vmul.f32 %v944, %v944
  %v1057 = vmul.f32 %v945, %v945
  %v1058 = vmul.f32 %v946, %v946
  %v1059 = vmul.f32 %v947, %v947
  %v1060 = vmul.f32 %v948, %v948
  %v1061 = vmul.f32 %v949, %v949
  %v1062 = vmul.f32 %v950, %v950
  %v1063 = vmul.f32 %v951, %v951
  %v1064 = vmul.f32 %v952, %v952
  %v1065 = vmul.f32 %v953, %v953
  %v1066 = vmul.f32 %v954, %v954
  %v1067 = vmul.f32 %v955, %v955
  %v1068 = vmul.f32 %v956, %v956
  %v1069 = vmul.f32 %v957, %v957
  %v1070 = vmul.f32 %v958, %v958
  %v1071 = vmul.f32 %v959, %v959
  %v1072 = vmul.f32 %v960, %v960
  %v1073 = vmul.f32 %v961, %v961
  %v1074 = vmul.f32 %v962, %v962
  %v1075 = vmul.f32 %v963, %v963
  %v1076 = vmul.f32 %v964, %v964
  %v1077 = vmul.f32 %v965, %v965
  %v1078 = vmul.f32 %v966, %v966
  %v1079 = vmul.f32 %v967, %v967
  %v1080 = vmul.f32 %v968, %v968
  %v1081 = vmul.f32 %v969, %v969
  %v1082 = vmul.f32 %v970, %v970
  %v1083 = vmul.f32 %v971, %v971
  %v1084 = vmul.f32 %v972, %v972
  %v1085 = vmul.f32 %v973, %v973
  %v1086 = vmul.f32 %v974, %v974
  %v1087 = vmul.f32 %v975, %v975
  %v1088 = vmul.f32 %v976, %v976
  %v1089 = vmul.f32 %v977, %v977
  %v1090 = vmul.f32 %v978, %v978
  %v1091 = vmul.f32 %v979, %v979
  %v1092 = vmul.f32 %v980, %v980
  %v1093 = vmul.f32 %v981, %v981
  %v1094 = vmul.f32 %v982, %v982
  %v1095 = vmul.f32 %v983, %v983
  %v1096 = vmul.f32 %v984, %v984
  %v1097 = vmul.f32 %v985, %v985
  %v1098 = vmul.f32 %v986, %v986
  %v1099 = vmul.f32 %v987, %v987
  %v1100 = vmul.f32 %v988, %v988
  %v1101 = vmul.f32 %v989, %v989
  %v1102 = vmul.f32 %v990, %v990
  %v1103 = vmul.f32 %v991, %v991
  %v1104 = vmul.f32 %v992, %v992
  %v1105 = vmul.f32 %v993, %v993
  %v1106 = vmul.f32 %v994, %v994
  %v1107 = vmul.f32 %v995, %v995
  %v1108 = vmul.f32 %v996, %v996
  %v1109 = vmul.f32 %v997, %v997
  %v1110 = vmul.f32 %v998, %v998
  %v1111 = vmul.f32 %v999, %v999
  %v1112 = vmul.f32 %v1000, %v1000
  %v1113 = vmul.f32 %v1001, %v1001
  %v1114 = vmul.f32 %v1002, %v1002
  %v1115 = vmul.f32 %v1003, %v1003
  %v1116 = vmul.f32 %v1004, %v1004
  %v1117 = vmul.f32 %v1005, %v1005
  %v1118 = vmul.f32 %v1006, %v1006
  %v1119 = vmul.f32 %v1007, %v1007
  %v1120 = vmul.f32 %v1008, %v1008
  %v1121 = vmul.f32 %v1009, %v1009
  %v1122 = vmul.f32 %v1010, %v1010
  %v1123 = vmul.f32 %v1011, %v1011
  %v1124 = vmul.f32 %v1012, %v1012
  %v1125 = vmul.f32 %v1013, %v1013
  %v1126 = vmul.f32 %v1014, %v1014
  %v1127 = vmul.f32 %v1015, %v1015
  %v1128 = vmul.f32 %v1016, %v1016
  %v1129 = vmul.f32 %v1017, %v1017
  %v1130 = vmul.f32 %v1018, %v1018
  %v1131 = vmul.f32 %v1019, %v1019
  %v1132 = vmul.f32 %v1020, %v1020
  %v1133 = vmul.f32 %v1021, %v1021
  %v1134 = vmul.f32 %v1022, %v1022
  %v1135 = vmul.f32 %v1023, %v1023
  %v1136 = vmul.f32 %v1024, %v1024
  %v1137 = vmul.f32 %v1025, %v1025
  %v1138 = vmul.f32 %v1026, %v1026
  %v1139 = vmul.f32 %v1027, %v1027
  %v1140 = vmul.f32 %v1028, %v1028
  %v1141 = vmul.f32 %v1029, %v1029
  %v1142 = vmul.f32 %v1030, %v1030
  %v1143 = vmul.f32 %v1031, %v1031
  %v1144 = vmul.f32 %v1032, %v1032
  %v1145 = vmul.f32 %v1033, %v1033
  %v1146 = vmul.f32 %v1034, %v1034
  %v1147 = vmul.f32 %v1035, %v1035
  %v1148 = vsel %vm128, %v1036, 0.0
  %1149 = vadd.xlane.f32.xlu0 %v1148
  %v1150 = vpop.xlane.xlu0 %1149
  %v1151 = vsel %vm128, %v1037, 0.0
  %1152 = vadd.xlane.f32.xlu0 %v1151
  %v1153 = vpop.xlane.xlu0 %1152
  %v1154 = vsel %vm128, %v1038, 0.0
  %1155 = vadd.xlane.f32.xlu0 %v1154
  %v1156 = vpop.xlane.xlu0 %1155
  %v1157 = vsel %vm128, %v1039, 0.0
  %1158 = vadd.xlane.f32.xlu0 %v1157
  %v1159 = vpop.xlane.xlu0 %1158
  %v1160 = vsel %vm128, %v1040, 0.0
  %1161 = vadd.xlane.f32.xlu0 %v1160
  %v1162 = vpop.xlane.xlu0 %1161
  %v1163 = vsel %vm128, %v1041, 0.0
  %1164 = vadd.xlane.f32.xlu0 %v1163
  %v1165 = vpop.xlane.xlu0 %1164
  %v1166 = vsel %vm140, %v1042, 0.0
  %1167 = vadd.xlane.f32.xlu0 %v1166
  %v1168 = vpop.xlane.xlu0 %1167
  %v1169 = vsel %vm128, %v1043, 0.0
  %1170 = vadd.xlane.f32.xlu0 %v1169
  %v1171 = vpop.xlane.xlu0 %1170
  %v1172 = vsel %vm128, %v1044, 0.0
  %1173 = vadd.xlane.f32.xlu0 %v1172
  %v1174 = vpop.xlane.xlu0 %1173
  %v1175 = vsel %vm128, %v1045, 0.0
  %1176 = vadd.xlane.f32.xlu0 %v1175
  %v1177 = vpop.xlane.xlu0 %1176
  %v1178 = vsel %vm128, %v1046, 0.0
  %1179 = vadd.xlane.f32.xlu0 %v1178
  %v1180 = vpop.xlane.xlu0 %1179
  %v1181 = vsel %vm128, %v1047, 0.0
  %1182 = vadd.xlane.f32.xlu0 %v1181
  %v1183 = vpop.xlane.xlu0 %1182
  %v1184 = vsel %vm128, %v1048, 0.0
  %1185 = vadd.xlane.f32.xlu0 %v1184
  %v1186 = vpop.xlane.xlu0 %1185
  %v1187 = vsel %vm140, %v1049, 0.0
  %1188 = vadd.xlane.f32.xlu0 %v1187
  %v1189 = vpop.xlane.xlu0 %1188
  %v1190 = vsel %vm128, %v1050, 0.0
  %1191 = vadd.xlane.f32.xlu0 %v1190
  %v1192 = vpop.xlane.xlu0 %1191
  %v1193 = vsel %vm128, %v1051, 0.0
  %1194 = vadd.xlane.f32.xlu0 %v1193
  %v1195 = vpop.xlane.xlu0 %1194
  %v1196 = vsel %vm128, %v1052, 0.0
  %1197 = vadd.xlane.f32.xlu0 %v1196
  %v1198 = vpop.xlane.xlu0 %1197
  %v1199 = vsel %vm128, %v1053, 0.0
  %1200 = vadd.xlane.f32.xlu0 %v1199
  %v1201 = vpop.xlane.xlu0 %1200
  %v1202 = vsel %vm128, %v1054, 0.0
  %1203 = vadd.xlane.f32.xlu0 %v1202
  %v1204 = vpop.xlane.xlu0 %1203
  %v1205 = vsel %vm128, %v1055, 0.0
  %1206 = vadd.xlane.f32.xlu0 %v1205
  %v1207 = vpop.xlane.xlu0 %1206
  %v1208 = vsel %vm140, %v1056, 0.0
  %1209 = vadd.xlane.f32.xlu0 %v1208
  %v1210 = vpop.xlane.xlu0 %1209
  %v1211 = vsel %vm128, %v1057, 0.0
  %1212 = vadd.xlane.f32.xlu0 %v1211
  %v1213 = vpop.xlane.xlu0 %1212
  %v1214 = vsel %vm128, %v1058, 0.0
  %1215 = vadd.xlane.f32.xlu0 %v1214
  %v1216 = vpop.xlane.xlu0 %1215
  %v1217 = vsel %vm128, %v1059, 0.0
  %1218 = vadd.xlane.f32.xlu0 %v1217
  %v1219 = vpop.xlane.xlu0 %1218
  %v1220 = vsel %vm128, %v1060, 0.0
  %1221 = vadd.xlane.f32.xlu0 %v1220
  %v1222 = vpop.xlane.xlu0 %1221
  %v1223 = vsel %vm128, %v1061, 0.0
  %1224 = vadd.xlane.f32.xlu0 %v1223
  %v1225 = vpop.xlane.xlu0 %1224
  %v1226 = vsel %vm128, %v1062, 0.0
  %1227 = vadd.xlane.f32.xlu0 %v1226
  %v1228 = vpop.xlane.xlu0 %1227
  %v1229 = vsel %vm140, %v1063, 0.0
  %1230 = vadd.xlane.f32.xlu0 %v1229
  %v1231 = vpop.xlane.xlu0 %1230
  %v1232 = vsel %vm128, %v1064, 0.0
  %1233 = vadd.xlane.f32.xlu0 %v1232
  %v1234 = vpop.xlane.xlu0 %1233
  %v1235 = vsel %vm128, %v1065, 0.0
  %1236 = vadd.xlane.f32.xlu0 %v1235
  %v1237 = vpop.xlane.xlu0 %1236
  %v1238 = vsel %vm128, %v1066, 0.0
  %1239 = vadd.xlane.f32.xlu0 %v1238
  %v1240 = vpop.xlane.xlu0 %1239
  %v1241 = vsel %vm128, %v1067, 0.0
  %1242 = vadd.xlane.f32.xlu0 %v1241
  %v1243 = vpop.xlane.xlu0 %1242
  %v1244 = vsel %vm128, %v1068, 0.0
  %1245 = vadd.xlane.f32.xlu0 %v1244
  %v1246 = vpop.xlane.xlu0 %1245
  %v1247 = vsel %vm128, %v1069, 0.0
  %1248 = vadd.xlane.f32.xlu0 %v1247
  %v1249 = vpop.xlane.xlu0 %1248
  %v1250 = vsel %vm140, %v1070, 0.0
  %1251 = vadd.xlane.f32.xlu0 %v1250
  %v1252 = vpop.xlane.xlu0 %1251
  %v1253 = vsel %vm128, %v1071, 0.0
  %1254 = vadd.xlane.f32.xlu0 %v1253
  %v1255 = vpop.xlane.xlu0 %1254
  %v1256 = vsel %vm128, %v1072, 0.0
  %1257 = vadd.xlane.f32.xlu0 %v1256
  %v1258 = vpop.xlane.xlu0 %1257
  %v1259 = vsel %vm128, %v1073, 0.0
  %1260 = vadd.xlane.f32.xlu0 %v1259
  %v1261 = vpop.xlane.xlu0 %1260
  %v1262 = vsel %vm128, %v1074, 0.0
  %1263 = vadd.xlane.f32.xlu0 %v1262
  %v1264 = vpop.xlane.xlu0 %1263
  %v1265 = vsel %vm128, %v1075, 0.0
  %1266 = vadd.xlane.f32.xlu0 %v1265
  %v1267 = vpop.xlane.xlu0 %1266
  %v1268 = vsel %vm128, %v1076, 0.0
  %1269 = vadd.xlane.f32.xlu0 %v1268
  %v1270 = vpop.xlane.xlu0 %1269
  %v1271 = vsel %vm140, %v1077, 0.0
  %1272 = vadd.xlane.f32.xlu0 %v1271
  %v1273 = vpop.xlane.xlu0 %1272
  %v1274 = vsel %vm128, %v1078, 0.0
  %1275 = vadd.xlane.f32.xlu0 %v1274
  %v1276 = vpop.xlane.xlu0 %1275
  %v1277 = vsel %vm128, %v1079, 0.0
  %1278 = vadd.xlane.f32.xlu0 %v1277
  %v1279 = vpop.xlane.xlu0 %1278
  %v1280 = vsel %vm128, %v1080, 0.0
  %1281 = vadd.xlane.f32.xlu0 %v1280
  %v1282 = vpop.xlane.xlu0 %1281
  %v1283 = vsel %vm128, %v1081, 0.0
  %1284 = vadd.xlane.f32.xlu0 %v1283
  %v1285 = vpop.xlane.xlu0 %1284
  %v1286 = vsel %vm128, %v1082, 0.0
  %1287 = vadd.xlane.f32.xlu0 %v1286
  %v1288 = vpop.xlane.xlu0 %1287
  %v1289 = vsel %vm128, %v1083, 0.0
  %1290 = vadd.xlane.f32.xlu0 %v1289
  %v1291 = vpop.xlane.xlu0 %1290
  %v1292 = vsel %vm140, %v1084, 0.0
  %1293 = vadd.xlane.f32.xlu0 %v1292
  %v1294 = vpop.xlane.xlu0 %1293
  %v1295 = vsel %vm128, %v1085, 0.0
  %1296 = vadd.xlane.f32.xlu0 %v1295
  %v1297 = vpop.xlane.xlu0 %1296
  %v1298 = vsel %vm128, %v1086, 0.0
  %1299 = vadd.xlane.f32.xlu0 %v1298
  %v1300 = vpop.xlane.xlu0 %1299
  %v1301 = vsel %vm128, %v1087, 0.0
  %1302 = vadd.xlane.f32.xlu0 %v1301
  %v1303 = vpop.xlane.xlu0 %1302
  %v1304 = vsel %vm128, %v1088, 0.0
  %1305 = vadd.xlane.f32.xlu0 %v1304
  %v1306 = vpop.xlane.xlu0 %1305
  %v1307 = vsel %vm128, %v1089, 0.0
  %1308 = vadd.xlane.f32.xlu0 %v1307
  %v1309 = vpop.xlane.xlu0 %1308
  %v1310 = vsel %vm128, %v1090, 0.0
  %1311 = vadd.xlane.f32.xlu0 %v1310
  %v1312 = vpop.xlane.xlu0 %1311
  %v1313 = vsel %vm140, %v1091, 0.0
  %1314 = vadd.xlane.f32.xlu0 %v1313
  %v1315 = vpop.xlane.xlu0 %1314
  %v1316 = vsel %vm128, %v1092, 0.0
  %1317 = vadd.xlane.f32.xlu0 %v1316
  %v1318 = vpop.xlane.xlu0 %1317
  %v1319 = vsel %vm128, %v1093, 0.0
  %1320 = vadd.xlane.f32.xlu0 %v1319
  %v1321 = vpop.xlane.xlu0 %1320
  %v1322 = vsel %vm128, %v1094, 0.0
  %1323 = vadd.xlane.f32.xlu0 %v1322
  %v1324 = vpop.xlane.xlu0 %1323
  %v1325 = vsel %vm128, %v1095, 0.0
  %1326 = vadd.xlane.f32.xlu0 %v1325
  %v1327 = vpop.xlane.xlu0 %1326
  %v1328 = vsel %vm128, %v1096, 0.0
  %1329 = vadd.xlane.f32.xlu0 %v1328
  %v1330 = vpop.xlane.xlu0 %1329
  %v1331 = vsel %vm128, %v1097, 0.0
  %1332 = vadd.xlane.f32.xlu0 %v1331
  %v1333 = vpop.xlane.xlu0 %1332
  %v1334 = vsel %vm140, %v1098, 0.0
  %1335 = vadd.xlane.f32.xlu0 %v1334
  %v1336 = vpop.xlane.xlu0 %1335
  %v1337 = vsel %vm128, %v1099, 0.0
  %1338 = vadd.xlane.f32.xlu0 %v1337
  %v1339 = vpop.xlane.xlu0 %1338
  %v1340 = vsel %vm128, %v1100, 0.0
  %1341 = vadd.xlane.f32.xlu0 %v1340
  %v1342 = vpop.xlane.xlu0 %1341
  %v1343 = vsel %vm128, %v1101, 0.0
  %1344 = vadd.xlane.f32.xlu0 %v1343
  %v1345 = vpop.xlane.xlu0 %1344
  %v1346 = vsel %vm128, %v1102, 0.0
  %1347 = vadd.xlane.f32.xlu0 %v1346
  %v1348 = vpop.xlane.xlu0 %1347
  %v1349 = vsel %vm128, %v1103, 0.0
  %1350 = vadd.xlane.f32.xlu0 %v1349
  %v1351 = vpop.xlane.xlu0 %1350
  %v1352 = vsel %vm128, %v1104, 0.0
  %1353 = vadd.xlane.f32.xlu0 %v1352
  %v1354 = vpop.xlane.xlu0 %1353
  %v1355 = vsel %vm140, %v1105, 0.0
  %1356 = vadd.xlane.f32.xlu0 %v1355
  %v1357 = vpop.xlane.xlu0 %1356
  %v1358 = vsel %vm128, %v1106, 0.0
  %1359 = vadd.xlane.f32.xlu0 %v1358
  %v1360 = vpop.xlane.xlu0 %1359
  %v1361 = vsel %vm128, %v1107, 0.0
  %1362 = vadd.xlane.f32.xlu0 %v1361
  %v1363 = vpop.xlane.xlu0 %1362
  %v1364 = vsel %vm128, %v1108, 0.0
  %1365 = vadd.xlane.f32.xlu0 %v1364
  %v1366 = vpop.xlane.xlu0 %1365
  %v1367 = vsel %vm128, %v1109, 0.0
  %1368 = vadd.xlane.f32.xlu0 %v1367
  %v1369 = vpop.xlane.xlu0 %1368
  %v1370 = vsel %vm128, %v1110, 0.0
  %1371 = vadd.xlane.f32.xlu0 %v1370
  %v1372 = vpop.xlane.xlu0 %1371
  %v1373 = vsel %vm128, %v1111, 0.0
  %1374 = vadd.xlane.f32.xlu0 %v1373
  %v1375 = vpop.xlane.xlu0 %1374
  %v1376 = vsel %vm140, %v1112, 0.0
  %1377 = vadd.xlane.f32.xlu0 %v1376
  %v1378 = vpop.xlane.xlu0 %1377
  %v1379 = vsel %vm128, %v1113, 0.0
  %1380 = vadd.xlane.f32.xlu0 %v1379
  %v1381 = vpop.xlane.xlu0 %1380
  %v1382 = vsel %vm128, %v1114, 0.0
  %1383 = vadd.xlane.f32.xlu0 %v1382
  %v1384 = vpop.xlane.xlu0 %1383
  %v1385 = vsel %vm128, %v1115, 0.0
  %1386 = vadd.xlane.f32.xlu0 %v1385
  %v1387 = vpop.xlane.xlu0 %1386
  %v1388 = vsel %vm128, %v1116, 0.0
  %1389 = vadd.xlane.f32.xlu0 %v1388
  %v1390 = vpop.xlane.xlu0 %1389
  %v1391 = vsel %vm128, %v1117, 0.0
  %1392 = vadd.xlane.f32.xlu0 %v1391
  %v1393 = vpop.xlane.xlu0 %1392
  %v1394 = vsel %vm128, %v1118, 0.0
  %1395 = vadd.xlane.f32.xlu0 %v1394
  %v1396 = vpop.xlane.xlu0 %1395
  %v1397 = vsel %vm140, %v1119, 0.0
  %1398 = vadd.xlane.f32.xlu0 %v1397
  %v1399 = vpop.xlane.xlu0 %1398
  %v1400 = vsel %vm128, %v1120, 0.0
  %1401 = vadd.xlane.f32.xlu0 %v1400
  %v1402 = vpop.xlane.xlu0 %1401
  %v1403 = vsel %vm128, %v1121, 0.0
  %1404 = vadd.xlane.f32.xlu0 %v1403
  %v1405 = vpop.xlane.xlu0 %1404
  %v1406 = vsel %vm128, %v1122, 0.0
  %1407 = vadd.xlane.f32.xlu0 %v1406
  %v1408 = vpop.xlane.xlu0 %1407
  %v1409 = vsel %vm128, %v1123, 0.0
  %1410 = vadd.xlane.f32.xlu0 %v1409
  %v1411 = vpop.xlane.xlu0 %1410
  %v1412 = vsel %vm128, %v1124, 0.0
  %1413 = vadd.xlane.f32.xlu0 %v1412
  %v1414 = vpop.xlane.xlu0 %1413
  %v1415 = vsel %vm128, %v1125, 0.0
  %1416 = vadd.xlane.f32.xlu0 %v1415
  %v1417 = vpop.xlane.xlu0 %1416
  %v1418 = vsel %vm140, %v1126, 0.0
  %1419 = vadd.xlane.f32.xlu0 %v1418
  %v1420 = vpop.xlane.xlu0 %1419
  %v1421 = vsel %vm128, %v1127, 0.0
  %1422 = vadd.xlane.f32.xlu0 %v1421
  %v1423 = vpop.xlane.xlu0 %1422
  %v1424 = vsel %vm128, %v1128, 0.0
  %1425 = vadd.xlane.f32.xlu0 %v1424
  %v1426 = vpop.xlane.xlu0 %1425
  %v1427 = vsel %vm128, %v1129, 0.0
  %1428 = vadd.xlane.f32.xlu0 %v1427
  %v1429 = vpop.xlane.xlu0 %1428
  %v1430 = vsel %vm128, %v1130, 0.0
  %1431 = vadd.xlane.f32.xlu0 %v1430
  %v1432 = vpop.xlane.xlu0 %1431
  %v1433 = vsel %vm128, %v1131, 0.0
  %1434 = vadd.xlane.f32.xlu0 %v1433
  %v1435 = vpop.xlane.xlu0 %1434
  %v1436 = vsel %vm128, %v1132, 0.0
  %1437 = vadd.xlane.f32.xlu0 %v1436
  %v1438 = vpop.xlane.xlu0 %1437
  %v1439 = vsel %vm140, %v1133, 0.0
  %1440 = vadd.xlane.f32.xlu0 %v1439
  %v1441 = vpop.xlane.xlu0 %1440
  %v1442 = vsel %vm128, %v1134, 0.0
  %1443 = vadd.xlane.f32.xlu0 %v1442
  %v1444 = vpop.xlane.xlu0 %1443
  %v1445 = vsel %vm128, %v1135, 0.0
  %1446 = vadd.xlane.f32.xlu0 %v1445
  %v1447 = vpop.xlane.xlu0 %1446
  %v1448 = vsel %vm128, %v1136, 0.0
  %1449 = vadd.xlane.f32.xlu0 %v1448
  %v1450 = vpop.xlane.xlu0 %1449
  %v1451 = vsel %vm128, %v1137, 0.0
  %1452 = vadd.xlane.f32.xlu0 %v1451
  %v1453 = vpop.xlane.xlu0 %1452
  %v1454 = vsel %vm128, %v1138, 0.0
  %1455 = vadd.xlane.f32.xlu0 %v1454
  %v1456 = vpop.xlane.xlu0 %1455
  %v1457 = vsel %vm128, %v1139, 0.0
  %1458 = vadd.xlane.f32.xlu0 %v1457
  %v1459 = vpop.xlane.xlu0 %1458
  %v1460 = vsel %vm140, %v1140, 0.0
  %1461 = vadd.xlane.f32.xlu0 %v1460
  %v1462 = vpop.xlane.xlu0 %1461
  %v1463 = vsel %vm128, %v1141, 0.0
  %1464 = vadd.xlane.f32.xlu0 %v1463
  %v1465 = vpop.xlane.xlu0 %1464
  %v1466 = vsel %vm128, %v1142, 0.0
  %1467 = vadd.xlane.f32.xlu0 %v1466
  %v1468 = vpop.xlane.xlu0 %1467
  %v1469 = vsel %vm128, %v1143, 0.0
  %1470 = vadd.xlane.f32.xlu0 %v1469
  %v1471 = vpop.xlane.xlu0 %1470
  %v1472 = vsel %vm128, %v1144, 0.0
  %1473 = vadd.xlane.f32.xlu0 %v1472
  %v1474 = vpop.xlane.xlu0 %1473
  %v1475 = vsel %vm128, %v1145, 0.0
  %1476 = vadd.xlane.f32.xlu0 %v1475
  %v1477 = vpop.xlane.xlu0 %1476
  %v1478 = vsel %vm128, %v1146, 0.0
  %1479 = vadd.xlane.f32.xlu0 %v1478
  %v1480 = vpop.xlane.xlu0 %1479
  %v1481 = vsel %vm140, %v1147, 0.0
  %1482 = vadd.xlane.f32.xlu0 %v1481
  %v1483 = vpop.xlane.xlu0 %1482
  %v1484 = vmul.f32 %v1150, %v811
  %v1485 = vmul.f32 %v1153, %v811
  %v1486 = vmul.f32 %v1156, %v811
  %v1487 = vmul.f32 %v1159, %v811
  %v1488 = vmul.f32 %v1162, %v811
  %v1489 = vmul.f32 %v1165, %v811
  %v1490 = vmul.f32 %v1168, %v811
  %v1491 = vmul.f32 %v1171, %v811
  %v1492 = vmul.f32 %v1174, %v811
  %v1493 = vmul.f32 %v1177, %v811
  %v1494 = vmul.f32 %v1180, %v811
  %v1495 = vmul.f32 %v1183, %v811
  %v1496 = vmul.f32 %v1186, %v811
  %v1497 = vmul.f32 %v1189, %v811
  %v1498 = vmul.f32 %v1192, %v811
  %v1499 = vmul.f32 %v1195, %v811
  %v1500 = vmul.f32 %v1198, %v811
  %v1501 = vmul.f32 %v1201, %v811
  %v1502 = vmul.f32 %v1204, %v811
  %v1503 = vmul.f32 %v1207, %v811
  %v1504 = vmul.f32 %v1210, %v811
  %v1505 = vmul.f32 %v1213, %v811
  %v1506 = vmul.f32 %v1216, %v811
  %v1507 = vmul.f32 %v1219, %v811
  %v1508 = vmul.f32 %v1222, %v811
  %v1509 = vmul.f32 %v1225, %v811
  %v1510 = vmul.f32 %v1228, %v811
  %v1511 = vmul.f32 %v1231, %v811
  %v1512 = vmul.f32 %v1234, %v811
  %v1513 = vmul.f32 %v1237, %v811
  %v1514 = vmul.f32 %v1240, %v811
  %v1515 = vmul.f32 %v1243, %v811
  %v1516 = vmul.f32 %v1246, %v811
  %v1517 = vmul.f32 %v1249, %v811
  %v1518 = vmul.f32 %v1252, %v811
  %v1519 = vmul.f32 %v1255, %v811
  %v1520 = vmul.f32 %v1258, %v811
  %v1521 = vmul.f32 %v1261, %v811
  %v1522 = vmul.f32 %v1264, %v811
  %v1523 = vmul.f32 %v1267, %v811
  %v1524 = vmul.f32 %v1270, %v811
  %v1525 = vmul.f32 %v1273, %v811
  %v1526 = vmul.f32 %v1276, %v811
  %v1527 = vmul.f32 %v1279, %v811
  %v1528 = vmul.f32 %v1282, %v811
  %v1529 = vmul.f32 %v1285, %v811
  %v1530 = vmul.f32 %v1288, %v811
  %v1531 = vmul.f32 %v1291, %v811
  %v1532 = vmul.f32 %v1294, %v811
  %v1533 = vmul.f32 %v1297, %v811
  %v1534 = vmul.f32 %v1300, %v811
  %v1535 = vmul.f32 %v1303, %v811
  %v1536 = vmul.f32 %v1306, %v811
  %v1537 = vmul.f32 %v1309, %v811
  %v1538 = vmul.f32 %v1312, %v811
  %v1539 = vmul.f32 %v1315, %v811
  %v1540 = vmul.f32 %v1318, %v811
  %v1541 = vmul.f32 %v1321, %v811
  %v1542 = vmul.f32 %v1324, %v811
  %v1543 = vmul.f32 %v1327, %v811
  %v1544 = vmul.f32 %v1330, %v811
  %v1545 = vmul.f32 %v1333, %v811
  %v1546 = vmul.f32 %v1336, %v811
  %v1547 = vmul.f32 %v1339, %v811
  %v1548 = vmul.f32 %v1342, %v811
  %v1549 = vmul.f32 %v1345, %v811
  %v1550 = vmul.f32 %v1348, %v811
  %v1551 = vmul.f32 %v1351, %v811
  %v1552 = vmul.f32 %v1354, %v811
  %v1553 = vmul.f32 %v1357, %v811
  %v1554 = vmul.f32 %v1360, %v811
  %v1555 = vmul.f32 %v1363, %v811
  %v1556 = vmul.f32 %v1366, %v811
  %v1557 = vmul.f32 %v1369, %v811
  %v1558 = vmul.f32 %v1372, %v811
  %v1559 = vmul.f32 %v1375, %v811
  %v1560 = vmul.f32 %v1378, %v811
  %v1561 = vmul.f32 %v1381, %v811
  %v1562 = vmul.f32 %v1384, %v811
  %v1563 = vmul.f32 %v1387, %v811
  %v1564 = vmul.f32 %v1390, %v811
  %v1565 = vmul.f32 %v1393, %v811
  %v1566 = vmul.f32 %v1396, %v811
  %v1567 = vmul.f32 %v1399, %v811
  %v1568 = vmul.f32 %v1402, %v811
  %v1569 = vmul.f32 %v1405, %v811
  %v1570 = vmul.f32 %v1408, %v811
  %v1571 = vmul.f32 %v1411, %v811
  %v1572 = vmul.f32 %v1414, %v811
  %v1573 = vmul.f32 %v1417, %v811
  %v1574 = vmul.f32 %v1420, %v811
  %v1575 = vmul.f32 %v1423, %v811
  %v1576 = vmul.f32 %v1426, %v811
  %v1577 = vmul.f32 %v1429, %v811
  %v1578 = vmul.f32 %v1432, %v811
  %v1579 = vmul.f32 %v1435, %v811
  %v1580 = vmul.f32 %v1438, %v811
  %v1581 = vmul.f32 %v1441, %v811
  %v1582 = vmul.f32 %v1444, %v811
  %v1583 = vmul.f32 %v1447, %v811
  %v1584 = vmul.f32 %v1450, %v811
  %v1585 = vmul.f32 %v1453, %v811
  %v1586 = vmul.f32 %v1456, %v811
  %v1587 = vmul.f32 %v1459, %v811
  %v1588 = vmul.f32 %v1462, %v811
  %v1589 = vmul.f32 %v1465, %v811
  %v1590 = vmul.f32 %v1468, %v811
  %v1591 = vmul.f32 %v1471, %v811
  %v1592 = vmul.f32 %v1474, %v811
  %v1593 = vmul.f32 %v1477, %v811
  %v1594 = vmul.f32 %v1480, %v811
  %v1595 = vmul.f32 %v1483, %v811
  %v1596 = vadd.f32 %v1484, 1e-06
  %v1597 = vadd.f32 %v1485, 1e-06
  %v1598 = vadd.f32 %v1486, 1e-06
  %v1599 = vadd.f32 %v1487, 1e-06
  %v1600 = vadd.f32 %v1488, 1e-06
  %v1601 = vadd.f32 %v1489, 1e-06
  %v1602 = vadd.f32 %v1490, 1e-06
  %v1603 = vadd.f32 %v1491, 1e-06
  %v1604 = vadd.f32 %v1492, 1e-06
  %v1605 = vadd.f32 %v1493, 1e-06
  %v1606 = vadd.f32 %v1494, 1e-06
  %v1607 = vadd.f32 %v1495, 1e-06
  %v1608 = vadd.f32 %v1496, 1e-06
  %v1609 = vadd.f32 %v1497, 1e-06
  %v1610 = vadd.f32 %v1498, 1e-06
  %v1611 = vadd.f32 %v1499, 1e-06
  %v1612 = vadd.f32 %v1500, 1e-06
  %v1613 = vadd.f32 %v1501, 1e-06
  %v1614 = vadd.f32 %v1502, 1e-06
  %v1615 = vadd.f32 %v1503, 1e-06
  %v1616 = vadd.f32 %v1504, 1e-06
  %v1617 = vadd.f32 %v1505, 1e-06
  %v1618 = vadd.f32 %v1506, 1e-06
  %v1619 = vadd.f32 %v1507, 1e-06
  %v1620 = vadd.f32 %v1508, 1e-06
  %v1621 = vadd.f32 %v1509, 1e-06
  %v1622 = vadd.f32 %v1510, 1e-06
  %v1623 = vadd.f32 %v1511, 1e-06
  %v1624 = vadd.f32 %v1512, 1e-06
  %v1625 = vadd.f32 %v1513, 1e-06
  %v1626 = vadd.f32 %v1514, 1e-06
  %v1627 = vadd.f32 %v1515, 1e-06
  %v1628 = vadd.f32 %v1516, 1e-06
  %v1629 = vadd.f32 %v1517, 1e-06
  %v1630 = vadd.f32 %v1518, 1e-06
  %v1631 = vadd.f32 %v1519, 1e-06
  %v1632 = vadd.f32 %v1520, 1e-06
  %v1633 = vadd.f32 %v1521, 1e-06
  %v1634 = vadd.f32 %v1522, 1e-06
  %v1635 = vadd.f32 %v1523, 1e-06
  %v1636 = vadd.f32 %v1524, 1e-06
  %v1637 = vadd.f32 %v1525, 1e-06
  %v1638 = vadd.f32 %v1526, 1e-06
  %v1639 = vadd.f32 %v1527, 1e-06
  %v1640 = vadd.f32 %v1528, 1e-06
  %v1641 = vadd.f32 %v1529, 1e-06
  %v1642 = vadd.f32 %v1530, 1e-06
  %v1643 = vadd.f32 %v1531, 1e-06
  %v1644 = vadd.f32 %v1532, 1e-06
  %v1645 = vadd.f32 %v1533, 1e-06
  %v1646 = vadd.f32 %v1534, 1e-06
  %v1647 = vadd.f32 %v1535, 1e-06
  %v1648 = vadd.f32 %v1536, 1e-06
  %v1649 = vadd.f32 %v1537, 1e-06
  %v1650 = vadd.f32 %v1538, 1e-06
  %v1651 = vadd.f32 %v1539, 1e-06
  %v1652 = vadd.f32 %v1540, 1e-06
  %v1653 = vadd.f32 %v1541, 1e-06
  %v1654 = vadd.f32 %v1542, 1e-06
  %v1655 = vadd.f32 %v1543, 1e-06
  %v1656 = vadd.f32 %v1544, 1e-06
  %v1657 = vadd.f32 %v1545, 1e-06
  %v1658 = vadd.f32 %v1546, 1e-06
  %v1659 = vadd.f32 %v1547, 1e-06
  %v1660 = vadd.f32 %v1548, 1e-06
  %v1661 = vadd.f32 %v1549, 1e-06
  %v1662 = vadd.f32 %v1550, 1e-06
  %v1663 = vadd.f32 %v1551, 1e-06
  %v1664 = vadd.f32 %v1552, 1e-06
  %v1665 = vadd.f32 %v1553, 1e-06
  %v1666 = vadd.f32 %v1554, 1e-06
  %v1667 = vadd.f32 %v1555, 1e-06
  %v1668 = vadd.f32 %v1556, 1e-06
  %v1669 = vadd.f32 %v1557, 1e-06
  %v1670 = vadd.f32 %v1558, 1e-06
  %v1671 = vadd.f32 %v1559, 1e-06
  %v1672 = vadd.f32 %v1560, 1e-06
  %v1673 = vadd.f32 %v1561, 1e-06
  %v1674 = vadd.f32 %v1562, 1e-06
  %v1675 = vadd.f32 %v1563, 1e-06
  %v1676 = vadd.f32 %v1564, 1e-06
  %v1677 = vadd.f32 %v1565, 1e-06
  %v1678 = vadd.f32 %v1566, 1e-06
  %v1679 = vadd.f32 %v1567, 1e-06
  %v1680 = vadd.f32 %v1568, 1e-06
  %v1681 = vadd.f32 %v1569, 1e-06
  %v1682 = vadd.f32 %v1570, 1e-06
  %v1683 = vadd.f32 %v1571, 1e-06
  %v1684 = vadd.f32 %v1572, 1e-06
  %v1685 = vadd.f32 %v1573, 1e-06
  %v1686 = vadd.f32 %v1574, 1e-06
  %v1687 = vadd.f32 %v1575, 1e-06
  %v1688 = vadd.f32 %v1576, 1e-06
  %v1689 = vadd.f32 %v1577, 1e-06
  %v1690 = vadd.f32 %v1578, 1e-06
  %v1691 = vadd.f32 %v1579, 1e-06
  %v1692 = vadd.f32 %v1580, 1e-06
  %v1693 = vadd.f32 %v1581, 1e-06
  %v1694 = vadd.f32 %v1582, 1e-06
  %v1695 = vadd.f32 %v1583, 1e-06
  %v1696 = vadd.f32 %v1584, 1e-06
  %v1697 = vadd.f32 %v1585, 1e-06
  %v1698 = vadd.f32 %v1586, 1e-06
  %v1699 = vadd.f32 %v1587, 1e-06
  %v1700 = vadd.f32 %v1588, 1e-06
  %v1701 = vadd.f32 %v1589, 1e-06
  %v1702 = vadd.f32 %v1590, 1e-06
  %v1703 = vadd.f32 %v1591, 1e-06
  %v1704 = vadd.f32 %v1592, 1e-06
  %v1705 = vadd.f32 %v1593, 1e-06
  %v1706 = vadd.f32 %v1594, 1e-06
  %v1707 = vadd.f32 %v1595, 1e-06
  %v1708 = vrsqrt.pop %v1596
  %v1709 = vrsqrt.pop %v1597
  %v1710 = vrsqrt.pop %v1598
  %v1711 = vrsqrt.pop %v1599
  %v1712 = vrsqrt.pop %v1600
  %v1713 = vrsqrt.pop %v1601
  %v1714 = vrsqrt.pop %v1602
  %v1715 = vrsqrt.pop %v1603
  %v1716 = vrsqrt.pop %v1604
  %v1717 = vrsqrt.pop %v1605
  %v1718 = vrsqrt.pop %v1606
  %v1719 = vrsqrt.pop %v1607
  %v1720 = vrsqrt.pop %v1608
  %v1721 = vrsqrt.pop %v1609
  %v1722 = vrsqrt.pop %v1610
  %v1723 = vrsqrt.pop %v1611
  %v1724 = vrsqrt.pop %v1612
  %v1725 = vrsqrt.pop %v1613
  %v1726 = vrsqrt.pop %v1614
  %v1727 = vrsqrt.pop %v1615
  %v1728 = vrsqrt.pop %v1616
  %v1729 = vrsqrt.pop %v1617
  %v1730 = vrsqrt.pop %v1618
  %v1731 = vrsqrt.pop %v1619
  %v1732 = vrsqrt.pop %v1620
  %v1733 = vrsqrt.pop %v1621
  %v1734 = vrsqrt.pop %v1622
  %v1735 = vrsqrt.pop %v1623
  %v1736 = vrsqrt.pop %v1624
  %v1737 = vrsqrt.pop %v1625
  %v1738 = vrsqrt.pop %v1626
  %v1739 = vrsqrt.pop %v1627
  %v1740 = vrsqrt.pop %v1628
  %v1741 = vrsqrt.pop %v1629
  %v1742 = vrsqrt.pop %v1630
  %v1743 = vrsqrt.pop %v1631
  %v1744 = vrsqrt.pop %v1632
  %v1745 = vrsqrt.pop %v1633
  %v1746 = vrsqrt.pop %v1634
  %v1747 = vrsqrt.pop %v1635
  %v1748 = vrsqrt.pop %v1636
  %v1749 = vrsqrt.pop %v1637
  %v1750 = vrsqrt.pop %v1638
  %v1751 = vrsqrt.pop %v1639
  %v1752 = vrsqrt.pop %v1640
  %v1753 = vrsqrt.pop %v1641
  %v1754 = vrsqrt.pop %v1642
  %v1755 = vrsqrt.pop %v1643
  %v1756 = vrsqrt.pop %v1644
  %v1757 = vrsqrt.pop %v1645
  %v1758 = vrsqrt.pop %v1646
  %v1759 = vrsqrt.pop %v1647
  %v1760 = vrsqrt.pop %v1648
  %v1761 = vrsqrt.pop %v1649
  %v1762 = vrsqrt.pop %v1650
  %v1763 = vrsqrt.pop %v1651
  %v1764 = vrsqrt.pop %v1652
  %v1765 = vrsqrt.pop %v1653
  %v1766 = vrsqrt.pop %v1654
  %v1767 = vrsqrt.pop %v1655
  %v1768 = vrsqrt.pop %v1656
  %v1769 = vrsqrt.pop %v1657
  %v1770 = vrsqrt.pop %v1658
  %v1771 = vrsqrt.pop %v1659
  %v1772 = vrsqrt.pop %v1660
  %v1773 = vrsqrt.pop %v1661
  %v1774 = vrsqrt.pop %v1662
  %v1775 = vrsqrt.pop %v1663
  %v1776 = vrsqrt.pop %v1664
  %v1777 = vrsqrt.pop %v1665
  %v1778 = vrsqrt.pop %v1666
  %v1779 = vrsqrt.pop %v1667
  %v1780 = vrsqrt.pop %v1668
  %v1781 = vrsqrt.pop %v1669
  %v1782 = vrsqrt.pop %v1670
  %v1783 = vrsqrt.pop %v1671
  %v1784 = vrsqrt.pop %v1672
  %v1785 = vrsqrt.pop %v1673
  %v1786 = vrsqrt.pop %v1674
  %v1787 = vrsqrt.pop %v1675
  %v1788 = vrsqrt.pop %v1676
  %v1789 = vrsqrt.pop %v1677
  %v1790 = vrsqrt.pop %v1678
  %v1791 = vrsqrt.pop %v1679
  %v1792 = vrsqrt.pop %v1680
  %v1793 = vrsqrt.pop %v1681
  %v1794 = vrsqrt.pop %v1682
  %v1795 = vrsqrt.pop %v1683
  %v1796 = vrsqrt.pop %v1684
  %v1797 = vrsqrt.pop %v1685
  %v1798 = vrsqrt.pop %v1686
  %v1799 = vrsqrt.pop %v1687
  %v1800 = vrsqrt.pop %v1688
  %v1801 = vrsqrt.pop %v1689
  %v1802 = vrsqrt.pop %v1690
  %v1803 = vrsqrt.pop %v1691
  %v1804 = vrsqrt.pop %v1692
  %v1805 = vrsqrt.pop %v1693
  %v1806 = vrsqrt.pop %v1694
  %v1807 = vrsqrt.pop %v1695
  %v1808 = vrsqrt.pop %v1696
  %v1809 = vrsqrt.pop %v1697
  %v1810 = vrsqrt.pop %v1698
  %v1811 = vrsqrt.pop %v1699
  %v1812 = vrsqrt.pop %v1700
  %v1813 = vrsqrt.pop %v1701
  %v1814 = vrsqrt.pop %v1702
  %v1815 = vrsqrt.pop %v1703
  %v1816 = vrsqrt.pop %v1704
  %v1817 = vrsqrt.pop %v1705
  %v1818 = vrsqrt.pop %v1706
  %v1819 = vrsqrt.pop %v1707
  %v1820 = vmul.f32 %v924, %v1708
  %v1821 = vmul.f32 %v925, %v1709
  %v1822 = vmul.f32 %v926, %v1710
  %v1823 = vmul.f32 %v927, %v1711
  %v1824 = vmul.f32 %v928, %v1712
  %v1825 = vmul.f32 %v929, %v1713
  %v1826 = vmul.f32 %v930, %v1714
  %v1827 = vmul.f32 %v931, %v1715
  %v1828 = vmul.f32 %v932, %v1716
  %v1829 = vmul.f32 %v933, %v1717
  %v1830 = vmul.f32 %v934, %v1718
  %v1831 = vmul.f32 %v935, %v1719
  %v1832 = vmul.f32 %v936, %v1720
  %v1833 = vmul.f32 %v937, %v1721
  %v1834 = vmul.f32 %v938, %v1722
  %v1835 = vmul.f32 %v939, %v1723
  %v1836 = vmul.f32 %v940, %v1724
  %v1837 = vmul.f32 %v941, %v1725
  %v1838 = vmul.f32 %v942, %v1726
  %v1839 = vmul.f32 %v943, %v1727
  %v1840 = vmul.f32 %v944, %v1728
  %v1841 = vmul.f32 %v945, %v1729
  %v1842 = vmul.f32 %v946, %v1730
  %v1843 = vmul.f32 %v947, %v1731
  %v1844 = vmul.f32 %v948, %v1732
  %v1845 = vmul.f32 %v949, %v1733
  %v1846 = vmul.f32 %v950, %v1734
  %v1847 = vmul.f32 %v951, %v1735
  %v1848 = vmul.f32 %v952, %v1736
  %v1849 = vmul.f32 %v953, %v1737
  %v1850 = vmul.f32 %v954, %v1738
  %v1851 = vmul.f32 %v955, %v1739
  %v1852 = vmul.f32 %v956, %v1740
  %v1853 = vmul.f32 %v957, %v1741
  %v1854 = vmul.f32 %v958, %v1742
  %v1855 = vmul.f32 %v959, %v1743
  %v1856 = vmul.f32 %v960, %v1744
  %v1857 = vmul.f32 %v961, %v1745
  %v1858 = vmul.f32 %v962, %v1746
  %v1859 = vmul.f32 %v963, %v1747
  %v1860 = vmul.f32 %v964, %v1748
  %v1861 = vmul.f32 %v965, %v1749
  %v1862 = vmul.f32 %v966, %v1750
  %v1863 = vmul.f32 %v967, %v1751
  %v1864 = vmul.f32 %v968, %v1752
  %v1865 = vmul.f32 %v969, %v1753
  %v1866 = vmul.f32 %v970, %v1754
  %v1867 = vmul.f32 %v971, %v1755
  %v1868 = vmul.f32 %v972, %v1756
  %v1869 = vmul.f32 %v973, %v1757
  %v1870 = vmul.f32 %v974, %v1758
  %v1871 = vmul.f32 %v975, %v1759
  %v1872 = vmul.f32 %v976, %v1760
  %v1873 = vmul.f32 %v977, %v1761
  %v1874 = vmul.f32 %v978, %v1762
  %v1875 = vmul.f32 %v979, %v1763
  %v1876 = vmul.f32 %v980, %v1764
  %v1877 = vmul.f32 %v981, %v1765
  %v1878 = vmul.f32 %v982, %v1766
  %v1879 = vmul.f32 %v983, %v1767
  %v1880 = vmul.f32 %v984, %v1768
  %v1881 = vmul.f32 %v985, %v1769
  %v1882 = vmul.f32 %v986, %v1770
  %v1883 = vmul.f32 %v987, %v1771
  %v1884 = vmul.f32 %v988, %v1772
  %v1885 = vmul.f32 %v989, %v1773
  %v1886 = vmul.f32 %v990, %v1774
  %v1887 = vmul.f32 %v991, %v1775
  %v1888 = vmul.f32 %v992, %v1776
  %v1889 = vmul.f32 %v993, %v1777
  %v1890 = vmul.f32 %v994, %v1778
  %v1891 = vmul.f32 %v995, %v1779
  %v1892 = vmul.f32 %v996, %v1780
  %v1893 = vmul.f32 %v997, %v1781
  %v1894 = vmul.f32 %v998, %v1782
  %v1895 = vmul.f32 %v999, %v1783
  %v1896 = vmul.f32 %v1000, %v1784
  %v1897 = vmul.f32 %v1001, %v1785
  %v1898 = vmul.f32 %v1002, %v1786
  %v1899 = vmul.f32 %v1003, %v1787
  %v1900 = vmul.f32 %v1004, %v1788
  %v1901 = vmul.f32 %v1005, %v1789
  %v1902 = vmul.f32 %v1006, %v1790
  %v1903 = vmul.f32 %v1007, %v1791
  %v1904 = vmul.f32 %v1008, %v1792
  %v1905 = vmul.f32 %v1009, %v1793
  %v1906 = vmul.f32 %v1010, %v1794
  %v1907 = vmul.f32 %v1011, %v1795
  %v1908 = vmul.f32 %v1012, %v1796
  %v1909 = vmul.f32 %v1013, %v1797
  %v1910 = vmul.f32 %v1014, %v1798
  %v1911 = vmul.f32 %v1015, %v1799
  %v1912 = vmul.f32 %v1016, %v1800
  %v1913 = vmul.f32 %v1017, %v1801
  %v1914 = vmul.f32 %v1018, %v1802
  %v1915 = vmul.f32 %v1019, %v1803
  %v1916 = vmul.f32 %v1020, %v1804
  %v1917 = vmul.f32 %v1021, %v1805
  %v1918 = vmul.f32 %v1022, %v1806
  %v1919 = vmul.f32 %v1023, %v1807
  %v1920 = vmul.f32 %v1024, %v1808
  %v1921 = vmul.f32 %v1025, %v1809
  %v1922 = vmul.f32 %v1026, %v1810
  %v1923 = vmul.f32 %v1027, %v1811
  %v1924 = vmul.f32 %v1028, %v1812
  %v1925 = vmul.f32 %v1029, %v1813
  %v1926 = vmul.f32 %v1030, %v1814
  %v1927 = vmul.f32 %v1031, %v1815
  %v1928 = vmul.f32 %v1032, %v1816
  %v1929 = vmul.f32 %v1033, %v1817
  %v1930 = vmul.f32 %v1034, %v1818
  %v1931 = vmul.f32 %v1035, %v1819
  %v1932 = vld [vmem:[%s1] sm:$0x1]
  %v1934 = vlaneseq
  %v1935 = vshrl.u32 %v1934, 7
  %v1936 = vsub.s32 0, %v1935
  %v1937 = vrot.slane %v1932, %v1936
  %v1939 = vmul.f32 %v1820, %v1937
  %v1940 = vmul.f32 %v1821, %v1937
  %v1941 = vmul.f32 %v1822, %v1937
  %v1942 = vmul.f32 %v1823, %v1937
  %v1943 = vmul.f32 %v1824, %v1937
  %v1944 = vmul.f32 %v1825, %v1937
  %v1945 = vmul.f32 %v1826, %v1937
  %v1946 = vmul.f32 %v1827, %v1937
  %v1947 = vmul.f32 %v1828, %v1937
  %v1948 = vmul.f32 %v1829, %v1937
  %v1949 = vmul.f32 %v1830, %v1937
  %v1950 = vmul.f32 %v1831, %v1937
  %v1951 = vmul.f32 %v1832, %v1937
  %v1952 = vmul.f32 %v1833, %v1937
  %v1953 = vmul.f32 %v1834, %v1937
  %v1954 = vmul.f32 %v1835, %v1937
  %v1955 = vmul.f32 %v1836, %v1937
  %v1956 = vmul.f32 %v1837, %v1937
  %v1957 = vmul.f32 %v1838, %v1937
  %v1958 = vmul.f32 %v1839, %v1937
  %v1959 = vmul.f32 %v1840, %v1937
  %v1960 = vmul.f32 %v1841, %v1937
  %v1961 = vmul.f32 %v1842, %v1937
  %v1962 = vmul.f32 %v1843, %v1937
  %v1963 = vmul.f32 %v1844, %v1937
  %v1964 = vmul.f32 %v1845, %v1937
  %v1965 = vmul.f32 %v1846, %v1937
  %v1966 = vmul.f32 %v1847, %v1937
  %v1967 = vmul.f32 %v1848, %v1937
  %v1968 = vmul.f32 %v1849, %v1937
  %v1969 = vmul.f32 %v1850, %v1937
  %v1970 = vmul.f32 %v1851, %v1937
  %v1971 = vmul.f32 %v1852, %v1937
  %v1972 = vmul.f32 %v1853, %v1937
  %v1973 = vmul.f32 %v1854, %v1937
  %v1974 = vmul.f32 %v1855, %v1937
  %v1975 = vmul.f32 %v1856, %v1937
  %v1976 = vmul.f32 %v1857, %v1937
  %v1977 = vmul.f32 %v1858, %v1937
  %v1978 = vmul.f32 %v1859, %v1937
  %v1979 = vmul.f32 %v1860, %v1937
  %v1980 = vmul.f32 %v1861, %v1937
  %v1981 = vmul.f32 %v1862, %v1937
  %v1982 = vmul.f32 %v1863, %v1937
  %v1983 = vmul.f32 %v1864, %v1937
  %v1984 = vmul.f32 %v1865, %v1937
  %v1985 = vmul.f32 %v1866, %v1937
  %v1986 = vmul.f32 %v1867, %v1937
  %v1987 = vmul.f32 %v1868, %v1937
  %v1988 = vmul.f32 %v1869, %v1937
  %v1989 = vmul.f32 %v1870, %v1937
  %v1990 = vmul.f32 %v1871, %v1937
  %v1991 = vmul.f32 %v1872, %v1937
  %v1992 = vmul.f32 %v1873, %v1937
  %v1993 = vmul.f32 %v1874, %v1937
  %v1994 = vmul.f32 %v1875, %v1937
  %v1995 = vmul.f32 %v1876, %v1937
  %v1996 = vmul.f32 %v1877, %v1937
  %v1997 = vmul.f32 %v1878, %v1937
  %v1998 = vmul.f32 %v1879, %v1937
  %v1999 = vmul.f32 %v1880, %v1937
  %v2000 = vmul.f32 %v1881, %v1937
  %v2001 = vmul.f32 %v1882, %v1937
  %v2002 = vmul.f32 %v1883, %v1937
  %v2003 = vmul.f32 %v1884, %v1937
  %v2004 = vmul.f32 %v1885, %v1937
  %v2005 = vmul.f32 %v1886, %v1937
  %v2006 = vmul.f32 %v1887, %v1937
  %v2007 = vmul.f32 %v1888, %v1937
  %v2008 = vmul.f32 %v1889, %v1937
  %v2009 = vmul.f32 %v1890, %v1937
  %v2010 = vmul.f32 %v1891, %v1937
  %v2011 = vmul.f32 %v1892, %v1937
  %v2012 = vmul.f32 %v1893, %v1937
  %v2013 = vmul.f32 %v1894, %v1937
  %v2014 = vmul.f32 %v1895, %v1937
  %v2015 = vmul.f32 %v1896, %v1937
  %v2016 = vmul.f32 %v1897, %v1937
  %v2017 = vmul.f32 %v1898, %v1937
  %v2018 = vmul.f32 %v1899, %v1937
  %v2019 = vmul.f32 %v1900, %v1937
  %v2020 = vmul.f32 %v1901, %v1937
  %v2021 = vmul.f32 %v1902, %v1937
  %v2022 = vmul.f32 %v1903, %v1937
  %v2023 = vmul.f32 %v1904, %v1937
  %v2024 = vmul.f32 %v1905, %v1937
  %v2025 = vmul.f32 %v1906, %v1937
  %v2026 = vmul.f32 %v1907, %v1937
  %v2027 = vmul.f32 %v1908, %v1937
  %v2028 = vmul.f32 %v1909, %v1937
  %v2029 = vmul.f32 %v1910, %v1937
  %v2030 = vmul.f32 %v1911, %v1937
  %v2031 = vmul.f32 %v1912, %v1937
  %v2032 = vmul.f32 %v1913, %v1937
  %v2033 = vmul.f32 %v1914, %v1937
  %v2034 = vmul.f32 %v1915, %v1937
  %v2035 = vmul.f32 %v1916, %v1937
  %v2036 = vmul.f32 %v1917, %v1937
  %v2037 = vmul.f32 %v1918, %v1937
  %v2038 = vmul.f32 %v1919, %v1937
  %v2039 = vmul.f32 %v1920, %v1937
  %v2040 = vmul.f32 %v1921, %v1937
  %v2041 = vmul.f32 %v1922, %v1937
  %v2042 = vmul.f32 %v1923, %v1937
  %v2043 = vmul.f32 %v1924, %v1937
  %v2044 = vmul.f32 %v1925, %v1937
  %v2045 = vmul.f32 %v1926, %v1937
  %v2046 = vmul.f32 %v1927, %v1937
  %v2047 = vmul.f32 %v1928, %v1937
  %v2048 = vmul.f32 %v1929, %v1937
  %v2049 = vmul.f32 %v1930, %v1937
  %v2050 = vmul.f32 %v1931, %v1937
  %v2051 = vld [vmem:[%s2] sm:$0x1]
  %v2053 = vlaneseq
  %v2054 = vshrl.u32 %v2053, 7
  %v2055 = vsub.s32 0, %v2054
  %v2056 = vrot.slane %v2051, %v2055
  %v2058 = vadd.f32 %v1939, %v2056
  %v2059 = vadd.f32 %v1940, %v2056
  %v2060 = vadd.f32 %v1941, %v2056
  %v2061 = vadd.f32 %v1942, %v2056
  %v2062 = vadd.f32 %v1943, %v2056
  %v2063 = vadd.f32 %v1944, %v2056
  %v2064 = vadd.f32 %v1945, %v2056
  %v2065 = vadd.f32 %v1946, %v2056
  %v2066 = vadd.f32 %v1947, %v2056
  %v2067 = vadd.f32 %v1948, %v2056
  %v2068 = vadd.f32 %v1949, %v2056
  %v2069 = vadd.f32 %v1950, %v2056
  %v2070 = vadd.f32 %v1951, %v2056
  %v2071 = vadd.f32 %v1952, %v2056
  %v2072 = vadd.f32 %v1953, %v2056
  %v2073 = vadd.f32 %v1954, %v2056
  %v2074 = vadd.f32 %v1955, %v2056
  %v2075 = vadd.f32 %v1956, %v2056
  %v2076 = vadd.f32 %v1957, %v2056
  %v2077 = vadd.f32 %v1958, %v2056
  %v2078 = vadd.f32 %v1959, %v2056
  %v2079 = vadd.f32 %v1960, %v2056
  %v2080 = vadd.f32 %v1961, %v2056
  %v2081 = vadd.f32 %v1962, %v2056
  %v2082 = vadd.f32 %v1963, %v2056
  %v2083 = vadd.f32 %v1964, %v2056
  %v2084 = vadd.f32 %v1965, %v2056
  %v2085 = vadd.f32 %v1966, %v2056
  %v2086 = vadd.f32 %v1967, %v2056
  %v2087 = vadd.f32 %v1968, %v2056
  %v2088 = vadd.f32 %v1969, %v2056
  %v2089 = vadd.f32 %v1970, %v2056
  %v2090 = vadd.f32 %v1971, %v2056
  %v2091 = vadd.f32 %v1972, %v2056
  %v2092 = vadd.f32 %v1973, %v2056
  %v2093 = vadd.f32 %v1974, %v2056
  %v2094 = vadd.f32 %v1975, %v2056
  %v2095 = vadd.f32 %v1976, %v2056
  %v2096 = vadd.f32 %v1977, %v2056
  %v2097 = vadd.f32 %v1978, %v2056
  %v2098 = vadd.f32 %v1979, %v2056
  %v2099 = vadd.f32 %v1980, %v2056
  %v2100 = vadd.f32 %v1981, %v2056
  %v2101 = vadd.f32 %v1982, %v2056
  %v2102 = vadd.f32 %v1983, %v2056
  %v2103 = vadd.f32 %v1984, %v2056
  %v2104 = vadd.f32 %v1985, %v2056
  %v2105 = vadd.f32 %v1986, %v2056
  %v2106 = vadd.f32 %v1987, %v2056
  %v2107 = vadd.f32 %v1988, %v2056
  %v2108 = vadd.f32 %v1989, %v2056
  %v2109 = vadd.f32 %v1990, %v2056
  %v2110 = vadd.f32 %v1991, %v2056
  %v2111 = vadd.f32 %v1992, %v2056
  %v2112 = vadd.f32 %v1993, %v2056
  %v2113 = vadd.f32 %v1994, %v2056
  %v2114 = vadd.f32 %v1995, %v2056
  %v2115 = vadd.f32 %v1996, %v2056
  %v2116 = vadd.f32 %v1997, %v2056
  %v2117 = vadd.f32 %v1998, %v2056
  %v2118 = vadd.f32 %v1999, %v2056
  %v2119 = vadd.f32 %v2000, %v2056
  %v2120 = vadd.f32 %v2001, %v2056
  %v2121 = vadd.f32 %v2002, %v2056
  %v2122 = vadd.f32 %v2003, %v2056
  %v2123 = vadd.f32 %v2004, %v2056
  %v2124 = vadd.f32 %v2005, %v2056
  %v2125 = vadd.f32 %v2006, %v2056
  %v2126 = vadd.f32 %v2007, %v2056
  %v2127 = vadd.f32 %v2008, %v2056
  %v2128 = vadd.f32 %v2009, %v2056
  %v2129 = vadd.f32 %v2010, %v2056
  %v2130 = vadd.f32 %v2011, %v2056
  %v2131 = vadd.f32 %v2012, %v2056
  %v2132 = vadd.f32 %v2013, %v2056
  %v2133 = vadd.f32 %v2014, %v2056
  %v2134 = vadd.f32 %v2015, %v2056
  %v2135 = vadd.f32 %v2016, %v2056
  %v2136 = vadd.f32 %v2017, %v2056
  %v2137 = vadd.f32 %v2018, %v2056
  %v2138 = vadd.f32 %v2019, %v2056
  %v2139 = vadd.f32 %v2020, %v2056
  %v2140 = vadd.f32 %v2021, %v2056
  %v2141 = vadd.f32 %v2022, %v2056
  %v2142 = vadd.f32 %v2023, %v2056
  %v2143 = vadd.f32 %v2024, %v2056
  %v2144 = vadd.f32 %v2025, %v2056
  %v2145 = vadd.f32 %v2026, %v2056
  %v2146 = vadd.f32 %v2027, %v2056
  %v2147 = vadd.f32 %v2028, %v2056
  %v2148 = vadd.f32 %v2029, %v2056
  %v2149 = vadd.f32 %v2030, %v2056
  %v2150 = vadd.f32 %v2031, %v2056
  %v2151 = vadd.f32 %v2032, %v2056
  %v2152 = vadd.f32 %v2033, %v2056
  %v2153 = vadd.f32 %v2034, %v2056
  %v2154 = vadd.f32 %v2035, %v2056
  %v2155 = vadd.f32 %v2036, %v2056
  %v2156 = vadd.f32 %v2037, %v2056
  %v2157 = vadd.f32 %v2038, %v2056
  %v2158 = vadd.f32 %v2039, %v2056
  %v2159 = vadd.f32 %v2040, %v2056
  %v2160 = vadd.f32 %v2041, %v2056
  %v2161 = vadd.f32 %v2042, %v2056
  %v2162 = vadd.f32 %v2043, %v2056
  %v2163 = vadd.f32 %v2044, %v2056
  %v2164 = vadd.f32 %v2045, %v2056
  %v2165 = vadd.f32 %v2046, %v2056
  %v2166 = vadd.f32 %v2047, %v2056
  %v2167 = vadd.f32 %v2048, %v2056
  %v2168 = vadd.f32 %v2049, %v2056
  %v2169 = vadd.f32 %v2050, %v2056
  %2170 = vst.msk [vmem:[%s4] sm:$0xff] %vm128, %v2058
  %2171 = vst.msk [vmem:[%s4 + $0x8] sm:$0xff] %vm128, %v2059
  %2172 = vst.msk [vmem:[%s4 + $0x10] sm:$0xff] %vm128, %v2060
  %2173 = vst.msk [vmem:[%s4 + $0x18] sm:$0xff] %vm128, %v2061
  %2174 = vst.msk [vmem:[%s4 + $0x20] sm:$0xff] %vm128, %v2062
  %2175 = vst.msk [vmem:[%s4 + $0x28] sm:$0xff] %vm128, %v2063
  %2176 = vst.msk [vmem:[%s4 + $0x30] sm:$0x1] %vm140, %v2064
  %2177 = vst.msk [vmem:[%s4 + $0x38] sm:$0xff] %vm128, %v2065
  %2178 = vst.msk [vmem:[%s4 + $0x40] sm:$0xff] %vm128, %v2066
  %2179 = vst.msk [vmem:[%s4 + $0x48] sm:$0xff] %vm128, %v2067
  %2180 = vst.msk [vmem:[%s4 + $0x50] sm:$0xff] %vm128, %v2068
  %2181 = vst.msk [vmem:[%s4 + $0x58] sm:$0xff] %vm128, %v2069
  %2182 = vst.msk [vmem:[%s4 + $0x60] sm:$0xff] %vm128, %v2070
  %2183 = vst.msk [vmem:[%s4 + $0x68] sm:$0x1] %vm140, %v2071
  %2184 = vst.msk [vmem:[%s4 + $0x70] sm:$0xff] %vm128, %v2072
  %2185 = vst.msk [vmem:[%s4 + $0x78] sm:$0xff] %vm128, %v2073
  %2186 = vst.msk [vmem:[%s4 + $0x80] sm:$0xff] %vm128, %v2074
  %2187 = vst.msk [vmem:[%s4 + $0x88] sm:$0xff] %vm128, %v2075
  %2188 = vst.msk [vmem:[%s4 + $0x90] sm:$0xff] %vm128, %v2076
  %2189 = vst.msk [vmem:[%s4 + $0x98] sm:$0xff] %vm128, %v2077
  %2190 = vst.msk [vmem:[%s4 + $0xa0] sm:$0x1] %vm140, %v2078
  %2191 = vst.msk [vmem:[%s4 + $0xa8] sm:$0xff] %vm128, %v2079
  %2192 = vst.msk [vmem:[%s4 + $0xb0] sm:$0xff] %vm128, %v2080
  %2193 = vst.msk [vmem:[%s4 + $0xb8] sm:$0xff] %vm128, %v2081
  %2194 = vst.msk [vmem:[%s4 + $0xc0] sm:$0xff] %vm128, %v2082
  %2195 = vst.msk [vmem:[%s4 + $0xc8] sm:$0xff] %vm128, %v2083
  %2196 = vst.msk [vmem:[%s4 + $0xd0] sm:$0xff] %vm128, %v2084
  %2197 = vst.msk [vmem:[%s4 + $0xd8] sm:$0x1] %vm140, %v2085
  %2198 = vst.msk [vmem:[%s4 + $0xe0] sm:$0xff] %vm128, %v2086
  %2199 = vst.msk [vmem:[%s4 + $0xe8] sm:$0xff] %vm128, %v2087
  %2200 = vst.msk [vmem:[%s4 + $0xf0] sm:$0xff] %vm128, %v2088
  %2201 = vst.msk [vmem:[%s4 + $0xf8] sm:$0xff] %vm128, %v2089
  %2202 = vst.msk [vmem:[%s4 + $0x100] sm:$0xff] %vm128, %v2090
  %2203 = vst.msk [vmem:[%s4 + $0x108] sm:$0xff] %vm128, %v2091
  %2204 = vst.msk [vmem:[%s4 + $0x110] sm:$0x1] %vm140, %v2092
  %2205 = vst.msk [vmem:[%s4 + $0x118] sm:$0xff] %vm128, %v2093
  %2206 = vst.msk [vmem:[%s4 + $0x120] sm:$0xff] %vm128, %v2094
  %2207 = vst.msk [vmem:[%s4 + $0x128] sm:$0xff] %vm128, %v2095
  %2208 = vst.msk [vmem:[%s4 + $0x130] sm:$0xff] %vm128, %v2096
  %2209 = vst.msk [vmem:[%s4 + $0x138] sm:$0xff] %vm128, %v2097
  %2210 = vst.msk [vmem:[%s4 + $0x140] sm:$0xff] %vm128, %v2098
  %2211 = vst.msk [vmem:[%s4 + $0x148] sm:$0x1] %vm140, %v2099
  %2212 = vst.msk [vmem:[%s4 + $0x150] sm:$0xff] %vm128, %v2100
  %2213 = vst.msk [vmem:[%s4 + $0x158] sm:$0xff] %vm128, %v2101
  %2214 = vst.msk [vmem:[%s4 + $0x160] sm:$0xff] %vm128, %v2102
  %2215 = vst.msk [vmem:[%s4 + $0x168] sm:$0xff] %vm128, %v2103
  %2216 = vst.msk [vmem:[%s4 + $0x170] sm:$0xff] %vm128, %v2104
  %2217 = vst.msk [vmem:[%s4 + $0x178] sm:$0xff] %vm128, %v2105
  %2218 = vst.msk [vmem:[%s4 + $0x180] sm:$0x1] %vm140, %v2106
  %2219 = vst.msk [vmem:[%s4 + $0x188] sm:$0xff] %vm128, %v2107
  %2220 = vst.msk [vmem:[%s4 + $0x190] sm:$0xff] %vm128, %v2108
  %2221 = vst.msk [vmem:[%s4 + $0x198] sm:$0xff] %vm128, %v2109
  %2222 = vst.msk [vmem:[%s4 + $0x1a0] sm:$0xff] %vm128, %v2110
  %2223 = vst.msk [vmem:[%s4 + $0x1a8] sm:$0xff] %vm128, %v2111
  %2224 = vst.msk [vmem:[%s4 + $0x1b0] sm:$0xff] %vm128, %v2112
  %2225 = vst.msk [vmem:[%s4 + $0x1b8] sm:$0x1] %vm140, %v2113
  %2226 = vst.msk [vmem:[%s4 + $0x1c0] sm:$0xff] %vm128, %v2114
  %2227 = vst.msk [vmem:[%s4 + $0x1c8] sm:$0xff] %vm128, %v2115
  %2228 = vst.msk [vmem:[%s4 + $0x1d0] sm:$0xff] %vm128, %v2116
  %2229 = vst.msk [vmem:[%s4 + $0x1d8] sm:$0xff] %vm128, %v2117
  %2230 = vst.msk [vmem:[%s4 + $0x1e0] sm:$0xff] %vm128, %v2118
  %2231 = vst.msk [vmem:[%s4 + $0x1e8] sm:$0xff] %vm128, %v2119
  %2232 = vst.msk [vmem:[%s4 + $0x1f0] sm:$0x1] %vm140, %v2120
  %2233 = vst.msk [vmem:[%s4 + $0x1f8] sm:$0xff] %vm128, %v2121
  %2234 = vst.msk [vmem:[%s4 + $0x200] sm:$0xff] %vm128, %v2122
  %2235 = vst.msk [vmem:[%s4 + $0x208] sm:$0xff] %vm128, %v2123
  %2236 = vst.msk [vmem:[%s4 + $0x210] sm:$0xff] %vm128, %v2124
  %2237 = vst.msk [vmem:[%s4 + $0x218] sm:$0xff] %vm128, %v2125
  %2238 = vst.msk [vmem:[%s4 + $0x220] sm:$0xff] %vm128, %v2126
  %2239 = vst.msk [vmem:[%s4 + $0x228] sm:$0x1] %vm140, %v2127
  %2240 = vst.msk [vmem:[%s4 + $0x230] sm:$0xff] %vm128, %v2128
  %2241 = vst.msk [vmem:[%s4 + $0x238] sm:$0xff] %vm128, %v2129
  %2242 = vst.msk [vmem:[%s4 + $0x240] sm:$0xff] %vm128, %v2130
  %2243 = vst.msk [vmem:[%s4 + $0x248] sm:$0xff] %vm128, %v2131
  %2244 = vst.msk [vmem:[%s4 + $0x250] sm:$0xff] %vm128, %v2132
  %2245 = vst.msk [vmem:[%s4 + $0x258] sm:$0xff] %vm128, %v2133
  %2246 = vst.msk [vmem:[%s4 + $0x260] sm:$0x1] %vm140, %v2134
  %2247 = vst.msk [vmem:[%s4 + $0x268] sm:$0xff] %vm128, %v2135
  %2248 = vst.msk [vmem:[%s4 + $0x270] sm:$0xff] %vm128, %v2136
  %2249 = vst.msk [vmem:[%s4 + $0x278] sm:$0xff] %vm128, %v2137
  %2250 = vst.msk [vmem:[%s4 + $0x280] sm:$0xff] %vm128, %v2138
  %2251 = vst.msk [vmem:[%s4 + $0x288] sm:$0xff] %vm128, %v2139
  %2252 = vst.msk [vmem:[%s4 + $0x290] sm:$0xff] %vm128, %v2140
  %2253 = vst.msk [vmem:[%s4 + $0x298] sm:$0x1] %vm140, %v2141
  %2254 = vst.msk [vmem:[%s4 + $0x2a0] sm:$0xff] %vm128, %v2142
  %2255 = vst.msk [vmem:[%s4 + $0x2a8] sm:$0xff] %vm128, %v2143
  %2256 = vst.msk [vmem:[%s4 + $0x2b0] sm:$0xff] %vm128, %v2144
  %2257 = vst.msk [vmem:[%s4 + $0x2b8] sm:$0xff] %vm128, %v2145
  %2258 = vst.msk [vmem:[%s4 + $0x2c0] sm:$0xff] %vm128, %v2146
  %2259 = vst.msk [vmem:[%s4 + $0x2c8] sm:$0xff] %vm128, %v2147
  %2260 = vst.msk [vmem:[%s4 + $0x2d0] sm:$0x1] %vm140, %v2148
  %2261 = vst.msk [vmem:[%s4 + $0x2d8] sm:$0xff] %vm128, %v2149
  %2262 = vst.msk [vmem:[%s4 + $0x2e0] sm:$0xff] %vm128, %v2150
  %2263 = vst.msk [vmem:[%s4 + $0x2e8] sm:$0xff] %vm128, %v2151
  %2264 = vst.msk [vmem:[%s4 + $0x2f0] sm:$0xff] %vm128, %v2152
  %2265 = vst.msk [vmem:[%s4 + $0x2f8] sm:$0xff] %vm128, %v2153
  %2266 = vst.msk [vmem:[%s4 + $0x300] sm:$0xff] %vm128, %v2154
  %2267 = vst.msk [vmem:[%s4 + $0x308] sm:$0x1] %vm140, %v2155
  %2268 = vst.msk [vmem:[%s4 + $0x310] sm:$0xff] %vm128, %v2156
  %2269 = vst.msk [vmem:[%s4 + $0x318] sm:$0xff] %vm128, %v2157
  %2270 = vst.msk [vmem:[%s4 + $0x320] sm:$0xff] %vm128, %v2158
  %2271 = vst.msk [vmem:[%s4 + $0x328] sm:$0xff] %vm128, %v2159
  %2272 = vst.msk [vmem:[%s4 + $0x330] sm:$0xff] %vm128, %v2160
  %2273 = vst.msk [vmem:[%s4 + $0x338] sm:$0xff] %vm128, %v2161
  %2274 = vst.msk [vmem:[%s4 + $0x340] sm:$0x1] %vm140, %v2162
  %2275 = vst.msk [vmem:[%s4 + $0x348] sm:$0xff] %vm128, %v2163
  %2276 = vst.msk [vmem:[%s4 + $0x350] sm:$0xff] %vm128, %v2164
  %2277 = vst.msk [vmem:[%s4 + $0x358] sm:$0xff] %vm128, %v2165
  %2278 = vst.msk [vmem:[%s4 + $0x360] sm:$0xff] %vm128, %v2166
  %2279 = vst.msk [vmem:[%s4 + $0x368] sm:$0xff] %vm128, %v2167
  %2280 = vst.msk [vmem:[%s4 + $0x370] sm:$0xff] %vm128, %v2168
  %2281 = vst.msk [vmem:[%s4 + $0x378] sm:$0x1] %vm140, %v2169
  // Predicated region
  $region14: #{adaptive_pooler_forward.3} parent=0 // pred_check
    _
  $region15: #{adaptive_pooler_forward.3} parent=0 // pred_check_branch
    %2283 = sbr.rel (0) target = $region17
  $region16: #{adaptive_pooler_forward.3} parent=0 // pred_region
    _
  $region17: #{adaptive_pooler_forward.3} parent=0 // pred_fallthru
    _
  // Predicated region
  $region18: #{adaptive_pooler_forward.3} parent=0 // pred_check
    _
  $region19: #{adaptive_pooler_forward.3} parent=0 // pred_check_branch
    %2285 = sbr.rel (0) target = $region21
  $region20: #{adaptive_pooler_forward.3} parent=0 // pred_region
    _
  $region21: #{adaptive_pooler_forward.3} parent=0 // pred_fallthru
    _
  // Predicated region
  $region22: #{adaptive_pooler_forward.3} parent=0 // pred_check
    _
  $region23: #{adaptive_pooler_forward.3} parent=0 // pred_check_branch
    %2287 = sbr.rel (0) target = $region25
  $region24: #{adaptive_pooler_forward.3} parent=0 // pred_region
    _
  $region25: #{adaptive_pooler_forward.3} parent=0 // pred_fallthru
    _
  // Predicated region
  $region26: #{adaptive_pooler_forward.3} parent=0 // pred_check
    _
  $region27: #{adaptive_pooler_forward.3} parent=0 // pred_check_branch
    %2289 = sbr.rel (0) target = $region29
  $region28: #{adaptive_pooler_forward.3} parent=0 // pred_region
    _
  $region29: #{adaptive_pooler_forward.3} parent=0 // pred_fallthru
    _

// kernel: adaptive_pooler_forward.5
$region0: #{adaptive_pooler_forward.5}
  #allocation0 [shape = 'u32[]', space=smem, size = 0x4, offset = 0x4, fixed_abs, tag = 'smem constant byte address 0x4 - core index']
  #allocation1 [shape = 'u32[144,128]{1,0:T(1,128)}', space=vmem, size = 0x12000, scoped, tag = 'internal scratch']
  %s0 = inlined_call_operand.vmem [shape: f32[8,8,8], index: 0, kind: input, shape index: {}]
  %s1 = inlined_call_operand.vmem [shape: f32[8,8,8], index: 1, kind: input, shape index: {}]
  %s2 = inlined_call_operand.vmem [shape: f32[8,8,8], index: 2, kind: input, shape index: {}]
  %s3 = inlined_call_operand.vmem [shape: f32[8,8,8], index: 3, kind: input, shape index: {}]
  %s4 = inlined_call_operand.vmem [shape: f32[16,32], index: 4, kind: input, shape index: {}]
  %s5 = inlined_call_operand.vmem [shape: f32[1,8], index: 5, kind: input, shape index: {}]
  %s6 = inlined_call_operand.vmem [shape: f32[1,8], index: 6, kind: input, shape index: {}]
  %s7 = inlined_call_operand.vmem [shape: f32[1,8], index: 7, kind: input, shape index: {}]
  %s8 = inlined_call_operand.vmem [shape: f32[1,8], index: 8, kind: input, shape index: {}]
  %s9 = inlined_call_operand.vmem [shape: f32[1,8], index: 9, kind: input, shape index: {}]
  %s10 = inlined_call_operand.vmem [shape: f32[1,8], index: 10, kind: input, shape index: {}]
  %s11 = inlined_call_operand.vmem [shape: f32[32,32], index: 11, kind: input, shape index: {}]
  %s12 = inlined_call_operand.vmem [shape: f32[1,32], index: 12, kind: input, shape index: {}]
  %s13 = inlined_call_operand.vmem [shape: f32[1,32], index: 13, kind: input, shape index: {}]
  %s14 = inlined_call_operand.vmem [shape: f32[1,32], index: 14, kind: input, shape index: {}]
  %s15 = inlined_call_operand.vmem [shape: f32[32,128], index: 15, kind: input, shape index: {}]
  %s16 = inlined_call_operand.vmem [shape: f32[1,128], index: 16, kind: input, shape index: {}]
  %s17 = inlined_call_operand.vmem [shape: f32[128,32], index: 17, kind: input, shape index: {}]
  %s18 = inlined_call_operand.vmem [shape: f32[1,32], index: 18, kind: input, shape index: {}]
  %s19 = inlined_call_operand.vmem [shape: f32[1,32], index: 19, kind: input, shape index: {}]
  %s20 = inlined_call_operand.vmem [shape: f32[1,32], index: 20, kind: input, shape index: {}]
  %s21 = inlined_call_operand.hbm [shape: f32[16,32], index: 21, kind: output, shape index: {0}]
  %s22 = inlined_call_operand.hbm [shape: f32[8,8,8], index: 22, kind: output, shape index: {1}]
  %23 = xla_tuple %s21, %s22
  %s24 = sld [smem:[#allocation0]]
  $region125: #{adaptive_pooler_forward.5} parent=0
    _
  %s26 = ssub.s32 1, %s24
  %s27 = scalar_select 0, %s26, %s24
  $region1: #{adaptive_pooler_forward.5} parent=0
    #allocation2 [shape = 'u8[8192]{0}', space=vmem, size = 0x2000, scoped, tag = 'output window, operand 0']
    #allocation3 [shape = 's32[2]{0}', space=sflag, size = 0x8, scoped, tag = 'scoped memory for adaptive_pooler_forward.5']
    #allocation4 [shape = 'u8[32768]{0}', space=vmem, size = 0x8000, scoped, tag = 'output window, operand 1']
    #allocation5 [shape = 's32[2]{0}', space=sflag, size = 0x8, scoped, tag = 'scoped memory for adaptive_pooler_forward.5']
    %28 = vsyncpa [#allocation3], 0
    %s29 = scalar_lea.sflag [#allocation3], 1
    %30 = vsyncpa %s29, 0
    %31 = vsyncpa [#allocation5], 0
    %s32 = scalar_lea.sflag [#allocation5], 1
    %33 = vsyncpa %s32, 0
    loop: start=0, step=1, limit=4
    $region2: #{adaptive_pooler_forward.5} parent=1 // loop_pre_header
      _
    $region3: #{adaptive_pooler_forward.5} parent=1 // loop_header
      %s35 = sphi 0, %s39
      %p36 = scmp.ge.s32.totalorder %s35, 4
      %s45 = sphi 0, %s47
      %s48 = sphi 0, %s45
      %s49 = sphi 0, %s48
      %s65 = sphi 0, %s49
      %s71 = sphi 0, %s73
      %s74 = sphi 0, %s71
      %s75 = sphi 0, %s74
      %s91 = sphi 0, %s75
      %s97 = sphi 0, %s99
      %s100 = sphi 0, %s97
      %s101 = sphi 0, %s100
      %s117 = sphi 0, %s101
      %s121 = sphi 0, %s121
      %s123 = sphi 0, %s121
      %s124 = sphi 0, %s123
      %s138 = sphi 0, %s124
      %s144 = sphi 0, %s146
      %s147 = sphi 0, %s144
      %s148 = sphi 0, %s147
      %s164 = sphi 0, %s148
      %s168 = sphi 0, %s168
      %s170 = sphi 0, %s168
      %s171 = sphi 0, %s170
      %s185 = sphi 0, %s171
      %s189 = sphi 0, %s189
      %s191 = sphi 0, %s189
      %s192 = sphi 0, %s191
      %s206 = sphi 0, %s192
      %s210 = sphi 0, %s210
      %s212 = sphi 0, %s210
      %s213 = sphi 0, %s212
      %s227 = sphi 0, %s213
      %s231 = sphi 0, %s231
      %s233 = sphi 0, %s231
      %s234 = sphi 0, %s233
      %s248 = sphi 0, %s234
      %s252 = sphi 0, %s252
      %s254 = sphi 0, %s252
      %s255 = sphi 0, %s254
      %s269 = sphi 0, %s255
      %s273 = sphi 0, %s273
      %s275 = sphi 0, %s273
      %s276 = sphi 0, %s275
      %s290 = sphi 0, %s276
      %s294 = sphi 0, %s294
      %s296 = sphi 0, %s294
      %s297 = sphi 0, %s296
      %s311 = sphi 0, %s297
      %s315 = sphi 0, %s315
      %s317 = sphi 0, %s315
      %s318 = sphi 0, %s317
      %s332 = sphi 0, %s318
      %s336 = sphi 0, %s336
      %s338 = sphi 0, %s336
      %s339 = sphi 0, %s338
      %s353 = sphi 0, %s339
      %s357 = sphi 0, %s357
      %s359 = sphi 0, %s357
      %s360 = sphi 0, %s359
      %s374 = sphi 0, %s360
      %s378 = sphi 0, %s378
      %s380 = sphi 0, %s378
      %s381 = sphi 0, %s380
      %s395 = sphi 0, %s381
      %s399 = sphi 0, %s399
      %s401 = sphi 0, %s399
      %s402 = sphi 0, %s401
      %s416 = sphi 0, %s402
      %s420 = sphi 0, %s420
      %s422 = sphi 0, %s420
      %s423 = sphi 0, %s422
      %s437 = sphi 0, %s423
      %s441 = sphi 0, %s441
      %s443 = sphi 0, %s441
      %s444 = sphi 0, %s443
      %s458 = sphi 0, %s444
      %s462 = sphi 0, %s462
      %s464 = sphi 0, %s462
      %s465 = sphi 0, %s464
      %s479 = sphi 0, %s465
      %s483 = sphi 0, %s483
      %s485 = sphi 0, %s483
      %s486 = sphi 0, %s485
      %s500 = sphi 0, %s486
      %s506 = sphi 0, %s508
      %s509 = sphi 0, %s506
      %s510 = sphi 0, %s509
      %s526 = sphi 0, %s510
      %s532 = sphi 0, %s534
      %s535 = sphi 0, %s532
      %s536 = sphi 0, %s535
      %s552 = sphi 0, %s536
    $region4: #{adaptive_pooler_forward.5} parent=1 // loop_header_branch
      %38 = sbr.rel (%p36) target = $region8
    $region5: #{adaptive_pooler_forward.5} parent=1 // loop_body
      %s40 = ssub.s32 %s35, 1
      %s41 = ssub.s32 %s35, 2
      %s42 = sadd.s32 %s35, 1
      %s43 = ssub.s32 %s35, %s42
      %p44 = scmp.eq.s32.totalorder %s43, 0
      %s46 = sadd.s32 %s45, 1
      %s47 = scalar_select %p44, %s45, %s46
      %p50 = pneg %p44
      %p51 = scmp.eq.s32.totalorder %s35, 1
      %p52 = por %p50, %p51
      %p53 = scmp.ne.s32.totalorder %s45, %s48
      %p54 = scmp.eq.s32.totalorder %s35, 0
      %p55 = por %p53, %p54
      %p56 = scmp.ne.s32.totalorder %s45, %s48
      %p57 = scmp.eq.s32.totalorder %s40, 1
      %p58 = por %p56, %p57
      %p59 = scmp.ne.s32.totalorder %s48, %s49
      %p60 = scmp.eq.s32.totalorder %s40, 0
      %p61 = por %p59, %p60
      %p62 = scmp.ne.s32.totalorder %s48, %s49
      %p63 = scmp.eq.s32.totalorder %s41, 1
      %p64 = por %p62, %p63
      %p66 = scmp.ne.s32.totalorder %s49, %s65
      %p67 = scmp.eq.s32.totalorder %s41, 0
      %p68 = por %p66, %p67
      %s69 = ssub.s32 %s35, %s42
      %p70 = scmp.eq.s32.totalorder %s69, 0
      %s72 = sadd.s32 %s71, 1
      %s73 = scalar_select %p70, %s71, %s72
      %p76 = pneg %p70
      %p77 = scmp.eq.s32.totalorder %s35, 1
      %p78 = por %p76, %p77
      %p79 = scmp.ne.s32.totalorder %s71, %s74
      %p80 = scmp.eq.s32.totalorder %s35, 0
      %p81 = por %p79, %p80
      %p82 = scmp.ne.s32.totalorder %s71, %s74
      %p83 = scmp.eq.s32.totalorder %s40, 1
      %p84 = por %p82, %p83
      %p85 = scmp.ne.s32.totalorder %s74, %s75
      %p86 = scmp.eq.s32.totalorder %s40, 0
      %p87 = por %p85, %p86
      %p88 = scmp.ne.s32.totalorder %s74, %s75
      %p89 = scmp.eq.s32.totalorder %s41, 1
      %p90 = por %p88, %p89
      %p92 = scmp.ne.s32.totalorder %s75, %s91
      %p93 = scmp.eq.s32.totalorder %s41, 0
      %p94 = por %p92, %p93
      %s95 = ssub.s32 %s35, %s42
      %p96 = scmp.eq.s32.totalorder %s95, 0
      %s98 = sadd.s32 %s97, 1
      %s99 = scalar_select %p96, %s97, %s98
      %p102 = pneg %p96
      %p103 = scmp.eq.s32.totalorder %s35, 1
      %p104 = por %p102, %p103
      %p105 = scmp.ne.s32.totalorder %s97, %s100
      %p106 = scmp.eq.s32.totalorder %s35, 0
      %p107 = por %p105, %p106
      %p108 = scmp.ne.s32.totalorder %s97, %s100
      %p109 = scmp.eq.s32.totalorder %s40, 1
      %p110 = por %p108, %p109
      %p111 = scmp.ne.s32.totalorder %s100, %s101
      %p112 = scmp.eq.s32.totalorder %s40, 0
      %p113 = por %p111, %p112
      %p114 = scmp.ne.s32.totalorder %s100, %s101
      %p115 = scmp.eq.s32.totalorder %s41, 1
      %p116 = por %p114, %p115
      %p118 = scmp.ne.s32.totalorder %s101, %s117
      %p119 = scmp.eq.s32.totalorder %s41, 0
      %p120 = por %p118, %p119
      %s122 = sadd.s32 %s121, 1
      %p125 = scmp.eq.s32.totalorder %s35, 1
      %p126 = scmp.ne.s32.totalorder %s121, %s123
      %p127 = scmp.eq.s32.totalorder %s35, 0
      %p128 = por %p126, %p127
      %p129 = scmp.ne.s32.totalorder %s121, %s123
      %p130 = scmp.eq.s32.totalorder %s40, 1
      %p131 = por %p129, %p130
      %p132 = scmp.ne.s32.totalorder %s123, %s124
      %p133 = scmp.eq.s32.totalorder %s40, 0
      %p134 = por %p132, %p133
      %p135 = scmp.ne.s32.totalorder %s123, %s124
      %p136 = scmp.eq.s32.totalorder %s41, 1
      %p137 = por %p135, %p136
      %p139 = scmp.ne.s32.totalorder %s124, %s138
      %p140 = scmp.eq.s32.totalorder %s41, 0
      %p141 = por %p139, %p140
      %s142 = ssub.s32 %s35, %s42
      %p143 = scmp.eq.s32.totalorder %s142, 0
      %s145 = sadd.s32 %s144, 1
      %s146 = scalar_select %p143, %s144, %s145
      %p149 = pneg %p143
      %p150 = scmp.eq.s32.totalorder %s35, 1
      %p151 = por %p149, %p150
      %p152 = scmp.ne.s32.totalorder %s144, %s147
      %p153 = scmp.eq.s32.totalorder %s35, 0
      %p154 = por %p152, %p153
      %p155 = scmp.ne.s32.totalorder %s144, %s147
      %p156 = scmp.eq.s32.totalorder %s40, 1
      %p157 = por %p155, %p156
      %p158 = scmp.ne.s32.totalorder %s147, %s148
      %p159 = scmp.eq.s32.totalorder %s40, 0
      %p160 = por %p158, %p159
      %p161 = scmp.ne.s32.totalorder %s147, %s148
      %p162 = scmp.eq.s32.totalorder %s41, 1
      %p163 = por %p161, %p162
      %p165 = scmp.ne.s32.totalorder %s148, %s164
      %p166 = scmp.eq.s32.totalorder %s41, 0
      %p167 = por %p165, %p166
      %s169 = sadd.s32 %s168, 1
      %p172 = scmp.eq.s32.totalorder %s35, 1
      %p173 = scmp.ne.s32.totalorder %s168, %s170
      %p174 = scmp.eq.s32.totalorder %s35, 0
      %p175 = por %p173, %p174
      %p176 = scmp.ne.s32.totalorder %s168, %s170
      %p177 = scmp.eq.s32.totalorder %s40, 1
      %p178 = por %p176, %p177
      %p179 = scmp.ne.s32.totalorder %s170, %s171
      %p180 = scmp.eq.s32.totalorder %s40, 0
      %p181 = por %p179, %p180
      %p182 = scmp.ne.s32.totalorder %s170, %s171
      %p183 = scmp.eq.s32.totalorder %s41, 1
      %p184 = por %p182, %p183
      %p186 = scmp.ne.s32.totalorder %s171, %s185
      %p187 = scmp.eq.s32.totalorder %s41, 0
      %p188 = por %p186, %p187
      %s190 = sadd.s32 %s189, 1
      %p193 = scmp.eq.s32.totalorder %s35, 1
      %p194 = scmp.ne.s32.totalorder %s189, %s191
      %p195 = scmp.eq.s32.totalorder %s35, 0
      %p196 = por %p194, %p195
      %p197 = scmp.ne.s32.totalorder %s189, %s191
      %p198 = scmp.eq.s32.totalorder %s40, 1
      %p199 = por %p197, %p198
      %p200 = scmp.ne.s32.totalorder %s191, %s192
      %p201 = scmp.eq.s32.totalorder %s40, 0
      %p202 = por %p200, %p201
      %p203 = scmp.ne.s32.totalorder %s191, %s192
      %p204 = scmp.eq.s32.totalorder %s41, 1
      %p205 = por %p203, %p204
      %p207 = scmp.ne.s32.totalorder %s192, %s206
      %p208 = scmp.eq.s32.totalorder %s41, 0
      %p209 = por %p207, %p208
      %s211 = sadd.s32 %s210, 1
      %p214 = scmp.eq.s32.totalorder %s35, 1
      %p215 = scmp.ne.s32.totalorder %s210, %s212
      %p216 = scmp.eq.s32.totalorder %s35, 0
      %p217 = por %p215, %p216
      %p218 = scmp.ne.s32.totalorder %s210, %s212
      %p219 = scmp.eq.s32.totalorder %s40, 1
      %p220 = por %p218, %p219
      %p221 = scmp.ne.s32.totalorder %s212, %s213
      %p222 = scmp.eq.s32.totalorder %s40, 0
      %p223 = por %p221, %p222
      %p224 = scmp.ne.s32.totalorder %s212, %s213
      %p225 = scmp.eq.s32.totalorder %s41, 1
      %p226 = por %p224, %p225
      %p228 = scmp.ne.s32.totalorder %s213, %s227
      %p229 = scmp.eq.s32.totalorder %s41, 0
      %p230 = por %p228, %p229
      %s232 = sadd.s32 %s231, 1
      %p235 = scmp.eq.s32.totalorder %s35, 1
      %p236 = scmp.ne.s32.totalorder %s231, %s233
      %p237 = scmp.eq.s32.totalorder %s35, 0
      %p238 = por %p236, %p237
      %p239 = scmp.ne.s32.totalorder %s231, %s233
      %p240 = scmp.eq.s32.totalorder %s40, 1
      %p241 = por %p239, %p240
      %p242 = scmp.ne.s32.totalorder %s233, %s234
      %p243 = scmp.eq.s32.totalorder %s40, 0
      %p244 = por %p242, %p243
      %p245 = scmp.ne.s32.totalorder %s233, %s234
      %p246 = scmp.eq.s32.totalorder %s41, 1
      %p247 = por %p245, %p246
      %p249 = scmp.ne.s32.totalorder %s234, %s248
      %p250 = scmp.eq.s32.totalorder %s41, 0
      %p251 = por %p249, %p250
      %s253 = sadd.s32 %s252, 1
      %p256 = scmp.eq.s32.totalorder %s35, 1
      %p257 = scmp.ne.s32.totalorder %s252, %s254
      %p258 = scmp.eq.s32.totalorder %s35, 0
      %p259 = por %p257, %p258
      %p260 = scmp.ne.s32.totalorder %s252, %s254
      %p261 = scmp.eq.s32.totalorder %s40, 1
      %p262 = por %p260, %p261
      %p263 = scmp.ne.s32.totalorder %s254, %s255
      %p264 = scmp.eq.s32.totalorder %s40, 0
      %p265 = por %p263, %p264
      %p266 = scmp.ne.s32.totalorder %s254, %s255
      %p267 = scmp.eq.s32.totalorder %s41, 1
      %p268 = por %p266, %p267
      %p270 = scmp.ne.s32.totalorder %s255, %s269
      %p271 = scmp.eq.s32.totalorder %s41, 0
      %p272 = por %p270, %p271
      %s274 = sadd.s32 %s273, 1
      %p277 = scmp.eq.s32.totalorder %s35, 1
      %p278 = scmp.ne.s32.totalorder %s273, %s275
      %p279 = scmp.eq.s32.totalorder %s35, 0
      %p280 = por %p278, %p279
      %p281 = scmp.ne.s32.totalorder %s273, %s275
      %p282 = scmp.eq.s32.totalorder %s40, 1
      %p283 = por %p281, %p282
      %p284 = scmp.ne.s32.totalorder %s275, %s276
      %p285 = scmp.eq.s32.totalorder %s40, 0
      %p286 = por %p284, %p285
      %p287 = scmp.ne.s32.totalorder %s275, %s276
      %p288 = scmp.eq.s32.totalorder %s41, 1
      %p289 = por %p287, %p288
      %p291 = scmp.ne.s32.totalorder %s276, %s290
      %p292 = scmp.eq.s32.totalorder %s41, 0
      %p293 = por %p291, %p292
      %s295 = sadd.s32 %s294, 1
      %p298 = scmp.eq.s32.totalorder %s35, 1
      %p299 = scmp.ne.s32.totalorder %s294, %s296
      %p300 = scmp.eq.s32.totalorder %s35, 0
      %p301 = por %p299, %p300
      %p302 = scmp.ne.s32.totalorder %s294, %s296
      %p303 = scmp.eq.s32.totalorder %s40, 1
      %p304 = por %p302, %p303
      %p305 = scmp.ne.s32.totalorder %s296, %s297
      %p306 = scmp.eq.s32.totalorder %s40, 0
      %p307 = por %p305, %p306
      %p308 = scmp.ne.s32.totalorder %s296, %s297
      %p309 = scmp.eq.s32.totalorder %s41, 1
      %p310 = por %p308, %p309
      %p312 = scmp.ne.s32.totalorder %s297, %s311
      %p313 = scmp.eq.s32.totalorder %s41, 0
      %p314 = por %p312, %p313
      %s316 = sadd.s32 %s315, 1
      %p319 = scmp.eq.s32.totalorder %s35, 1
      %p320 = scmp.ne.s32.totalorder %s315, %s317
      %p321 = scmp.eq.s32.totalorder %s35, 0
      %p322 = por %p320, %p321
      %p323 = scmp.ne.s32.totalorder %s315, %s317
      %p324 = scmp.eq.s32.totalorder %s40, 1
      %p325 = por %p323, %p324
      %p326 = scmp.ne.s32.totalorder %s317, %s318
      %p327 = scmp.eq.s32.totalorder %s40, 0
      %p328 = por %p326, %p327
      %p329 = scmp.ne.s32.totalorder %s317, %s318
      %p330 = scmp.eq.s32.totalorder %s41, 1
      %p331 = por %p329, %p330
      %p333 = scmp.ne.s32.totalorder %s318, %s332
      %p334 = scmp.eq.s32.totalorder %s41, 0
      %p335 = por %p333, %p334
      %s337 = sadd.s32 %s336, 1
      %p340 = scmp.eq.s32.totalorder %s35, 1
      %p341 = scmp.ne.s32.totalorder %s336, %s338
      %p342 = scmp.eq.s32.totalorder %s35, 0
      %p343 = por %p341, %p342
      %p344 = scmp.ne.s32.totalorder %s336, %s338
      %p345 = scmp.eq.s32.totalorder %s40, 1
      %p346 = por %p344, %p345
      %p347 = scmp.ne.s32.totalorder %s338, %s339
      %p348 = scmp.eq.s32.totalorder %s40, 0
      %p349 = por %p347, %p348
      %p350 = scmp.ne.s32.totalorder %s338, %s339
      %p351 = scmp.eq.s32.totalorder %s41, 1
      %p352 = por %p350, %p351
      %p354 = scmp.ne.s32.totalorder %s339, %s353
      %p355 = scmp.eq.s32.totalorder %s41, 0
      %p356 = por %p354, %p355
      %s358 = sadd.s32 %s357, 1
      %p361 = scmp.eq.s32.totalorder %s35, 1
      %p362 = scmp.ne.s32.totalorder %s357, %s359
      %p363 = scmp.eq.s32.totalorder %s35, 0
      %p364 = por %p362, %p363
      %p365 = scmp.ne.s32.totalorder %s357, %s359
      %p366 = scmp.eq.s32.totalorder %s40, 1
      %p367 = por %p365, %p366
      %p368 = scmp.ne.s32.totalorder %s359, %s360
      %p369 = scmp.eq.s32.totalorder %s40, 0
      %p370 = por %p368, %p369
      %p371 = scmp.ne.s32.totalorder %s359, %s360
      %p372 = scmp.eq.s32.totalorder %s41, 1
      %p373 = por %p371, %p372
      %p375 = scmp.ne.s32.totalorder %s360, %s374
      %p376 = scmp.eq.s32.totalorder %s41, 0
      %p377 = por %p375, %p376
      %s379 = sadd.s32 %s378, 1
      %p382 = scmp.eq.s32.totalorder %s35, 1
      %p383 = scmp.ne.s32.totalorder %s378, %s380
      %p384 = scmp.eq.s32.totalorder %s35, 0
      %p385 = por %p383, %p384
      %p386 = scmp.ne.s32.totalorder %s378, %s380
      %p387 = scmp.eq.s32.totalorder %s40, 1
      %p388 = por %p386, %p387
      %p389 = scmp.ne.s32.totalorder %s380, %s381
      %p390 = scmp.eq.s32.totalorder %s40, 0
      %p391 = por %p389, %p390
      %p392 = scmp.ne.s32.totalorder %s380, %s381
      %p393 = scmp.eq.s32.totalorder %s41, 1
      %p394 = por %p392, %p393
      %p396 = scmp.ne.s32.totalorder %s381, %s395
      %p397 = scmp.eq.s32.totalorder %s41, 0
      %p398 = por %p396, %p397
      %s400 = sadd.s32 %s399, 1
      %p403 = scmp.eq.s32.totalorder %s35, 1
      %p404 = scmp.ne.s32.totalorder %s399, %s401
      %p405 = scmp.eq.s32.totalorder %s35, 0
      %p406 = por %p404, %p405
      %p407 = scmp.ne.s32.totalorder %s399, %s401
      %p408 = scmp.eq.s32.totalorder %s40, 1
      %p409 = por %p407, %p408
      %p410 = scmp.ne.s32.totalorder %s401, %s402
      %p411 = scmp.eq.s32.totalorder %s40, 0
      %p412 = por %p410, %p411
      %p413 = scmp.ne.s32.totalorder %s401, %s402
      %p414 = scmp.eq.s32.totalorder %s41, 1
      %p415 = por %p413, %p414
      %p417 = scmp.ne.s32.totalorder %s402, %s416
      %p418 = scmp.eq.s32.totalorder %s41, 0
      %p419 = por %p417, %p418
      %s421 = sadd.s32 %s420, 1
      %p424 = scmp.eq.s32.totalorder %s35, 1
      %p425 = scmp.ne.s32.totalorder %s420, %s422
      %p426 = scmp.eq.s32.totalorder %s35, 0
      %p427 = por %p425, %p426
      %p428 = scmp.ne.s32.totalorder %s420, %s422
      %p429 = scmp.eq.s32.totalorder %s40, 1
      %p430 = por %p428, %p429
      %p431 = scmp.ne.s32.totalorder %s422, %s423
      %p432 = scmp.eq.s32.totalorder %s40, 0
      %p433 = por %p431, %p432
      %p434 = scmp.ne.s32.totalorder %s422, %s423
      %p435 = scmp.eq.s32.totalorder %s41, 1
      %p436 = por %p434, %p435
      %p438 = scmp.ne.s32.totalorder %s423, %s437
      %p439 = scmp.eq.s32.totalorder %s41, 0
      %p440 = por %p438, %p439
      %s442 = sadd.s32 %s441, 1
      %p445 = scmp.eq.s32.totalorder %s35, 1
      %p446 = scmp.ne.s32.totalorder %s441, %s443
      %p447 = scmp.eq.s32.totalorder %s35, 0
      %p448 = por %p446, %p447
      %p449 = scmp.ne.s32.totalorder %s441, %s443
      %p450 = scmp.eq.s32.totalorder %s40, 1
      %p451 = por %p449, %p450
      %p452 = scmp.ne.s32.totalorder %s443, %s444
      %p453 = scmp.eq.s32.totalorder %s40, 0
      %p454 = por %p452, %p453
      %p455 = scmp.ne.s32.totalorder %s443, %s444
      %p456 = scmp.eq.s32.totalorder %s41, 1
      %p457 = por %p455, %p456
      %p459 = scmp.ne.s32.totalorder %s444, %s458
      %p460 = scmp.eq.s32.totalorder %s41, 0
      %p461 = por %p459, %p460
      %s463 = sadd.s32 %s462, 1
      %p466 = scmp.eq.s32.totalorder %s35, 1
      %p467 = scmp.ne.s32.totalorder %s462, %s464
      %p468 = scmp.eq.s32.totalorder %s35, 0
      %p469 = por %p467, %p468
      %p470 = scmp.ne.s32.totalorder %s462, %s464
      %p471 = scmp.eq.s32.totalorder %s40, 1
      %p472 = por %p470, %p471
      %p473 = scmp.ne.s32.totalorder %s464, %s465
      %p474 = scmp.eq.s32.totalorder %s40, 0
      %p475 = por %p473, %p474
      %p476 = scmp.ne.s32.totalorder %s464, %s465
      %p477 = scmp.eq.s32.totalorder %s41, 1
      %p478 = por %p476, %p477
      %p480 = scmp.ne.s32.totalorder %s465, %s479
      %p481 = scmp.eq.s32.totalorder %s41, 0
      %p482 = por %p480, %p481
      %s484 = sadd.s32 %s483, 1
      %p487 = scmp.eq.s32.totalorder %s35, 1
      %p488 = scmp.ne.s32.totalorder %s483, %s485
      %p489 = scmp.eq.s32.totalorder %s35, 0
      %p490 = por %p488, %p489
      %p491 = scmp.ne.s32.totalorder %s483, %s485
      %p492 = scmp.eq.s32.totalorder %s40, 1
      %p493 = por %p491, %p492
      %p494 = scmp.ne.s32.totalorder %s485, %s486
      %p495 = scmp.eq.s32.totalorder %s40, 0
      %p496 = por %p494, %p495
      %p497 = scmp.ne.s32.totalorder %s485, %s486
      %p498 = scmp.eq.s32.totalorder %s41, 1
      %p499 = por %p497, %p498
      %p501 = scmp.ne.s32.totalorder %s486, %s500
      %p502 = scmp.eq.s32.totalorder %s41, 0
      %p503 = por %p501, %p502
      %s504 = ssub.s32 %s35, %s42
      %p505 = scmp.eq.s32.totalorder %s504, 0
      %s507 = sadd.s32 %s506, 1
      %s508 = scalar_select %p505, %s506, %s507
      %p511 = pneg %p505
      %p512 = scmp.eq.s32.totalorder %s35, 1
      %p513 = por %p511, %p512
      %p514 = scmp.ne.s32.totalorder %s506, %s509
      %p515 = scmp.eq.s32.totalorder %s35, 0
      %p516 = por %p514, %p515
      %p517 = scmp.ne.s32.totalorder %s506, %s509
      %p518 = scmp.eq.s32.totalorder %s40, 1
      %p519 = por %p517, %p518
      %p520 = scmp.ne.s32.totalorder %s509, %s510
      %p521 = scmp.eq.s32.totalorder %s40, 0
      %p522 = por %p520, %p521
      %p523 = scmp.ne.s32.totalorder %s509, %s510
      %p524 = scmp.eq.s32.totalorder %s41, 1
      %p525 = por %p523, %p524
      %p527 = scmp.ne.s32.totalorder %s510, %s526
      %p528 = scmp.eq.s32.totalorder %s41, 0
      %p529 = por %p527, %p528
      %s530 = ssub.s32 %s35, %s42
      %p531 = scmp.eq.s32.totalorder %s530, 0
      %s533 = sadd.s32 %s532, 1
      %s534 = scalar_select %p531, %s532, %s533
      %p537 = pneg %p531
      %p538 = scmp.eq.s32.totalorder %s35, 1
      %p539 = por %p537, %p538
      %p540 = scmp.ne.s32.totalorder %s532, %s535
      %p541 = scmp.eq.s32.totalorder %s35, 0
      %p542 = por %p540, %p541
      %p543 = scmp.ne.s32.totalorder %s532, %s535
      %p544 = scmp.eq.s32.totalorder %s40, 1
      %p545 = por %p543, %p544
      %p546 = scmp.ne.s32.totalorder %s535, %s536
      %p547 = scmp.eq.s32.totalorder %s40, 0
      %p548 = por %p546, %p547
      %p549 = scmp.ne.s32.totalorder %s535, %s536
      %p550 = scmp.eq.s32.totalorder %s41, 1
      %p551 = por %p549, %p550
      %p553 = scmp.ne.s32.totalorder %s536, %s552
      %p554 = scmp.eq.s32.totalorder %s41, 0
      %p555 = por %p553, %p554
      %p556 = scmp.le.s32.totalorder 1, %s35
      %p557 = scmp.lt.s32.totalorder %s35, 3
      %p558 = pnand %p556, %p557
      %p559 = pneg %p558
      // Predicated region
      $region9: #{adaptive_pooler_forward.5} parent=5 // pred_check
        _
      $region10: #{adaptive_pooler_forward.5} parent=5 // pred_check_branch
        %561 = sbr.rel (%p558) target = $region12
      $region11: #{adaptive_pooler_forward.5} parent=5 // pred_region
        %s562 = ssub.s32 %s35, 1
        // Predicated region
        $region13: #{adaptive_pooler_forward.5} parent=11 // pred_check
          %p563 = pneg %p134
        $region14: #{adaptive_pooler_forward.5} parent=11 // pred_check_branch
          %565 = sbr.rel (%p563) target = $region16
        $region15: #{adaptive_pooler_forward.5} parent=11 // pred_region
          _
        $region16: #{adaptive_pooler_forward.5} parent=11 // pred_fallthru
          _
        // Predicated region
        $region17: #{adaptive_pooler_forward.5} parent=11 // pred_check
          %p566 = pneg %p181
        $region18: #{adaptive_pooler_forward.5} parent=11 // pred_check_branch
          %568 = sbr.rel (%p566) target = $region20
        $region19: #{adaptive_pooler_forward.5} parent=11 // pred_region
          _
        $region20: #{adaptive_pooler_forward.5} parent=11 // pred_fallthru
          _
        // Predicated region
        $region21: #{adaptive_pooler_forward.5} parent=11 // pred_check
          %p569 = pneg %p202
        $region22: #{adaptive_pooler_forward.5} parent=11 // pred_check_branch
          %571 = sbr.rel (%p569) target = $region24
        $region23: #{adaptive_pooler_forward.5} parent=11 // pred_region
          _
        $region24: #{adaptive_pooler_forward.5} parent=11 // pred_fallthru
          _
        // Predicated region
        $region25: #{adaptive_pooler_forward.5} parent=11 // pred_check
          %p572 = pneg %p223
        $region26: #{adaptive_pooler_forward.5} parent=11 // pred_check_branch
          %574 = sbr.rel (%p572) target = $region28
        $region27: #{adaptive_pooler_forward.5} parent=11 // pred_region
          _
        $region28: #{adaptive_pooler_forward.5} parent=11 // pred_fallthru
          _
        // Predicated region
        $region29: #{adaptive_pooler_forward.5} parent=11 // pred_check
          %p575 = pneg %p244
        $region30: #{adaptive_pooler_forward.5} parent=11 // pred_check_branch
          %577 = sbr.rel (%p575) target = $region32
        $region31: #{adaptive_pooler_forward.5} parent=11 // pred_region
          _
        $region32: #{adaptive_pooler_forward.5} parent=11 // pred_fallthru
          _
        // Predicated region
        $region33: #{adaptive_pooler_forward.5} parent=11 // pred_check
          %p578 = pneg %p265
        $region34: #{adaptive_pooler_forward.5} parent=11 // pred_check_branch
          %580 = sbr.rel (%p578) target = $region36
        $region35: #{adaptive_pooler_forward.5} parent=11 // pred_region
          _
        $region36: #{adaptive_pooler_forward.5} parent=11 // pred_fallthru
          _
        // Predicated region
        $region37: #{adaptive_pooler_forward.5} parent=11 // pred_check
          %p581 = pneg %p286
        $region38: #{adaptive_pooler_forward.5} parent=11 // pred_check_branch
          %583 = sbr.rel (%p581) target = $region40
        $region39: #{adaptive_pooler_forward.5} parent=11 // pred_region
          _
        $region40: #{adaptive_pooler_forward.5} parent=11 // pred_fallthru
          _
        // Predicated region
        $region41: #{adaptive_pooler_forward.5} parent=11 // pred_check
          %p584 = pneg %p307
        $region42: #{adaptive_pooler_forward.5} parent=11 // pred_check_branch
          %586 = sbr.rel (%p584) target = $region44
        $region43: #{adaptive_pooler_forward.5} parent=11 // pred_region
          _
        $region44: #{adaptive_pooler_forward.5} parent=11 // pred_fallthru
          _
        // Predicated region
        $region45: #{adaptive_pooler_forward.5} parent=11 // pred_check
          %p587 = pneg %p328
        $region46: #{adaptive_pooler_forward.5} parent=11 // pred_check_branch
          %589 = sbr.rel (%p587) target = $region48
        $region47: #{adaptive_pooler_forward.5} parent=11 // pred_region
          _
        $region48: #{adaptive_pooler_forward.5} parent=11 // pred_fallthru
          _
        // Predicated region
        $region49: #{adaptive_pooler_forward.5} parent=11 // pred_check
          %p590 = pneg %p349
        $region50: #{adaptive_pooler_forward.5} parent=11 // pred_check_branch
          %592 = sbr.rel (%p590) target = $region52
        $region51: #{adaptive_pooler_forward.5} parent=11 // pred_region
          _
        $region52: #{adaptive_pooler_forward.5} parent=11 // pred_fallthru
          _
        // Predicated region
        $region53: #{adaptive_pooler_forward.5} parent=11 // pred_check
          %p593 = pneg %p370
        $region54: #{adaptive_pooler_forward.5} parent=11 // pred_check_branch
          %595 = sbr.rel (%p593) target = $region56
        $region55: #{adaptive_pooler_forward.5} parent=11 // pred_region
          _
        $region56: #{adaptive_pooler_forward.5} parent=11 // pred_fallthru
          _
        // Predicated region
        $region57: #{adaptive_pooler_forward.5} parent=11 // pred_check
          %p596 = pneg %p391
        $region58: #{adaptive_pooler_forward.5} parent=11 // pred_check_branch
          %598 = sbr.rel (%p596) target = $region60
        $region59: #{adaptive_pooler_forward.5} parent=11 // pred_region
          _
        $region60: #{adaptive_pooler_forward.5} parent=11 // pred_fallthru
          _
        // Predicated region
        $region61: #{adaptive_pooler_forward.5} parent=11 // pred_check
          %p599 = pneg %p412
        $region62: #{adaptive_pooler_forward.5} parent=11 // pred_check_branch
          %601 = sbr.rel (%p599) target = $region64
        $region63: #{adaptive_pooler_forward.5} parent=11 // pred_region
          _
        $region64: #{adaptive_pooler_forward.5} parent=11 // pred_fallthru
          _
        // Predicated region
        $region65: #{adaptive_pooler_forward.5} parent=11 // pred_check
          %p602 = pneg %p433
        $region66: #{adaptive_pooler_forward.5} parent=11 // pred_check_branch
          %604 = sbr.rel (%p602) target = $region68
        $region67: #{adaptive_pooler_forward.5} parent=11 // pred_region
          _
        $region68: #{adaptive_pooler_forward.5} parent=11 // pred_fallthru
          _
        // Predicated region
        $region69: #{adaptive_pooler_forward.5} parent=11 // pred_check
          %p605 = pneg %p454
        $region70: #{adaptive_pooler_forward.5} parent=11 // pred_check_branch
          %607 = sbr.rel (%p605) target = $region72
        $region71: #{adaptive_pooler_forward.5} parent=11 // pred_region
          _
        $region72: #{adaptive_pooler_forward.5} parent=11 // pred_fallthru
          _
        // Predicated region
        $region73: #{adaptive_pooler_forward.5} parent=11 // pred_check
          %p608 = pneg %p475
        $region74: #{adaptive_pooler_forward.5} parent=11 // pred_check_branch
          %610 = sbr.rel (%p608) target = $region76
        $region75: #{adaptive_pooler_forward.5} parent=11 // pred_region
          _
        $region76: #{adaptive_pooler_forward.5} parent=11 // pred_fallthru
          _
        // Predicated region
        $region77: #{adaptive_pooler_forward.5} parent=11 // pred_check
          %p611 = pneg %p496
        $region78: #{adaptive_pooler_forward.5} parent=11 // pred_check_branch
          %613 = sbr.rel (%p611) target = $region80
        $region79: #{adaptive_pooler_forward.5} parent=11 // pred_region
          _
        $region80: #{adaptive_pooler_forward.5} parent=11 // pred_fallthru
          _
      $region12: #{adaptive_pooler_forward.5} parent=5 // pred_fallthru
        _
      %p614 = scmp.lt.s32.totalorder %s35, 2
      // Predicated region
      $region81: #{adaptive_pooler_forward.5} parent=5 // pred_check
        %p615 = pneg %p614
      $region82: #{adaptive_pooler_forward.5} parent=5 // pred_check_branch
        %617 = sbr.rel (%p615) target = $region84
      $region83: #{adaptive_pooler_forward.5} parent=5 // pred_region
        // Predicated region
        $region85: #{adaptive_pooler_forward.5} parent=83 // pred_check
          %p618 = pneg %p55
        $region86: #{adaptive_pooler_forward.5} parent=83 // pred_check_branch
          %620 = sbr.rel (%p618) target = $region88
        $region87: #{adaptive_pooler_forward.5} parent=83 // pred_region
          %s621 = smul.u32 4, %s35
          %p622 = scmp.lt.s32.totalorder %s621, 7
          %s623 = scalar_select %p622, %s621, 7
          %s624 = smul.addr %s623, 8
          %s625 = scalar_lea.vmem %s0, %s624
          %s626 = smul.u32 4, %s35
        $region88: #{adaptive_pooler_forward.5} parent=83 // pred_fallthru
          _
        // Predicated region
        $region89: #{adaptive_pooler_forward.5} parent=83 // pred_check
          %p627 = pneg %p81
        $region90: #{adaptive_pooler_forward.5} parent=83 // pred_check_branch
          %629 = sbr.rel (%p627) target = $region92
        $region91: #{adaptive_pooler_forward.5} parent=83 // pred_region
          %s630 = smul.u32 4, %s35
          %p631 = scmp.lt.s32.totalorder %s630, 7
          %s632 = scalar_select %p631, %s630, 7
          %s633 = smul.addr %s632, 8
          %s634 = scalar_lea.vmem %s1, %s633
          %s635 = smul.u32 4, %s35
        $region92: #{adaptive_pooler_forward.5} parent=83 // pred_fallthru
          _
        // Predicated region
        $region93: #{adaptive_pooler_forward.5} parent=83 // pred_check
          %p636 = pneg %p107
        $region94: #{adaptive_pooler_forward.5} parent=83 // pred_check_branch
          %638 = sbr.rel (%p636) target = $region96
        $region95: #{adaptive_pooler_forward.5} parent=83 // pred_region
          %s639 = smul.u32 4, %s35
          %p640 = scmp.lt.s32.totalorder %s639, 7
          %s641 = scalar_select %p640, %s639, 7
          %s642 = smul.addr %s641, 8
          %s643 = scalar_lea.vmem %s2, %s642
          %s644 = smul.u32 4, %s35
        $region96: #{adaptive_pooler_forward.5} parent=83 // pred_fallthru
          _
        // Predicated region
        $region97: #{adaptive_pooler_forward.5} parent=83 // pred_check
          %p645 = pneg %p154
        $region98: #{adaptive_pooler_forward.5} parent=83 // pred_check_branch
          %647 = sbr.rel (%p645) target = $region100
        $region99: #{adaptive_pooler_forward.5} parent=83 // pred_region
          %p648 = scmp.lt.s32.totalorder %s35, 1
          %s649 = scalar_select %p648, %s35, 1
          %s650 = smul.addr %s649, 8
          %s651 = scalar_lea.vmem %s4, %s650
        $region100: #{adaptive_pooler_forward.5} parent=83 // pred_fallthru
          _
      $region84: #{adaptive_pooler_forward.5} parent=5 // pred_fallthru
        _
      %p652 = scmp.le.s32.totalorder 1, %s35
      %p653 = scmp.lt.s32.totalorder %s35, 3
      %p654 = pnand %p652, %p653
      %p655 = pneg %p654
      // Predicated region
      $region101: #{adaptive_pooler_forward.5} parent=5 // pred_check
        _
      $region102: #{adaptive_pooler_forward.5} parent=5 // pred_check_branch
        %657 = sbr.rel (%p654) target = $region104
      $region103: #{adaptive_pooler_forward.5} parent=5 // pred_region
        %s658 = ssub.s32 %s35, 1
        %s659 = smul.u32 4, %s40
        %p660 = scmp.lt.s32.totalorder %s659, 7
        %s661 = scalar_select %p660, %s659, 7
        %s662 = smul.addr %s661, 8
        %s663 = scalar_lea.vmem %s0, %s662
        %p664 = pneg %p61
        %p665 = pneg %p58
        %s666 = smul.u32 4, %s40
        %p667 = scmp.lt.s32.totalorder %s666, 7
        %s668 = scalar_select %p667, %s666, 7
        %s669 = smul.addr %s668, 8
        %s670 = scalar_lea.vmem %s1, %s669
        %p671 = pneg %p87
        %p672 = pneg %p84
        %s673 = smul.u32 4, %s40
        %p674 = scmp.lt.s32.totalorder %s673, 7
        %s675 = scalar_select %p674, %s673, 7
        %s676 = smul.addr %s675, 8
        %s677 = scalar_lea.vmem %s2, %s676
        %p678 = pneg %p113
        %p679 = pneg %p110
        %p680 = pneg %p134
        %p681 = pneg %p131
        %p682 = scmp.lt.s32.totalorder %s40, 1
        %s683 = scalar_select %p682, %s40, 1
        %s684 = smul.addr %s683, 8
        %s685 = scalar_lea.vmem %s4, %s684
        %p686 = pneg %p160
        %p687 = pneg %p157
        %p688 = pneg %p181
        %p689 = pneg %p178
        %p690 = pneg %p202
        %p691 = pneg %p199
        %p692 = pneg %p223
        %p693 = pneg %p220
        %p694 = pneg %p244
        %p695 = pneg %p241
        %p696 = pneg %p265
        %p697 = pneg %p262
        %p698 = pneg %p286
        %p699 = pneg %p283
        %p700 = pneg %p307
        %p701 = pneg %p304
        %p702 = pneg %p328
        %p703 = pneg %p325
        %p704 = pneg %p349
        %p705 = pneg %p346
        %p706 = pneg %p370
        %p707 = pneg %p367
        %p708 = pneg %p391
        %p709 = pneg %p388
        %p710 = pneg %p412
        %p711 = pneg %p409
        %p712 = pneg %p433
        %p713 = pneg %p430
        %p714 = pneg %p454
        %p715 = pneg %p451
        %p716 = pneg %p475
        %p717 = pneg %p472
        %p718 = pneg %p496
        %p719 = pneg %p493
        %p720 = pneg %p522
        %p721 = pneg %p519
        %s722 = sand.u32 %s509, 1
        %s723 = scalar_lea.sflag [#allocation3], %s722
        %s724 = sand.u32 %s509, 1
        %s725 = smul.addr %s724, 8
        %s726 = scalar_lea.vmem [#allocation2], %s725
        %p727 = pneg %p548
        %p728 = pneg %p545
        %s729 = sand.u32 %s535, 1
        %s730 = scalar_lea.sflag [#allocation5], %s729
        %s731 = sand.u32 %s535, 1
        %s732 = smul.addr %s731, 32
        %s733 = scalar_lea.vmem [#allocation4], %s732
        %s734 = smul.u32 4, %s40
        %p735 = scmp.lt.s32.totalorder %s734, 7
        %s736 = scalar_select %p735, %s734, 7
        %s737 = smul.addr %s736, 8
        %s738 = scalar_lea.vmem %s0, %s737
        %s739 = smul.u32 4, %s40
        %s740 = smul.u32 4, %s40
        %p741 = scmp.lt.s32.totalorder %s740, 7
        %s742 = scalar_select %p741, %s740, 7
        %s743 = smul.addr %s742, 8
        %s744 = scalar_lea.vmem %s1, %s743
        %s745 = smul.u32 4, %s40
        %s746 = smul.u32 4, %s40
        %p747 = scmp.lt.s32.totalorder %s746, 7
        %s748 = scalar_select %p747, %s746, 7
        %s749 = smul.addr %s748, 8
        %s750 = scalar_lea.vmem %s2, %s749
        %s751 = smul.u32 4, %s40
        %p752 = scmp.lt.s32.totalorder %s40, 1
        %s753 = scalar_select %p752, %s40, 1
        %s754 = smul.addr %s753, 8
        %s755 = scalar_lea.vmem %s4, %s754
        %s756 = smul.u32 4, %s40
        %v757 = vld [vmem:[%s738] sm:$0xff]
        %v758 = vld [vmem:[%s738 + $0x8] sm:$0xff]
        %v759 = vld [vmem:[%s738 + $0x10] sm:$0xff]
        %v760 = vld [vmem:[%s738 + $0x18] sm:$0xff]
        %v761 = vld [vmem:[%s5] sm:$0x1]
        %v762 = vld [vmem:[%s6] sm:$0x1]
        %vm763 = vcmask 64512
        %v764 = vsel %vm763, %v757, 0.0
        %765 = vadd.xlane.f32.xlu0 %v764
        %v766 = vpop.xlane.xlu0 %765
        %v767 = vsel %vm763, %v758, 0.0
        %768 = vadd.xlane.f32.xlu0 %v767
        %v769 = vpop.xlane.xlu0 %768
        %v770 = vsel %vm763, %v759, 0.0
        %771 = vadd.xlane.f32.xlu0 %v770
        %v772 = vpop.xlane.xlu0 %771
        %v773 = vsel %vm763, %v760, 0.0
        %774 = vadd.xlane.f32.xlu0 %v773
        %v775 = vpop.xlane.xlu0 %774
        %v776 = vrcp.pop 8.0
        %v777 = vmul.f32 %v766, %v776
        %v778 = vmul.f32 %v769, %v776
        %v779 = vmul.f32 %v772, %v776
        %v780 = vmul.f32 %v775, %v776
        %v781 = vsub.f32 %v757, %v777
        %v782 = vsub.f32 %v758, %v778
        %v783 = vsub.f32 %v759, %v779
        %v784 = vsub.f32 %v760, %v780
        %v785 = vmul.f32 %v781, %v781
        %v786 = vmul.f32 %v782, %v782
        %v787 = vmul.f32 %v783, %v783
        %v788 = vmul.f32 %v784, %v784
        %v789 = vsel %vm763, %v785, 0.0
        %790 = vadd.xlane.f32.xlu0 %v789
        %v791 = vpop.xlane.xlu0 %790
        %v792 = vsel %vm763, %v786, 0.0
        %793 = vadd.xlane.f32.xlu0 %v792
        %v794 = vpop.xlane.xlu0 %793
        %v795 = vsel %vm763, %v787, 0.0
        %796 = vadd.xlane.f32.xlu0 %v795
        %v797 = vpop.xlane.xlu0 %796
        %v798 = vsel %vm763, %v788, 0.0
        %799 = vadd.xlane.f32.xlu0 %v798
        %v800 = vpop.xlane.xlu0 %799
        %v801 = vmul.f32 %v791, %v776
        %v802 = vmul.f32 %v794, %v776
        %v803 = vmul.f32 %v797, %v776
        %v804 = vmul.f32 %v800, %v776
        %v805 = vadd.f32 %v801, 1e-06
        %v806 = vadd.f32 %v802, 1e-06
        %v807 = vadd.f32 %v803, 1e-06
        %v808 = vadd.f32 %v804, 1e-06
        %v809 = vrsqrt.pop %v805
        %v810 = vrsqrt.pop %v806
        %v811 = vrsqrt.pop %v807
        %v812 = vrsqrt.pop %v808
        %v813 = vmul.f32 %v781, %v809
        %v814 = vmul.f32 %v782, %v810
        %v815 = vmul.f32 %v783, %v811
        %v816 = vmul.f32 %v784, %v812
        %v818 = vlaneseq
        %v819 = vshrl.u32 %v818, 7
        %v820 = vsub.s32 0, %v819
        %v821 = vrot.slane %v761, %v820
        %v823 = vmul.f32 %v813, %v821
        %v824 = vmul.f32 %v814, %v821
        %v825 = vmul.f32 %v815, %v821
        %v826 = vmul.f32 %v816, %v821
        %v828 = vlaneseq
        %v829 = vshrl.u32 %v828, 7
        %v830 = vsub.s32 0, %v829
        %v831 = vrot.slane %v762, %v830
        %v833 = vadd.f32 %v823, %v831
        %v834 = vadd.f32 %v824, %v831
        %v835 = vadd.f32 %v825, %v831
        %v836 = vadd.f32 %v826, %v831
        %v837 = vld [vmem:[%s744] sm:$0xff]
        %v838 = vld [vmem:[%s744 + $0x8] sm:$0xff]
        %v839 = vld [vmem:[%s744 + $0x10] sm:$0xff]
        %v840 = vld [vmem:[%s744 + $0x18] sm:$0xff]
        %v841 = vld [vmem:[%s7] sm:$0x1]
        %v842 = vld [vmem:[%s8] sm:$0x1]
        %v843 = vsel %vm763, %v837, 0.0
        %844 = vadd.xlane.f32.xlu0 %v843
        %v845 = vpop.xlane.xlu0 %844
        %v846 = vsel %vm763, %v838, 0.0
        %847 = vadd.xlane.f32.xlu0 %v846
        %v848 = vpop.xlane.xlu0 %847
        %v849 = vsel %vm763, %v839, 0.0
        %850 = vadd.xlane.f32.xlu0 %v849
        %v851 = vpop.xlane.xlu0 %850
        %v852 = vsel %vm763, %v840, 0.0
        %853 = vadd.xlane.f32.xlu0 %v852
        %v854 = vpop.xlane.xlu0 %853
        %v855 = vmul.f32 %v845, %v776
        %v856 = vmul.f32 %v848, %v776
        %v857 = vmul.f32 %v851, %v776
        %v858 = vmul.f32 %v854, %v776
        %v859 = vsub.f32 %v837, %v855
        %v860 = vsub.f32 %v838, %v856
        %v861 = vsub.f32 %v839, %v857
        %v862 = vsub.f32 %v840, %v858
        %v863 = vmul.f32 %v859, %v859
        %v864 = vmul.f32 %v860, %v860
        %v865 = vmul.f32 %v861, %v861
        %v866 = vmul.f32 %v862, %v862
        %v867 = vsel %vm763, %v863, 0.0
        %868 = vadd.xlane.f32.xlu0 %v867
        %v869 = vpop.xlane.xlu0 %868
        %v870 = vsel %vm763, %v864, 0.0
        %871 = vadd.xlane.f32.xlu0 %v870
        %v872 = vpop.xlane.xlu0 %871
        %v873 = vsel %vm763, %v865, 0.0
        %874 = vadd.xlane.f32.xlu0 %v873
        %v875 = vpop.xlane.xlu0 %874
        %v876 = vsel %vm763, %v866, 0.0
        %877 = vadd.xlane.f32.xlu0 %v876
        %v878 = vpop.xlane.xlu0 %877
        %v879 = vmul.f32 %v869, %v776
        %v880 = vmul.f32 %v872, %v776
        %v881 = vmul.f32 %v875, %v776
        %v882 = vmul.f32 %v878, %v776
        %v883 = vadd.f32 %v879, 1e-06
        %v884 = vadd.f32 %v880, 1e-06
        %v885 = vadd.f32 %v881, 1e-06
        %v886 = vadd.f32 %v882, 1e-06
        %v887 = vrsqrt.pop %v883
        %v888 = vrsqrt.pop %v884
        %v889 = vrsqrt.pop %v885
        %v890 = vrsqrt.pop %v886
        %v891 = vmul.f32 %v859, %v887
        %v892 = vmul.f32 %v860, %v888
        %v893 = vmul.f32 %v861, %v889
        %v894 = vmul.f32 %v862, %v890
        %v896 = vlaneseq
        %v897 = vshrl.u32 %v896, 7
        %v898 = vsub.s32 0, %v897
        %v899 = vrot.slane %v841, %v898
        %v901 = vmul.f32 %v891, %v899
        %v902 = vmul.f32 %v892, %v899
        %v903 = vmul.f32 %v893, %v899
        %v904 = vmul.f32 %v894, %v899
        %v906 = vlaneseq
        %v907 = vshrl.u32 %v906, 7
        %v908 = vsub.s32 0, %v907
        %v909 = vrot.slane %v842, %v908
        %v911 = vadd.f32 %v901, %v909
        %v912 = vadd.f32 %v902, %v909
        %v913 = vadd.f32 %v903, %v909
        %v914 = vadd.f32 %v904, %v909
        %v915 = vld [vmem:[%s750] sm:$0xff]
        %v916 = vld [vmem:[%s750 + $0x8] sm:$0xff]
        %v917 = vld [vmem:[%s750 + $0x10] sm:$0xff]
        %v918 = vld [vmem:[%s750 + $0x18] sm:$0xff]
        %v919 = vld [vmem:[%s9] sm:$0x1]
        %v920 = vld [vmem:[%s10] sm:$0x1]
        %v921 = vsel %vm763, %v915, 0.0
        %922 = vadd.xlane.f32.xlu0 %v921
        %v923 = vpop.xlane.xlu0 %922
        %v924 = vsel %vm763, %v916, 0.0
        %925 = vadd.xlane.f32.xlu0 %v924
        %v926 = vpop.xlane.xlu0 %925
        %v927 = vsel %vm763, %v917, 0.0
        %928 = vadd.xlane.f32.xlu0 %v927
        %v929 = vpop.xlane.xlu0 %928
        %v930 = vsel %vm763, %v918, 0.0
        %931 = vadd.xlane.f32.xlu0 %v930
        %v932 = vpop.xlane.xlu0 %931
        %v933 = vmul.f32 %v923, %v776
        %v934 = vmul.f32 %v926, %v776
        %v935 = vmul.f32 %v929, %v776
        %v936 = vmul.f32 %v932, %v776
        %v937 = vsub.f32 %v915, %v933
        %v938 = vsub.f32 %v916, %v934
        %v939 = vsub.f32 %v917, %v935
        %v940 = vsub.f32 %v918, %v936
        %v941 = vmul.f32 %v937, %v937
        %v942 = vmul.f32 %v938, %v938
        %v943 = vmul.f32 %v939, %v939
        %v944 = vmul.f32 %v940, %v940
        %v945 = vsel %vm763, %v941, 0.0
        %946 = vadd.xlane.f32.xlu0 %v945
        %v947 = vpop.xlane.xlu0 %946
        %v948 = vsel %vm763, %v942, 0.0
        %949 = vadd.xlane.f32.xlu0 %v948
        %v950 = vpop.xlane.xlu0 %949
        %v951 = vsel %vm763, %v943, 0.0
        %952 = vadd.xlane.f32.xlu0 %v951
        %v953 = vpop.xlane.xlu0 %952
        %v954 = vsel %vm763, %v944, 0.0
        %955 = vadd.xlane.f32.xlu0 %v954
        %v956 = vpop.xlane.xlu0 %955
        %v957 = vmul.f32 %v947, %v776
        %v958 = vmul.f32 %v950, %v776
        %v959 = vmul.f32 %v953, %v776
        %v960 = vmul.f32 %v956, %v776
        %v961 = vadd.f32 %v957, 1e-06
        %v962 = vadd.f32 %v958, 1e-06
        %v963 = vadd.f32 %v959, 1e-06
        %v964 = vadd.f32 %v960, 1e-06
        %v965 = vrsqrt.pop %v961
        %v966 = vrsqrt.pop %v962
        %v967 = vrsqrt.pop %v963
        %v968 = vrsqrt.pop %v964
        %v969 = vmul.f32 %v937, %v965
        %v970 = vmul.f32 %v938, %v966
        %v971 = vmul.f32 %v939, %v967
        %v972 = vmul.f32 %v940, %v968
        %v974 = vlaneseq
        %v975 = vshrl.u32 %v974, 7
        %v976 = vsub.s32 0, %v975
        %v977 = vrot.slane %v919, %v976
        %v979 = vmul.f32 %v969, %v977
        %v980 = vmul.f32 %v970, %v977
        %v981 = vmul.f32 %v971, %v977
        %v982 = vmul.f32 %v972, %v977
        %v984 = vlaneseq
        %v985 = vshrl.u32 %v984, 7
        %v986 = vsub.s32 0, %v985
        %v987 = vrot.slane %v920, %v986
        %v989 = vadd.f32 %v979, %v987
        %v990 = vadd.f32 %v980, %v987
        %v991 = vadd.f32 %v981, %v987
        %v992 = vadd.f32 %v982, %v987
        %v993 = vld [vmem:[%s3] sm:$0xff]
        %v994 = vld [vmem:[%s3 + $0x8] sm:$0xff]
        %v995 = vld [vmem:[%s3 + $0x10] sm:$0xff]
        %v996 = vld [vmem:[%s3 + $0x18] sm:$0xff]
        %v997 = vld [vmem:[%s3 + $0x20] sm:$0xff]
        %v998 = vld [vmem:[%s3 + $0x28] sm:$0xff]
        %v999 = vld [vmem:[%s3 + $0x30] sm:$0xff]
        %v1000 = vld [vmem:[%s3 + $0x38] sm:$0xff]
        %v1001 = vmul.f32 %v833, 0.35355338
        %v1002 = vmul.f32 %v834, 0.35355338
        %v1003 = vmul.f32 %v835, 0.35355338
        %v1004 = vmul.f32 %v836, 0.35355338
        %v1009 = vcombine.high %v833, %v833
        %v1011 = vunpack.c.l.s4 1966171168
        %v1012 = vunpack.c.0.s8 %v1011
        %v1013 = vlaneseq
        %v1014 = vshrl.u32 %v1013, 7
        %v1015 = vsub.s32 %v1012, %v1014
        %v1016 = vrot.slane %v833, %v1015
        %v1018 = vunpack.c.l.s4 1966171168
        %v1019 = vunpack.c.0.s8 %v1018
        %v1020 = vlaneseq
        %v1021 = vshrl.u32 %v1020, 7
        %v1022 = vsub.s32 %v1019, %v1021
        %v1023 = vrot.slane %v1009, %v1022
        %v1024 = vcombine.high %v1016, %v1016
        %v1025 = vcombine.high %v1023, %v1023
        %v1027 = vunpack.c.l.s4 1966171168
        %v1028 = vunpack.c.0.s8 %v1027
        %v1029 = vlaneseq
        %v1030 = vshrl.u32 %v1029, 7
        %v1031 = vsub.s32 %v1028, %v1030
        %v1032 = vrot.slane %v1016, %v1031
        %v1034 = vunpack.c.l.s4 1966171168
        %v1035 = vunpack.c.0.s8 %v1034
        %v1036 = vlaneseq
        %v1037 = vshrl.u32 %v1036, 7
        %v1038 = vsub.s32 %v1035, %v1037
        %v1039 = vrot.slane %v1023, %v1038
        %v1041 = vunpack.c.l.s4 1966171168
        %v1042 = vunpack.c.0.s8 %v1041
        %v1043 = vlaneseq
        %v1044 = vshrl.u32 %v1043, 7
        %v1045 = vsub.s32 %v1042, %v1044
        %v1046 = vrot.slane %v1024, %v1045
        %v1048 = vunpack.c.l.s4 1966171168
        %v1049 = vunpack.c.0.s8 %v1048
        %v1050 = vlaneseq
        %v1051 = vshrl.u32 %v1050, 7
        %v1052 = vsub.s32 %v1049, %v1051
        %v1053 = vrot.slane %v1025, %v1052
        %v1054 = vcombine.high %v1032, %v1032
        %v1055 = vcombine.high %v1039, %v1039
        %v1056 = vcombine.high %v1046, %v1046
        %v1057 = vcombine.high %v1053, %v1053
        %v1058 = vcombine.high %v834, %v834
        %v1060 = vunpack.c.l.s4 1966171168
        %v1061 = vunpack.c.0.s8 %v1060
        %v1062 = vlaneseq
        %v1063 = vshrl.u32 %v1062, 7
        %v1064 = vsub.s32 %v1061, %v1063
        %v1065 = vrot.slane %v834, %v1064
        %v1067 = vunpack.c.l.s4 1966171168
        %v1068 = vunpack.c.0.s8 %v1067
        %v1069 = vlaneseq
        %v1070 = vshrl.u32 %v1069, 7
        %v1071 = vsub.s32 %v1068, %v1070
        %v1072 = vrot.slane %v1058, %v1071
        %v1073 = vcombine.high %v1065, %v1065
        %v1074 = vcombine.high %v1072, %v1072
        %v1076 = vunpack.c.l.s4 1966171168
        %v1077 = vunpack.c.0.s8 %v1076
        %v1078 = vlaneseq
        %v1079 = vshrl.u32 %v1078, 7
        %v1080 = vsub.s32 %v1077, %v1079
        %v1081 = vrot.slane %v1065, %v1080
        %v1083 = vunpack.c.l.s4 1966171168
        %v1084 = vunpack.c.0.s8 %v1083
        %v1085 = vlaneseq
        %v1086 = vshrl.u32 %v1085, 7
        %v1087 = vsub.s32 %v1084, %v1086
        %v1088 = vrot.slane %v1072, %v1087
        %v1090 = vunpack.c.l.s4 1966171168
        %v1091 = vunpack.c.0.s8 %v1090
        %v1092 = vlaneseq
        %v1093 = vshrl.u32 %v1092, 7
        %v1094 = vsub.s32 %v1091, %v1093
        %v1095 = vrot.slane %v1073, %v1094
        %v1097 = vunpack.c.l.s4 1966171168
        %v1098 = vunpack.c.0.s8 %v1097
        %v1099 = vlaneseq
        %v1100 = vshrl.u32 %v1099, 7
        %v1101 = vsub.s32 %v1098, %v1100
        %v1102 = vrot.slane %v1074, %v1101
        %v1103 = vcombine.high %v1081, %v1081
        %v1104 = vcombine.high %v1088, %v1088
        %v1105 = vcombine.high %v1095, %v1095
        %v1106 = vcombine.high %v1102, %v1102
        %v1107 = vcombine.high %v835, %v835
        %v1109 = vunpack.c.l.s4 1966171168
        %v1110 = vunpack.c.0.s8 %v1109
        %v1111 = vlaneseq
        %v1112 = vshrl.u32 %v1111, 7
        %v1113 = vsub.s32 %v1110, %v1112
        %v1114 = vrot.slane %v835, %v1113
        %v1116 = vunpack.c.l.s4 1966171168
        %v1117 = vunpack.c.0.s8 %v1116
        %v1118 = vlaneseq
        %v1119 = vshrl.u32 %v1118, 7
        %v1120 = vsub.s32 %v1117, %v1119
        %v1121 = vrot.slane %v1107, %v1120
        %v1122 = vcombine.high %v1114, %v1114
        %v1123 = vcombine.high %v1121, %v1121
        %v1125 = vunpack.c.l.s4 1966171168
        %v1126 = vunpack.c.0.s8 %v1125
        %v1127 = vlaneseq
        %v1128 = vshrl.u32 %v1127, 7
        %v1129 = vsub.s32 %v1126, %v1128
        %v1130 = vrot.slane %v1114, %v1129
        %v1132 = vunpack.c.l.s4 1966171168
        %v1133 = vunpack.c.0.s8 %v1132
        %v1134 = vlaneseq
        %v1135 = vshrl.u32 %v1134, 7
        %v1136 = vsub.s32 %v1133, %v1135
        %v1137 = vrot.slane %v1121, %v1136
        %v1139 = vunpack.c.l.s4 1966171168
        %v1140 = vunpack.c.0.s8 %v1139
        %v1141 = vlaneseq
        %v1142 = vshrl.u32 %v1141, 7
        %v1143 = vsub.s32 %v1140, %v1142
        %v1144 = vrot.slane %v1122, %v1143
        %v1146 = vunpack.c.l.s4 1966171168
        %v1147 = vunpack.c.0.s8 %v1146
        %v1148 = vlaneseq
        %v1149 = vshrl.u32 %v1148, 7
        %v1150 = vsub.s32 %v1147, %v1149
        %v1151 = vrot.slane %v1123, %v1150
        %v1152 = vcombine.high %v1130, %v1130
        %v1153 = vcombine.high %v1137, %v1137
        %v1154 = vcombine.high %v1144, %v1144
        %v1155 = vcombine.high %v1151, %v1151
        %v1156 = vcombine.high %v836, %v836
        %v1158 = vunpack.c.l.s4 1966171168
        %v1159 = vunpack.c.0.s8 %v1158
        %v1160 = vlaneseq
        %v1161 = vshrl.u32 %v1160, 7
        %v1162 = vsub.s32 %v1159, %v1161
        %v1163 = vrot.slane %v836, %v1162
        %v1165 = vunpack.c.l.s4 1966171168
        %v1166 = vunpack.c.0.s8 %v1165
        %v1167 = vlaneseq
        %v1168 = vshrl.u32 %v1167, 7
        %v1169 = vsub.s32 %v1166, %v1168
        %v1170 = vrot.slane %v1156, %v1169
        %v1171 = vcombine.high %v1163, %v1163
        %v1172 = vcombine.high %v1170, %v1170
        %v1174 = vunpack.c.l.s4 1966171168
        %v1175 = vunpack.c.0.s8 %v1174
        %v1176 = vlaneseq
        %v1177 = vshrl.u32 %v1176, 7
        %v1178 = vsub.s32 %v1175, %v1177
        %v1179 = vrot.slane %v1163, %v1178
        %v1181 = vunpack.c.l.s4 1966171168
        %v1182 = vunpack.c.0.s8 %v1181
        %v1183 = vlaneseq
        %v1184 = vshrl.u32 %v1183, 7
        %v1185 = vsub.s32 %v1182, %v1184
        %v1186 = vrot.slane %v1170, %v1185
        %v1188 = vunpack.c.l.s4 1966171168
        %v1189 = vunpack.c.0.s8 %v1188
        %v1190 = vlaneseq
        %v1191 = vshrl.u32 %v1190, 7
        %v1192 = vsub.s32 %v1189, %v1191
        %v1193 = vrot.slane %v1171, %v1192
        %v1195 = vunpack.c.l.s4 1966171168
        %v1196 = vunpack.c.0.s8 %v1195
        %v1197 = vlaneseq
        %v1198 = vshrl.u32 %v1197, 7
        %v1199 = vsub.s32 %v1196, %v1198
        %v1200 = vrot.slane %v1172, %v1199
        %v1201 = vcombine.high %v1179, %v1179
        %v1202 = vcombine.high %v1186, %v1186
        %v1203 = vcombine.high %v1193, %v1193
        %v1204 = vcombine.high %v1200, %v1200
        %v1205 = vlaneseq
        %v1206 = vshrl.u32 %v1205, 7
        %v1207 = vsub.s32 0, %v1206
        %v1208 = vrot.slane %v1032, %v1207
        %v1209 = vlaneseq
        %v1210 = vshrl.u32 %v1209, 7
        %v1211 = vsub.s32 0, %v1210
        %v1212 = vrot.slane %v1046, %v1211
        %v1213 = vlaneseq
        %v1214 = vshrl.u32 %v1213, 7
        %v1215 = vsub.s32 0, %v1214
        %v1216 = vrot.slane %v1054, %v1215
        %v1217 = vlaneseq
        %v1218 = vshrl.u32 %v1217, 7
        %v1219 = vsub.s32 0, %v1218
        %v1220 = vrot.slane %v1056, %v1219
        %v1221 = vlaneseq
        %v1222 = vshrl.u32 %v1221, 7
        %v1223 = vsub.s32 0, %v1222
        %v1224 = vrot.slane %v1039, %v1223
        %v1225 = vlaneseq
        %v1226 = vshrl.u32 %v1225, 7
        %v1227 = vsub.s32 0, %v1226
        %v1228 = vrot.slane %v1053, %v1227
        %v1229 = vlaneseq
        %v1230 = vshrl.u32 %v1229, 7
        %v1231 = vsub.s32 0, %v1230
        %v1232 = vrot.slane %v1055, %v1231
        %v1233 = vlaneseq
        %v1234 = vshrl.u32 %v1233, 7
        %v1235 = vsub.s32 0, %v1234
        %v1236 = vrot.slane %v1057, %v1235
        %v1237 = vlaneseq
        %v1238 = vshrl.u32 %v1237, 7
        %v1239 = vsub.s32 0, %v1238
        %v1240 = vrot.slane %v1081, %v1239
        %v1241 = vlaneseq
        %v1242 = vshrl.u32 %v1241, 7
        %v1243 = vsub.s32 0, %v1242
        %v1244 = vrot.slane %v1095, %v1243
        %v1245 = vlaneseq
        %v1246 = vshrl.u32 %v1245, 7
        %v1247 = vsub.s32 0, %v1246
        %v1248 = vrot.slane %v1103, %v1247
        %v1249 = vlaneseq
        %v1250 = vshrl.u32 %v1249, 7
        %v1251 = vsub.s32 0, %v1250
        %v1252 = vrot.slane %v1105, %v1251
        %v1253 = vlaneseq
        %v1254 = vshrl.u32 %v1253, 7
        %v1255 = vsub.s32 0, %v1254
        %v1256 = vrot.slane %v1088, %v1255
        %v1257 = vlaneseq
        %v1258 = vshrl.u32 %v1257, 7
        %v1259 = vsub.s32 0, %v1258
        %v1260 = vrot.slane %v1102, %v1259
        %v1261 = vlaneseq
        %v1262 = vshrl.u32 %v1261, 7
        %v1263 = vsub.s32 0, %v1262
        %v1264 = vrot.slane %v1104, %v1263
        %v1265 = vlaneseq
        %v1266 = vshrl.u32 %v1265, 7
        %v1267 = vsub.s32 0, %v1266
        %v1268 = vrot.slane %v1106, %v1267
        %v1269 = vlaneseq
        %v1270 = vshrl.u32 %v1269, 7
        %v1271 = vsub.s32 0, %v1270
        %v1272 = vrot.slane %v1130, %v1271
        %v1273 = vlaneseq
        %v1274 = vshrl.u32 %v1273, 7
        %v1275 = vsub.s32 0, %v1274
        %v1276 = vrot.slane %v1144, %v1275
        %v1277 = vlaneseq
        %v1278 = vshrl.u32 %v1277, 7
        %v1279 = vsub.s32 0, %v1278
        %v1280 = vrot.slane %v1152, %v1279
        %v1281 = vlaneseq
        %v1282 = vshrl.u32 %v1281, 7
        %v1283 = vsub.s32 0, %v1282
        %v1284 = vrot.slane %v1154, %v1283
        %v1285 = vlaneseq
        %v1286 = vshrl.u32 %v1285, 7
        %v1287 = vsub.s32 0, %v1286
        %v1288 = vrot.slane %v1137, %v1287
        %v1289 = vlaneseq
        %v1290 = vshrl.u32 %v1289, 7
        %v1291 = vsub.s32 0, %v1290
        %v1292 = vrot.slane %v1151, %v1291
        %v1293 = vlaneseq
        %v1294 = vshrl.u32 %v1293, 7
        %v1295 = vsub.s32 0, %v1294
        %v1296 = vrot.slane %v1153, %v1295
        %v1297 = vlaneseq
        %v1298 = vshrl.u32 %v1297, 7
        %v1299 = vsub.s32 0, %v1298
        %v1300 = vrot.slane %v1155, %v1299
        %v1301 = vlaneseq
        %v1302 = vshrl.u32 %v1301, 7
        %v1303 = vsub.s32 0, %v1302
        %v1304 = vrot.slane %v1179, %v1303
        %v1305 = vlaneseq
        %v1306 = vshrl.u32 %v1305, 7
        %v1307 = vsub.s32 0, %v1306
        %v1308 = vrot.slane %v1193, %v1307
        %v1309 = vlaneseq
        %v1310 = vshrl.u32 %v1309, 7
        %v1311 = vsub.s32 0, %v1310
        %v1312 = vrot.slane %v1201, %v1311
        %v1313 = vlaneseq
        %v1314 = vshrl.u32 %v1313, 7
        %v1315 = vsub.s32 0, %v1314
        %v1316 = vrot.slane %v1203, %v1315
        %v1317 = vlaneseq
        %v1318 = vshrl.u32 %v1317, 7
        %v1319 = vsub.s32 0, %v1318
        %v1320 = vrot.slane %v1186, %v1319
        %v1321 = vlaneseq
        %v1322 = vshrl.u32 %v1321, 7
        %v1323 = vsub.s32 0, %v1322
        %v1324 = vrot.slane %v1200, %v1323
        %v1325 = vlaneseq
        %v1326 = vshrl.u32 %v1325, 7
        %v1327 = vsub.s32 0, %v1326
        %v1328 = vrot.slane %v1202, %v1327
        %v1329 = vlaneseq
        %v1330 = vshrl.u32 %v1329, 7
        %v1331 = vsub.s32 0, %v1330
        %v1332 = vrot.slane %v1204, %v1331
        %v1365 = vmul.f32 %v1208, %v993
        %v1366 = vmul.f32 %v1212, %v994
        %v1367 = vmul.f32 %v1216, %v995
        %v1368 = vmul.f32 %v1220, %v996
        %v1369 = vmul.f32 %v1224, %v997
        %v1370 = vmul.f32 %v1228, %v998
        %v1371 = vmul.f32 %v1232, %v999
        %v1372 = vmul.f32 %v1236, %v1000
        %v1373 = vmul.f32 %v1240, %v993
        %v1374 = vmul.f32 %v1244, %v994
        %v1375 = vmul.f32 %v1248, %v995
        %v1376 = vmul.f32 %v1252, %v996
        %v1377 = vmul.f32 %v1256, %v997
        %v1378 = vmul.f32 %v1260, %v998
        %v1379 = vmul.f32 %v1264, %v999
        %v1380 = vmul.f32 %v1268, %v1000
        %v1381 = vmul.f32 %v1272, %v993
        %v1382 = vmul.f32 %v1276, %v994
        %v1383 = vmul.f32 %v1280, %v995
        %v1384 = vmul.f32 %v1284, %v996
        %v1385 = vmul.f32 %v1288, %v997
        %v1386 = vmul.f32 %v1292, %v998
        %v1387 = vmul.f32 %v1296, %v999
        %v1388 = vmul.f32 %v1300, %v1000
        %v1389 = vmul.f32 %v1304, %v993
        %v1390 = vmul.f32 %v1308, %v994
        %v1391 = vmul.f32 %v1312, %v995
        %v1392 = vmul.f32 %v1316, %v996
        %v1393 = vmul.f32 %v1320, %v997
        %v1394 = vmul.f32 %v1324, %v998
        %v1395 = vmul.f32 %v1328, %v999
        %v1396 = vmul.f32 %v1332, %v1000
        %v1397 = vsel %vm763, %v1365, 0.0
        %1398 = vadd.xlane.f32.xlu0 %v1397
        %v1399 = vpop.xlane.xlu0 %1398
        %v1400 = vsel %vm763, %v1366, 0.0
        %1401 = vadd.xlane.f32.xlu0 %v1400
        %v1402 = vpop.xlane.xlu0 %1401
        %v1403 = vsel %vm763, %v1367, 0.0
        %1404 = vadd.xlane.f32.xlu0 %v1403
        %v1405 = vpop.xlane.xlu0 %1404
        %v1406 = vsel %vm763, %v1368, 0.0
        %1407 = vadd.xlane.f32.xlu0 %v1406
        %v1408 = vpop.xlane.xlu0 %1407
        %v1409 = vsel %vm763, %v1369, 0.0
        %1410 = vadd.xlane.f32.xlu0 %v1409
        %v1411 = vpop.xlane.xlu0 %1410
        %v1412 = vsel %vm763, %v1370, 0.0
        %1413 = vadd.xlane.f32.xlu0 %v1412
        %v1414 = vpop.xlane.xlu0 %1413
        %v1415 = vsel %vm763, %v1371, 0.0
        %1416 = vadd.xlane.f32.xlu0 %v1415
        %v1417 = vpop.xlane.xlu0 %1416
        %v1418 = vsel %vm763, %v1372, 0.0
        %1419 = vadd.xlane.f32.xlu0 %v1418
        %v1420 = vpop.xlane.xlu0 %1419
        %v1421 = vsel %vm763, %v1373, 0.0
        %1422 = vadd.xlane.f32.xlu0 %v1421
        %v1423 = vpop.xlane.xlu0 %1422
        %v1424 = vsel %vm763, %v1374, 0.0
        %1425 = vadd.xlane.f32.xlu0 %v1424
        %v1426 = vpop.xlane.xlu0 %1425
        %v1427 = vsel %vm763, %v1375, 0.0
        %1428 = vadd.xlane.f32.xlu0 %v1427
        %v1429 = vpop.xlane.xlu0 %1428
        %v1430 = vsel %vm763, %v1376, 0.0
        %1431 = vadd.xlane.f32.xlu0 %v1430
        %v1432 = vpop.xlane.xlu0 %1431
        %v1433 = vsel %vm763, %v1377, 0.0
        %1434 = vadd.xlane.f32.xlu0 %v1433
        %v1435 = vpop.xlane.xlu0 %1434
        %v1436 = vsel %vm763, %v1378, 0.0
        %1437 = vadd.xlane.f32.xlu0 %v1436
        %v1438 = vpop.xlane.xlu0 %1437
        %v1439 = vsel %vm763, %v1379, 0.0
        %1440 = vadd.xlane.f32.xlu0 %v1439
        %v1441 = vpop.xlane.xlu0 %1440
        %v1442 = vsel %vm763, %v1380, 0.0
        %1443 = vadd.xlane.f32.xlu0 %v1442
        %v1444 = vpop.xlane.xlu0 %1443
        %v1445 = vsel %vm763, %v1381, 0.0
        %1446 = vadd.xlane.f32.xlu0 %v1445
        %v1447 = vpop.xlane.xlu0 %1446
        %v1448 = vsel %vm763, %v1382, 0.0
        %1449 = vadd.xlane.f32.xlu0 %v1448
        %v1450 = vpop.xlane.xlu0 %1449
        %v1451 = vsel %vm763, %v1383, 0.0
        %1452 = vadd.xlane.f32.xlu0 %v1451
        %v1453 = vpop.xlane.xlu0 %1452
        %v1454 = vsel %vm763, %v1384, 0.0
        %1455 = vadd.xlane.f32.xlu0 %v1454
        %v1456 = vpop.xlane.xlu0 %1455
        %v1457 = vsel %vm763, %v1385, 0.0
        %1458 = vadd.xlane.f32.xlu0 %v1457
        %v1459 = vpop.xlane.xlu0 %1458
        %v1460 = vsel %vm763, %v1386, 0.0
        %1461 = vadd.xlane.f32.xlu0 %v1460
        %v1462 = vpop.xlane.xlu0 %1461
        %v1463 = vsel %vm763, %v1387, 0.0
        %1464 = vadd.xlane.f32.xlu0 %v1463
        %v1465 = vpop.xlane.xlu0 %1464
        %v1466 = vsel %vm763, %v1388, 0.0
        %1467 = vadd.xlane.f32.xlu0 %v1466
        %v1468 = vpop.xlane.xlu0 %1467
        %v1469 = vsel %vm763, %v1389, 0.0
        %1470 = vadd.xlane.f32.xlu0 %v1469
        %v1471 = vpop.xlane.xlu0 %1470
        %v1472 = vsel %vm763, %v1390, 0.0
        %1473 = vadd.xlane.f32.xlu0 %v1472
        %v1474 = vpop.xlane.xlu0 %1473
        %v1475 = vsel %vm763, %v1391, 0.0
        %1476 = vadd.xlane.f32.xlu0 %v1475
        %v1477 = vpop.xlane.xlu0 %1476
        %v1478 = vsel %vm763, %v1392, 0.0
        %1479 = vadd.xlane.f32.xlu0 %v1478
        %v1480 = vpop.xlane.xlu0 %1479
        %v1481 = vsel %vm763, %v1393, 0.0
        %1482 = vadd.xlane.f32.xlu0 %v1481
        %v1483 = vpop.xlane.xlu0 %1482
        %v1484 = vsel %vm763, %v1394, 0.0
        %1485 = vadd.xlane.f32.xlu0 %v1484
        %v1486 = vpop.xlane.xlu0 %1485
        %v1487 = vsel %vm763, %v1395, 0.0
        %1488 = vadd.xlane.f32.xlu0 %v1487
        %v1489 = vpop.xlane.xlu0 %1488
        %v1490 = vsel %vm763, %v1396, 0.0
        %1491 = vadd.xlane.f32.xlu0 %v1490
        %v1492 = vpop.xlane.xlu0 %1491
        %v1501 = vlaneseq
        %v1502 = vand.u32 %v1501, 127
        %v1503 = vlaneseq
        %v1504 = vshrl.u32 %v1503, 7
        %v1505 = vsub.s32 %v1502, %v1504
        %v1506 = vrot.slane %v1399, %v1505
        %v1507 = vlaneseq
        %v1508 = vshrl.u32 %v1507, 7
        %v1509 = vsub.s32 %v1502, %v1508
        %v1510 = vrot.slane %v1402, %v1509
        %v1511 = vlaneseq
        %v1512 = vshrl.u32 %v1511, 7
        %v1513 = vsub.s32 %v1502, %v1512
        %v1514 = vrot.slane %v1405, %v1513
        %v1515 = vlaneseq
        %v1516 = vshrl.u32 %v1515, 7
        %v1517 = vsub.s32 %v1502, %v1516
        %v1518 = vrot.slane %v1408, %v1517
        %v1519 = vlaneseq
        %v1520 = vshrl.u32 %v1519, 7
        %v1521 = vsub.s32 %v1502, %v1520
        %v1522 = vrot.slane %v1411, %v1521
        %v1523 = vlaneseq
        %v1524 = vshrl.u32 %v1523, 7
        %v1525 = vsub.s32 %v1502, %v1524
        %v1526 = vrot.slane %v1414, %v1525
        %v1527 = vlaneseq
        %v1528 = vshrl.u32 %v1527, 7
        %v1529 = vsub.s32 %v1502, %v1528
        %v1530 = vrot.slane %v1417, %v1529
        %v1531 = vlaneseq
        %v1532 = vshrl.u32 %v1531, 7
        %v1533 = vsub.s32 %v1502, %v1532
        %v1534 = vrot.slane %v1420, %v1533
        %vm1535 = vcmask 1041409
        %v1536 = vsel %vm1535, %v1510, %v1506
        %vm1537 = vcmask 1042434
        %v1538 = vsel %vm1537, %v1514, %v1536
        %vm1539 = vcmask 1043459
        %v1540 = vsel %vm1539, %v1518, %v1538
        %vm1541 = vcmask 1044484
        %v1542 = vsel %vm1541, %v1522, %v1540
        %vm1543 = vcmask 1045509
        %v1544 = vsel %vm1543, %v1526, %v1542
        %vm1545 = vcmask 1046534
        %v1546 = vsel %vm1545, %v1530, %v1544
        %vm1547 = vcmask 1047559
        %v1548 = vsel %vm1547, %v1534, %v1546
        %v1551 = vsel %vm763, %v1001, 0
        %v1554 = vsel %vm763, %v911, 0
        %1556 = vmatprep.subr.mxu0 0.0
        %1557 = vmatpush1.xpose.msra.mxu0 %v1554
        %1558 = vmatprep.subr.mxu0 0.0
        %1559 = vmatpush1.xpose.msra.mxu0 0.0
        %1560 = vmatprep.subr.mxu0 0.0
        %1561 = vmatpush1.xpose.msra.mxu0 0.0
        %1562 = vmatprep.subr.mxu0 0.0
        %1563 = vmatpush1.xpose.msra.mxu0 0.0
        %1564 = vmatprep.subr.mxu0 0.0
        %1565 = vmatpush1.xpose.msra.mxu0 0.0
        %1566 = vmatprep.subr.mxu0 0.0
        %1567 = vmatpush1.xpose.msra.mxu0 0.0
        %1568 = vmatprep.subr.mxu0 0.0
        %1569 = vmatpush1.xpose.msra.mxu0 0.0
        %1570 = vmatprep.subr.mxu0 0.0
        %1571 = vmatpush1.xpose.msra.mxu0 0.0
        %1572 = vmatprep.subr.mxu0 0.0
        %1573 = vmatpush1.xpose.msra.mxu0 0.0
        %1574 = vmatprep.subr.mxu0 0.0
        %1575 = vmatpush1.xpose.msra.mxu0 0.0
        %1576 = vmatprep.subr.mxu0 0.0
        %1577 = vmatpush1.xpose.msra.mxu0 0.0
        %1578 = vmatprep.subr.mxu0 0.0
        %1579 = vmatpush1.xpose.msra.mxu0 0.0
        %1580 = vmatprep.subr.mxu0 0.0
        %1581 = vmatpush1.xpose.msra.mxu0 0.0
        %1582 = vmatprep.subr.mxu0 0.0
        %1583 = vmatpush1.xpose.msra.mxu0 0.0
        %1584 = vmatprep.subr.mxu0 0.0
        %1585 = vmatpush1.xpose.msra.mxu0 0.0
        %1586 = vmatprep.subr.mxu0 0.0
        %1587 = vmatpush1.xpose.msra.mxu0 0.0
        %1588 = vmatprep.subr.mxu0 0.0
        %1589 = vmatpush1.xpose.msra.mxu0 0.0
        %1590 = vmatprep.subr.mxu0 0.0
        %1591 = vmatpush1.xpose.msra.mxu0 0.0
        %1592 = vmatprep.subr.mxu0 0.0
        %1593 = vmatpush1.xpose.msra.mxu0 0.0
        %1594 = vmatprep.subr.mxu0 0.0
        %1595 = vmatpush1.xpose.msra.mxu0 0.0
        %1596 = vmatprep.subr.mxu0 0.0
        %1597 = vmatpush1.xpose.msra.mxu0 0.0
        %1598 = vmatprep.subr.mxu0 0.0
        %1599 = vmatpush1.xpose.msra.mxu0 0.0
        %1600 = vmatprep.subr.mxu0 0.0
        %1601 = vmatpush1.xpose.msra.mxu0 0.0
        %1602 = vmatprep.subr.mxu0 0.0
        %1603 = vmatpush1.xpose.msra.mxu0 0.0
        %1604 = vmatprep.subr.mxu0 0.0
        %1605 = vmatpush1.xpose.msra.mxu0 0.0
        %1606 = vmatprep.subr.mxu0 0.0
        %1607 = vmatpush1.xpose.msra.mxu0 0.0
        %1608 = vmatprep.subr.mxu0 0.0
        %1609 = vmatpush1.xpose.msra.mxu0 0.0
        %1610 = vmatprep.subr.mxu0 0.0
        %1611 = vmatpush1.xpose.msra.mxu0 0.0
        %1612 = vmatprep.subr.mxu0 0.0
        %1613 = vmatpush1.xpose.msra.mxu0 0.0
        %1614 = vmatprep.subr.mxu0 0.0
        %1615 = vmatpush1.xpose.msra.mxu0 0.0
        %1616 = vmatprep.subr.mxu0 0.0
        %1617 = vmatpush1.xpose.msra.mxu0 0.0
        %1618 = vmatprep.subr.mxu0 0.0
        %1619 = vmatpush1.xpose.msra.mxu0 0.0
        %1620 = vmatprep.mubr.f32.mxu0 0.0
        %1621 = vmatmul.mubr.f32.gmra.mrb[0].mxu0 %v1551
        %v1622 = vpop.f32.mrb[0].mxu0
        %v1623 = vadd.f32 %v1548, %v1622
        %v1624 = vpop.f32.mrb[0].mxu0
        %1625 = vdwg.mxu0
        %v1634 = vlaneseq
        %v1635 = vshrl.u32 %v1634, 7
        %v1636 = vsub.s32 %v1502, %v1635
        %v1637 = vrot.slane %v1423, %v1636
        %v1638 = vlaneseq
        %v1639 = vshrl.u32 %v1638, 7
        %v1640 = vsub.s32 %v1502, %v1639
        %v1641 = vrot.slane %v1426, %v1640
        %v1642 = vlaneseq
        %v1643 = vshrl.u32 %v1642, 7
        %v1644 = vsub.s32 %v1502, %v1643
        %v1645 = vrot.slane %v1429, %v1644
        %v1646 = vlaneseq
        %v1647 = vshrl.u32 %v1646, 7
        %v1648 = vsub.s32 %v1502, %v1647
        %v1649 = vrot.slane %v1432, %v1648
        %v1650 = vlaneseq
        %v1651 = vshrl.u32 %v1650, 7
        %v1652 = vsub.s32 %v1502, %v1651
        %v1653 = vrot.slane %v1435, %v1652
        %v1654 = vlaneseq
        %v1655 = vshrl.u32 %v1654, 7
        %v1656 = vsub.s32 %v1502, %v1655
        %v1657 = vrot.slane %v1438, %v1656
        %v1658 = vlaneseq
        %v1659 = vshrl.u32 %v1658, 7
        %v1660 = vsub.s32 %v1502, %v1659
        %v1661 = vrot.slane %v1441, %v1660
        %v1662 = vlaneseq
        %v1663 = vshrl.u32 %v1662, 7
        %v1664 = vsub.s32 %v1502, %v1663
        %v1665 = vrot.slane %v1444, %v1664
        %v1666 = vsel %vm1535, %v1641, %v1637
        %v1667 = vsel %vm1537, %v1645, %v1666
        %v1668 = vsel %vm1539, %v1649, %v1667
        %v1669 = vsel %vm1541, %v1653, %v1668
        %v1670 = vsel %vm1543, %v1657, %v1669
        %v1671 = vsel %vm1545, %v1661, %v1670
        %v1672 = vsel %vm1547, %v1665, %v1671
        %v1675 = vsel %vm763, %v1002, 0
        %v1678 = vsel %vm763, %v912, 0
        %1680 = vmatprep.subr.mxu0 0.0
        %1681 = vmatpush1.xpose.msra.mxu0 %v1678
        %1682 = vmatprep.subr.mxu0 0.0
        %1683 = vmatpush1.xpose.msra.mxu0 0.0
        %1684 = vmatprep.subr.mxu0 0.0
        %1685 = vmatpush1.xpose.msra.mxu0 0.0
        %1686 = vmatprep.subr.mxu0 0.0
        %1687 = vmatpush1.xpose.msra.mxu0 0.0
        %1688 = vmatprep.subr.mxu0 0.0
        %1689 = vmatpush1.xpose.msra.mxu0 0.0
        %1690 = vmatprep.subr.mxu0 0.0
        %1691 = vmatpush1.xpose.msra.mxu0 0.0
        %1692 = vmatprep.subr.mxu0 0.0
        %1693 = vmatpush1.xpose.msra.mxu0 0.0
        %1694 = vmatprep.subr.mxu0 0.0
        %1695 = vmatpush1.xpose.msra.mxu0 0.0
        %1696 = vmatprep.subr.mxu0 0.0
        %1697 = vmatpush1.xpose.msra.mxu0 0.0
        %1698 = vmatprep.subr.mxu0 0.0
        %1699 = vmatpush1.xpose.msra.mxu0 0.0
        %1700 = vmatprep.subr.mxu0 0.0
        %1701 = vmatpush1.xpose.msra.mxu0 0.0
        %1702 = vmatprep.subr.mxu0 0.0
        %1703 = vmatpush1.xpose.msra.mxu0 0.0
        %1704 = vmatprep.subr.mxu0 0.0
        %1705 = vmatpush1.xpose.msra.mxu0 0.0
        %1706 = vmatprep.subr.mxu0 0.0
        %1707 = vmatpush1.xpose.msra.mxu0 0.0
        %1708 = vmatprep.subr.mxu0 0.0
        %1709 = vmatpush1.xpose.msra.mxu0 0.0
        %1710 = vmatprep.subr.mxu0 0.0
        %1711 = vmatpush1.xpose.msra.mxu0 0.0
        %1712 = vmatprep.subr.mxu0 0.0
        %1713 = vmatpush1.xpose.msra.mxu0 0.0
        %1714 = vmatprep.subr.mxu0 0.0
        %1715 = vmatpush1.xpose.msra.mxu0 0.0
        %1716 = vmatprep.subr.mxu0 0.0
        %1717 = vmatpush1.xpose.msra.mxu0 0.0
        %1718 = vmatprep.subr.mxu0 0.0
        %1719 = vmatpush1.xpose.msra.mxu0 0.0
        %1720 = vmatprep.subr.mxu0 0.0
        %1721 = vmatpush1.xpose.msra.mxu0 0.0
        %1722 = vmatprep.subr.mxu0 0.0
        %1723 = vmatpush1.xpose.msra.mxu0 0.0
        %1724 = vmatprep.subr.mxu0 0.0
        %1725 = vmatpush1.xpose.msra.mxu0 0.0
        %1726 = vmatprep.subr.mxu0 0.0
        %1727 = vmatpush1.xpose.msra.mxu0 0.0
        %1728 = vmatprep.subr.mxu0 0.0
        %1729 = vmatpush1.xpose.msra.mxu0 0.0
        %1730 = vmatprep.subr.mxu0 0.0
        %1731 = vmatpush1.xpose.msra.mxu0 0.0
        %1732 = vmatprep.subr.mxu0 0.0
        %1733 = vmatpush1.xpose.msra.mxu0 0.0
        %1734 = vmatprep.subr.mxu0 0.0
        %1735 = vmatpush1.xpose.msra.mxu0 0.0
        %1736 = vmatprep.subr.mxu0 0.0
        %1737 = vmatpush1.xpose.msra.mxu0 0.0
        %1738 = vmatprep.subr.mxu0 0.0
        %1739 = vmatpush1.xpose.msra.mxu0 0.0
        %1740 = vmatprep.subr.mxu0 0.0
        %1741 = vmatpush1.xpose.msra.mxu0 0.0
        %1742 = vmatprep.subr.mxu0 0.0
        %1743 = vmatpush1.xpose.msra.mxu0 0.0
        %1744 = vmatprep.mubr.f32.mxu0 0.0
        %1745 = vmatmul.mubr.f32.gmra.mrb[0].mxu0 %v1675
        %v1746 = vpop.f32.mrb[0].mxu0
        %v1747 = vadd.f32 %v1672, %v1746
        %v1748 = vpop.f32.mrb[0].mxu0
        %1749 = vdwg.mxu0
        %v1758 = vlaneseq
        %v1759 = vshrl.u32 %v1758, 7
        %v1760 = vsub.s32 %v1502, %v1759
        %v1761 = vrot.slane %v1447, %v1760
        %v1762 = vlaneseq
        %v1763 = vshrl.u32 %v1762, 7
        %v1764 = vsub.s32 %v1502, %v1763
        %v1765 = vrot.slane %v1450, %v1764
        %v1766 = vlaneseq
        %v1767 = vshrl.u32 %v1766, 7
        %v1768 = vsub.s32 %v1502, %v1767
        %v1769 = vrot.slane %v1453, %v1768
        %v1770 = vlaneseq
        %v1771 = vshrl.u32 %v1770, 7
        %v1772 = vsub.s32 %v1502, %v1771
        %v1773 = vrot.slane %v1456, %v1772
        %v1774 = vlaneseq
        %v1775 = vshrl.u32 %v1774, 7
        %v1776 = vsub.s32 %v1502, %v1775
        %v1777 = vrot.slane %v1459, %v1776
        %v1778 = vlaneseq
        %v1779 = vshrl.u32 %v1778, 7
        %v1780 = vsub.s32 %v1502, %v1779
        %v1781 = vrot.slane %v1462, %v1780
        %v1782 = vlaneseq
        %v1783 = vshrl.u32 %v1782, 7
        %v1784 = vsub.s32 %v1502, %v1783
        %v1785 = vrot.slane %v1465, %v1784
        %v1786 = vlaneseq
        %v1787 = vshrl.u32 %v1786, 7
        %v1788 = vsub.s32 %v1502, %v1787
        %v1789 = vrot.slane %v1468, %v1788
        %v1790 = vsel %vm1535, %v1765, %v1761
        %v1791 = vsel %vm1537, %v1769, %v1790
        %v1792 = vsel %vm1539, %v1773, %v1791
        %v1793 = vsel %vm1541, %v1777, %v1792
        %v1794 = vsel %vm1543, %v1781, %v1793
        %v1795 = vsel %vm1545, %v1785, %v1794
        %v1796 = vsel %vm1547, %v1789, %v1795
        %v1799 = vsel %vm763, %v1003, 0
        %v1802 = vsel %vm763, %v913, 0
        %1804 = vmatprep.subr.mxu0 0.0
        %1805 = vmatpush1.xpose.msra.mxu0 %v1802
        %1806 = vmatprep.subr.mxu0 0.0
        %1807 = vmatpush1.xpose.msra.mxu0 0.0
        %1808 = vmatprep.subr.mxu0 0.0
        %1809 = vmatpush1.xpose.msra.mxu0 0.0
        %1810 = vmatprep.subr.mxu0 0.0
        %1811 = vmatpush1.xpose.msra.mxu0 0.0
        %1812 = vmatprep.subr.mxu0 0.0
        %1813 = vmatpush1.xpose.msra.mxu0 0.0
        %1814 = vmatprep.subr.mxu0 0.0
        %1815 = vmatpush1.xpose.msra.mxu0 0.0
        %1816 = vmatprep.subr.mxu0 0.0
        %1817 = vmatpush1.xpose.msra.mxu0 0.0
        %1818 = vmatprep.subr.mxu0 0.0
        %1819 = vmatpush1.xpose.msra.mxu0 0.0
        %1820 = vmatprep.subr.mxu0 0.0
        %1821 = vmatpush1.xpose.msra.mxu0 0.0
        %1822 = vmatprep.subr.mxu0 0.0
        %1823 = vmatpush1.xpose.msra.mxu0 0.0
        %1824 = vmatprep.subr.mxu0 0.0
        %1825 = vmatpush1.xpose.msra.mxu0 0.0
        %1826 = vmatprep.subr.mxu0 0.0
        %1827 = vmatpush1.xpose.msra.mxu0 0.0
        %1828 = vmatprep.subr.mxu0 0.0
        %1829 = vmatpush1.xpose.msra.mxu0 0.0
        %1830 = vmatprep.subr.mxu0 0.0
        %1831 = vmatpush1.xpose.msra.mxu0 0.0
        %1832 = vmatprep.subr.mxu0 0.0
        %1833 = vmatpush1.xpose.msra.mxu0 0.0
        %1834 = vmatprep.subr.mxu0 0.0
        %1835 = vmatpush1.xpose.msra.mxu0 0.0
        %1836 = vmatprep.subr.mxu0 0.0
        %1837 = vmatpush1.xpose.msra.mxu0 0.0
        %1838 = vmatprep.subr.mxu0 0.0
        %1839 = vmatpush1.xpose.msra.mxu0 0.0
        %1840 = vmatprep.subr.mxu0 0.0
        %1841 = vmatpush1.xpose.msra.mxu0 0.0
        %1842 = vmatprep.subr.mxu0 0.0
        %1843 = vmatpush1.xpose.msra.mxu0 0.0
        %1844 = vmatprep.subr.mxu0 0.0
        %1845 = vmatpush1.xpose.msra.mxu0 0.0
        %1846 = vmatprep.subr.mxu0 0.0
        %1847 = vmatpush1.xpose.msra.mxu0 0.0
        %1848 = vmatprep.subr.mxu0 0.0
        %1849 = vmatpush1.xpose.msra.mxu0 0.0
        %1850 = vmatprep.subr.mxu0 0.0
        %1851 = vmatpush1.xpose.msra.mxu0 0.0
        %1852 = vmatprep.subr.mxu0 0.0
        %1853 = vmatpush1.xpose.msra.mxu0 0.0
        %1854 = vmatprep.subr.mxu0 0.0
        %1855 = vmatpush1.xpose.msra.mxu0 0.0
        %1856 = vmatprep.subr.mxu0 0.0
        %1857 = vmatpush1.xpose.msra.mxu0 0.0
        %1858 = vmatprep.subr.mxu0 0.0
        %1859 = vmatpush1.xpose.msra.mxu0 0.0
        %1860 = vmatprep.subr.mxu0 0.0
        %1861 = vmatpush1.xpose.msra.mxu0 0.0
        %1862 = vmatprep.subr.mxu0 0.0
        %1863 = vmatpush1.xpose.msra.mxu0 0.0
        %1864 = vmatprep.subr.mxu0 0.0
        %1865 = vmatpush1.xpose.msra.mxu0 0.0
        %1866 = vmatprep.subr.mxu0 0.0
        %1867 = vmatpush1.xpose.msra.mxu0 0.0
        %1868 = vmatprep.mubr.f32.mxu0 0.0
        %1869 = vmatmul.mubr.f32.gmra.mrb[0].mxu0 %v1799
        %v1870 = vpop.f32.mrb[0].mxu0
        %v1871 = vadd.f32 %v1796, %v1870
        %v1872 = vpop.f32.mrb[0].mxu0
        %1873 = vdwg.mxu0
        %v1882 = vlaneseq
        %v1883 = vshrl.u32 %v1882, 7
        %v1884 = vsub.s32 %v1502, %v1883
        %v1885 = vrot.slane %v1471, %v1884
        %v1886 = vlaneseq
        %v1887 = vshrl.u32 %v1886, 7
        %v1888 = vsub.s32 %v1502, %v1887
        %v1889 = vrot.slane %v1474, %v1888
        %v1890 = vlaneseq
        %v1891 = vshrl.u32 %v1890, 7
        %v1892 = vsub.s32 %v1502, %v1891
        %v1893 = vrot.slane %v1477, %v1892
        %v1894 = vlaneseq
        %v1895 = vshrl.u32 %v1894, 7
        %v1896 = vsub.s32 %v1502, %v1895
        %v1897 = vrot.slane %v1480, %v1896
        %v1898 = vlaneseq
        %v1899 = vshrl.u32 %v1898, 7
        %v1900 = vsub.s32 %v1502, %v1899
        %v1901 = vrot.slane %v1483, %v1900
        %v1902 = vlaneseq
        %v1903 = vshrl.u32 %v1902, 7
        %v1904 = vsub.s32 %v1502, %v1903
        %v1905 = vrot.slane %v1486, %v1904
        %v1906 = vlaneseq
        %v1907 = vshrl.u32 %v1906, 7
        %v1908 = vsub.s32 %v1502, %v1907
        %v1909 = vrot.slane %v1489, %v1908
        %v1910 = vlaneseq
        %v1911 = vshrl.u32 %v1910, 7
        %v1912 = vsub.s32 %v1502, %v1911
        %v1913 = vrot.slane %v1492, %v1912
        %v1914 = vsel %vm1535, %v1889, %v1885
        %v1915 = vsel %vm1537, %v1893, %v1914
        %v1916 = vsel %vm1539, %v1897, %v1915
        %v1917 = vsel %vm1541, %v1901, %v1916
        %v1918 = vsel %vm1543, %v1905, %v1917
        %v1919 = vsel %vm1545, %v1909, %v1918
        %v1920 = vsel %vm1547, %v1913, %v1919
        %v1923 = vsel %vm763, %v1004, 0
        %v1926 = vsel %vm763, %v914, 0
        %1928 = vmatprep.subr.mxu0 0.0
        %1929 = vmatpush1.xpose.msra.mxu0 %v1926
        %1930 = vmatprep.subr.mxu0 0.0
        %1931 = vmatpush1.xpose.msra.mxu0 0.0
        %1932 = vmatprep.subr.mxu0 0.0
        %1933 = vmatpush1.xpose.msra.mxu0 0.0
        %1934 = vmatprep.subr.mxu0 0.0
        %1935 = vmatpush1.xpose.msra.mxu0 0.0
        %1936 = vmatprep.subr.mxu0 0.0
        %1937 = vmatpush1.xpose.msra.mxu0 0.0
        %1938 = vmatprep.subr.mxu0 0.0
        %1939 = vmatpush1.xpose.msra.mxu0 0.0
        %1940 = vmatprep.subr.mxu0 0.0
        %1941 = vmatpush1.xpose.msra.mxu0 0.0
        %1942 = vmatprep.subr.mxu0 0.0
        %1943 = vmatpush1.xpose.msra.mxu0 0.0
        %1944 = vmatprep.subr.mxu0 0.0
        %1945 = vmatpush1.xpose.msra.mxu0 0.0
        %1946 = vmatprep.subr.mxu0 0.0
        %1947 = vmatpush1.xpose.msra.mxu0 0.0
        %1948 = vmatprep.subr.mxu0 0.0
        %1949 = vmatpush1.xpose.msra.mxu0 0.0
        %1950 = vmatprep.subr.mxu0 0.0
        %1951 = vmatpush1.xpose.msra.mxu0 0.0
        %1952 = vmatprep.subr.mxu0 0.0
        %1953 = vmatpush1.xpose.msra.mxu0 0.0
        %1954 = vmatprep.subr.mxu0 0.0
        %1955 = vmatpush1.xpose.msra.mxu0 0.0
        %1956 = vmatprep.subr.mxu0 0.0
        %1957 = vmatpush1.xpose.msra.mxu0 0.0
        %1958 = vmatprep.subr.mxu0 0.0
        %1959 = vmatpush1.xpose.msra.mxu0 0.0
        %1960 = vmatprep.subr.mxu0 0.0
        %1961 = vmatpush1.xpose.msra.mxu0 0.0
        %1962 = vmatprep.subr.mxu0 0.0
        %1963 = vmatpush1.xpose.msra.mxu0 0.0
        %1964 = vmatprep.subr.mxu0 0.0
        %1965 = vmatpush1.xpose.msra.mxu0 0.0
        %1966 = vmatprep.subr.mxu0 0.0
        %1967 = vmatpush1.xpose.msra.mxu0 0.0
        %1968 = vmatprep.subr.mxu0 0.0
        %1969 = vmatpush1.xpose.msra.mxu0 0.0
        %1970 = vmatprep.subr.mxu0 0.0
        %1971 = vmatpush1.xpose.msra.mxu0 0.0
        %1972 = vmatprep.subr.mxu0 0.0
        %1973 = vmatpush1.xpose.msra.mxu0 0.0
        %1974 = vmatprep.subr.mxu0 0.0
        %1975 = vmatpush1.xpose.msra.mxu0 0.0
        %1976 = vmatprep.subr.mxu0 0.0
        %1977 = vmatpush1.xpose.msra.mxu0 0.0
        %1978 = vmatprep.subr.mxu0 0.0
        %1979 = vmatpush1.xpose.msra.mxu0 0.0
        %1980 = vmatprep.subr.mxu0 0.0
        %1981 = vmatpush1.xpose.msra.mxu0 0.0
        %1982 = vmatprep.subr.mxu0 0.0
        %1983 = vmatpush1.xpose.msra.mxu0 0.0
        %1984 = vmatprep.subr.mxu0 0.0
        %1985 = vmatpush1.xpose.msra.mxu0 0.0
        %1986 = vmatprep.subr.mxu0 0.0
        %1987 = vmatpush1.xpose.msra.mxu0 0.0
        %1988 = vmatprep.subr.mxu0 0.0
        %1989 = vmatpush1.xpose.msra.mxu0 0.0
        %1990 = vmatprep.subr.mxu0 0.0
        %1991 = vmatpush1.xpose.msra.mxu0 0.0
        %1992 = vmatprep.mubr.f32.mxu0 0.0
        %1993 = vmatmul.mubr.f32.gmra.mrb[0].mxu0 %v1923
        %v1994 = vpop.f32.mrb[0].mxu0
        %v1995 = vadd.f32 %v1920, %v1994
        %v1996 = vpop.f32.mrb[0].mxu0
        %1997 = vdwg.mxu0
        %v1998 = vsel %vm763, %v1623, -inf
        %1999 = vmax.xlane.f32.xlu0 %v1998
        %v2000 = vpop.xlane.xlu0 %1999
        %v2001 = vsel %vm763, %v1747, -inf
        %2002 = vmax.xlane.f32.xlu0 %v2001
        %v2003 = vpop.xlane.xlu0 %2002
        %v2004 = vsel %vm763, %v1871, -inf
        %2005 = vmax.xlane.f32.xlu0 %v2004
        %v2006 = vpop.xlane.xlu0 %2005
        %v2007 = vsel %vm763, %v1995, -inf
        %2008 = vmax.xlane.f32.xlu0 %v2007
        %v2009 = vpop.xlane.xlu0 %2008
        %v2010 = vsub.f32 %v1623, %v2000
        %v2011 = vsub.f32 %v1747, %v2003
        %v2012 = vsub.f32 %v1871, %v2006
        %v2013 = vsub.f32 %v1995, %v2009
        %v2014 = vmul.f32 %v2010, 1.442695
        %v2015 = vpow.pop %v2014
        %v2016 = vmul.f32 %v2011, 1.442695
        %v2017 = vpow.pop %v2016
        %v2018 = vmul.f32 %v2012, 1.442695
        %v2019 = vpow.pop %v2018
        %v2020 = vmul.f32 %v2013, 1.442695
        %v2021 = vpow.pop %v2020
        %v2022 = vsel %vm763, %v2015, 0.0
        %2023 = vadd.xlane.f32.xlu0 %v2022
        %v2024 = vpop.xlane.xlu0 %2023
        %v2025 = vsel %vm763, %v2017, 0.0
        %2026 = vadd.xlane.f32.xlu0 %v2025
        %v2027 = vpop.xlane.xlu0 %2026
        %v2028 = vsel %vm763, %v2019, 0.0
        %2029 = vadd.xlane.f32.xlu0 %v2028
        %v2030 = vpop.xlane.xlu0 %2029
        %v2031 = vsel %vm763, %v2021, 0.0
        %2032 = vadd.xlane.f32.xlu0 %v2031
        %v2033 = vpop.xlane.xlu0 %2032
        %v2034 = vrcp.pop %v2024
        %v2035 = vrcp.pop %v2027
        %v2036 = vrcp.pop %v2030
        %v2037 = vrcp.pop %v2033
        %v2038 = vmul.f32 %v2015, %v2034
        %v2039 = vmul.f32 %v2017, %v2035
        %v2040 = vmul.f32 %v2019, %v2036
        %v2041 = vmul.f32 %v2021, %v2037
        %2042 = vst.msk [vmem:[%s733] sm:$0xff] %vm763, %v2038
        %2043 = vst.msk [vmem:[%s733 + $0x8] sm:$0xff] %vm763, %v2039
        %2044 = vst.msk [vmem:[%s733 + $0x10] sm:$0xff] %vm763, %v2040
        %2045 = vst.msk [vmem:[%s733 + $0x18] sm:$0xff] %vm763, %v2041
        %v2047 = vsel %vm763, %v2038, 0
        %2049 = vmatprep.subr.mxu0 0.0
        %2050 = vmatpush1.msra.mxu0 %v989
        %2051 = vmatprep.subr.mxu0 0.0
        %2052 = vmatpush1.msra.mxu0 0.0
        %2053 = vmatprep.subr.mxu0 0.0
        %2054 = vmatpush1.msra.mxu0 0.0
        %2055 = vmatprep.subr.mxu0 0.0
        %2056 = vmatpush1.msra.mxu0 0.0
        %2057 = vmatprep.subr.mxu0 0.0
        %2058 = vmatpush1.msra.mxu0 0.0
        %2059 = vmatprep.subr.mxu0 0.0
        %2060 = vmatpush1.msra.mxu0 0.0
        %2061 = vmatprep.subr.mxu0 0.0
        %2062 = vmatpush1.msra.mxu0 0.0
        %2063 = vmatprep.subr.mxu0 0.0
        %2064 = vmatpush1.msra.mxu0 0.0
        %2065 = vmatprep.subr.mxu0 0.0
        %2066 = vmatpush1.msra.mxu0 0.0
        %2067 = vmatprep.subr.mxu0 0.0
        %2068 = vmatpush1.msra.mxu0 0.0
        %2069 = vmatprep.subr.mxu0 0.0
        %2070 = vmatpush1.msra.mxu0 0.0
        %2071 = vmatprep.subr.mxu0 0.0
        %2072 = vmatpush1.msra.mxu0 0.0
        %2073 = vmatprep.subr.mxu0 0.0
        %2074 = vmatpush1.msra.mxu0 0.0
        %2075 = vmatprep.subr.mxu0 0.0
        %2076 = vmatpush1.msra.mxu0 0.0
        %2077 = vmatprep.subr.mxu0 0.0
        %2078 = vmatpush1.msra.mxu0 0.0
        %2079 = vmatprep.subr.mxu0 0.0
        %2080 = vmatpush1.msra.mxu0 0.0
        %2081 = vmatprep.subr.mxu0 0.0
        %2082 = vmatpush1.msra.mxu0 0.0
        %2083 = vmatprep.subr.mxu0 0.0
        %2084 = vmatpush1.msra.mxu0 0.0
        %2085 = vmatprep.subr.mxu0 0.0
        %2086 = vmatpush1.msra.mxu0 0.0
        %2087 = vmatprep.subr.mxu0 0.0
        %2088 = vmatpush1.msra.mxu0 0.0
        %2089 = vmatprep.subr.mxu0 0.0
        %2090 = vmatpush1.msra.mxu0 0.0
        %2091 = vmatprep.subr.mxu0 0.0
        %2092 = vmatpush1.msra.mxu0 0.0
        %2093 = vmatprep.subr.mxu0 0.0
        %2094 = vmatpush1.msra.mxu0 0.0
        %2095 = vmatprep.subr.mxu0 0.0
        %2096 = vmatpush1.msra.mxu0 0.0
        %2097 = vmatprep.subr.mxu0 0.0
        %2098 = vmatpush1.msra.mxu0 0.0
        %2099 = vmatprep.subr.mxu0 0.0
        %2100 = vmatpush1.msra.mxu0 0.0
        %2101 = vmatprep.subr.mxu0 0.0
        %2102 = vmatpush1.msra.mxu0 0.0
        %2103 = vmatprep.subr.mxu0 0.0
        %2104 = vmatpush1.msra.mxu0 0.0
        %2105 = vmatprep.subr.mxu0 0.0
        %2106 = vmatpush1.msra.mxu0 0.0
        %2107 = vmatprep.subr.mxu0 0.0
        %2108 = vmatpush1.msra.mxu0 0.0
        %2109 = vmatprep.subr.mxu0 0.0
        %2110 = vmatpush1.msra.mxu0 0.0
        %2111 = vmatprep.subr.mxu0 0.0
        %2112 = vmatpush1.msra.mxu0 0.0
        %2113 = vmatprep.mubr.f32.mxu0 0.0
        %2114 = vmatmul.mubr.f32.gmra.mrb[0].mxu0 %v2047
        %v2115 = vpop.f32.mrb[0].mxu0
        %v2116 = vadd.f32 %v833, %v2115
        %v2117 = vpop.f32.mrb[0].mxu0
        %2118 = vdwg.mxu0
        %v2120 = vsel %vm763, %v2039, 0
        %2122 = vmatprep.subr.mxu0 0.0
        %2123 = vmatpush1.msra.mxu0 %v990
        %2124 = vmatprep.subr.mxu0 0.0
        %2125 = vmatpush1.msra.mxu0 0.0
        %2126 = vmatprep.subr.mxu0 0.0
        %2127 = vmatpush1.msra.mxu0 0.0
        %2128 = vmatprep.subr.mxu0 0.0
        %2129 = vmatpush1.msra.mxu0 0.0
        %2130 = vmatprep.subr.mxu0 0.0
        %2131 = vmatpush1.msra.mxu0 0.0
        %2132 = vmatprep.subr.mxu0 0.0
        %2133 = vmatpush1.msra.mxu0 0.0
        %2134 = vmatprep.subr.mxu0 0.0
        %2135 = vmatpush1.msra.mxu0 0.0
        %2136 = vmatprep.subr.mxu0 0.0
        %2137 = vmatpush1.msra.mxu0 0.0
        %2138 = vmatprep.subr.mxu0 0.0
        %2139 = vmatpush1.msra.mxu0 0.0
        %2140 = vmatprep.subr.mxu0 0.0
        %2141 = vmatpush1.msra.mxu0 0.0
        %2142 = vmatprep.subr.mxu0 0.0
        %2143 = vmatpush1.msra.mxu0 0.0
        %2144 = vmatprep.subr.mxu0 0.0
        %2145 = vmatpush1.msra.mxu0 0.0
        %2146 = vmatprep.subr.mxu0 0.0
        %2147 = vmatpush1.msra.mxu0 0.0
        %2148 = vmatprep.subr.mxu0 0.0
        %2149 = vmatpush1.msra.mxu0 0.0
        %2150 = vmatprep.subr.mxu0 0.0
        %2151 = vmatpush1.msra.mxu0 0.0
        %2152 = vmatprep.subr.mxu0 0.0
        %2153 = vmatpush1.msra.mxu0 0.0
        %2154 = vmatprep.subr.mxu0 0.0
        %2155 = vmatpush1.msra.mxu0 0.0
        %2156 = vmatprep.subr.mxu0 0.0
        %2157 = vmatpush1.msra.mxu0 0.0
        %2158 = vmatprep.subr.mxu0 0.0
        %2159 = vmatpush1.msra.mxu0 0.0
        %2160 = vmatprep.subr.mxu0 0.0
        %2161 = vmatpush1.msra.mxu0 0.0
        %2162 = vmatprep.subr.mxu0 0.0
        %2163 = vmatpush1.msra.mxu0 0.0
        %2164 = vmatprep.subr.mxu0 0.0
        %2165 = vmatpush1.msra.mxu0 0.0
        %2166 = vmatprep.subr.mxu0 0.0
        %2167 = vmatpush1.msra.mxu0 0.0
        %2168 = vmatprep.subr.mxu0 0.0
        %2169 = vmatpush1.msra.mxu0 0.0
        %2170 = vmatprep.subr.mxu0 0.0
        %2171 = vmatpush1.msra.mxu0 0.0
        %2172 = vmatprep.subr.mxu0 0.0
        %2173 = vmatpush1.msra.mxu0 0.0
        %2174 = vmatprep.subr.mxu0 0.0
        %2175 = vmatpush1.msra.mxu0 0.0
        %2176 = vmatprep.subr.mxu0 0.0
        %2177 = vmatpush1.msra.mxu0 0.0
        %2178 = vmatprep.subr.mxu0 0.0
        %2179 = vmatpush1.msra.mxu0 0.0
        %2180 = vmatprep.subr.mxu0 0.0
        %2181 = vmatpush1.msra.mxu0 0.0
        %2182 = vmatprep.subr.mxu0 0.0
        %2183 = vmatpush1.msra.mxu0 0.0
        %2184 = vmatprep.subr.mxu0 0.0
        %2185 = vmatpush1.msra.mxu0 0.0
        %2186 = vmatprep.mubr.f32.mxu0 0.0
        %2187 = vmatmul.mubr.f32.gmra.mrb[0].mxu0 %v2120
        %v2188 = vpop.f32.mrb[0].mxu0
        %v2189 = vadd.f32 %v834, %v2188
        %v2190 = vpop.f32.mrb[0].mxu0
        %2191 = vdwg.mxu0
        %v2193 = vsel %vm763, %v2040, 0
        %2195 = vmatprep.subr.mxu0 0.0
        %2196 = vmatpush1.msra.mxu0 %v991
        %2197 = vmatprep.subr.mxu0 0.0
        %2198 = vmatpush1.msra.mxu0 0.0
        %2199 = vmatprep.subr.mxu0 0.0
        %2200 = vmatpush1.msra.mxu0 0.0
        %2201 = vmatprep.subr.mxu0 0.0
        %2202 = vmatpush1.msra.mxu0 0.0
        %2203 = vmatprep.subr.mxu0 0.0
        %2204 = vmatpush1.msra.mxu0 0.0
        %2205 = vmatprep.subr.mxu0 0.0
        %2206 = vmatpush1.msra.mxu0 0.0
        %2207 = vmatprep.subr.mxu0 0.0
        %2208 = vmatpush1.msra.mxu0 0.0
        %2209 = vmatprep.subr.mxu0 0.0
        %2210 = vmatpush1.msra.mxu0 0.0
        %2211 = vmatprep.subr.mxu0 0.0
        %2212 = vmatpush1.msra.mxu0 0.0
        %2213 = vmatprep.subr.mxu0 0.0
        %2214 = vmatpush1.msra.mxu0 0.0
        %2215 = vmatprep.subr.mxu0 0.0
        %2216 = vmatpush1.msra.mxu0 0.0
        %2217 = vmatprep.subr.mxu0 0.0
        %2218 = vmatpush1.msra.mxu0 0.0
        %2219 = vmatprep.subr.mxu0 0.0
        %2220 = vmatpush1.msra.mxu0 0.0
        %2221 = vmatprep.subr.mxu0 0.0
        %2222 = vmatpush1.msra.mxu0 0.0
        %2223 = vmatprep.subr.mxu0 0.0
        %2224 = vmatpush1.msra.mxu0 0.0
        %2225 = vmatprep.subr.mxu0 0.0
        %2226 = vmatpush1.msra.mxu0 0.0
        %2227 = vmatprep.subr.mxu0 0.0
        %2228 = vmatpush1.msra.mxu0 0.0
        %2229 = vmatprep.subr.mxu0 0.0
        %2230 = vmatpush1.msra.mxu0 0.0
        %2231 = vmatprep.subr.mxu0 0.0
        %2232 = vmatpush1.msra.mxu0 0.0
        %2233 = vmatprep.subr.mxu0 0.0
        %2234 = vmatpush1.msra.mxu0 0.0
        %2235 = vmatprep.subr.mxu0 0.0
        %2236 = vmatpush1.msra.mxu0 0.0
        %2237 = vmatprep.subr.mxu0 0.0
        %2238 = vmatpush1.msra.mxu0 0.0
        %2239 = vmatprep.subr.mxu0 0.0
        %2240 = vmatpush1.msra.mxu0 0.0
        %2241 = vmatprep.subr.mxu0 0.0
        %2242 = vmatpush1.msra.mxu0 0.0
        %2243 = vmatprep.subr.mxu0 0.0
        %2244 = vmatpush1.msra.mxu0 0.0
        %2245 = vmatprep.subr.mxu0 0.0
        %2246 = vmatpush1.msra.mxu0 0.0
        %2247 = vmatprep.subr.mxu0 0.0
        %2248 = vmatpush1.msra.mxu0 0.0
        %2249 = vmatprep.subr.mxu0 0.0
        %2250 = vmatpush1.msra.mxu0 0.0
        %2251 = vmatprep.subr.mxu0 0.0
        %2252 = vmatpush1.msra.mxu0 0.0
        %2253 = vmatprep.subr.mxu0 0.0
        %2254 = vmatpush1.msra.mxu0 0.0
        %2255 = vmatprep.subr.mxu0 0.0
        %2256 = vmatpush1.msra.mxu0 0.0
        %2257 = vmatprep.subr.mxu0 0.0
        %2258 = vmatpush1.msra.mxu0 0.0
        %2259 = vmatprep.mubr.f32.mxu0 0.0
        %2260 = vmatmul.mubr.f32.gmra.mrb[0].mxu0 %v2193
        %v2261 = vpop.f32.mrb[0].mxu0
        %v2262 = vadd.f32 %v835, %v2261
        %v2263 = vpop.f32.mrb[0].mxu0
        %2264 = vdwg.mxu0
        %v2266 = vsel %vm763, %v2041, 0
        %2268 = vmatprep.subr.mxu0 0.0
        %2269 = vmatpush1.msra.mxu0 %v992
        %2270 = vmatprep.subr.mxu0 0.0
        %2271 = vmatpush1.msra.mxu0 0.0
        %2272 = vmatprep.subr.mxu0 0.0
        %2273 = vmatpush1.msra.mxu0 0.0
        %2274 = vmatprep.subr.mxu0 0.0
        %2275 = vmatpush1.msra.mxu0 0.0
        %2276 = vmatprep.subr.mxu0 0.0
        %2277 = vmatpush1.msra.mxu0 0.0
        %2278 = vmatprep.subr.mxu0 0.0
        %2279 = vmatpush1.msra.mxu0 0.0
        %2280 = vmatprep.subr.mxu0 0.0
        %2281 = vmatpush1.msra.mxu0 0.0
        %2282 = vmatprep.subr.mxu0 0.0
        %2283 = vmatpush1.msra.mxu0 0.0
        %2284 = vmatprep.subr.mxu0 0.0
        %2285 = vmatpush1.msra.mxu0 0.0
        %2286 = vmatprep.subr.mxu0 0.0
        %2287 = vmatpush1.msra.mxu0 0.0
        %2288 = vmatprep.subr.mxu0 0.0
        %2289 = vmatpush1.msra.mxu0 0.0
        %2290 = vmatprep.subr.mxu0 0.0
        %2291 = vmatpush1.msra.mxu0 0.0
        %2292 = vmatprep.subr.mxu0 0.0
        %2293 = vmatpush1.msra.mxu0 0.0
        %2294 = vmatprep.subr.mxu0 0.0
        %2295 = vmatpush1.msra.mxu0 0.0
        %2296 = vmatprep.subr.mxu0 0.0
        %2297 = vmatpush1.msra.mxu0 0.0
        %2298 = vmatprep.subr.mxu0 0.0
        %2299 = vmatpush1.msra.mxu0 0.0
        %2300 = vmatprep.subr.mxu0 0.0
        %2301 = vmatpush1.msra.mxu0 0.0
        %2302 = vmatprep.subr.mxu0 0.0
        %2303 = vmatpush1.msra.mxu0 0.0
        %2304 = vmatprep.subr.mxu0 0.0
        %2305 = vmatpush1.msra.mxu0 0.0
        %2306 = vmatprep.subr.mxu0 0.0
        %2307 = vmatpush1.msra.mxu0 0.0
        %2308 = vmatprep.subr.mxu0 0.0
        %2309 = vmatpush1.msra.mxu0 0.0
        %2310 = vmatprep.subr.mxu0 0.0
        %2311 = vmatpush1.msra.mxu0 0.0
        %2312 = vmatprep.subr.mxu0 0.0
        %2313 = vmatpush1.msra.mxu0 0.0
        %2314 = vmatprep.subr.mxu0 0.0
        %2315 = vmatpush1.msra.mxu0 0.0
        %2316 = vmatprep.subr.mxu0 0.0
        %2317 = vmatpush1.msra.mxu0 0.0
        %2318 = vmatprep.subr.mxu0 0.0
        %2319 = vmatpush1.msra.mxu0 0.0
        %2320 = vmatprep.subr.mxu0 0.0
        %2321 = vmatpush1.msra.mxu0 0.0
        %2322 = vmatprep.subr.mxu0 0.0
        %2323 = vmatpush1.msra.mxu0 0.0
        %2324 = vmatprep.subr.mxu0 0.0
        %2325 = vmatpush1.msra.mxu0 0.0
        %2326 = vmatprep.subr.mxu0 0.0
        %2327 = vmatpush1.msra.mxu0 0.0
        %2328 = vmatprep.subr.mxu0 0.0
        %2329 = vmatpush1.msra.mxu0 0.0
        %2330 = vmatprep.subr.mxu0 0.0
        %2331 = vmatpush1.msra.mxu0 0.0
        %2332 = vmatprep.mubr.f32.mxu0 0.0
        %2333 = vmatmul.mubr.f32.gmra.mrb[0].mxu0 %v2266
        %v2334 = vpop.f32.mrb[0].mxu0
        %v2335 = vadd.f32 %v836, %v2334
        %v2336 = vpop.f32.mrb[0].mxu0
        %2337 = vdwg.mxu0
        %v2338 = vld [vmem:[%s11] sm:$0xff]
        %v2339 = vld [vmem:[%s11 + $0x8] sm:$0xff]
        %v2340 = vld [vmem:[%s11 + $0x10] sm:$0xff]
        %v2341 = vld [vmem:[%s11 + $0x18] sm:$0xff]
        %v2342 = vld [vmem:[%s12] sm:$0x1]
        %v2343 = vld [vmem:[%s755] sm:$0xff]
        %v2345 = vlaneseq
        %v2346 = vshrl.u32 %v2345, 7
        %v2347 = vsub.s32 0, %v2346
        %v2348 = vrot.slane %v2342, %v2347
        %v2350 = vadd.f32 %v2348, %v2343
        %v2352 = vsel %vm763, %v2116, 0
        %2354 = vmatprep.subr.mxu0 0.0
        %2355 = vmatpush1.msra.mxu0 %v2338
        %2356 = vmatprep.subr.mxu0 0.0
        %2357 = vmatpush1.msra.mxu0 0.0
        %2358 = vmatprep.subr.mxu0 0.0
        %2359 = vmatpush1.msra.mxu0 0.0
        %2360 = vmatprep.subr.mxu0 0.0
        %2361 = vmatpush1.msra.mxu0 0.0
        %2362 = vmatprep.subr.mxu0 0.0
        %2363 = vmatpush1.msra.mxu0 0.0
        %2364 = vmatprep.subr.mxu0 0.0
        %2365 = vmatpush1.msra.mxu0 0.0
        %2366 = vmatprep.subr.mxu0 0.0
        %2367 = vmatpush1.msra.mxu0 0.0
        %2368 = vmatprep.subr.mxu0 0.0
        %2369 = vmatpush1.msra.mxu0 0.0
        %2370 = vmatprep.subr.mxu0 0.0
        %2371 = vmatpush1.msra.mxu0 0.0
        %2372 = vmatprep.subr.mxu0 0.0
        %2373 = vmatpush1.msra.mxu0 0.0
        %2374 = vmatprep.subr.mxu0 0.0
        %2375 = vmatpush1.msra.mxu0 0.0
        %2376 = vmatprep.subr.mxu0 0.0
        %2377 = vmatpush1.msra.mxu0 0.0
        %2378 = vmatprep.subr.mxu0 0.0
        %2379 = vmatpush1.msra.mxu0 0.0
        %2380 = vmatprep.subr.mxu0 0.0
        %2381 = vmatpush1.msra.mxu0 0.0
        %2382 = vmatprep.subr.mxu0 0.0
        %2383 = vmatpush1.msra.mxu0 0.0
        %2384 = vmatprep.subr.mxu0 0.0
        %2385 = vmatpush1.msra.mxu0 0.0
        %2386 = vmatprep.subr.mxu0 0.0
        %2387 = vmatpush1.msra.mxu0 0.0
        %2388 = vmatprep.subr.mxu0 0.0
        %2389 = vmatpush1.msra.mxu0 0.0
        %2390 = vmatprep.subr.mxu0 0.0
        %2391 = vmatpush1.msra.mxu0 0.0
        %2392 = vmatprep.subr.mxu0 0.0
        %2393 = vmatpush1.msra.mxu0 0.0
        %2394 = vmatprep.subr.mxu0 0.0
        %2395 = vmatpush1.msra.mxu0 0.0
        %2396 = vmatprep.subr.mxu0 0.0
        %2397 = vmatpush1.msra.mxu0 0.0
        %2398 = vmatprep.subr.mxu0 0.0
        %2399 = vmatpush1.msra.mxu0 0.0
        %2400 = vmatprep.subr.mxu0 0.0
        %2401 = vmatpush1.msra.mxu0 0.0
        %2402 = vmatprep.subr.mxu0 0.0
        %2403 = vmatpush1.msra.mxu0 0.0
        %2404 = vmatprep.subr.mxu0 0.0
        %2405 = vmatpush1.msra.mxu0 0.0
        %2406 = vmatprep.subr.mxu0 0.0
        %2407 = vmatpush1.msra.mxu0 0.0
        %2408 = vmatprep.subr.mxu0 0.0
        %2409 = vmatpush1.msra.mxu0 0.0
        %2410 = vmatprep.subr.mxu0 0.0
        %2411 = vmatpush1.msra.mxu0 0.0
        %2412 = vmatprep.subr.mxu0 0.0
        %2413 = vmatpush1.msra.mxu0 0.0
        %2414 = vmatprep.subr.mxu0 0.0
        %2415 = vmatpush1.msra.mxu0 0.0
        %2416 = vmatprep.subr.mxu0 0.0
        %2417 = vmatpush1.msra.mxu0 0.0
        %2418 = vmatprep.mubr.f32.mxu0 0.0
        %2419 = vmatmul.mubr.f32.gmra.mrb[0].mxu0 %v2352
        %v2420 = vpop.f32.mrb[0].mxu0
        %v2421 = vadd.f32 0.0, %v2420
        %v2422 = vpop.f32.mrb[0].mxu0
        %2423 = vdwg.mxu0
        %v2424 = vadd.f32 %v2350, %v2421
        %v2426 = vsel %vm763, %v2189, 0
        %2428 = vmatprep.subr.mxu0 0.0
        %2429 = vmatpush1.msra.mxu0 %v2339
        %2430 = vmatprep.subr.mxu0 0.0
        %2431 = vmatpush1.msra.mxu0 0.0
        %2432 = vmatprep.subr.mxu0 0.0
        %2433 = vmatpush1.msra.mxu0 0.0
        %2434 = vmatprep.subr.mxu0 0.0
        %2435 = vmatpush1.msra.mxu0 0.0
        %2436 = vmatprep.subr.mxu0 0.0
        %2437 = vmatpush1.msra.mxu0 0.0
        %2438 = vmatprep.subr.mxu0 0.0
        %2439 = vmatpush1.msra.mxu0 0.0
        %2440 = vmatprep.subr.mxu0 0.0
        %2441 = vmatpush1.msra.mxu0 0.0
        %2442 = vmatprep.subr.mxu0 0.0
        %2443 = vmatpush1.msra.mxu0 0.0
        %2444 = vmatprep.subr.mxu0 0.0
        %2445 = vmatpush1.msra.mxu0 0.0
        %2446 = vmatprep.subr.mxu0 0.0
        %2447 = vmatpush1.msra.mxu0 0.0
        %2448 = vmatprep.subr.mxu0 0.0
        %2449 = vmatpush1.msra.mxu0 0.0
        %2450 = vmatprep.subr.mxu0 0.0
        %2451 = vmatpush1.msra.mxu0 0.0
        %2452 = vmatprep.subr.mxu0 0.0
        %2453 = vmatpush1.msra.mxu0 0.0
        %2454 = vmatprep.subr.mxu0 0.0
        %2455 = vmatpush1.msra.mxu0 0.0
        %2456 = vmatprep.subr.mxu0 0.0
        %2457 = vmatpush1.msra.mxu0 0.0
        %2458 = vmatprep.subr.mxu0 0.0
        %2459 = vmatpush1.msra.mxu0 0.0
        %2460 = vmatprep.subr.mxu0 0.0
        %2461 = vmatpush1.msra.mxu0 0.0
        %2462 = vmatprep.subr.mxu0 0.0
        %2463 = vmatpush1.msra.mxu0 0.0
        %2464 = vmatprep.subr.mxu0 0.0
        %2465 = vmatpush1.msra.mxu0 0.0
        %2466 = vmatprep.subr.mxu0 0.0
        %2467 = vmatpush1.msra.mxu0 0.0
        %2468 = vmatprep.subr.mxu0 0.0
        %2469 = vmatpush1.msra.mxu0 0.0
        %2470 = vmatprep.subr.mxu0 0.0
        %2471 = vmatpush1.msra.mxu0 0.0
        %2472 = vmatprep.subr.mxu0 0.0
        %2473 = vmatpush1.msra.mxu0 0.0
        %2474 = vmatprep.subr.mxu0 0.0
        %2475 = vmatpush1.msra.mxu0 0.0
        %2476 = vmatprep.subr.mxu0 0.0
        %2477 = vmatpush1.msra.mxu0 0.0
        %2478 = vmatprep.subr.mxu0 0.0
        %2479 = vmatpush1.msra.mxu0 0.0
        %2480 = vmatprep.subr.mxu0 0.0
        %2481 = vmatpush1.msra.mxu0 0.0
        %2482 = vmatprep.subr.mxu0 0.0
        %2483 = vmatpush1.msra.mxu0 0.0
        %2484 = vmatprep.subr.mxu0 0.0
        %2485 = vmatpush1.msra.mxu0 0.0
        %2486 = vmatprep.subr.mxu0 0.0
        %2487 = vmatpush1.msra.mxu0 0.0
        %2488 = vmatprep.subr.mxu0 0.0
        %2489 = vmatpush1.msra.mxu0 0.0
        %2490 = vmatprep.subr.mxu0 0.0
        %2491 = vmatpush1.msra.mxu0 0.0
        %2492 = vmatprep.mubr.f32.mxu0 0.0
        %2493 = vmatmul.mubr.f32.gmra.mrb[0].mxu0 %v2426
        %v2494 = vpop.f32.mrb[0].mxu0
        %v2495 = vadd.f32 0.0, %v2494
        %v2496 = vpop.f32.mrb[0].mxu0
        %2497 = vdwg.mxu0
        %v2498 = vadd.f32 %v2424, %v2495
        %v2500 = vsel %vm763, %v2262, 0
        %2502 = vmatprep.subr.mxu0 0.0
        %2503 = vmatpush1.msra.mxu0 %v2340
        %2504 = vmatprep.subr.mxu0 0.0
        %2505 = vmatpush1.msra.mxu0 0.0
        %2506 = vmatprep.subr.mxu0 0.0
        %2507 = vmatpush1.msra.mxu0 0.0
        %2508 = vmatprep.subr.mxu0 0.0
        %2509 = vmatpush1.msra.mxu0 0.0
        %2510 = vmatprep.subr.mxu0 0.0
        %2511 = vmatpush1.msra.mxu0 0.0
        %2512 = vmatprep.subr.mxu0 0.0
        %2513 = vmatpush1.msra.mxu0 0.0
        %2514 = vmatprep.subr.mxu0 0.0
        %2515 = vmatpush1.msra.mxu0 0.0
        %2516 = vmatprep.subr.mxu0 0.0
        %2517 = vmatpush1.msra.mxu0 0.0
        %2518 = vmatprep.subr.mxu0 0.0
        %2519 = vmatpush1.msra.mxu0 0.0
        %2520 = vmatprep.subr.mxu0 0.0
        %2521 = vmatpush1.msra.mxu0 0.0
        %2522 = vmatprep.subr.mxu0 0.0
        %2523 = vmatpush1.msra.mxu0 0.0
        %2524 = vmatprep.subr.mxu0 0.0
        %2525 = vmatpush1.msra.mxu0 0.0
        %2526 = vmatprep.subr.mxu0 0.0
        %2527 = vmatpush1.msra.mxu0 0.0
        %2528 = vmatprep.subr.mxu0 0.0
        %2529 = vmatpush1.msra.mxu0 0.0
        %2530 = vmatprep.subr.mxu0 0.0
        %2531 = vmatpush1.msra.mxu0 0.0
        %2532 = vmatprep.subr.mxu0 0.0
        %2533 = vmatpush1.msra.mxu0 0.0
        %2534 = vmatprep.subr.mxu0 0.0
        %2535 = vmatpush1.msra.mxu0 0.0
        %2536 = vmatprep.subr.mxu0 0.0
        %2537 = vmatpush1.msra.mxu0 0.0
        %2538 = vmatprep.subr.mxu0 0.0
        %2539 = vmatpush1.msra.mxu0 0.0
        %2540 = vmatprep.subr.mxu0 0.0
        %2541 = vmatpush1.msra.mxu0 0.0
        %2542 = vmatprep.subr.mxu0 0.0
        %2543 = vmatpush1.msra.mxu0 0.0
        %2544 = vmatprep.subr.mxu0 0.0
        %2545 = vmatpush1.msra.mxu0 0.0
        %2546 = vmatprep.subr.mxu0 0.0
        %2547 = vmatpush1.msra.mxu0 0.0
        %2548 = vmatprep.subr.mxu0 0.0
        %2549 = vmatpush1.msra.mxu0 0.0
        %2550 = vmatprep.subr.mxu0 0.0
        %2551 = vmatpush1.msra.mxu0 0.0
        %2552 = vmatprep.subr.mxu0 0.0
        %2553 = vmatpush1.msra.mxu0 0.0
        %2554 = vmatprep.subr.mxu0 0.0
        %2555 = vmatpush1.msra.mxu0 0.0
        %2556 = vmatprep.subr.mxu0 0.0
        %2557 = vmatpush1.msra.mxu0 0.0
        %2558 = vmatprep.subr.mxu0 0.0
        %2559 = vmatpush1.msra.mxu0 0.0
        %2560 = vmatprep.subr.mxu0 0.0
        %2561 = vmatpush1.msra.mxu0 0.0
        %2562 = vmatprep.subr.mxu0 0.0
        %2563 = vmatpush1.msra.mxu0 0.0
        %2564 = vmatprep.subr.mxu0 0.0
        %2565 = vmatpush1.msra.mxu0 0.0
        %2566 = vmatprep.mubr.f32.mxu0 0.0
        %2567 = vmatmul.mubr.f32.gmra.mrb[0].mxu0 %v2500
        %v2568 = vpop.f32.mrb[0].mxu0
        %v2569 = vadd.f32 0.0, %v2568
        %v2570 = vpop.f32.mrb[0].mxu0
        %2571 = vdwg.mxu0
        %v2572 = vadd.f32 %v2498, %v2569
        %v2574 = vsel %vm763, %v2335, 0
        %2576 = vmatprep.subr.mxu0 0.0
        %2577 = vmatpush1.msra.mxu0 %v2341
        %2578 = vmatprep.subr.mxu0 0.0
        %2579 = vmatpush1.msra.mxu0 0.0
        %2580 = vmatprep.subr.mxu0 0.0
        %2581 = vmatpush1.msra.mxu0 0.0
        %2582 = vmatprep.subr.mxu0 0.0
        %2583 = vmatpush1.msra.mxu0 0.0
        %2584 = vmatprep.subr.mxu0 0.0
        %2585 = vmatpush1.msra.mxu0 0.0
        %2586 = vmatprep.subr.mxu0 0.0
        %2587 = vmatpush1.msra.mxu0 0.0
        %2588 = vmatprep.subr.mxu0 0.0
        %2589 = vmatpush1.msra.mxu0 0.0
        %2590 = vmatprep.subr.mxu0 0.0
        %2591 = vmatpush1.msra.mxu0 0.0
        %2592 = vmatprep.subr.mxu0 0.0
        %2593 = vmatpush1.msra.mxu0 0.0
        %2594 = vmatprep.subr.mxu0 0.0
        %2595 = vmatpush1.msra.mxu0 0.0
        %2596 = vmatprep.subr.mxu0 0.0
        %2597 = vmatpush1.msra.mxu0 0.0
        %2598 = vmatprep.subr.mxu0 0.0
        %2599 = vmatpush1.msra.mxu0 0.0
        %2600 = vmatprep.subr.mxu0 0.0
        %2601 = vmatpush1.msra.mxu0 0.0
        %2602 = vmatprep.subr.mxu0 0.0
        %2603 = vmatpush1.msra.mxu0 0.0
        %2604 = vmatprep.subr.mxu0 0.0
        %2605 = vmatpush1.msra.mxu0 0.0
        %2606 = vmatprep.subr.mxu0 0.0
        %2607 = vmatpush1.msra.mxu0 0.0
        %2608 = vmatprep.subr.mxu0 0.0
        %2609 = vmatpush1.msra.mxu0 0.0
        %2610 = vmatprep.subr.mxu0 0.0
        %2611 = vmatpush1.msra.mxu0 0.0
        %2612 = vmatprep.subr.mxu0 0.0
        %2613 = vmatpush1.msra.mxu0 0.0
        %2614 = vmatprep.subr.mxu0 0.0
        %2615 = vmatpush1.msra.mxu0 0.0
        %2616 = vmatprep.subr.mxu0 0.0
        %2617 = vmatpush1.msra.mxu0 0.0
        %2618 = vmatprep.subr.mxu0 0.0
        %2619 = vmatpush1.msra.mxu0 0.0
        %2620 = vmatprep.subr.mxu0 0.0
        %2621 = vmatpush1.msra.mxu0 0.0
        %2622 = vmatprep.subr.mxu0 0.0
        %2623 = vmatpush1.msra.mxu0 0.0
        %2624 = vmatprep.subr.mxu0 0.0
        %2625 = vmatpush1.msra.mxu0 0.0
        %2626 = vmatprep.subr.mxu0 0.0
        %2627 = vmatpush1.msra.mxu0 0.0
        %2628 = vmatprep.subr.mxu0 0.0
        %2629 = vmatpush1.msra.mxu0 0.0
        %2630 = vmatprep.subr.mxu0 0.0
        %2631 = vmatpush1.msra.mxu0 0.0
        %2632 = vmatprep.subr.mxu0 0.0
        %2633 = vmatpush1.msra.mxu0 0.0
        %2634 = vmatprep.subr.mxu0 0.0
        %2635 = vmatpush1.msra.mxu0 0.0
        %2636 = vmatprep.subr.mxu0 0.0
        %2637 = vmatpush1.msra.mxu0 0.0
        %2638 = vmatprep.subr.mxu0 0.0
        %2639 = vmatpush1.msra.mxu0 0.0
        %2640 = vmatprep.mubr.f32.mxu0 0.0
        %2641 = vmatmul.mubr.f32.gmra.mrb[0].mxu0 %v2574
        %v2642 = vpop.f32.mrb[0].mxu0
        %v2643 = vadd.f32 0.0, %v2642
        %v2644 = vpop.f32.mrb[0].mxu0
        %2645 = vdwg.mxu0
        %v2646 = vadd.f32 %v2572, %v2643
        %v2647 = vld [vmem:[%s13] sm:$0x1]
        %v2648 = vld [vmem:[%s14] sm:$0x1]
        %vm2649 = vcmask 261120
        %v2650 = vsel %vm2649, %v2646, 0.0
        %2651 = vadd.xlane.f32.xlu0 %v2650
        %v2652 = vpop.xlane.xlu0 %2651
        %v2653 = vrcp.pop 32.0
        %v2654 = vmul.f32 %v2652, %v2653
        %v2655 = vsub.f32 %v2646, %v2654
        %v2656 = vmul.f32 %v2655, %v2655
        %v2657 = vsel %vm2649, %v2656, 0.0
        %2658 = vadd.xlane.f32.xlu0 %v2657
        %v2659 = vpop.xlane.xlu0 %2658
        %v2660 = vmul.f32 %v2659, %v2653
        %v2661 = vadd.f32 %v2660, 1e-06
        %v2662 = vrsqrt.pop %v2661
        %v2663 = vmul.f32 %v2655, %v2662
        %v2665 = vlaneseq
        %v2666 = vshrl.u32 %v2665, 7
        %v2667 = vsub.s32 0, %v2666
        %v2668 = vrot.slane %v2647, %v2667
        %v2670 = vmul.f32 %v2663, %v2668
        %v2672 = vlaneseq
        %v2673 = vshrl.u32 %v2672, 7
        %v2674 = vsub.s32 0, %v2673
        %v2675 = vrot.slane %v2648, %v2674
        %v2677 = vadd.f32 %v2670, %v2675
        %v2678 = vld [vmem:[%s15] sm:$0xff]
        %v2679 = vld [vmem:[%s15 + $0x8] sm:$0xff]
        %v2680 = vld [vmem:[%s15 + $0x10] sm:$0xff]
        %v2681 = vld [vmem:[%s15 + $0x18] sm:$0xff]
        %v2682 = vld [vmem:[%s16] sm:$0x1]
        %v2684 = vlaneseq
        %v2685 = vshrl.u32 %v2684, 7
        %v2686 = vsub.s32 0, %v2685
        %v2687 = vrot.slane %v2682, %v2686
        %v2690 = vsel %vm2649, %v2677, 0
        %2692 = vmatprep.subr.mxu0 0.0
        %2693 = vmatpush1.msra.mxu0 %v2678
        %2694 = vmatprep.subr.mxu0 0.0
        %2695 = vmatpush1.msra.mxu0 %v2679
        %2696 = vmatprep.subr.mxu0 0.0
        %2697 = vmatpush1.msra.mxu0 %v2680
        %2698 = vmatprep.subr.mxu0 0.0
        %2699 = vmatpush1.msra.mxu0 %v2681
        %2700 = vmatprep.subr.mxu0 0.0
        %2701 = vmatpush1.msra.mxu0 0.0
        %2702 = vmatprep.subr.mxu0 0.0
        %2703 = vmatpush1.msra.mxu0 0.0
        %2704 = vmatprep.subr.mxu0 0.0
        %2705 = vmatpush1.msra.mxu0 0.0
        %2706 = vmatprep.subr.mxu0 0.0
        %2707 = vmatpush1.msra.mxu0 0.0
        %2708 = vmatprep.subr.mxu0 0.0
        %2709 = vmatpush1.msra.mxu0 0.0
        %2710 = vmatprep.subr.mxu0 0.0
        %2711 = vmatpush1.msra.mxu0 0.0
        %2712 = vmatprep.subr.mxu0 0.0
        %2713 = vmatpush1.msra.mxu0 0.0
        %2714 = vmatprep.subr.mxu0 0.0
        %2715 = vmatpush1.msra.mxu0 0.0
        %2716 = vmatprep.subr.mxu0 0.0
        %2717 = vmatpush1.msra.mxu0 0.0
        %2718 = vmatprep.subr.mxu0 0.0
        %2719 = vmatpush1.msra.mxu0 0.0
        %2720 = vmatprep.subr.mxu0 0.0
        %2721 = vmatpush1.msra.mxu0 0.0
        %2722 = vmatprep.subr.mxu0 0.0
        %2723 = vmatpush1.msra.mxu0 0.0
        %2724 = vmatprep.subr.mxu0 0.0
        %2725 = vmatpush1.msra.mxu0 0.0
        %2726 = vmatprep.subr.mxu0 0.0
        %2727 = vmatpush1.msra.mxu0 0.0
        %2728 = vmatprep.subr.mxu0 0.0
        %2729 = vmatpush1.msra.mxu0 0.0
        %2730 = vmatprep.subr.mxu0 0.0
        %2731 = vmatpush1.msra.mxu0 0.0
        %2732 = vmatprep.subr.mxu0 0.0
        %2733 = vmatpush1.msra.mxu0 0.0
        %2734 = vmatprep.subr.mxu0 0.0
        %2735 = vmatpush1.msra.mxu0 0.0
        %2736 = vmatprep.subr.mxu0 0.0
        %2737 = vmatpush1.msra.mxu0 0.0
        %2738 = vmatprep.subr.mxu0 0.0
        %2739 = vmatpush1.msra.mxu0 0.0
        %2740 = vmatprep.subr.mxu0 0.0
        %2741 = vmatpush1.msra.mxu0 0.0
        %2742 = vmatprep.subr.mxu0 0.0
        %2743 = vmatpush1.msra.mxu0 0.0
        %2744 = vmatprep.subr.mxu0 0.0
        %2745 = vmatpush1.msra.mxu0 0.0
        %2746 = vmatprep.subr.mxu0 0.0
        %2747 = vmatpush1.msra.mxu0 0.0
        %2748 = vmatprep.subr.mxu0 0.0
        %2749 = vmatpush1.msra.mxu0 0.0
        %2750 = vmatprep.subr.mxu0 0.0
        %2751 = vmatpush1.msra.mxu0 0.0
        %2752 = vmatprep.subr.mxu0 0.0
        %2753 = vmatpush1.msra.mxu0 0.0
        %2754 = vmatprep.subr.mxu0 0.0
        %2755 = vmatpush1.msra.mxu0 0.0
        %2756 = vmatprep.mubr.f32.mxu0 0.0
        %2757 = vmatmul.mubr.f32.gmra.mrb[0].mxu0 %v2690
        %v2758 = vpop.f32.mrb[0].mxu0
        %v2759 = vadd.f32 %v2687, %v2758
        %v2760 = vpop.f32.mrb[0].mxu0
        %2761 = vdwg.mxu0
        %v2762 = vmul.f32 %v2759, 0.5
        %v2763 = vmul.f32 %v2759, 0.70710677
        %v2764 = verf.f32.pop %v2763
        %v2765 = vadd.f32 %v2764, 1.0
        %v2766 = vmul.f32 %v2762, %v2765
        %v2767 = vld [vmem:[%s17] sm:$0xff]
        %v2768 = vld [vmem:[%s17 + $0x8] sm:$0xff]
        %v2769 = vld [vmem:[%s17 + $0x10] sm:$0xff]
        %v2770 = vld [vmem:[%s17 + $0x18] sm:$0xff]
        %v2771 = vld [vmem:[%s17 + $0x20] sm:$0xff]
        %v2772 = vld [vmem:[%s17 + $0x28] sm:$0xff]
        %v2773 = vld [vmem:[%s17 + $0x30] sm:$0xff]
        %v2774 = vld [vmem:[%s17 + $0x38] sm:$0xff]
        %v2775 = vld [vmem:[%s17 + $0x40] sm:$0xff]
        %v2776 = vld [vmem:[%s17 + $0x48] sm:$0xff]
        %v2777 = vld [vmem:[%s17 + $0x50] sm:$0xff]
        %v2778 = vld [vmem:[%s17 + $0x58] sm:$0xff]
        %v2779 = vld [vmem:[%s17 + $0x60] sm:$0xff]
        %v2780 = vld [vmem:[%s17 + $0x68] sm:$0xff]
        %v2781 = vld [vmem:[%s17 + $0x70] sm:$0xff]
        %v2782 = vld [vmem:[%s17 + $0x78] sm:$0xff]
        %v2783 = vld [vmem:[%s18] sm:$0x1]
        %v2785 = vlaneseq
        %v2786 = vshrl.u32 %v2785, 7
        %v2787 = vsub.s32 0, %v2786
        %v2788 = vrot.slane %v2783, %v2787
        %2790 = vmatprep.subr.mxu0 0.0
        %2791 = vmatpush1.msra.mxu0 %v2767
        %2792 = vmatprep.subr.mxu0 0.0
        %2793 = vmatpush1.msra.mxu0 %v2768
        %2794 = vmatprep.subr.mxu0 0.0
        %2795 = vmatpush1.msra.mxu0 %v2769
        %2796 = vmatprep.subr.mxu0 0.0
        %2797 = vmatpush1.msra.mxu0 %v2770
        %2798 = vmatprep.subr.mxu0 0.0
        %2799 = vmatpush1.msra.mxu0 %v2771
        %2800 = vmatprep.subr.mxu0 0.0
        %2801 = vmatpush1.msra.mxu0 %v2772
        %2802 = vmatprep.subr.mxu0 0.0
        %2803 = vmatpush1.msra.mxu0 %v2773
        %2804 = vmatprep.subr.mxu0 0.0
        %2805 = vmatpush1.msra.mxu0 %v2774
        %2806 = vmatprep.subr.mxu0 0.0
        %2807 = vmatpush1.msra.mxu0 %v2775
        %2808 = vmatprep.subr.mxu0 0.0
        %2809 = vmatpush1.msra.mxu0 %v2776
        %2810 = vmatprep.subr.mxu0 0.0
        %2811 = vmatpush1.msra.mxu0 %v2777
        %2812 = vmatprep.subr.mxu0 0.0
        %2813 = vmatpush1.msra.mxu0 %v2778
        %2814 = vmatprep.subr.mxu0 0.0
        %2815 = vmatpush1.msra.mxu0 %v2779
        %2816 = vmatprep.subr.mxu0 0.0
        %2817 = vmatpush1.msra.mxu0 %v2780
        %2818 = vmatprep.subr.mxu0 0.0
        %2819 = vmatpush1.msra.mxu0 %v2781
        %2820 = vmatprep.subr.mxu0 0.0
        %2821 = vmatpush1.msra.mxu0 %v2782
        %2822 = vmatprep.subr.mxu0 0.0
        %2823 = vmatpush1.msra.mxu0 0.0
        %2824 = vmatprep.subr.mxu0 0.0
        %2825 = vmatpush1.msra.mxu0 0.0
        %2826 = vmatprep.subr.mxu0 0.0
        %2827 = vmatpush1.msra.mxu0 0.0
        %2828 = vmatprep.subr.mxu0 0.0
        %2829 = vmatpush1.msra.mxu0 0.0
        %2830 = vmatprep.subr.mxu0 0.0
        %2831 = vmatpush1.msra.mxu0 0.0
        %2832 = vmatprep.subr.mxu0 0.0
        %2833 = vmatpush1.msra.mxu0 0.0
        %2834 = vmatprep.subr.mxu0 0.0
        %2835 = vmatpush1.msra.mxu0 0.0
        %2836 = vmatprep.subr.mxu0 0.0
        %2837 = vmatpush1.msra.mxu0 0.0
        %2838 = vmatprep.subr.mxu0 0.0
        %2839 = vmatpush1.msra.mxu0 0.0
        %2840 = vmatprep.subr.mxu0 0.0
        %2841 = vmatpush1.msra.mxu0 0.0
        %2842 = vmatprep.subr.mxu0 0.0
        %2843 = vmatpush1.msra.mxu0 0.0
        %2844 = vmatprep.subr.mxu0 0.0
        %2845 = vmatpush1.msra.mxu0 0.0
        %2846 = vmatprep.subr.mxu0 0.0
        %2847 = vmatpush1.msra.mxu0 0.0
        %2848 = vmatprep.subr.mxu0 0.0
        %2849 = vmatpush1.msra.mxu0 0.0
        %2850 = vmatprep.subr.mxu0 0.0
        %2851 = vmatpush1.msra.mxu0 0.0
        %2852 = vmatprep.subr.mxu0 0.0
        %2853 = vmatpush1.msra.mxu0 0.0
        %2854 = vmatprep.mubr.f32.mxu0 0.0
        %2855 = vmatmul.mubr.f32.gmra.mrb[0].mxu0 %v2766
        %v2856 = vpop.f32.mrb[0].mxu0
        %v2857 = vadd.f32 %v2788, %v2856
        %v2858 = vpop.f32.mrb[0].mxu0
        %2859 = vdwg.mxu0
        %v2860 = vadd.f32 %v2857, %v2646
        %v2861 = vld [vmem:[%s19] sm:$0x1]
        %v2862 = vld [vmem:[%s20] sm:$0x1]
        %v2863 = vsel %vm2649, %v2860, 0.0
        %2864 = vadd.xlane.f32.xlu0 %v2863
        %v2865 = vpop.xlane.xlu0 %2864
        %v2866 = vmul.f32 %v2865, %v2653
        %v2867 = vsub.f32 %v2860, %v2866
        %v2868 = vmul.f32 %v2867, %v2867
        %v2869 = vsel %vm2649, %v2868, 0.0
        %2870 = vadd.xlane.f32.xlu0 %v2869
        %v2871 = vpop.xlane.xlu0 %2870
        %v2872 = vmul.f32 %v2871, %v2653
        %v2873 = vadd.f32 %v2872, 1e-06
        %v2874 = vrsqrt.pop %v2873
        %v2875 = vmul.f32 %v2867, %v2874
        %v2877 = vlaneseq
        %v2878 = vshrl.u32 %v2877, 7
        %v2879 = vsub.s32 0, %v2878
        %v2880 = vrot.slane %v2861, %v2879
        %v2882 = vmul.f32 %v2875, %v2880
        %v2884 = vlaneseq
        %v2885 = vshrl.u32 %v2884, 7
        %v2886 = vsub.s32 0, %v2885
        %v2887 = vrot.slane %v2862, %v2886
        %v2889 = vadd.f32 %v2882, %v2887
        %2890 = vst.msk [vmem:[%s726] sm:$0xff] %vm2649, %v2889
        %s2891 = sand.u32 %s509, 1
        %s2892 = scalar_lea.sflag [#allocation3], %s2891
        %s2893 = sand.u32 %s509, 1
        %s2894 = smul.addr %s2893, 8
        %s2895 = scalar_lea.vmem [#allocation2], %s2894
        %s2896 = sand.u32 %s535, 1
        %s2897 = scalar_lea.sflag [#allocation5], %s2896
        %s2898 = sand.u32 %s535, 1
        %s2899 = smul.addr %s2898, 32
        %s2900 = scalar_lea.vmem [#allocation4], %s2899
        // Predicated region
        $region105: #{adaptive_pooler_forward.5} parent=103 // pred_check
          %p2901 = pneg %p519
        $region106: #{adaptive_pooler_forward.5} parent=103 // pred_check_branch
          %2903 = sbr.rel (%p2901) target = $region108
        $region107: #{adaptive_pooler_forward.5} parent=103 // pred_region
          %s2905 = ssub.s32 128, 128
          %2906 = vsyncadd %s2892, %s2905
          %s2907 = smul.addr %s40, 128
          %s2908 = scalar_lea.hbm %s21, %s2907
          %s2910 = sshll.u32 %s2895, 4
          %s2911 = int_to_ptr.vmem [resolvable:$true] %s2910
          %2913 = dma.vmem_to_hbm [thread:$0]  %s2911, 128, %s2908, %s2892
        $region108: #{adaptive_pooler_forward.5} parent=103 // pred_fallthru
          _
        // Predicated region
        $region109: #{adaptive_pooler_forward.5} parent=103 // pred_check
          %p2914 = pneg %p545
        $region110: #{adaptive_pooler_forward.5} parent=103 // pred_check_branch
          %2916 = sbr.rel (%p2914) target = $region112
        $region111: #{adaptive_pooler_forward.5} parent=103 // pred_region
          %s2917 = smul.u32 4, %s40
          %s2919 = ssub.s32 512, 512
          %2920 = vsyncadd %s2897, %s2919
          %s2921 = smul.addr %s2917, 128
          %s2922 = scalar_lea.hbm %s22, %s2921
          %s2923 = sshll.u32 %s2900, 4
          %s2924 = int_to_ptr.vmem [resolvable:$true] %s2923
          %2929 = dma.vmem_to_hbm [thread:$0]  %s2924, 512, %s2922, %s2897, 128, 128, 8
        $region112: #{adaptive_pooler_forward.5} parent=103 // pred_fallthru
          _
      $region104: #{adaptive_pooler_forward.5} parent=5 // pred_fallthru
        _
      %p2930 = scmp.le.s32.totalorder 2, %s35
      // Predicated region
      $region113: #{adaptive_pooler_forward.5} parent=5 // pred_check
        %p2931 = pneg %p2930
      $region114: #{adaptive_pooler_forward.5} parent=5 // pred_check_branch
        %2933 = sbr.rel (%p2931) target = $region116
      $region115: #{adaptive_pooler_forward.5} parent=5 // pred_region
        %s2934 = ssub.s32 %s35, 2
        // Predicated region
        $region117: #{adaptive_pooler_forward.5} parent=115 // pred_check
          %p2935 = pneg %p525
        $region118: #{adaptive_pooler_forward.5} parent=115 // pred_check_branch
          %2937 = sbr.rel (%p2935) target = $region120
        $region119: #{adaptive_pooler_forward.5} parent=115 // pred_region
          %s2938 = sand.u32 %s510, 1
          %s2939 = scalar_lea.sflag [#allocation3], %s2938
          %s2940 = sand.u32 %s510, 1
          %s2941 = smul.addr %s2940, 8
          %s2942 = scalar_lea.vmem [#allocation2], %s2941
          %2943 = dma.done %s2939, 128
        $region120: #{adaptive_pooler_forward.5} parent=115 // pred_fallthru
          _
        // Predicated region
        $region121: #{adaptive_pooler_forward.5} parent=115 // pred_check
          %p2944 = pneg %p551
        $region122: #{adaptive_pooler_forward.5} parent=115 // pred_check_branch
          %2946 = sbr.rel (%p2944) target = $region124
        $region123: #{adaptive_pooler_forward.5} parent=115 // pred_region
          %s2947 = sand.u32 %s536, 1
          %s2948 = scalar_lea.sflag [#allocation5], %s2947
          %s2949 = sand.u32 %s536, 1
          %s2950 = smul.addr %s2949, 32
          %s2951 = scalar_lea.vmem [#allocation4], %s2950
          %2952 = dma.done %s2948, 512
        $region124: #{adaptive_pooler_forward.5} parent=115 // pred_fallthru
          _
      $region116: #{adaptive_pooler_forward.5} parent=5 // pred_fallthru
        _
    $region6: #{adaptive_pooler_forward.5} parent=1 // loop_footer
      %s39 = sadd.s32 1, %s35
    $region7: #{adaptive_pooler_forward.5} parent=1 // loop_footer_branch
      %34 = sbr.rel target = $region3
    $region8: #{adaptive_pooler_forward.5} parent=1 // loop_exit
      _
    %2953 = vsyncpa [#allocation3], 1
    %s2954 = scalar_lea.sflag [#allocation3], 1
    %2955 = vsyncpa %s2954, 1
    %2956 = vsyncpa [#allocation5], 1
    %s2957 = scalar_lea.sflag [#allocation5], 1
    %2958 = vsyncpa %s2957, 1

</llo_original>
